<compile_context>
chip_gen: v7x
topology: tpu7x:2x2x1
jax: 0.10.0
libtpu: 0.0.40
codegen_flags: <defaults>
</compile_context>

<pallas_src>
import functools
import math

import jax
import jax.numpy as jnp
from jax.experimental import pallas as pl
from jax.experimental.pallas import tpu as pltpu


def _layernorm(x, w, b, eps=1e-5):
    """LayerNorm over the last dim in fp32 (matches the fp16-safe subclass)."""
    x32 = x.astype(jnp.float32)
    mu = jnp.mean(x32, axis=-1, keepdims=True)
    var = jnp.mean((x32 - mu) ** 2, axis=-1, keepdims=True)
    return (x32 - mu) * jax.lax.rsqrt(var + eps) * w + b


def fused_text_transformer_kernel(
        x_ref, mask_ref,
        ln1w_ref, ln1b_ref,
        wqkv_ref, bqkv_ref, wo_ref, bo_ref,
        ln2w_ref, ln2b_ref,
        wfc_ref, bfc_ref, wpj_ref, bpj_ref,
        o_ref,
        x_acc, attn_acc,
        *, n_head, mlp_chunks):
    """One grid step = one ResidualAttentionBlock applied to Bt batch elements.

    grid = (B_pad // Bt, layers).  The fp32 activation is carried across the
    inner ("arbitrary") layer axis in the `x_acc` VMEM scratch; the output
    block is written only on the last layer.
    """
    layer = pl.program_id(1)

    @pl.when(layer == 0)
    def _init():
        x_acc[...] = x_ref[...].astype(jnp.float32)

    Bt, L, D = x_acc.shape
    H = n_head
    Dh = D // H
    mxu_dtype = wqkv_ref.dtype                 # bf16 weights feed the MXU

    x = x_acc[...]                             # (Bt, L, D) fp32 residual stream

    # ---- x = x + attn(ln_1(x)) ----
    h = _layernorm(x, ln1w_ref[0], ln1b_ref[0])               # (Bt, L, D) f32
    h2d = h.reshape(Bt * L, D).astype(mxu_dtype)
    # 1/sqrt(Dh) is pre-folded into the q-third of w_qkv / b_qkv (pack_params).
    qkv = jnp.dot(h2d, wqkv_ref[0],
                  preferred_element_type=jnp.float32) + bqkv_ref[0]  # (Bt*L, 3D)
    q = qkv[:, 0 * D:1 * D].reshape(Bt, L, D).astype(mxu_dtype)
    k = qkv[:, 1 * D:2 * D].reshape(Bt, L, D).astype(mxu_dtype)
    v = qkv[:, 2 * D:3 * D].reshape(Bt, L, D).astype(mxu_dtype)
    mask = mask_ref[...]                                      # (L, L) f32 additive

    def one_head(sl):                          # Bt-batched single head, f32 out
        s = jnp.einsum("bld,bmd->blm", q[:, :, sl], k[:, :, sl],
                       preferred_element_type=jnp.float32) + mask
        s = s - jnp.max(s, axis=-1, keepdims=True)
        p = jnp.exp(s)
        p = p * pl.reciprocal(jnp.sum(p, axis=-1, keepdims=True), approx=True)
        return jnp.einsum("blm,bmd->bld", p.astype(mxu_dtype), v[:, :, sl],
                          preferred_element_type=jnp.float32)

    # Heads in pairs -> one 2*Dh-lane-wide store per pair (128 lanes for Dh=64).
    for hd in range(0, H - (H % 2), 2):
        o0 = one_head(slice(hd * Dh, (hd + 1) * Dh))
        o1 = one_head(slice((hd + 1) * Dh, (hd + 2) * Dh))
        attn_acc[:, :, hd * Dh:(hd + 2) * Dh] = (
            jnp.concatenate([o0, o1], axis=-1).astype(attn_acc.dtype))
    if H % 2:                                  # odd head count fallback
        hd = H - 1
        attn_acc[:, :, hd * Dh:(hd + 1) * Dh] = (
            one_head(slice(hd * Dh, (hd + 1) * Dh)).astype(attn_acc.dtype))

    attn2d = attn_acc[...].reshape(Bt * L, D)                 # already mxu_dtype
    attn_o = jnp.dot(attn2d, wo_ref[0],
                     preferred_element_type=jnp.float32) + bo_ref[0]
    x = x + attn_o.reshape(Bt, L, D)

    # ---- x = x + mlp(ln_2(x)) ----  (chunked along the 4D hidden axis)
    h2 = _layernorm(x, ln2w_ref[0], ln2b_ref[0])
    g2d = h2.reshape(Bt * L, D).astype(mxu_dtype)
    hid = 4 * D
    chunk = hid // mlp_chunks
    m = None
    for c in range(mlp_chunks):
        csl = slice(c * chunk, (c + 1) * chunk)
        f = jnp.dot(g2d, wfc_ref[0, :, csl],
                    preferred_element_type=jnp.float32) + bfc_ref[0][:, csl]
        f = f * jax.nn.sigmoid(1.702 * f)                     # QuickGELU (f32)
        part = jnp.dot(f.astype(mxu_dtype), wpj_ref[0, csl, :],
                       preferred_element_type=jnp.float32)
        m = part if m is None else m + part
    m = m + bpj_ref[0]
    x = x + m.reshape(Bt, L, D)

    x_acc[...] = x

    @pl.when(layer == pl.num_programs(1) - 1)
    def _store():
        o_ref[...] = x.astype(o_ref.dtype)


def init_block_params(key, width):
    """Per-layer params in the PyTorch layout ((out, in) weights, 1-D biases)."""
    k = jax.random.split(key, 6)
    std = 0.02
    f32 = jnp.float32
    return dict(
        ln1_w=jnp.ones((width,), f32),
        ln1_b=jnp.zeros((width,), f32),
        w_qkv=std * jax.random.normal(k[0], (3 * width, width), f32),
        b_qkv=std * jax.random.normal(k[1], (3 * width,), f32),
        w_o=std * jax.random.normal(k[2], (width, width), f32),
        b_o=jnp.zeros((width,), f32),
        ln2_w=jnp.ones((width,), f32),
        ln2_b=jnp.zeros((width,), f32),
        w_fc=std * jax.random.normal(k[3], (4 * width, width), f32),
        b_fc=std * jax.random.normal(k[4], (4 * width,), f32),
        w_pj=std * jax.random.normal(k[5], (width, 4 * width), f32),
        b_pj=jnp.zeros((width,), f32),
    )


def pack_params(params_list, n_head, mxu_dtype=jnp.bfloat16):
    """Stack per-layer params, fold the q-scale into w_qkv/b_qkv, pre-transpose
    big matrices to (in, out) layout and cast them once to the MXU dtype."""
    D = params_list[0]["ln1_w"].shape[0]
    scale = 1.0 / math.sqrt(D // n_head)

    def stack(name):
        return jnp.stack([p[name] for p in params_list]).astype(jnp.float32)

    # Fold 1/sqrt(Dh) into the q-third of the qkv projection (rows [0:D]).
    w_qkv = stack("w_qkv")
    w_qkv = w_qkv.at[:, :D, :].multiply(scale)
    b_qkv = stack("b_qkv")
    b_qkv = b_qkv.at[:, :D].multiply(scale)

    def as_mat(a):                        # (layers, out, in) -> (layers, in, out) bf16
        return jnp.transpose(a, (0, 2, 1)).astype(mxu_dtype)

    def as_vec(a):                        # (layers, X) -> (layers, 1, X) f32
        return a[:, None, :]

    return dict(
        ln1_w=as_vec(stack("ln1_w")), ln1_b=as_vec(stack("ln1_b")),
        w_qkv=as_mat(w_qkv), b_qkv=as_vec(b_qkv),
        w_o=as_mat(stack("w_o")), b_o=as_vec(stack("b_o")),
        ln2_w=as_vec(stack("ln2_w")), ln2_b=as_vec(stack("ln2_b")),
        w_fc=as_mat(stack("w_fc")), b_fc=as_vec(stack("b_fc")),
        w_pj=as_mat(stack("w_pj")), b_pj=as_vec(stack("b_pj")),
    )


def _vmem_budget_bytes():
    """Per-generation VMEM budget: physical capacity minus headroom, capped."""
    default = 64 * 1024 * 1024
    try:
        info = pltpu.get_tpu_info()
        cap = int(getattr(info, "vmem_capacity_bytes", 0) or 0)
    except Exception:
        cap = 0
    if cap <= 0:
        return default                     # unknown chip: conservative
    return max(32 * 1024 * 1024, min(cap - 12 * 1024 * 1024, 112 * 1024 * 1024))


def _estimate_vmem_bytes(Bt, L_pad, D):
    """Rough per-step VMEM footprint (double-buffered blocks + scratch + temps)."""
    act = Bt * L_pad * D
    x_io = 2 * 2 * act * 4                           # x in + out blocks, 2 buffers each
    mask = 2 * L_pad * L_pad * 4
    weights = 2 * (12 * D * D) * 2                   # qkv+o+fc+pj bf16, double-buffered
    biases = 2 * 13 * D * 4
    scratch = act * 4 + act * 2                      # x_acc f32 + attn_acc bf16
    temps = act * 4 * 6 + Bt * L_pad * L_pad * 4 * 3  # h/qkv/f slabs + score tiles
    return x_io + mask + weights + biases + scratch + temps


def _pick_block_b(B, target_bt, L_pad, D, budget):
    """Largest Bt <= min(target, B) whose estimated footprint fits the budget."""
    for bt in range(max(1, min(target_bt, B)), 0, -1):
        if _estimate_vmem_bytes(bt, L_pad, D) <= budget:
            return bt
    return 1


def text_transformer(x_lbd, params_list, mask, n_head, *,
                     block_b=8, mxu_dtype=jnp.bfloat16):
    """TextTransformer.forward.  x_lbd: (L, N, D), seq-major like PyTorch."""
    L, B, D = x_lbd.shape
    n_layers = len(params_list)
    assert D % n_head == 0, "width must be divisible by heads"
    packed = pack_params(params_list, n_head, mxu_dtype)

    # (L, B, D) -> (B, L, D); pad L to a lane-dense multiple of 128.
    x = jnp.transpose(x_lbd, (1, 0, 2))
    L_pad = ((L + 127) // 128) * 128
    lpad = L_pad - L
    mask_f32 = mask.astype(jnp.float32)
    if lpad:
        x = jnp.pad(x, ((0, 0), (0, lpad), (0, 0)))
        mask_f32 = jnp.pad(mask_f32, ((0, lpad), (0, lpad)),
                           constant_values=-1e9)     # padded keys masked out

    # Per-generation VMEM budget + batch-block sizing; pad B up to a multiple
    # of Bt (never fall back to tiny divisors for odd/prime batch sizes).
    budget = _vmem_budget_bytes()
    Bt = _pick_block_b(B, block_b, L_pad, D, budget)
    B_pad = ((B + Bt - 1) // Bt) * Bt
    if B_pad != B:
        x = jnp.pad(x, ((0, B_pad - B), (0, 0), (0, 0)))

    # Chunk the MLP hidden axis only when the chunks stay 128-lane aligned.
    mlp_chunks = 2 if (4 * D) % 2 == 0 and ((4 * D) // 2) % 128 == 0 else 1

    grid = (B_pad // Bt, n_layers)
    kernel = functools.partial(fused_text_transformer_kernel,
                               n_head=n_head, mlp_chunks=mlp_chunks)

    param_order = ["ln1_w", "ln1_b", "w_qkv", "b_qkv", "w_o", "b_o",
                   "ln2_w", "ln2_b", "w_fc", "b_fc", "w_pj", "b_pj"]
    param_args = [packed[name] for name in param_order]

    def layer_spec(arr):                 # stacked (layers, r, c): indexed by layer
        return pl.BlockSpec((1,) + arr.shape[1:], lambda b, l: (l, 0, 0))

    in_specs = ([pl.BlockSpec((Bt, L_pad, D), lambda b, l: (b, 0, 0)),   # x
                 pl.BlockSpec((L_pad, L_pad), lambda b, l: (0, 0))]      # mask
                + [layer_spec(a) for a in param_args])
    out_specs = pl.BlockSpec((Bt, L_pad, D), lambda b, l: (b, 0, 0))

    out = pl.pallas_call(
        kernel,
        out_shape=jax.ShapeDtypeStruct((B_pad, L_pad, D), x_lbd.dtype),
        grid=grid,
        in_specs=in_specs,
        out_specs=out_specs,
        scratch_shapes=[pltpu.VMEM((Bt, L_pad, D), jnp.float32),   # residual stream
                        pltpu.VMEM((Bt, L_pad, D), mxu_dtype)],    # attention out (bf16)
        compiler_params=pltpu.CompilerParams(
            dimension_semantics=("parallel", "arbitrary"),
            vmem_limit_bytes=int(budget)),
    )(x, mask_f32, *param_args)

    out = out[:B, :L, :]                 # strip batch + seq padding
    return jnp.transpose(out, (1, 0, 2))


# ---------------- pure-JAX reference (PyTorch semantics) ----------------
def _ln_ref(x, w, b, eps=1e-5):
    mu = jnp.mean(x, axis=-1, keepdims=True)
    var = jnp.mean((x - mu) ** 2, axis=-1, keepdims=True)
    return (x - mu) * jax.lax.rsqrt(var + eps) * w + b


def reference_forward(x_lbd, params_list, mask, n_head):
    x = jnp.transpose(x_lbd, (1, 0, 2)).astype(jnp.float32)   # (B, L, D)
    B, L, D = x.shape
    H = n_head
    Dh = D // H
    for prm in params_list:
        h = _ln_ref(x, prm["ln1_w"], prm["ln1_b"])
        qkv = h @ prm["w_qkv"].T + prm["b_qkv"]
        q, k, v = jnp.split(qkv, 3, axis=-1)
        q = q.reshape(B, L, H, Dh).transpose(0, 2, 1, 3) / math.sqrt(Dh)
        k = k.reshape(B, L, H, Dh).transpose(0, 2, 1, 3)
        v = v.reshape(B, L, H, Dh).transpose(0, 2, 1, 3)
        s = jnp.einsum("bhld,bhmd->bhlm", q, k) + mask
        p = jax.nn.softmax(s, axis=-1)
        o = jnp.einsum("bhlm,bhmd->bhld", p, v)
        o = o.transpose(0, 2, 1, 3).reshape(B, L, D)
        x = x + o @ prm["w_o"].T + prm["b_o"]
        h2 = _ln_ref(x, prm["ln2_w"], prm["ln2_b"])
        f = h2 @ prm["w_fc"].T + prm["b_fc"]
        f = f * jax.nn.sigmoid(1.702 * f)
        x = x + f @ prm["w_pj"].T + prm["b_pj"]
    return jnp.transpose(x, (1, 0, 2))


if __name__ == "__main__":
    # Small shapes: width=32, layers=2, heads=4, seq=8, batch=2.
    width, layers, heads = 32, 2, 4
    L, B = 8, 2

    root = jax.random.PRNGKey(0)
    kx, *kblocks = jax.random.split(root, layers + 1)
    params_list = [init_block_params(kb, width) for kb in kblocks]

    # Causal additive attention mask (CLIP text-transformer style).
    mask = jnp.where(jnp.triu(jnp.ones((L, L), jnp.bool_), k=1),
                     jnp.float32(-1e9), jnp.float32(0.0))

    x = jax.random.normal(kx, (L, B, width), jnp.float32)   # (L, N, D) seq-major

    out = text_transformer(x, params_list, mask, heads)
    out = jax.block_until_ready(out)

    assert out.shape == (L, B, width)
    assert jnp.all(jnp.isfinite(out))

    ref = reference_forward(x, params_list, mask, heads)
    max_err = float(jnp.max(jnp.abs(out - ref)))
    assert max_err < 5e-2, f"max abs err vs reference: {max_err}"

    print("KERNEL_OK")
</pallas_src>

<mosaic_0001>
module attributes {stable_mosaic.version = 11 : i64} {
  func.func @fused_text_transformer_kernel(%arg0: i32, %arg1: i32, %arg2: memref<2x128x32xf32, #tpu.memory_space<vmem>>, %arg3: memref<128x128xf32, #tpu.memory_space<vmem>>, %arg4: memref<1x1x32xf32, #tpu.memory_space<vmem>>, %arg5: memref<1x1x32xf32, #tpu.memory_space<vmem>>, %arg6: memref<1x32x96xbf16, #tpu.memory_space<vmem>>, %arg7: memref<1x1x96xf32, #tpu.memory_space<vmem>>, %arg8: memref<1x32x32xbf16, #tpu.memory_space<vmem>>, %arg9: memref<1x1x32xf32, #tpu.memory_space<vmem>>, %arg10: memref<1x1x32xf32, #tpu.memory_space<vmem>>, %arg11: memref<1x1x32xf32, #tpu.memory_space<vmem>>, %arg12: memref<1x32x128xbf16, #tpu.memory_space<vmem>>, %arg13: memref<1x1x128xf32, #tpu.memory_space<vmem>>, %arg14: memref<1x128x32xbf16, #tpu.memory_space<vmem>>, %arg15: memref<1x1x32xf32, #tpu.memory_space<vmem>>, %arg16: memref<2x128x32xf32, #tpu.memory_space<vmem>>, %arg17: memref<2x128x32xf32, #tpu.memory_space<vmem>>, %arg18: memref<2x128x32xbf16, #tpu.memory_space<vmem>>) attributes {dimension_semantics = [#tpu.dimension_semantics<parallel>, #tpu.dimension_semantics<arbitrary>], iteration_bounds = array<i64: 1, 2>, scalar_prefetch = 0 : i64, scratch_operands = 2 : i64, tpu.core_type = #tpu.core_type<tc>, window_params = [{transform_indices = @transform_0, window_bounds = array<i64: 2, 128, 32>}, {pipeline_mode = #tpu.pipeline_mode<synchronous>, transform_indices = @transform_1, window_bounds = array<i64: 128, 128>}, {transform_indices = @transform_2, window_bounds = array<i64: 1, 1, 32>}, {transform_indices = @transform_3, window_bounds = array<i64: 1, 1, 32>}, {transform_indices = @transform_4, window_bounds = array<i64: 1, 32, 96>}, {transform_indices = @transform_5, window_bounds = array<i64: 1, 1, 96>}, {transform_indices = @transform_6, window_bounds = array<i64: 1, 32, 32>}, {transform_indices = @transform_7, window_bounds = array<i64: 1, 1, 32>}, {transform_indices = @transform_8, window_bounds = array<i64: 1, 1, 32>}, {transform_indices = @transform_9, window_bounds = array<i64: 1, 1, 32>}, {transform_indices = @transform_10, window_bounds = array<i64: 1, 32, 128>}, {transform_indices = @transform_11, window_bounds = array<i64: 1, 1, 128>}, {transform_indices = @transform_12, window_bounds = array<i64: 1, 128, 32>}, {transform_indices = @transform_13, window_bounds = array<i64: 1, 1, 32>}, {transform_indices = @transform_14, window_bounds = array<i64: 2, 128, 32>}]} {
    %c0_i32 = arith.constant 0 : i32
    %0 = arith.cmpi eq, %arg1, %c0_i32 : i32
    %1 = arith.extui %0 : i1 to i32
    %c0_i32_0 = arith.constant 0 : i32
    %2 = arith.cmpi ne, %1, %c0_i32_0 : i32
    scf.if %2 {
      %c0_84 = arith.constant 0 : index
      %c0_85 = arith.constant 0 : index
      %c0_86 = arith.constant 0 : index
      %203 = vector.load %arg2[%c0_84, %c0_85, %c0_86] : memref<2x128x32xf32, #tpu.memory_space<vmem>>, vector<2x128x32xf32>
      %c0_87 = arith.constant 0 : index
      %c0_88 = arith.constant 0 : index
      %c0_89 = arith.constant 0 : index
      %204 = vector.load %arg17[%c0_87, %c0_88, %c0_89] : memref<2x128x32xf32, #tpu.memory_space<vmem>>, vector<2x128x32xf32>
      tpu.vector_store %arg17[%c0_87, %c0_88, %c0_89], %203 {strides = array<i32>} : memref<2x128x32xf32, #tpu.memory_space<vmem>>, vector<2x128x32xf32>,
    } else {
    }
    %c0 = arith.constant 0 : index
    %c0_1 = arith.constant 0 : index
    %c0_2 = arith.constant 0 : index
    %3 = vector.load %arg17[%c0, %c0_1, %c0_2] : memref<2x128x32xf32, #tpu.memory_space<vmem>>, vector<2x128x32xf32>
    %c0_3 = arith.constant 0 : index
    %c0_4 = arith.constant 0 : index
    %c0_5 = arith.constant 0 : index
    %4 = vector.load %arg4[%c0_3, %c0_4, %c0_5] : memref<1x1x32xf32, #tpu.memory_space<vmem>>, vector<1x1x32xf32>
    %5 = vector.shape_cast %4 : vector<1x1x32xf32> to vector<1x32xf32>
    %c0_6 = arith.constant 0 : index
    %c0_7 = arith.constant 0 : index
    %c0_8 = arith.constant 0 : index
    %6 = vector.load %arg5[%c0_6, %c0_7, %c0_8] : memref<1x1x32xf32, #tpu.memory_space<vmem>>, vector<1x1x32xf32>
    %7 = vector.shape_cast %6 : vector<1x1x32xf32> to vector<1x32xf32>
    %cst = arith.constant dense<0.000000e+00> : vector<2x128xf32>
    %8 = vector.multi_reduction <add>, %3, %cst [2] : vector<2x128x32xf32> to vector<2x128xf32>
    %9 = vector.shape_cast %8 : vector<2x128xf32> to vector<2x128x1xf32>
    %cst_9 = arith.constant 3.200000e+01 : f32
    %10 = vector.broadcast %cst_9 : f32 to vector<2x128x1xf32>
    %11 = arith.divf %9, %10 : vector<2x128x1xf32>
    %12 = vector.broadcast %11 : vector<2x128x1xf32> to vector<2x128x32xf32>
    %13 = arith.subf %3, %12 : vector<2x128x32xf32>
    %14 = arith.mulf %13, %13 : vector<2x128x32xf32>
    %cst_10 = arith.constant dense<0.000000e+00> : vector<2x128xf32>
    %15 = vector.multi_reduction <add>, %14, %cst_10 [2] : vector<2x128x32xf32> to vector<2x128xf32>
    %16 = vector.shape_cast %15 : vector<2x128xf32> to vector<2x128x1xf32>
    %cst_11 = arith.constant 3.200000e+01 : f32
    %17 = vector.broadcast %cst_11 : f32 to vector<2x128x1xf32>
    %18 = arith.divf %16, %17 : vector<2x128x1xf32>
    %19 = vector.broadcast %11 : vector<2x128x1xf32> to vector<2x128x32xf32>
    %20 = arith.subf %3, %19 : vector<2x128x32xf32>
    %cst_12 = arith.constant 9.99999974E-6 : f32
    %21 = vector.broadcast %cst_12 : f32 to vector<2x128x1xf32>
    %22 = arith.addf %18, %21 : vector<2x128x1xf32>
    %23 = math.rsqrt %22 : vector<2x128x1xf32>
    %24 = vector.broadcast %23 : vector<2x128x1xf32> to vector<2x128x32xf32>
    %25 = arith.mulf %20, %24 : vector<2x128x32xf32>
    %26 = vector.shape_cast %5 : vector<1x32xf32> to vector<1x1x32xf32>
    %27 = vector.broadcast %26 : vector<1x1x32xf32> to vector<2x128x32xf32>
    %28 = arith.mulf %25, %27 : vector<2x128x32xf32>
    %29 = vector.shape_cast %7 : vector<1x32xf32> to vector<1x1x32xf32>
    %30 = vector.broadcast %29 : vector<1x1x32xf32> to vector<2x128x32xf32>
    %31 = arith.addf %28, %30 : vector<2x128x32xf32>
    %32 = vector.shape_cast %31 : vector<2x128x32xf32> to vector<256x32xf32>
    %33 = arith.truncf %32 : vector<256x32xf32> to vector<256x32xbf16>
    %c0_13 = arith.constant 0 : index
    %c0_14 = arith.constant 0 : index
    %c0_15 = arith.constant 0 : index
    %34 = vector.load %arg6[%c0_13, %c0_14, %c0_15] : memref<1x32x96xbf16, #tpu.memory_space<vmem>>, vector<1x32x96xbf16>
    %35 = vector.shape_cast %34 : vector<1x32x96xbf16> to vector<32x96xbf16>
    %cst_16 = arith.constant dense<0.000000e+00> : vector<256x96xf32>
    %36 = tpu.matmul %33, %35, %cst_16 {dimension_numbers = #tpu.dot_dimension_numbers<[1], [0], [0], [1], [0, 0, 1, 1], [], []>} : vector<256x32xbf16>, vector<32x96xbf16>, vector<256x96xf32> -> vector<256x96xf32>
    %c0_17 = arith.constant 0 : index
    %c0_18 = arith.constant 0 : index
    %c0_19 = arith.constant 0 : index
    %37 = vector.load %arg7[%c0_17, %c0_18, %c0_19] : memref<1x1x96xf32, #tpu.memory_space<vmem>>, vector<1x1x96xf32>
    %38 = vector.shape_cast %37 : vector<1x1x96xf32> to vector<1x96xf32>
    %39 = vector.broadcast %38 : vector<1x96xf32> to vector<256x96xf32>
    %40 = arith.addf %36, %39 : vector<256x96xf32>
    %41 = vector.extract_strided_slice %40 {offsets = [0, 0], sizes = [256, 32], strides = [1, 1]} : vector<256x96xf32> to vector<256x32xf32>
    %42 = vector.shape_cast %41 : vector<256x32xf32> to vector<2x128x32xf32>
    %43 = arith.truncf %42 : vector<2x128x32xf32> to vector<2x128x32xbf16>
    %44 = vector.extract_strided_slice %40 {offsets = [0, 32], sizes = [256, 32], strides = [1, 1]} : vector<256x96xf32> to vector<256x32xf32>
    %45 = vector.shape_cast %44 : vector<256x32xf32> to vector<2x128x32xf32>
    %46 = arith.truncf %45 : vector<2x128x32xf32> to vector<2x128x32xbf16>
    %47 = vector.extract_strided_slice %40 {offsets = [0, 64], sizes = [256, 32], strides = [1, 1]} : vector<256x96xf32> to vector<256x32xf32>
    %48 = vector.shape_cast %47 : vector<256x32xf32> to vector<2x128x32xf32>
    %49 = arith.truncf %48 : vector<2x128x32xf32> to vector<2x128x32xbf16>
    %c0_20 = arith.constant 0 : index
    %c0_21 = arith.constant 0 : index
    %50 = vector.load %arg3[%c0_20, %c0_21] : memref<128x128xf32, #tpu.memory_space<vmem>>, vector<128x128xf32>
    %51 = vector.extract_strided_slice %43 {offsets = [0, 0, 0], sizes = [2, 128, 8], strides = [1, 1, 1]} : vector<2x128x32xbf16> to vector<2x128x8xbf16>
    %52 = vector.extract_strided_slice %46 {offsets = [0, 0, 0], sizes = [2, 128, 8], strides = [1, 1, 1]} : vector<2x128x32xbf16> to vector<2x128x8xbf16>
    "tpu.trace_start"() <{level = 10 : i32, message = "bld,bmd->blm"}> : () -> ()
    %cst_22 = arith.constant dense<0.000000e+00> : vector<2x128x128xf32>
    %53 = tpu.matmul %51, %52, %cst_22 {dimension_numbers = #tpu.dot_dimension_numbers<[2], [2], [1], [1], [0, 0, 0, 1, 1, 1], [0], [0]>} : vector<2x128x8xbf16>, vector<2x128x8xbf16>, vector<2x128x128xf32> -> vector<2x128x128xf32>
    "tpu.trace_stop"() : () -> ()
    %54 = vector.shape_cast %50 : vector<128x128xf32> to vector<1x128x128xf32>
    %55 = vector.broadcast %54 : vector<1x128x128xf32> to vector<2x128x128xf32>
    %56 = arith.addf %53, %55 : vector<2x128x128xf32>
    %cst_23 = arith.constant dense<0xFF800000> : vector<2x128xf32>
    %57 = vector.multi_reduction <maximumf>, %56, %cst_23 [2] : vector<2x128x128xf32> to vector<2x128xf32>
    %58 = vector.shape_cast %57 : vector<2x128xf32> to vector<2x128x1xf32>
    %59 = vector.broadcast %58 : vector<2x128x1xf32> to vector<2x128x128xf32>
    %60 = arith.subf %56, %59 : vector<2x128x128xf32>
    %61 = math.exp %60 : vector<2x128x128xf32>
    %cst_24 = arith.constant dense<0.000000e+00> : vector<2x128xf32>
    %62 = vector.multi_reduction <add>, %61, %cst_24 [2] : vector<2x128x128xf32> to vector<2x128xf32>
    %63 = vector.shape_cast %62 : vector<2x128xf32> to vector<2x128x1xf32>
    %64 = tpu.reciprocal %63 {approx = true} : vector<2x128x1xf32> -> vector<2x128x1xf32>
    %65 = vector.broadcast %64 : vector<2x128x1xf32> to vector<2x128x128xf32>
    %66 = arith.mulf %61, %65 : vector<2x128x128xf32>
    %67 = arith.truncf %66 : vector<2x128x128xf32> to vector<2x128x128xbf16>
    %68 = vector.extract_strided_slice %49 {offsets = [0, 0, 0], sizes = [2, 128, 8], strides = [1, 1, 1]} : vector<2x128x32xbf16> to vector<2x128x8xbf16>
    "tpu.trace_start"() <{level = 10 : i32, message = "blm,bmd->bld"}> : () -> ()
    %cst_25 = arith.constant dense<0.000000e+00> : vector<2x128x8xf32>
    %69 = tpu.matmul %67, %68, %cst_25 {dimension_numbers = #tpu.dot_dimension_numbers<[2], [1], [1], [2], [0, 0, 0, 1, 1, 2], [0], [0]>} : vector<2x128x128xbf16>, vector<2x128x8xbf16>, vector<2x128x8xf32> -> vector<2x128x8xf32>
    "tpu.trace_stop"() : () -> ()
    %70 = vector.extract_strided_slice %43 {offsets = [0, 0, 8], sizes = [2, 128, 8], strides = [1, 1, 1]} : vector<2x128x32xbf16> to vector<2x128x8xbf16>
    %71 = vector.extract_strided_slice %46 {offsets = [0, 0, 8], sizes = [2, 128, 8], strides = [1, 1, 1]} : vector<2x128x32xbf16> to vector<2x128x8xbf16>
    "tpu.trace_start"() <{level = 10 : i32, message = "bld,bmd->blm"}> : () -> ()
    %cst_26 = arith.constant dense<0.000000e+00> : vector<2x128x128xf32>
    %72 = tpu.matmul %70, %71, %cst_26 {dimension_numbers = #tpu.dot_dimension_numbers<[2], [2], [1], [1], [0, 0, 0, 1, 1, 1], [0], [0]>} : vector<2x128x8xbf16>, vector<2x128x8xbf16>, vector<2x128x128xf32> -> vector<2x128x128xf32>
    "tpu.trace_stop"() : () -> ()
    %73 = vector.shape_cast %50 : vector<128x128xf32> to vector<1x128x128xf32>
    %74 = vector.broadcast %73 : vector<1x128x128xf32> to vector<2x128x128xf32>
    %75 = arith.addf %72, %74 : vector<2x128x128xf32>
    %cst_27 = arith.constant dense<0xFF800000> : vector<2x128xf32>
    %76 = vector.multi_reduction <maximumf>, %75, %cst_27 [2] : vector<2x128x128xf32> to vector<2x128xf32>
    %77 = vector.shape_cast %76 : vector<2x128xf32> to vector<2x128x1xf32>
    %78 = vector.broadcast %77 : vector<2x128x1xf32> to vector<2x128x128xf32>
    %79 = arith.subf %75, %78 : vector<2x128x128xf32>
    %80 = math.exp %79 : vector<2x128x128xf32>
    %cst_28 = arith.constant dense<0.000000e+00> : vector<2x128xf32>
    %81 = vector.multi_reduction <add>, %80, %cst_28 [2] : vector<2x128x128xf32> to vector<2x128xf32>
    %82 = vector.shape_cast %81 : vector<2x128xf32> to vector<2x128x1xf32>
    %83 = tpu.reciprocal %82 {approx = true} : vector<2x128x1xf32> -> vector<2x128x1xf32>
    %84 = vector.broadcast %83 : vector<2x128x1xf32> to vector<2x128x128xf32>
    %85 = arith.mulf %80, %84 : vector<2x128x128xf32>
    %86 = arith.truncf %85 : vector<2x128x128xf32> to vector<2x128x128xbf16>
    %87 = vector.extract_strided_slice %49 {offsets = [0, 0, 8], sizes = [2, 128, 8], strides = [1, 1, 1]} : vector<2x128x32xbf16> to vector<2x128x8xbf16>
    "tpu.trace_start"() <{level = 10 : i32, message = "blm,bmd->bld"}> : () -> ()
    %cst_29 = arith.constant dense<0.000000e+00> : vector<2x128x8xf32>
    %88 = tpu.matmul %86, %87, %cst_29 {dimension_numbers = #tpu.dot_dimension_numbers<[2], [1], [1], [2], [0, 0, 0, 1, 1, 2], [0], [0]>} : vector<2x128x128xbf16>, vector<2x128x8xbf16>, vector<2x128x8xf32> -> vector<2x128x8xf32>
    "tpu.trace_stop"() : () -> ()
    %89 = tpu.concatenate %69, %88 in 2 : vector<2x128x8xf32>, vector<2x128x8xf32> -> vector<2x128x16xf32>
    %90 = arith.truncf %89 : vector<2x128x16xf32> to vector<2x128x16xbf16>
    %c0_30 = arith.constant 0 : index
    %c0_31 = arith.constant 0 : index
    %c0_32 = arith.constant 0 : index
    %91 = vector.load %arg18[%c0_30, %c0_31, %c0_32] : memref<2x128x32xbf16, #tpu.memory_space<vmem>>, vector<2x128x16xbf16>
    tpu.vector_store %arg18[%c0_30, %c0_31, %c0_32], %90 {strides = array<i32>} : memref<2x128x32xbf16, #tpu.memory_space<vmem>>, vector<2x128x16xbf16>,
    %92 = vector.extract_strided_slice %43 {offsets = [0, 0, 16], sizes = [2, 128, 8], strides = [1, 1, 1]} : vector<2x128x32xbf16> to vector<2x128x8xbf16>
    %93 = vector.extract_strided_slice %46 {offsets = [0, 0, 16], sizes = [2, 128, 8], strides = [1, 1, 1]} : vector<2x128x32xbf16> to vector<2x128x8xbf16>
    "tpu.trace_start"() <{level = 10 : i32, message = "bld,bmd->blm"}> : () -> ()
    %cst_33 = arith.constant dense<0.000000e+00> : vector<2x128x128xf32>
    %94 = tpu.matmul %92, %93, %cst_33 {dimension_numbers = #tpu.dot_dimension_numbers<[2], [2], [1], [1], [0, 0, 0, 1, 1, 1], [0], [0]>} : vector<2x128x8xbf16>, vector<2x128x8xbf16>, vector<2x128x128xf32> -> vector<2x128x128xf32>
    "tpu.trace_stop"() : () -> ()
    %95 = vector.shape_cast %50 : vector<128x128xf32> to vector<1x128x128xf32>
    %96 = vector.broadcast %95 : vector<1x128x128xf32> to vector<2x128x128xf32>
    %97 = arith.addf %94, %96 : vector<2x128x128xf32>
    %cst_34 = arith.constant dense<0xFF800000> : vector<2x128xf32>
    %98 = vector.multi_reduction <maximumf>, %97, %cst_34 [2] : vector<2x128x128xf32> to vector<2x128xf32>
    %99 = vector.shape_cast %98 : vector<2x128xf32> to vector<2x128x1xf32>
    %100 = vector.broadcast %99 : vector<2x128x1xf32> to vector<2x128x128xf32>
    %101 = arith.subf %97, %100 : vector<2x128x128xf32>
    %102 = math.exp %101 : vector<2x128x128xf32>
    %cst_35 = arith.constant dense<0.000000e+00> : vector<2x128xf32>
    %103 = vector.multi_reduction <add>, %102, %cst_35 [2] : vector<2x128x128xf32> to vector<2x128xf32>
    %104 = vector.shape_cast %103 : vector<2x128xf32> to vector<2x128x1xf32>
    %105 = tpu.reciprocal %104 {approx = true} : vector<2x128x1xf32> -> vector<2x128x1xf32>
    %106 = vector.broadcast %105 : vector<2x128x1xf32> to vector<2x128x128xf32>
    %107 = arith.mulf %102, %106 : vector<2x128x128xf32>
    %108 = arith.truncf %107 : vector<2x128x128xf32> to vector<2x128x128xbf16>
    %109 = vector.extract_strided_slice %49 {offsets = [0, 0, 16], sizes = [2, 128, 8], strides = [1, 1, 1]} : vector<2x128x32xbf16> to vector<2x128x8xbf16>
    "tpu.trace_start"() <{level = 10 : i32, message = "blm,bmd->bld"}> : () -> ()
    %cst_36 = arith.constant dense<0.000000e+00> : vector<2x128x8xf32>
    %110 = tpu.matmul %108, %109, %cst_36 {dimension_numbers = #tpu.dot_dimension_numbers<[2], [1], [1], [2], [0, 0, 0, 1, 1, 2], [0], [0]>} : vector<2x128x128xbf16>, vector<2x128x8xbf16>, vector<2x128x8xf32> -> vector<2x128x8xf32>
    "tpu.trace_stop"() : () -> ()
    %111 = vector.extract_strided_slice %43 {offsets = [0, 0, 24], sizes = [2, 128, 8], strides = [1, 1, 1]} : vector<2x128x32xbf16> to vector<2x128x8xbf16>
    %112 = vector.extract_strided_slice %46 {offsets = [0, 0, 24], sizes = [2, 128, 8], strides = [1, 1, 1]} : vector<2x128x32xbf16> to vector<2x128x8xbf16>
    "tpu.trace_start"() <{level = 10 : i32, message = "bld,bmd->blm"}> : () -> ()
    %cst_37 = arith.constant dense<0.000000e+00> : vector<2x128x128xf32>
    %113 = tpu.matmul %111, %112, %cst_37 {dimension_numbers = #tpu.dot_dimension_numbers<[2], [2], [1], [1], [0, 0, 0, 1, 1, 1], [0], [0]>} : vector<2x128x8xbf16>, vector<2x128x8xbf16>, vector<2x128x128xf32> -> vector<2x128x128xf32>
    "tpu.trace_stop"() : () -> ()
    %114 = vector.shape_cast %50 : vector<128x128xf32> to vector<1x128x128xf32>
    %115 = vector.broadcast %114 : vector<1x128x128xf32> to vector<2x128x128xf32>
    %116 = arith.addf %113, %115 : vector<2x128x128xf32>
    %cst_38 = arith.constant dense<0xFF800000> : vector<2x128xf32>
    %117 = vector.multi_reduction <maximumf>, %116, %cst_38 [2] : vector<2x128x128xf32> to vector<2x128xf32>
    %118 = vector.shape_cast %117 : vector<2x128xf32> to vector<2x128x1xf32>
    %119 = vector.broadcast %118 : vector<2x128x1xf32> to vector<2x128x128xf32>
    %120 = arith.subf %116, %119 : vector<2x128x128xf32>
    %121 = math.exp %120 : vector<2x128x128xf32>
    %cst_39 = arith.constant dense<0.000000e+00> : vector<2x128xf32>
    %122 = vector.multi_reduction <add>, %121, %cst_39 [2] : vector<2x128x128xf32> to vector<2x128xf32>
    %123 = vector.shape_cast %122 : vector<2x128xf32> to vector<2x128x1xf32>
    %124 = tpu.reciprocal %123 {approx = true} : vector<2x128x1xf32> -> vector<2x128x1xf32>
    %125 = vector.broadcast %124 : vector<2x128x1xf32> to vector<2x128x128xf32>
    %126 = arith.mulf %121, %125 : vector<2x128x128xf32>
    %127 = arith.truncf %126 : vector<2x128x128xf32> to vector<2x128x128xbf16>
    %128 = vector.extract_strided_slice %49 {offsets = [0, 0, 24], sizes = [2, 128, 8], strides = [1, 1, 1]} : vector<2x128x32xbf16> to vector<2x128x8xbf16>
    "tpu.trace_start"() <{level = 10 : i32, message = "blm,bmd->bld"}> : () -> ()
    %cst_40 = arith.constant dense<0.000000e+00> : vector<2x128x8xf32>
    %129 = tpu.matmul %127, %128, %cst_40 {dimension_numbers = #tpu.dot_dimension_numbers<[2], [1], [1], [2], [0, 0, 0, 1, 1, 2], [0], [0]>} : vector<2x128x128xbf16>, vector<2x128x8xbf16>, vector<2x128x8xf32> -> vector<2x128x8xf32>
    "tpu.trace_stop"() : () -> ()
    %130 = tpu.concatenate %110, %129 in 2 : vector<2x128x8xf32>, vector<2x128x8xf32> -> vector<2x128x16xf32>
    %131 = arith.truncf %130 : vector<2x128x16xf32> to vector<2x128x16xbf16>
    %c0_41 = arith.constant 0 : index
    %c0_42 = arith.constant 0 : index
    %c16 = arith.constant 16 : index
    %132 = vector.load %arg18[%c0_41, %c0_42, %c16] : memref<2x128x32xbf16, #tpu.memory_space<vmem>>, vector<2x128x16xbf16>
    tpu.vector_store %arg18[%c0_41, %c0_42, %c16], %131 {strides = array<i32>} : memref<2x128x32xbf16, #tpu.memory_space<vmem>>, vector<2x128x16xbf16>,
    %c0_43 = arith.constant 0 : index
    %c0_44 = arith.constant 0 : index
    %c0_45 = arith.constant 0 : index
    %133 = vector.load %arg18[%c0_43, %c0_44, %c0_45] : memref<2x128x32xbf16, #tpu.memory_space<vmem>>, vector<2x128x32xbf16>
    %134 = vector.shape_cast %133 : vector<2x128x32xbf16> to vector<256x32xbf16>
    %c0_46 = arith.constant 0 : index
    %c0_47 = arith.constant 0 : index
    %c0_48 = arith.constant 0 : index
    %135 = vector.load %arg8[%c0_46, %c0_47, %c0_48] : memref<1x32x32xbf16, #tpu.memory_space<vmem>>, vector<1x32x32xbf16>
    %136 = vector.shape_cast %135 : vector<1x32x32xbf16> to vector<32x32xbf16>
    %cst_49 = arith.constant dense<0.000000e+00> : vector<256x32xf32>
    %137 = tpu.matmul %134, %136, %cst_49 {dimension_numbers = #tpu.dot_dimension_numbers<[1], [0], [0], [1], [0, 0, 1, 1], [], []>} : vector<256x32xbf16>, vector<32x32xbf16>, vector<256x32xf32> -> vector<256x32xf32>
    %c0_50 = arith.constant 0 : index
    %c0_51 = arith.constant 0 : index
    %c0_52 = arith.constant 0 : index
    %138 = vector.load %arg9[%c0_50, %c0_51, %c0_52] : memref<1x1x32xf32, #tpu.memory_space<vmem>>, vector<1x1x32xf32>
    %139 = vector.shape_cast %138 : vector<1x1x32xf32> to vector<1x32xf32>
    %140 = vector.broadcast %139 : vector<1x32xf32> to vector<256x32xf32>
    %141 = arith.addf %137, %140 : vector<256x32xf32>
    %142 = vector.shape_cast %141 : vector<256x32xf32> to vector<2x128x32xf32>
    %143 = arith.addf %3, %142 : vector<2x128x32xf32>
    %c0_53 = arith.constant 0 : index
    %c0_54 = arith.constant 0 : index
    %c0_55 = arith.constant 0 : index
    %144 = vector.load %arg10[%c0_53, %c0_54, %c0_55] : memref<1x1x32xf32, #tpu.memory_space<vmem>>, vector<1x1x32xf32>
    %145 = vector.shape_cast %144 : vector<1x1x32xf32> to vector<1x32xf32>
    %c0_56 = arith.constant 0 : index
    %c0_57 = arith.constant 0 : index
    %c0_58 = arith.constant 0 : index
    %146 = vector.load %arg11[%c0_56, %c0_57, %c0_58] : memref<1x1x32xf32, #tpu.memory_space<vmem>>, vector<1x1x32xf32>
    %147 = vector.shape_cast %146 : vector<1x1x32xf32> to vector<1x32xf32>
    %cst_59 = arith.constant dense<0.000000e+00> : vector<2x128xf32>
    %148 = vector.multi_reduction <add>, %143, %cst_59 [2] : vector<2x128x32xf32> to vector<2x128xf32>
    %149 = vector.shape_cast %148 : vector<2x128xf32> to vector<2x128x1xf32>
    %cst_60 = arith.constant 3.200000e+01 : f32
    %150 = vector.broadcast %cst_60 : f32 to vector<2x128x1xf32>
    %151 = arith.divf %149, %150 : vector<2x128x1xf32>
    %152 = vector.broadcast %151 : vector<2x128x1xf32> to vector<2x128x32xf32>
    %153 = arith.subf %143, %152 : vector<2x128x32xf32>
    %154 = arith.mulf %153, %153 : vector<2x128x32xf32>
    %cst_61 = arith.constant dense<0.000000e+00> : vector<2x128xf32>
    %155 = vector.multi_reduction <add>, %154, %cst_61 [2] : vector<2x128x32xf32> to vector<2x128xf32>
    %156 = vector.shape_cast %155 : vector<2x128xf32> to vector<2x128x1xf32>
    %cst_62 = arith.constant 3.200000e+01 : f32
    %157 = vector.broadcast %cst_62 : f32 to vector<2x128x1xf32>
    %158 = arith.divf %156, %157 : vector<2x128x1xf32>
    %159 = vector.broadcast %151 : vector<2x128x1xf32> to vector<2x128x32xf32>
    %160 = arith.subf %143, %159 : vector<2x128x32xf32>
    %cst_63 = arith.constant 9.99999974E-6 : f32
    %161 = vector.broadcast %cst_63 : f32 to vector<2x128x1xf32>
    %162 = arith.addf %158, %161 : vector<2x128x1xf32>
    %163 = math.rsqrt %162 : vector<2x128x1xf32>
    %164 = vector.broadcast %163 : vector<2x128x1xf32> to vector<2x128x32xf32>
    %165 = arith.mulf %160, %164 : vector<2x128x32xf32>
    %166 = vector.shape_cast %145 : vector<1x32xf32> to vector<1x1x32xf32>
    %167 = vector.broadcast %166 : vector<1x1x32xf32> to vector<2x128x32xf32>
    %168 = arith.mulf %165, %167 : vector<2x128x32xf32>
    %169 = vector.shape_cast %147 : vector<1x32xf32> to vector<1x1x32xf32>
    %170 = vector.broadcast %169 : vector<1x1x32xf32> to vector<2x128x32xf32>
    %171 = arith.addf %168, %170 : vector<2x128x32xf32>
    %172 = vector.shape_cast %171 : vector<2x128x32xf32> to vector<256x32xf32>
    %173 = arith.truncf %172 : vector<256x32xf32> to vector<256x32xbf16>
    %c0_64 = arith.constant 0 : index
    %c0_65 = arith.constant 0 : index
    %c0_66 = arith.constant 0 : index
    %174 = vector.load %arg12[%c0_64, %c0_65, %c0_66] : memref<1x32x128xbf16, #tpu.memory_space<vmem>>, vector<1x32x128xbf16>
    %175 = vector.shape_cast %174 : vector<1x32x128xbf16> to vector<32x128xbf16>
    %cst_67 = arith.constant dense<0.000000e+00> : vector<256x128xf32>
    %176 = tpu.matmul %173, %175, %cst_67 {dimension_numbers = #tpu.dot_dimension_numbers<[1], [0], [0], [1], [0, 0, 1, 1], [], []>} : vector<256x32xbf16>, vector<32x128xbf16>, vector<256x128xf32> -> vector<256x128xf32>
    %c0_68 = arith.constant 0 : index
    %c0_69 = arith.constant 0 : index
    %c0_70 = arith.constant 0 : index
    %177 = vector.load %arg13[%c0_68, %c0_69, %c0_70] : memref<1x1x128xf32, #tpu.memory_space<vmem>>, vector<1x1x128xf32>
    %178 = vector.shape_cast %177 : vector<1x1x128xf32> to vector<1x128xf32>
    %179 = vector.broadcast %178 : vector<1x128xf32> to vector<256x128xf32>
    %180 = arith.addf %176, %179 : vector<256x128xf32>
    %cst_71 = arith.constant 1.702000e+00 : f32
    %181 = vector.broadcast %cst_71 : f32 to vector<256x128xf32>
    %182 = arith.mulf %181, %180 : vector<256x128xf32>
    %183 = arith.negf %182 : vector<256x128xf32>
    %184 = math.exp %183 : vector<256x128xf32>
    %cst_72 = arith.constant 1.000000e+00 : f32
    %185 = vector.broadcast %cst_72 : f32 to vector<256x128xf32>
    %186 = arith.addf %185, %184 : vector<256x128xf32>
    %187 = arith.divf %185, %186 : vector<256x128xf32>
    %188 = arith.mulf %180, %187 : vector<256x128xf32>
    %189 = arith.truncf %188 : vector<256x128xf32> to vector<256x128xbf16>
    %c0_73 = arith.constant 0 : index
    %c0_74 = arith.constant 0 : index
    %c0_75 = arith.constant 0 : index
    %190 = vector.load %arg14[%c0_73, %c0_74, %c0_75] : memref<1x128x32xbf16, #tpu.memory_space<vmem>>, vector<1x128x32xbf16>
    %191 = vector.shape_cast %190 : vector<1x128x32xbf16> to vector<128x32xbf16>
    %cst_76 = arith.constant dense<0.000000e+00> : vector<256x32xf32>
    %192 = tpu.matmul %189, %191, %cst_76 {dimension_numbers = #tpu.dot_dimension_numbers<[1], [0], [0], [1], [0, 0, 1, 1], [], []>} : vector<256x128xbf16>, vector<128x32xbf16>, vector<256x32xf32> -> vector<256x32xf32>
    %c0_77 = arith.constant 0 : index
    %c0_78 = arith.constant 0 : index
    %c0_79 = arith.constant 0 : index
    %193 = vector.load %arg15[%c0_77, %c0_78, %c0_79] : memref<1x1x32xf32, #tpu.memory_space<vmem>>, vector<1x1x32xf32>
    %194 = vector.shape_cast %193 : vector<1x1x32xf32> to vector<1x32xf32>
    %195 = vector.broadcast %194 : vector<1x32xf32> to vector<256x32xf32>
    %196 = arith.addf %192, %195 : vector<256x32xf32>
    %197 = vector.shape_cast %196 : vector<256x32xf32> to vector<2x128x32xf32>
    %198 = arith.addf %143, %197 : vector<2x128x32xf32>
    %c0_80 = arith.constant 0 : index
    %c0_81 = arith.constant 0 : index
    %c0_82 = arith.constant 0 : index
    %199 = vector.load %arg17[%c0_80, %c0_81, %c0_82] : memref<2x128x32xf32, #tpu.memory_space<vmem>>, vector<2x128x32xf32>
    tpu.vector_store %arg17[%c0_80, %c0_81, %c0_82], %198 {strides = array<i32>} : memref<2x128x32xf32, #tpu.memory_space<vmem>>, vector<2x128x32xf32>,
    %c1_i32 = arith.constant 1 : i32
    %200 = arith.cmpi eq, %arg1, %c1_i32 : i32
    %201 = arith.extui %200 : i1 to i32
    %c0_i32_83 = arith.constant 0 : i32
    %202 = arith.cmpi ne, %201, %c0_i32_83 : i32
    scf.if %202 {
      %c0_84 = arith.constant 0 : index
      %c0_85 = arith.constant 0 : index
      %c0_86 = arith.constant 0 : index
      %203 = vector.load %arg16[%c0_84, %c0_85, %c0_86] : memref<2x128x32xf32, #tpu.memory_space<vmem>>, vector<2x128x32xf32>
      tpu.vector_store %arg16[%c0_84, %c0_85, %c0_86], %198 {strides = array<i32>} : memref<2x128x32xf32, #tpu.memory_space<vmem>>, vector<2x128x32xf32>,
    } else {
    }
    return
  }
  func.func @transform_0(%arg0: i32, %arg1: i32) -> (i32, i32, i32) {
    %c0_i32 = arith.constant 0 : i32
    %c0_i32_0 = arith.constant 0 : i32
    %c0_i32_1 = arith.constant 0 : i32
    return %arg0, %c0_i32, %c0_i32_0 : i32, i32, i32
  }
  func.func @transform_1(%arg0: i32, %arg1: i32) -> (i32, i32) {
    %c0_i32 = arith.constant 0 : i32
    %c0_i32_0 = arith.constant 0 : i32
    %c0_i32_1 = arith.constant 0 : i32
    return %c0_i32, %c0_i32_0 : i32, i32
  }
  func.func @transform_2(%arg0: i32, %arg1: i32) -> (i32, i32, i32) {
    %c0_i32 = arith.constant 0 : i32
    %c0_i32_0 = arith.constant 0 : i32
    %c0_i32_1 = arith.constant 0 : i32
    return %arg1, %c0_i32, %c0_i32_0 : i32, i32, i32
  }
  func.func @transform_3(%arg0: i32, %arg1: i32) -> (i32, i32, i32) {
    %c0_i32 = arith.constant 0 : i32
    %c0_i32_0 = arith.constant 0 : i32
    %c0_i32_1 = arith.constant 0 : i32
    return %arg1, %c0_i32, %c0_i32_0 : i32, i32, i32
  }
  func.func @transform_4(%arg0: i32, %arg1: i32) -> (i32, i32, i32) {
    %c0_i32 = arith.constant 0 : i32
    %c0_i32_0 = arith.constant 0 : i32
    %c0_i32_1 = arith.constant 0 : i32
    return %arg1, %c0_i32, %c0_i32_0 : i32, i32, i32
  }
  func.func @transform_5(%arg0: i32, %arg1: i32) -> (i32, i32, i32) {
    %c0_i32 = arith.constant 0 : i32
    %c0_i32_0 = arith.constant 0 : i32
    %c0_i32_1 = arith.constant 0 : i32
    return %arg1, %c0_i32, %c0_i32_0 : i32, i32, i32
  }
  func.func @transform_6(%arg0: i32, %arg1: i32) -> (i32, i32, i32) {
    %c0_i32 = arith.constant 0 : i32
    %c0_i32_0 = arith.constant 0 : i32
    %c0_i32_1 = arith.constant 0 : i32
    return %arg1, %c0_i32, %c0_i32_0 : i32, i32, i32
  }
  func.func @transform_7(%arg0: i32, %arg1: i32) -> (i32, i32, i32) {
    %c0_i32 = arith.constant 0 : i32
    %c0_i32_0 = arith.constant 0 : i32
    %c0_i32_1 = arith.constant 0 : i32
    return %arg1, %c0_i32, %c0_i32_0 : i32, i32, i32
  }
  func.func @transform_8(%arg0: i32, %arg1: i32) -> (i32, i32, i32) {
    %c0_i32 = arith.constant 0 : i32
    %c0_i32_0 = arith.constant 0 : i32
    %c0_i32_1 = arith.constant 0 : i32
    return %arg1, %c0_i32, %c0_i32_0 : i32, i32, i32
  }
  func.func @transform_9(%arg0: i32, %arg1: i32) -> (i32, i32, i32) {
    %c0_i32 = arith.constant 0 : i32
    %c0_i32_0 = arith.constant 0 : i32
    %c0_i32_1 = arith.constant 0 : i32
    return %arg1, %c0_i32, %c0_i32_0 : i32, i32, i32
  }
  func.func @transform_10(%arg0: i32, %arg1: i32) -> (i32, i32, i32) {
    %c0_i32 = arith.constant 0 : i32
    %c0_i32_0 = arith.constant 0 : i32
    %c0_i32_1 = arith.constant 0 : i32
    return %arg1, %c0_i32, %c0_i32_0 : i32, i32, i32
  }
  func.func @transform_11(%arg0: i32, %arg1: i32) -> (i32, i32, i32) {
    %c0_i32 = arith.constant 0 : i32
    %c0_i32_0 = arith.constant 0 : i32
    %c0_i32_1 = arith.constant 0 : i32
    return %arg1, %c0_i32, %c0_i32_0 : i32, i32, i32
  }
  func.func @transform_12(%arg0: i32, %arg1: i32) -> (i32, i32, i32) {
    %c0_i32 = arith.constant 0 : i32
    %c0_i32_0 = arith.constant 0 : i32
    %c0_i32_1 = arith.constant 0 : i32
    return %arg1, %c0_i32, %c0_i32_0 : i32, i32, i32
  }
  func.func @transform_13(%arg0: i32, %arg1: i32) -> (i32, i32, i32) {
    %c0_i32 = arith.constant 0 : i32
    %c0_i32_0 = arith.constant 0 : i32
    %c0_i32_1 = arith.constant 0 : i32
    return %arg1, %c0_i32, %c0_i32_0 : i32, i32, i32
  }
  func.func @transform_14(%arg0: i32, %arg1: i32) -> (i32, i32, i32) {
    %c0_i32 = arith.constant 0 : i32
    %c0_i32_0 = arith.constant 0 : i32
    %c0_i32_1 = arith.constant 0 : i32
    return %arg0, %c0_i32, %c0_i32_0 : i32, i32, i32
  }
}

</mosaic_0001>

<llo_original>
// kernel: tpu_custom_call.1
$region0: #{tpu_custom_call.1}
  #allocation0 [shape = 'u32[]', space=smem, size = 0x4, offset = 0x4, fixed_abs, tag = 'smem constant byte address 0x4 - core index']
  #allocation1 [shape = 'u32[144,128]{1,0:T(1,128)}', space=vmem, size = 0x12000, scoped, tag = 'internal scratch']
  #allocation2 [shape = 'f32[2,128,32]{2,1,0:T(8,128)}', space=vmem, size = 0x20000, scoped, tag = 'scratch operand']
  #allocation3 [shape = 'bf16[2,128,32]{2,1,0:T(16,128)(2,1)}', space=vmem, size = 0x10000, scoped, tag = 'scratch operand']
  %s0 = inlined_call_operand.hbm [shape: f32[2,128,32], index: 0, kind: input, shape index: {}]
  %s1 = inlined_call_operand.hbm [shape: f32[128,128], index: 1, kind: input, shape index: {}]
  %s2 = inlined_call_operand.hbm [shape: f32[2,1,32], index: 2, kind: input, shape index: {}]
  %s3 = inlined_call_operand.hbm [shape: f32[2,1,32], index: 3, kind: input, shape index: {}]
  %s4 = inlined_call_operand.hbm [shape: bf16[2,32,96], index: 4, kind: input, shape index: {}]
  %s5 = inlined_call_operand.hbm [shape: f32[2,1,96], index: 5, kind: input, shape index: {}]
  %s6 = inlined_call_operand.hbm [shape: bf16[2,32,32], index: 6, kind: input, shape index: {}]
  %s7 = inlined_call_operand.hbm [shape: f32[2,1,32], index: 7, kind: input, shape index: {}]
  %s8 = inlined_call_operand.hbm [shape: f32[2,1,32], index: 8, kind: input, shape index: {}]
  %s9 = inlined_call_operand.hbm [shape: f32[2,1,32], index: 9, kind: input, shape index: {}]
  %s10 = inlined_call_operand.hbm [shape: bf16[2,32,128], index: 10, kind: input, shape index: {}]
  %s11 = inlined_call_operand.hbm [shape: f32[2,1,128], index: 11, kind: input, shape index: {}]
  %s12 = inlined_call_operand.hbm [shape: bf16[2,128,32], index: 12, kind: input, shape index: {}]
  %s13 = inlined_call_operand.hbm [shape: f32[2,1,32], index: 13, kind: input, shape index: {}]
  %s14 = inlined_call_operand.hbm [shape: f32[2,128,32], index: 14, kind: output, shape index: {}]
  %s15 = sld [smem:[#allocation0]]
  $region153: #{tpu_custom_call.1} parent=0
    _
  %s17 = ssub.s32 1, %s15
  %s18 = scalar_select 0, %s17, %s15
  $region1: #{tpu_custom_call.1} parent=0
    #allocation4 [shape = 'u8[131072]{0}', space=vmem, size = 0x20000, scoped, tag = 'input window, operand 0, single buffered']
    #allocation5 [shape = 's32[2]{0}', space=sflag, size = 0x8, scoped, tag = 'scoped memory for tpu_custom_call.1']
    #allocation6 [shape = 's32[2]{0}', space=sflag, size = 0x8, scoped, tag = 'scoped memory for tpu_custom_call.1']
    #allocation7 [shape = 'u8[65536]{0}', space=vmem, size = 0x10000, scoped, tag = 'input window, operand 1, single buffered']
    #allocation8 [shape = 's32[1]{0}', space=sflag, size = 0x4, scoped, tag = 'scoped memory for tpu_custom_call.1']
    #allocation9 [shape = 'u8[1024]{0}', space=vmem, size = 0x400, scoped, tag = 'input window, operand 2']
    #allocation10 [shape = 'u8[1024]{0}', space=vmem, size = 0x400, scoped, tag = 'input window, operand 3']
    #allocation11 [shape = 'u8[16384]{0}', space=vmem, size = 0x4000, scoped, tag = 'input window, operand 4']
    #allocation12 [shape = 'u8[1024]{0}', space=vmem, size = 0x400, scoped, tag = 'input window, operand 5']
    #allocation13 [shape = 'u8[16384]{0}', space=vmem, size = 0x4000, scoped, tag = 'input window, operand 6']
    #allocation14 [shape = 'u8[1024]{0}', space=vmem, size = 0x400, scoped, tag = 'input window, operand 7']
    #allocation15 [shape = 'u8[1024]{0}', space=vmem, size = 0x400, scoped, tag = 'input window, operand 8']
    #allocation16 [shape = 'u8[1024]{0}', space=vmem, size = 0x400, scoped, tag = 'input window, operand 9']
    #allocation17 [shape = 'u8[16384]{0}', space=vmem, size = 0x4000, scoped, tag = 'input window, operand 10']
    #allocation18 [shape = 'u8[1024]{0}', space=vmem, size = 0x400, scoped, tag = 'input window, operand 11']
    #allocation19 [shape = 'u8[65536]{0}', space=vmem, size = 0x10000, scoped, tag = 'input window, operand 12']
    #allocation20 [shape = 'u8[1024]{0}', space=vmem, size = 0x400, scoped, tag = 'input window, operand 13']
    #allocation21 [shape = 'u8[131072]{0}', space=vmem, size = 0x20000, scoped, tag = 'output window, operand 0, single buffered']
    %19 = vsyncpa [#allocation5], 0
    %20 = vsyncpa [#allocation8], 0
    %21 = vsyncpa [#allocation6], 0
    loop: start=0, step=1, limit=4
    $region2: #{tpu_custom_call.1} parent=1 // loop_pre_header
      _
    $region3: #{tpu_custom_call.1} parent=1 // loop_header
      %s23 = sphi 0, %s27
      %p24 = scmp.ge.s32.totalorder %s23, 4
      %s30 = sphi 0, %s42
      %s31 = sphi 0, %s38
      %s32 = sphi 0, %s30
      %s33 = sphi 0, %s31
      %s34 = sphi 0, %s32
      %s35 = sphi 0, %s33
      %s45 = sphi 0, %s47
      %s48 = sphi 0, %s45
      %s49 = sphi 0, %s48
      %s65 = sphi 0, %s49
      %s69 = sphi 0, %s69
      %s71 = sphi 0, %s69
      %s72 = sphi 0, %s71
      %s86 = sphi 0, %s72
      %s92 = sphi 0, %s94
      %s95 = sphi 0, %s92
      %s96 = sphi 0, %s95
      %s112 = sphi 0, %s96
      %s118 = sphi 0, %s120
      %s121 = sphi 0, %s118
      %s122 = sphi 0, %s121
      %s138 = sphi 0, %s122
      %s144 = sphi 0, %s146
      %s147 = sphi 0, %s144
      %s148 = sphi 0, %s147
      %s164 = sphi 0, %s148
      %s170 = sphi 0, %s172
      %s173 = sphi 0, %s170
      %s174 = sphi 0, %s173
      %s190 = sphi 0, %s174
      %s196 = sphi 0, %s198
      %s199 = sphi 0, %s196
      %s200 = sphi 0, %s199
      %s216 = sphi 0, %s200
      %s222 = sphi 0, %s224
      %s225 = sphi 0, %s222
      %s226 = sphi 0, %s225
      %s242 = sphi 0, %s226
      %s248 = sphi 0, %s250
      %s251 = sphi 0, %s248
      %s252 = sphi 0, %s251
      %s268 = sphi 0, %s252
      %s274 = sphi 0, %s276
      %s277 = sphi 0, %s274
      %s278 = sphi 0, %s277
      %s294 = sphi 0, %s278
      %s300 = sphi 0, %s302
      %s303 = sphi 0, %s300
      %s304 = sphi 0, %s303
      %s320 = sphi 0, %s304
      %s326 = sphi 0, %s328
      %s329 = sphi 0, %s326
      %s330 = sphi 0, %s329
      %s346 = sphi 0, %s330
      %s352 = sphi 0, %s354
      %s355 = sphi 0, %s352
      %s356 = sphi 0, %s355
      %s372 = sphi 0, %s356
      %s378 = sphi 0, %s380
      %s381 = sphi 0, %s378
      %s382 = sphi 0, %s381
      %s398 = sphi 0, %s382
      %s404 = sphi 0, %s406
      %s407 = sphi 0, %s404
      %s408 = sphi 0, %s407
      %s424 = sphi 0, %s408
    $region4: #{tpu_custom_call.1} parent=1 // loop_header_branch
      %26 = sbr.rel (%p24) target = $region8
    $region5: #{tpu_custom_call.1} parent=1 // loop_body
      %s28 = ssub.s32 %s23, 1
      %s29 = ssub.s32 %s23, 2
      %s36 = sadd.s32 1, %s31
      %p37 = scmp.ge.s32.totalorder %s36, 2
      %s38 = scalar_select %p37, 0, %s36
      %s39 = sadd.s32 1, %s30
      %s40 = scalar_select %p37, %s39, %s30
      %p41 = scmp.ge.s32.totalorder %s40, 1
      %s42 = scalar_select %p41, 0, %s40
      %s43 = ssub.s32 %s30, %s42
      %p44 = scmp.eq.s32.totalorder %s43, 0
      %s46 = sadd.s32 %s45, 1
      %s47 = scalar_select %p44, %s45, %s46
      %p50 = pneg %p44
      %p51 = scmp.eq.s32.totalorder %s23, 1
      %p52 = por %p50, %p51
      %p53 = scmp.ne.s32.totalorder %s45, %s48
      %p54 = scmp.eq.s32.totalorder %s23, 0
      %p55 = por %p53, %p54
      %p56 = scmp.ne.s32.totalorder %s45, %s48
      %p57 = scmp.eq.s32.totalorder %s28, 1
      %p58 = por %p56, %p57
      %p59 = scmp.ne.s32.totalorder %s48, %s49
      %p60 = scmp.eq.s32.totalorder %s28, 0
      %p61 = por %p59, %p60
      %p62 = scmp.ne.s32.totalorder %s48, %s49
      %p63 = scmp.eq.s32.totalorder %s29, 1
      %p64 = por %p62, %p63
      %p66 = scmp.ne.s32.totalorder %s49, %s65
      %p67 = scmp.eq.s32.totalorder %s29, 0
      %p68 = por %p66, %p67
      %s70 = sadd.s32 %s69, 1
      %p73 = scmp.eq.s32.totalorder %s23, 1
      %p74 = scmp.ne.s32.totalorder %s69, %s71
      %p75 = scmp.eq.s32.totalorder %s23, 0
      %p76 = por %p74, %p75
      %p77 = scmp.ne.s32.totalorder %s69, %s71
      %p78 = scmp.eq.s32.totalorder %s28, 1
      %p79 = por %p77, %p78
      %p80 = scmp.ne.s32.totalorder %s71, %s72
      %p81 = scmp.eq.s32.totalorder %s28, 0
      %p82 = por %p80, %p81
      %p83 = scmp.ne.s32.totalorder %s71, %s72
      %p84 = scmp.eq.s32.totalorder %s29, 1
      %p85 = por %p83, %p84
      %p87 = scmp.ne.s32.totalorder %s72, %s86
      %p88 = scmp.eq.s32.totalorder %s29, 0
      %p89 = por %p87, %p88
      %s90 = ssub.s32 %s31, %s38
      %p91 = scmp.eq.s32.totalorder %s90, 0
      %s93 = sadd.s32 %s92, 1
      %s94 = scalar_select %p91, %s92, %s93
      %p97 = pneg %p91
      %p98 = scmp.eq.s32.totalorder %s23, 1
      %p99 = por %p97, %p98
      %p100 = scmp.ne.s32.totalorder %s92, %s95
      %p101 = scmp.eq.s32.totalorder %s23, 0
      %p102 = por %p100, %p101
      %p103 = scmp.ne.s32.totalorder %s92, %s95
      %p104 = scmp.eq.s32.totalorder %s28, 1
      %p105 = por %p103, %p104
      %p106 = scmp.ne.s32.totalorder %s95, %s96
      %p107 = scmp.eq.s32.totalorder %s28, 0
      %p108 = por %p106, %p107
      %p109 = scmp.ne.s32.totalorder %s95, %s96
      %p110 = scmp.eq.s32.totalorder %s29, 1
      %p111 = por %p109, %p110
      %p113 = scmp.ne.s32.totalorder %s96, %s112
      %p114 = scmp.eq.s32.totalorder %s29, 0
      %p115 = por %p113, %p114
      %s116 = ssub.s32 %s31, %s38
      %p117 = scmp.eq.s32.totalorder %s116, 0
      %s119 = sadd.s32 %s118, 1
      %s120 = scalar_select %p117, %s118, %s119
      %p123 = pneg %p117
      %p124 = scmp.eq.s32.totalorder %s23, 1
      %p125 = por %p123, %p124
      %p126 = scmp.ne.s32.totalorder %s118, %s121
      %p127 = scmp.eq.s32.totalorder %s23, 0
      %p128 = por %p126, %p127
      %p129 = scmp.ne.s32.totalorder %s118, %s121
      %p130 = scmp.eq.s32.totalorder %s28, 1
      %p131 = por %p129, %p130
      %p132 = scmp.ne.s32.totalorder %s121, %s122
      %p133 = scmp.eq.s32.totalorder %s28, 0
      %p134 = por %p132, %p133
      %p135 = scmp.ne.s32.totalorder %s121, %s122
      %p136 = scmp.eq.s32.totalorder %s29, 1
      %p137 = por %p135, %p136
      %p139 = scmp.ne.s32.totalorder %s122, %s138
      %p140 = scmp.eq.s32.totalorder %s29, 0
      %p141 = por %p139, %p140
      %s142 = ssub.s32 %s31, %s38
      %p143 = scmp.eq.s32.totalorder %s142, 0
      %s145 = sadd.s32 %s144, 1
      %s146 = scalar_select %p143, %s144, %s145
      %p149 = pneg %p143
      %p150 = scmp.eq.s32.totalorder %s23, 1
      %p151 = por %p149, %p150
      %p152 = scmp.ne.s32.totalorder %s144, %s147
      %p153 = scmp.eq.s32.totalorder %s23, 0
      %p154 = por %p152, %p153
      %p155 = scmp.ne.s32.totalorder %s144, %s147
      %p156 = scmp.eq.s32.totalorder %s28, 1
      %p157 = por %p155, %p156
      %p158 = scmp.ne.s32.totalorder %s147, %s148
      %p159 = scmp.eq.s32.totalorder %s28, 0
      %p160 = por %p158, %p159
      %p161 = scmp.ne.s32.totalorder %s147, %s148
      %p162 = scmp.eq.s32.totalorder %s29, 1
      %p163 = por %p161, %p162
      %p165 = scmp.ne.s32.totalorder %s148, %s164
      %p166 = scmp.eq.s32.totalorder %s29, 0
      %p167 = por %p165, %p166
      %s168 = ssub.s32 %s31, %s38
      %p169 = scmp.eq.s32.totalorder %s168, 0
      %s171 = sadd.s32 %s170, 1
      %s172 = scalar_select %p169, %s170, %s171
      %p175 = pneg %p169
      %p176 = scmp.eq.s32.totalorder %s23, 1
      %p177 = por %p175, %p176
      %p178 = scmp.ne.s32.totalorder %s170, %s173
      %p179 = scmp.eq.s32.totalorder %s23, 0
      %p180 = por %p178, %p179
      %p181 = scmp.ne.s32.totalorder %s170, %s173
      %p182 = scmp.eq.s32.totalorder %s28, 1
      %p183 = por %p181, %p182
      %p184 = scmp.ne.s32.totalorder %s173, %s174
      %p185 = scmp.eq.s32.totalorder %s28, 0
      %p186 = por %p184, %p185
      %p187 = scmp.ne.s32.totalorder %s173, %s174
      %p188 = scmp.eq.s32.totalorder %s29, 1
      %p189 = por %p187, %p188
      %p191 = scmp.ne.s32.totalorder %s174, %s190
      %p192 = scmp.eq.s32.totalorder %s29, 0
      %p193 = por %p191, %p192
      %s194 = ssub.s32 %s31, %s38
      %p195 = scmp.eq.s32.totalorder %s194, 0
      %s197 = sadd.s32 %s196, 1
      %s198 = scalar_select %p195, %s196, %s197
      %p201 = pneg %p195
      %p202 = scmp.eq.s32.totalorder %s23, 1
      %p203 = por %p201, %p202
      %p204 = scmp.ne.s32.totalorder %s196, %s199
      %p205 = scmp.eq.s32.totalorder %s23, 0
      %p206 = por %p204, %p205
      %p207 = scmp.ne.s32.totalorder %s196, %s199
      %p208 = scmp.eq.s32.totalorder %s28, 1
      %p209 = por %p207, %p208
      %p210 = scmp.ne.s32.totalorder %s199, %s200
      %p211 = scmp.eq.s32.totalorder %s28, 0
      %p212 = por %p210, %p211
      %p213 = scmp.ne.s32.totalorder %s199, %s200
      %p214 = scmp.eq.s32.totalorder %s29, 1
      %p215 = por %p213, %p214
      %p217 = scmp.ne.s32.totalorder %s200, %s216
      %p218 = scmp.eq.s32.totalorder %s29, 0
      %p219 = por %p217, %p218
      %s220 = ssub.s32 %s31, %s38
      %p221 = scmp.eq.s32.totalorder %s220, 0
      %s223 = sadd.s32 %s222, 1
      %s224 = scalar_select %p221, %s222, %s223
      %p227 = pneg %p221
      %p228 = scmp.eq.s32.totalorder %s23, 1
      %p229 = por %p227, %p228
      %p230 = scmp.ne.s32.totalorder %s222, %s225
      %p231 = scmp.eq.s32.totalorder %s23, 0
      %p232 = por %p230, %p231
      %p233 = scmp.ne.s32.totalorder %s222, %s225
      %p234 = scmp.eq.s32.totalorder %s28, 1
      %p235 = por %p233, %p234
      %p236 = scmp.ne.s32.totalorder %s225, %s226
      %p237 = scmp.eq.s32.totalorder %s28, 0
      %p238 = por %p236, %p237
      %p239 = scmp.ne.s32.totalorder %s225, %s226
      %p240 = scmp.eq.s32.totalorder %s29, 1
      %p241 = por %p239, %p240
      %p243 = scmp.ne.s32.totalorder %s226, %s242
      %p244 = scmp.eq.s32.totalorder %s29, 0
      %p245 = por %p243, %p244
      %s246 = ssub.s32 %s31, %s38
      %p247 = scmp.eq.s32.totalorder %s246, 0
      %s249 = sadd.s32 %s248, 1
      %s250 = scalar_select %p247, %s248, %s249
      %p253 = pneg %p247
      %p254 = scmp.eq.s32.totalorder %s23, 1
      %p255 = por %p253, %p254
      %p256 = scmp.ne.s32.totalorder %s248, %s251
      %p257 = scmp.eq.s32.totalorder %s23, 0
      %p258 = por %p256, %p257
      %p259 = scmp.ne.s32.totalorder %s248, %s251
      %p260 = scmp.eq.s32.totalorder %s28, 1
      %p261 = por %p259, %p260
      %p262 = scmp.ne.s32.totalorder %s251, %s252
      %p263 = scmp.eq.s32.totalorder %s28, 0
      %p264 = por %p262, %p263
      %p265 = scmp.ne.s32.totalorder %s251, %s252
      %p266 = scmp.eq.s32.totalorder %s29, 1
      %p267 = por %p265, %p266
      %p269 = scmp.ne.s32.totalorder %s252, %s268
      %p270 = scmp.eq.s32.totalorder %s29, 0
      %p271 = por %p269, %p270
      %s272 = ssub.s32 %s31, %s38
      %p273 = scmp.eq.s32.totalorder %s272, 0
      %s275 = sadd.s32 %s274, 1
      %s276 = scalar_select %p273, %s274, %s275
      %p279 = pneg %p273
      %p280 = scmp.eq.s32.totalorder %s23, 1
      %p281 = por %p279, %p280
      %p282 = scmp.ne.s32.totalorder %s274, %s277
      %p283 = scmp.eq.s32.totalorder %s23, 0
      %p284 = por %p282, %p283
      %p285 = scmp.ne.s32.totalorder %s274, %s277
      %p286 = scmp.eq.s32.totalorder %s28, 1
      %p287 = por %p285, %p286
      %p288 = scmp.ne.s32.totalorder %s277, %s278
      %p289 = scmp.eq.s32.totalorder %s28, 0
      %p290 = por %p288, %p289
      %p291 = scmp.ne.s32.totalorder %s277, %s278
      %p292 = scmp.eq.s32.totalorder %s29, 1
      %p293 = por %p291, %p292
      %p295 = scmp.ne.s32.totalorder %s278, %s294
      %p296 = scmp.eq.s32.totalorder %s29, 0
      %p297 = por %p295, %p296
      %s298 = ssub.s32 %s31, %s38
      %p299 = scmp.eq.s32.totalorder %s298, 0
      %s301 = sadd.s32 %s300, 1
      %s302 = scalar_select %p299, %s300, %s301
      %p305 = pneg %p299
      %p306 = scmp.eq.s32.totalorder %s23, 1
      %p307 = por %p305, %p306
      %p308 = scmp.ne.s32.totalorder %s300, %s303
      %p309 = scmp.eq.s32.totalorder %s23, 0
      %p310 = por %p308, %p309
      %p311 = scmp.ne.s32.totalorder %s300, %s303
      %p312 = scmp.eq.s32.totalorder %s28, 1
      %p313 = por %p311, %p312
      %p314 = scmp.ne.s32.totalorder %s303, %s304
      %p315 = scmp.eq.s32.totalorder %s28, 0
      %p316 = por %p314, %p315
      %p317 = scmp.ne.s32.totalorder %s303, %s304
      %p318 = scmp.eq.s32.totalorder %s29, 1
      %p319 = por %p317, %p318
      %p321 = scmp.ne.s32.totalorder %s304, %s320
      %p322 = scmp.eq.s32.totalorder %s29, 0
      %p323 = por %p321, %p322
      %s324 = ssub.s32 %s31, %s38
      %p325 = scmp.eq.s32.totalorder %s324, 0
      %s327 = sadd.s32 %s326, 1
      %s328 = scalar_select %p325, %s326, %s327
      %p331 = pneg %p325
      %p332 = scmp.eq.s32.totalorder %s23, 1
      %p333 = por %p331, %p332
      %p334 = scmp.ne.s32.totalorder %s326, %s329
      %p335 = scmp.eq.s32.totalorder %s23, 0
      %p336 = por %p334, %p335
      %p337 = scmp.ne.s32.totalorder %s326, %s329
      %p338 = scmp.eq.s32.totalorder %s28, 1
      %p339 = por %p337, %p338
      %p340 = scmp.ne.s32.totalorder %s329, %s330
      %p341 = scmp.eq.s32.totalorder %s28, 0
      %p342 = por %p340, %p341
      %p343 = scmp.ne.s32.totalorder %s329, %s330
      %p344 = scmp.eq.s32.totalorder %s29, 1
      %p345 = por %p343, %p344
      %p347 = scmp.ne.s32.totalorder %s330, %s346
      %p348 = scmp.eq.s32.totalorder %s29, 0
      %p349 = por %p347, %p348
      %s350 = ssub.s32 %s31, %s38
      %p351 = scmp.eq.s32.totalorder %s350, 0
      %s353 = sadd.s32 %s352, 1
      %s354 = scalar_select %p351, %s352, %s353
      %p357 = pneg %p351
      %p358 = scmp.eq.s32.totalorder %s23, 1
      %p359 = por %p357, %p358
      %p360 = scmp.ne.s32.totalorder %s352, %s355
      %p361 = scmp.eq.s32.totalorder %s23, 0
      %p362 = por %p360, %p361
      %p363 = scmp.ne.s32.totalorder %s352, %s355
      %p364 = scmp.eq.s32.totalorder %s28, 1
      %p365 = por %p363, %p364
      %p366 = scmp.ne.s32.totalorder %s355, %s356
      %p367 = scmp.eq.s32.totalorder %s28, 0
      %p368 = por %p366, %p367
      %p369 = scmp.ne.s32.totalorder %s355, %s356
      %p370 = scmp.eq.s32.totalorder %s29, 1
      %p371 = por %p369, %p370
      %p373 = scmp.ne.s32.totalorder %s356, %s372
      %p374 = scmp.eq.s32.totalorder %s29, 0
      %p375 = por %p373, %p374
      %s376 = ssub.s32 %s31, %s38
      %p377 = scmp.eq.s32.totalorder %s376, 0
      %s379 = sadd.s32 %s378, 1
      %s380 = scalar_select %p377, %s378, %s379
      %p383 = pneg %p377
      %p384 = scmp.eq.s32.totalorder %s23, 1
      %p385 = por %p383, %p384
      %p386 = scmp.ne.s32.totalorder %s378, %s381
      %p387 = scmp.eq.s32.totalorder %s23, 0
      %p388 = por %p386, %p387
      %p389 = scmp.ne.s32.totalorder %s378, %s381
      %p390 = scmp.eq.s32.totalorder %s28, 1
      %p391 = por %p389, %p390
      %p392 = scmp.ne.s32.totalorder %s381, %s382
      %p393 = scmp.eq.s32.totalorder %s28, 0
      %p394 = por %p392, %p393
      %p395 = scmp.ne.s32.totalorder %s381, %s382
      %p396 = scmp.eq.s32.totalorder %s29, 1
      %p397 = por %p395, %p396
      %p399 = scmp.ne.s32.totalorder %s382, %s398
      %p400 = scmp.eq.s32.totalorder %s29, 0
      %p401 = por %p399, %p400
      %s402 = ssub.s32 %s30, %s42
      %p403 = scmp.eq.s32.totalorder %s402, 0
      %s405 = sadd.s32 %s404, 1
      %s406 = scalar_select %p403, %s404, %s405
      %p409 = pneg %p403
      %p410 = scmp.eq.s32.totalorder %s23, 1
      %p411 = por %p409, %p410
      %p412 = scmp.ne.s32.totalorder %s404, %s407
      %p413 = scmp.eq.s32.totalorder %s23, 0
      %p414 = por %p412, %p413
      %p415 = scmp.ne.s32.totalorder %s404, %s407
      %p416 = scmp.eq.s32.totalorder %s28, 1
      %p417 = por %p415, %p416
      %p418 = scmp.ne.s32.totalorder %s407, %s408
      %p419 = scmp.eq.s32.totalorder %s28, 0
      %p420 = por %p418, %p419
      %p421 = scmp.ne.s32.totalorder %s407, %s408
      %p422 = scmp.eq.s32.totalorder %s29, 1
      %p423 = por %p421, %p422
      %p425 = scmp.ne.s32.totalorder %s408, %s424
      %p426 = scmp.eq.s32.totalorder %s29, 0
      %p427 = por %p425, %p426
      %p428 = scmp.le.s32.totalorder 1, %s23
      %p429 = scmp.lt.s32.totalorder %s23, 3
      %p430 = pnand %p428, %p429
      %p431 = pneg %p430
      // Predicated region
      $region9: #{tpu_custom_call.1} parent=5 // pred_check
        _
      $region10: #{tpu_custom_call.1} parent=5 // pred_check_branch
        %433 = sbr.rel (%p430) target = $region12
      $region11: #{tpu_custom_call.1} parent=5 // pred_region
        %s434 = ssub.s32 %s23, 1
        // Predicated region
        $region13: #{tpu_custom_call.1} parent=11 // pred_check
          %p435 = pneg %p61
        $region14: #{tpu_custom_call.1} parent=11 // pred_check_branch
          %437 = sbr.rel (%p435) target = $region16
        $region15: #{tpu_custom_call.1} parent=11 // pred_region
          %s438 = smul.u32 2, %s32
          %s440 = ssub.s32 4096, 4096
          %441 = vsyncadd [#allocation5], %s440
          %s442 = smul.addr %s438, 16
          %s443 = smul.addr %s442, 128
          %s444 = scalar_lea.hbm %s0, %s443
          %s445 = sshll.u32 [#allocation4], 4
          %s446 = int_to_ptr.vmem [resolvable:$true] %s445
          %451 = dma.hbm_to_vmem [thread:$0]  %s444, 4096, %s446, [#allocation5], 128, 128, 8
        $region16: #{tpu_custom_call.1} parent=11 // pred_fallthru
          _
        // Predicated region
        $region17: #{tpu_custom_call.1} parent=11 // pred_check
          %p452 = pneg %p82
        $region18: #{tpu_custom_call.1} parent=11 // pred_check_branch
          %454 = sbr.rel (%p452) target = $region20
        $region19: #{tpu_custom_call.1} parent=11 // pred_region
          %s456 = ssub.s32 2048, 2048
          %457 = vsyncadd [#allocation8], %s456
          %s458 = sshll.u32 [#allocation7], 4
          %s459 = int_to_ptr.vmem [resolvable:$true] %s458
          %464 = dma.hbm_to_vmem [thread:$0]  %s1, 2048, %s459, [#allocation8], 128, 128, 8
        $region20: #{tpu_custom_call.1} parent=11 // pred_fallthru
          _
      $region12: #{tpu_custom_call.1} parent=5 // pred_fallthru
        _
      %p465 = scmp.lt.s32.totalorder %s23, 2
      // Predicated region
      $region21: #{tpu_custom_call.1} parent=5 // pred_check
        %p466 = pneg %p465
      $region22: #{tpu_custom_call.1} parent=5 // pred_check_branch
        %468 = sbr.rel (%p466) target = $region24
      $region23: #{tpu_custom_call.1} parent=5 // pred_region
        // Predicated region
        $region25: #{tpu_custom_call.1} parent=23 // pred_check
          %p469 = pneg %p102
        $region26: #{tpu_custom_call.1} parent=23 // pred_check_branch
          %471 = sbr.rel (%p469) target = $region28
        $region27: #{tpu_custom_call.1} parent=23 // pred_region
          %s472 = sand.u32 %s23, 1
          %s473 = scalar_lea.sflag [#allocation5], %s472
          %s474 = sand.u32 %s92, 1
          %s475 = scalar_lea.vmem [#allocation9], %s474
          %s477 = ssub.s32 16, 16
          %478 = vsyncadd %s473, %s477
          %s479 = smul.addr %s31, 16
          %s480 = scalar_lea.hbm %s2, %s479
          %s482 = sshll.u32 %s475, 4
          %s483 = int_to_ptr.vmem [resolvable:$true] %s482
          %485 = dma.hbm_to_vmem [thread:$0]  %s480, 16, %s483, %s473
        $region28: #{tpu_custom_call.1} parent=23 // pred_fallthru
          _
        // Predicated region
        $region29: #{tpu_custom_call.1} parent=23 // pred_check
          %p486 = pneg %p128
        $region30: #{tpu_custom_call.1} parent=23 // pred_check_branch
          %488 = sbr.rel (%p486) target = $region32
        $region31: #{tpu_custom_call.1} parent=23 // pred_region
          %s489 = sand.u32 %s23, 1
          %s490 = scalar_lea.sflag [#allocation5], %s489
          %s491 = sand.u32 %s118, 1
          %s492 = scalar_lea.vmem [#allocation10], %s491
          %s494 = ssub.s32 16, 16
          %495 = vsyncadd %s490, %s494
          %s496 = smul.addr %s31, 16
          %s497 = scalar_lea.hbm %s3, %s496
          %s499 = sshll.u32 %s492, 4
          %s500 = int_to_ptr.vmem [resolvable:$true] %s499
          %502 = dma.hbm_to_vmem [thread:$0]  %s497, 16, %s500, %s490
        $region32: #{tpu_custom_call.1} parent=23 // pred_fallthru
          _
        // Predicated region
        $region33: #{tpu_custom_call.1} parent=23 // pred_check
          %p503 = pneg %p154
        $region34: #{tpu_custom_call.1} parent=23 // pred_check_branch
          %505 = sbr.rel (%p503) target = $region36
        $region35: #{tpu_custom_call.1} parent=23 // pred_region
          %s506 = sand.u32 %s23, 1
          %s507 = scalar_lea.sflag [#allocation5], %s506
          %s508 = sand.u32 %s144, 1
          %s509 = smul.addr %s508, 16
          %s510 = scalar_lea.vmem [#allocation11], %s509
          %s512 = ssub.s32 256, 256
          %513 = vsyncadd %s507, %s512
          %s514 = smul.addr %s31, 4
          %s515 = smul.addr %s514, 64
          %s516 = scalar_lea.hbm %s4, %s515
          %s517 = sshll.u32 %s510, 4
          %s518 = int_to_ptr.vmem [resolvable:$true] %s517
          %523 = dma.hbm_to_vmem [thread:$0]  %s516, 256, %s518, %s507, 64, 64, 4
        $region36: #{tpu_custom_call.1} parent=23 // pred_fallthru
          _
        // Predicated region
        $region37: #{tpu_custom_call.1} parent=23 // pred_check
          %p524 = pneg %p180
        $region38: #{tpu_custom_call.1} parent=23 // pred_check_branch
          %526 = sbr.rel (%p524) target = $region40
        $region39: #{tpu_custom_call.1} parent=23 // pred_region
          %s527 = sand.u32 %s23, 1
          %s528 = scalar_lea.sflag [#allocation5], %s527
          %s529 = sand.u32 %s170, 1
          %s530 = scalar_lea.vmem [#allocation12], %s529
          %s532 = ssub.s32 16, 16
          %533 = vsyncadd %s528, %s532
          %s534 = smul.addr %s31, 16
          %s535 = scalar_lea.hbm %s5, %s534
          %s537 = sshll.u32 %s530, 4
          %s538 = int_to_ptr.vmem [resolvable:$true] %s537
          %540 = dma.hbm_to_vmem [thread:$0]  %s535, 16, %s538, %s528
        $region40: #{tpu_custom_call.1} parent=23 // pred_fallthru
          _
        // Predicated region
        $region41: #{tpu_custom_call.1} parent=23 // pred_check
          %p541 = pneg %p206
        $region42: #{tpu_custom_call.1} parent=23 // pred_check_branch
          %543 = sbr.rel (%p541) target = $region44
        $region43: #{tpu_custom_call.1} parent=23 // pred_region
          %s544 = sand.u32 %s23, 1
          %s545 = scalar_lea.sflag [#allocation5], %s544
          %s546 = sand.u32 %s196, 1
          %s547 = smul.addr %s546, 16
          %s548 = scalar_lea.vmem [#allocation13], %s547
          %s550 = ssub.s32 256, 256
          %551 = vsyncadd %s545, %s550
          %s552 = smul.addr %s31, 4
          %s553 = smul.addr %s552, 64
          %s554 = scalar_lea.hbm %s6, %s553
          %s555 = sshll.u32 %s548, 4
          %s556 = int_to_ptr.vmem [resolvable:$true] %s555
          %561 = dma.hbm_to_vmem [thread:$0]  %s554, 256, %s556, %s545, 64, 64, 4
        $region44: #{tpu_custom_call.1} parent=23 // pred_fallthru
          _
        // Predicated region
        $region45: #{tpu_custom_call.1} parent=23 // pred_check
          %p562 = pneg %p232
        $region46: #{tpu_custom_call.1} parent=23 // pred_check_branch
          %564 = sbr.rel (%p562) target = $region48
        $region47: #{tpu_custom_call.1} parent=23 // pred_region
          %s565 = sand.u32 %s23, 1
          %s566 = scalar_lea.sflag [#allocation5], %s565
          %s567 = sand.u32 %s222, 1
          %s568 = scalar_lea.vmem [#allocation14], %s567
          %s570 = ssub.s32 16, 16
          %571 = vsyncadd %s566, %s570
          %s572 = smul.addr %s31, 16
          %s573 = scalar_lea.hbm %s7, %s572
          %s575 = sshll.u32 %s568, 4
          %s576 = int_to_ptr.vmem [resolvable:$true] %s575
          %578 = dma.hbm_to_vmem [thread:$0]  %s573, 16, %s576, %s566
        $region48: #{tpu_custom_call.1} parent=23 // pred_fallthru
          _
        // Predicated region
        $region49: #{tpu_custom_call.1} parent=23 // pred_check
          %p579 = pneg %p258
        $region50: #{tpu_custom_call.1} parent=23 // pred_check_branch
          %581 = sbr.rel (%p579) target = $region52
        $region51: #{tpu_custom_call.1} parent=23 // pred_region
          %s582 = sand.u32 %s23, 1
          %s583 = scalar_lea.sflag [#allocation5], %s582
          %s584 = sand.u32 %s248, 1
          %s585 = scalar_lea.vmem [#allocation15], %s584
          %s587 = ssub.s32 16, 16
          %588 = vsyncadd %s583, %s587
          %s589 = smul.addr %s31, 16
          %s590 = scalar_lea.hbm %s8, %s589
          %s592 = sshll.u32 %s585, 4
          %s593 = int_to_ptr.vmem [resolvable:$true] %s592
          %595 = dma.hbm_to_vmem [thread:$0]  %s590, 16, %s593, %s583
        $region52: #{tpu_custom_call.1} parent=23 // pred_fallthru
          _
        // Predicated region
        $region53: #{tpu_custom_call.1} parent=23 // pred_check
          %p596 = pneg %p284
        $region54: #{tpu_custom_call.1} parent=23 // pred_check_branch
          %598 = sbr.rel (%p596) target = $region56
        $region55: #{tpu_custom_call.1} parent=23 // pred_region
          %s599 = sand.u32 %s23, 1
          %s600 = scalar_lea.sflag [#allocation5], %s599
          %s601 = sand.u32 %s274, 1
          %s602 = scalar_lea.vmem [#allocation16], %s601
          %s604 = ssub.s32 16, 16
          %605 = vsyncadd %s600, %s604
          %s606 = smul.addr %s31, 16
          %s607 = scalar_lea.hbm %s9, %s606
          %s609 = sshll.u32 %s602, 4
          %s610 = int_to_ptr.vmem [resolvable:$true] %s609
          %612 = dma.hbm_to_vmem [thread:$0]  %s607, 16, %s610, %s600
        $region56: #{tpu_custom_call.1} parent=23 // pred_fallthru
          _
        // Predicated region
        $region57: #{tpu_custom_call.1} parent=23 // pred_check
          %p613 = pneg %p310
        $region58: #{tpu_custom_call.1} parent=23 // pred_check_branch
          %615 = sbr.rel (%p613) target = $region60
        $region59: #{tpu_custom_call.1} parent=23 // pred_region
          %s616 = sand.u32 %s23, 1
          %s617 = scalar_lea.sflag [#allocation5], %s616
          %s618 = sand.u32 %s300, 1
          %s619 = smul.addr %s618, 16
          %s620 = scalar_lea.vmem [#allocation17], %s619
          %s622 = ssub.s32 256, 256
          %623 = vsyncadd %s617, %s622
          %s624 = smul.addr %s31, 4
          %s625 = smul.addr %s624, 64
          %s626 = scalar_lea.hbm %s10, %s625
          %s627 = sshll.u32 %s620, 4
          %s628 = int_to_ptr.vmem [resolvable:$true] %s627
          %633 = dma.hbm_to_vmem [thread:$0]  %s626, 256, %s628, %s617, 64, 64, 4
        $region60: #{tpu_custom_call.1} parent=23 // pred_fallthru
          _
        // Predicated region
        $region61: #{tpu_custom_call.1} parent=23 // pred_check
          %p634 = pneg %p336
        $region62: #{tpu_custom_call.1} parent=23 // pred_check_branch
          %636 = sbr.rel (%p634) target = $region64
        $region63: #{tpu_custom_call.1} parent=23 // pred_region
          %s637 = sand.u32 %s23, 1
          %s638 = scalar_lea.sflag [#allocation5], %s637
          %s639 = sand.u32 %s326, 1
          %s640 = scalar_lea.vmem [#allocation18], %s639
          %s642 = ssub.s32 16, 16
          %643 = vsyncadd %s638, %s642
          %s644 = smul.addr %s31, 16
          %s645 = scalar_lea.hbm %s11, %s644
          %s647 = sshll.u32 %s640, 4
          %s648 = int_to_ptr.vmem [resolvable:$true] %s647
          %650 = dma.hbm_to_vmem [thread:$0]  %s645, 16, %s648, %s638
        $region64: #{tpu_custom_call.1} parent=23 // pred_fallthru
          _
        // Predicated region
        $region65: #{tpu_custom_call.1} parent=23 // pred_check
          %p651 = pneg %p362
        $region66: #{tpu_custom_call.1} parent=23 // pred_check_branch
          %653 = sbr.rel (%p651) target = $region68
        $region67: #{tpu_custom_call.1} parent=23 // pred_region
          %s654 = sand.u32 %s23, 1
          %s655 = scalar_lea.sflag [#allocation5], %s654
          %s656 = sand.u32 %s352, 1
          %s657 = smul.addr %s656, 64
          %s658 = scalar_lea.vmem [#allocation19], %s657
          %s660 = ssub.s32 1024, 1024
          %661 = vsyncadd %s655, %s660
          %s662 = smul.addr %s31, 16
          %s663 = smul.addr %s662, 64
          %s664 = scalar_lea.hbm %s12, %s663
          %s665 = sshll.u32 %s658, 4
          %s666 = int_to_ptr.vmem [resolvable:$true] %s665
          %671 = dma.hbm_to_vmem [thread:$0]  %s664, 1024, %s666, %s655, 64, 64, 4
        $region68: #{tpu_custom_call.1} parent=23 // pred_fallthru
          _
        // Predicated region
        $region69: #{tpu_custom_call.1} parent=23 // pred_check
          %p672 = pneg %p388
        $region70: #{tpu_custom_call.1} parent=23 // pred_check_branch
          %674 = sbr.rel (%p672) target = $region72
        $region71: #{tpu_custom_call.1} parent=23 // pred_region
          %s675 = sand.u32 %s23, 1
          %s676 = scalar_lea.sflag [#allocation5], %s675
          %s677 = sand.u32 %s378, 1
          %s678 = scalar_lea.vmem [#allocation20], %s677
          %s680 = ssub.s32 16, 16
          %681 = vsyncadd %s676, %s680
          %s682 = smul.addr %s31, 16
          %s683 = scalar_lea.hbm %s13, %s682
          %s685 = sshll.u32 %s678, 4
          %s686 = int_to_ptr.vmem [resolvable:$true] %s685
          %688 = dma.hbm_to_vmem [thread:$0]  %s683, 16, %s686, %s676
        $region72: #{tpu_custom_call.1} parent=23 // pred_fallthru
          _
      $region24: #{tpu_custom_call.1} parent=5 // pred_fallthru
        _
      %p689 = scmp.le.s32.totalorder 1, %s23
      %p690 = scmp.lt.s32.totalorder %s23, 3
      %p691 = pnand %p689, %p690
      %p692 = pneg %p691
      // Predicated region
      $region73: #{tpu_custom_call.1} parent=5 // pred_check
        _
      $region74: #{tpu_custom_call.1} parent=5 // pred_check_branch
        %694 = sbr.rel (%p691) target = $region76
      $region75: #{tpu_custom_call.1} parent=5 // pred_region
        %s695 = ssub.s32 %s23, 1
        // Predicated region
        $region77: #{tpu_custom_call.1} parent=75 // pred_check
          %p696 = pneg %p61
        $region78: #{tpu_custom_call.1} parent=75 // pred_check_branch
          %698 = sbr.rel (%p696) target = $region80
        $region79: #{tpu_custom_call.1} parent=75 // pred_region
          %699 = dma.done [#allocation5], 4096
        $region80: #{tpu_custom_call.1} parent=75 // pred_fallthru
          _
        // Predicated region
        $region81: #{tpu_custom_call.1} parent=75 // pred_check
          %p700 = pneg %p82
        $region82: #{tpu_custom_call.1} parent=75 // pred_check_branch
          %702 = sbr.rel (%p700) target = $region84
        $region83: #{tpu_custom_call.1} parent=75 // pred_region
          %703 = dma.done [#allocation8], 2048
        $region84: #{tpu_custom_call.1} parent=75 // pred_fallthru
          _
        %s704 = sand.u32 %s28, 1
        %s705 = scalar_lea.sflag [#allocation5], %s704
        %s706 = sand.u32 %s95, 1
        %s707 = scalar_lea.vmem [#allocation9], %s706
        // Predicated region
        $region85: #{tpu_custom_call.1} parent=75 // pred_check
          %p708 = pneg %p108
        $region86: #{tpu_custom_call.1} parent=75 // pred_check_branch
          %710 = sbr.rel (%p708) target = $region88
        $region87: #{tpu_custom_call.1} parent=75 // pred_region
          %711 = dma.done %s705, 16
        $region88: #{tpu_custom_call.1} parent=75 // pred_fallthru
          _
        %s712 = sand.u32 %s28, 1
        %s713 = scalar_lea.sflag [#allocation5], %s712
        %s714 = sand.u32 %s121, 1
        %s715 = scalar_lea.vmem [#allocation10], %s714
        // Predicated region
        $region89: #{tpu_custom_call.1} parent=75 // pred_check
          %p716 = pneg %p134
        $region90: #{tpu_custom_call.1} parent=75 // pred_check_branch
          %718 = sbr.rel (%p716) target = $region92
        $region91: #{tpu_custom_call.1} parent=75 // pred_region
          %719 = dma.done %s713, 16
        $region92: #{tpu_custom_call.1} parent=75 // pred_fallthru
          _
        %s720 = sand.u32 %s28, 1
        %s721 = scalar_lea.sflag [#allocation5], %s720
        %s722 = sand.u32 %s147, 1
        %s723 = smul.addr %s722, 16
        %s724 = scalar_lea.vmem [#allocation11], %s723
        // Predicated region
        $region93: #{tpu_custom_call.1} parent=75 // pred_check
          %p725 = pneg %p160
        $region94: #{tpu_custom_call.1} parent=75 // pred_check_branch
          %727 = sbr.rel (%p725) target = $region96
        $region95: #{tpu_custom_call.1} parent=75 // pred_region
          %728 = dma.done %s721, 256
        $region96: #{tpu_custom_call.1} parent=75 // pred_fallthru
          _
        %s729 = sand.u32 %s28, 1
        %s730 = scalar_lea.sflag [#allocation5], %s729
        %s731 = sand.u32 %s173, 1
        %s732 = scalar_lea.vmem [#allocation12], %s731
        // Predicated region
        $region97: #{tpu_custom_call.1} parent=75 // pred_check
          %p733 = pneg %p186
        $region98: #{tpu_custom_call.1} parent=75 // pred_check_branch
          %735 = sbr.rel (%p733) target = $region100
        $region99: #{tpu_custom_call.1} parent=75 // pred_region
          %736 = dma.done %s730, 16
        $region100: #{tpu_custom_call.1} parent=75 // pred_fallthru
          _
        %s737 = sand.u32 %s28, 1
        %s738 = scalar_lea.sflag [#allocation5], %s737
        %s739 = sand.u32 %s199, 1
        %s740 = smul.addr %s739, 16
        %s741 = scalar_lea.vmem [#allocation13], %s740
        // Predicated region
        $region101: #{tpu_custom_call.1} parent=75 // pred_check
          %p742 = pneg %p212
        $region102: #{tpu_custom_call.1} parent=75 // pred_check_branch
          %744 = sbr.rel (%p742) target = $region104
        $region103: #{tpu_custom_call.1} parent=75 // pred_region
          %745 = dma.done %s738, 256
        $region104: #{tpu_custom_call.1} parent=75 // pred_fallthru
          _
        %s746 = sand.u32 %s28, 1
        %s747 = scalar_lea.sflag [#allocation5], %s746
        %s748 = sand.u32 %s225, 1
        %s749 = scalar_lea.vmem [#allocation14], %s748
        // Predicated region
        $region105: #{tpu_custom_call.1} parent=75 // pred_check
          %p750 = pneg %p238
        $region106: #{tpu_custom_call.1} parent=75 // pred_check_branch
          %752 = sbr.rel (%p750) target = $region108
        $region107: #{tpu_custom_call.1} parent=75 // pred_region
          %753 = dma.done %s747, 16
        $region108: #{tpu_custom_call.1} parent=75 // pred_fallthru
          _
        %s754 = sand.u32 %s28, 1
        %s755 = scalar_lea.sflag [#allocation5], %s754
        %s756 = sand.u32 %s251, 1
        %s757 = scalar_lea.vmem [#allocation15], %s756
        // Predicated region
        $region109: #{tpu_custom_call.1} parent=75 // pred_check
          %p758 = pneg %p264
        $region110: #{tpu_custom_call.1} parent=75 // pred_check_branch
          %760 = sbr.rel (%p758) target = $region112
        $region111: #{tpu_custom_call.1} parent=75 // pred_region
          %761 = dma.done %s755, 16
        $region112: #{tpu_custom_call.1} parent=75 // pred_fallthru
          _
        %s762 = sand.u32 %s28, 1
        %s763 = scalar_lea.sflag [#allocation5], %s762
        %s764 = sand.u32 %s277, 1
        %s765 = scalar_lea.vmem [#allocation16], %s764
        // Predicated region
        $region113: #{tpu_custom_call.1} parent=75 // pred_check
          %p766 = pneg %p290
        $region114: #{tpu_custom_call.1} parent=75 // pred_check_branch
          %768 = sbr.rel (%p766) target = $region116
        $region115: #{tpu_custom_call.1} parent=75 // pred_region
          %769 = dma.done %s763, 16
        $region116: #{tpu_custom_call.1} parent=75 // pred_fallthru
          _
        %s770 = sand.u32 %s28, 1
        %s771 = scalar_lea.sflag [#allocation5], %s770
        %s772 = sand.u32 %s303, 1
        %s773 = smul.addr %s772, 16
        %s774 = scalar_lea.vmem [#allocation17], %s773
        // Predicated region
        $region117: #{tpu_custom_call.1} parent=75 // pred_check
          %p775 = pneg %p316
        $region118: #{tpu_custom_call.1} parent=75 // pred_check_branch
          %777 = sbr.rel (%p775) target = $region120
        $region119: #{tpu_custom_call.1} parent=75 // pred_region
          %778 = dma.done %s771, 256
        $region120: #{tpu_custom_call.1} parent=75 // pred_fallthru
          _
        %s779 = sand.u32 %s28, 1
        %s780 = scalar_lea.sflag [#allocation5], %s779
        %s781 = sand.u32 %s329, 1
        %s782 = scalar_lea.vmem [#allocation18], %s781
        // Predicated region
        $region121: #{tpu_custom_call.1} parent=75 // pred_check
          %p783 = pneg %p342
        $region122: #{tpu_custom_call.1} parent=75 // pred_check_branch
          %785 = sbr.rel (%p783) target = $region124
        $region123: #{tpu_custom_call.1} parent=75 // pred_region
          %786 = dma.done %s780, 16
        $region124: #{tpu_custom_call.1} parent=75 // pred_fallthru
          _
        %s787 = sand.u32 %s28, 1
        %s788 = scalar_lea.sflag [#allocation5], %s787
        %s789 = sand.u32 %s355, 1
        %s790 = smul.addr %s789, 64
        %s791 = scalar_lea.vmem [#allocation19], %s790
        // Predicated region
        $region125: #{tpu_custom_call.1} parent=75 // pred_check
          %p792 = pneg %p368
        $region126: #{tpu_custom_call.1} parent=75 // pred_check_branch
          %794 = sbr.rel (%p792) target = $region128
        $region127: #{tpu_custom_call.1} parent=75 // pred_region
          %795 = dma.done %s788, 1024
        $region128: #{tpu_custom_call.1} parent=75 // pred_fallthru
          _
        %s796 = sand.u32 %s28, 1
        %s797 = scalar_lea.sflag [#allocation5], %s796
        %s798 = sand.u32 %s381, 1
        %s799 = scalar_lea.vmem [#allocation20], %s798
        // Predicated region
        $region129: #{tpu_custom_call.1} parent=75 // pred_check
          %p800 = pneg %p394
        $region130: #{tpu_custom_call.1} parent=75 // pred_check_branch
          %802 = sbr.rel (%p800) target = $region132
        $region131: #{tpu_custom_call.1} parent=75 // pred_region
          %803 = dma.done %s797, 16
        $region132: #{tpu_custom_call.1} parent=75 // pred_fallthru
          _
        %p804 = pneg %p61
        %p805 = pneg %p58
        %p806 = pneg %p82
        %p807 = pneg %p79
        %s808 = sand.u32 %s28, 1
        %s809 = scalar_lea.sflag [#allocation5], %s808
        %s810 = sand.u32 %s95, 1
        %s811 = scalar_lea.vmem [#allocation9], %s810
        %p812 = pneg %p108
        %p813 = pneg %p105
        %s814 = sand.u32 %s28, 1
        %s815 = scalar_lea.sflag [#allocation5], %s814
        %s816 = sand.u32 %s121, 1
        %s817 = scalar_lea.vmem [#allocation10], %s816
        %p818 = pneg %p134
        %p819 = pneg %p131
        %s820 = sand.u32 %s28, 1
        %s821 = scalar_lea.sflag [#allocation5], %s820
        %s822 = sand.u32 %s147, 1
        %s823 = smul.addr %s822, 16
        %s824 = scalar_lea.vmem [#allocation11], %s823
        %p825 = pneg %p160
        %p826 = pneg %p157
        %s827 = sand.u32 %s28, 1
        %s828 = scalar_lea.sflag [#allocation5], %s827
        %s829 = sand.u32 %s173, 1
        %s830 = scalar_lea.vmem [#allocation12], %s829
        %p831 = pneg %p186
        %p832 = pneg %p183
        %s833 = sand.u32 %s28, 1
        %s834 = scalar_lea.sflag [#allocation5], %s833
        %s835 = sand.u32 %s199, 1
        %s836 = smul.addr %s835, 16
        %s837 = scalar_lea.vmem [#allocation13], %s836
        %p838 = pneg %p212
        %p839 = pneg %p209
        %s840 = sand.u32 %s28, 1
        %s841 = scalar_lea.sflag [#allocation5], %s840
        %s842 = sand.u32 %s225, 1
        %s843 = scalar_lea.vmem [#allocation14], %s842
        %p844 = pneg %p238
        %p845 = pneg %p235
        %s846 = sand.u32 %s28, 1
        %s847 = scalar_lea.sflag [#allocation5], %s846
        %s848 = sand.u32 %s251, 1
        %s849 = scalar_lea.vmem [#allocation15], %s848
        %p850 = pneg %p264
        %p851 = pneg %p261
        %s852 = sand.u32 %s28, 1
        %s853 = scalar_lea.sflag [#allocation5], %s852
        %s854 = sand.u32 %s277, 1
        %s855 = scalar_lea.vmem [#allocation16], %s854
        %p856 = pneg %p290
        %p857 = pneg %p287
        %s858 = sand.u32 %s28, 1
        %s859 = scalar_lea.sflag [#allocation5], %s858
        %s860 = sand.u32 %s303, 1
        %s861 = smul.addr %s860, 16
        %s862 = scalar_lea.vmem [#allocation17], %s861
        %p863 = pneg %p316
        %p864 = pneg %p313
        %s865 = sand.u32 %s28, 1
        %s866 = scalar_lea.sflag [#allocation5], %s865
        %s867 = sand.u32 %s329, 1
        %s868 = scalar_lea.vmem [#allocation18], %s867
        %p869 = pneg %p342
        %p870 = pneg %p339
        %s871 = sand.u32 %s28, 1
        %s872 = scalar_lea.sflag [#allocation5], %s871
        %s873 = sand.u32 %s355, 1
        %s874 = smul.addr %s873, 64
        %s875 = scalar_lea.vmem [#allocation19], %s874
        %p876 = pneg %p368
        %p877 = pneg %p365
        %s878 = sand.u32 %s28, 1
        %s879 = scalar_lea.sflag [#allocation5], %s878
        %s880 = sand.u32 %s381, 1
        %s881 = scalar_lea.vmem [#allocation20], %s880
        %p882 = pneg %p394
        %p883 = pneg %p391
        %p884 = pneg %p420
        %p885 = pneg %p417
        %s886 = smul.u32 2, %s32
        %s887 = smul.u32 2, %s32
        %p889 = scmp.eq.s32.totalorder %s33, 0
        // Predicated region
        $region133: #{tpu_custom_call.1} parent=75 // pred_check
          %p890 = pneg %p889
        $region134: #{tpu_custom_call.1} parent=75 // pred_check_branch
          %892 = sbr.rel (%p890) target = $region136
        $region135: #{tpu_custom_call.1} parent=75 // pred_region
          %v893 = vld [vmem:[#allocation4] sm:$0xff]
          %v894 = vld [vmem:[#allocation4 + $0x8] sm:$0xff]
          %v895 = vld [vmem:[#allocation4 + $0x10] sm:$0xff]
          %v896 = vld [vmem:[#allocation4 + $0x18] sm:$0xff]
          %v897 = vld [vmem:[#allocation4 + $0x20] sm:$0xff]
          %v898 = vld [vmem:[#allocation4 + $0x28] sm:$0xff]
          %v899 = vld [vmem:[#allocation4 + $0x30] sm:$0xff]
          %v900 = vld [vmem:[#allocation4 + $0x38] sm:$0xff]
          %v901 = vld [vmem:[#allocation4 + $0x40] sm:$0xff]
          %v902 = vld [vmem:[#allocation4 + $0x48] sm:$0xff]
          %v903 = vld [vmem:[#allocation4 + $0x50] sm:$0xff]
          %v904 = vld [vmem:[#allocation4 + $0x58] sm:$0xff]
          %v905 = vld [vmem:[#allocation4 + $0x60] sm:$0xff]
          %v906 = vld [vmem:[#allocation4 + $0x68] sm:$0xff]
          %v907 = vld [vmem:[#allocation4 + $0x70] sm:$0xff]
          %v908 = vld [vmem:[#allocation4 + $0x78] sm:$0xff]
          %v909 = vld [vmem:[#allocation4 + $0x80] sm:$0xff]
          %v910 = vld [vmem:[#allocation4 + $0x88] sm:$0xff]
          %v911 = vld [vmem:[#allocation4 + $0x90] sm:$0xff]
          %v912 = vld [vmem:[#allocation4 + $0x98] sm:$0xff]
          %v913 = vld [vmem:[#allocation4 + $0xa0] sm:$0xff]
          %v914 = vld [vmem:[#allocation4 + $0xa8] sm:$0xff]
          %v915 = vld [vmem:[#allocation4 + $0xb0] sm:$0xff]
          %v916 = vld [vmem:[#allocation4 + $0xb8] sm:$0xff]
          %v917 = vld [vmem:[#allocation4 + $0xc0] sm:$0xff]
          %v918 = vld [vmem:[#allocation4 + $0xc8] sm:$0xff]
          %v919 = vld [vmem:[#allocation4 + $0xd0] sm:$0xff]
          %v920 = vld [vmem:[#allocation4 + $0xd8] sm:$0xff]
          %v921 = vld [vmem:[#allocation4 + $0xe0] sm:$0xff]
          %v922 = vld [vmem:[#allocation4 + $0xe8] sm:$0xff]
          %v923 = vld [vmem:[#allocation4 + $0xf0] sm:$0xff]
          %v924 = vld [vmem:[#allocation4 + $0xf8] sm:$0xff]
          %vm925 = vcmask 261120
          %926 = vst.msk [vmem:[#allocation2] sm:$0xff] %vm925, %v893
          %927 = vst.msk [vmem:[#allocation2 + $0x8] sm:$0xff] %vm925, %v894
          %928 = vst.msk [vmem:[#allocation2 + $0x10] sm:$0xff] %vm925, %v895
          %929 = vst.msk [vmem:[#allocation2 + $0x18] sm:$0xff] %vm925, %v896
          %930 = vst.msk [vmem:[#allocation2 + $0x20] sm:$0xff] %vm925, %v897
          %931 = vst.msk [vmem:[#allocation2 + $0x28] sm:$0xff] %vm925, %v898
          %932 = vst.msk [vmem:[#allocation2 + $0x30] sm:$0xff] %vm925, %v899
          %933 = vst.msk [vmem:[#allocation2 + $0x38] sm:$0xff] %vm925, %v900
          %934 = vst.msk [vmem:[#allocation2 + $0x40] sm:$0xff] %vm925, %v901
          %935 = vst.msk [vmem:[#allocation2 + $0x48] sm:$0xff] %vm925, %v902
          %936 = vst.msk [vmem:[#allocation2 + $0x50] sm:$0xff] %vm925, %v903
          %937 = vst.msk [vmem:[#allocation2 + $0x58] sm:$0xff] %vm925, %v904
          %938 = vst.msk [vmem:[#allocation2 + $0x60] sm:$0xff] %vm925, %v905
          %939 = vst.msk [vmem:[#allocation2 + $0x68] sm:$0xff] %vm925, %v906
          %940 = vst.msk [vmem:[#allocation2 + $0x70] sm:$0xff] %vm925, %v907
          %941 = vst.msk [vmem:[#allocation2 + $0x78] sm:$0xff] %vm925, %v908
          %942 = vst.msk [vmem:[#allocation2 + $0x80] sm:$0xff] %vm925, %v909
          %943 = vst.msk [vmem:[#allocation2 + $0x88] sm:$0xff] %vm925, %v910
          %944 = vst.msk [vmem:[#allocation2 + $0x90] sm:$0xff] %vm925, %v911
          %945 = vst.msk [vmem:[#allocation2 + $0x98] sm:$0xff] %vm925, %v912
          %946 = vst.msk [vmem:[#allocation2 + $0xa0] sm:$0xff] %vm925, %v913
          %947 = vst.msk [vmem:[#allocation2 + $0xa8] sm:$0xff] %vm925, %v914
          %948 = vst.msk [vmem:[#allocation2 + $0xb0] sm:$0xff] %vm925, %v915
          %949 = vst.msk [vmem:[#allocation2 + $0xb8] sm:$0xff] %vm925, %v916
          %950 = vst.msk [vmem:[#allocation2 + $0xc0] sm:$0xff] %vm925, %v917
          %951 = vst.msk [vmem:[#allocation2 + $0xc8] sm:$0xff] %vm925, %v918
          %952 = vst.msk [vmem:[#allocation2 + $0xd0] sm:$0xff] %vm925, %v919
          %953 = vst.msk [vmem:[#allocation2 + $0xd8] sm:$0xff] %vm925, %v920
          %954 = vst.msk [vmem:[#allocation2 + $0xe0] sm:$0xff] %vm925, %v921
          %955 = vst.msk [vmem:[#allocation2 + $0xe8] sm:$0xff] %vm925, %v922
          %956 = vst.msk [vmem:[#allocation2 + $0xf0] sm:$0xff] %vm925, %v923
          %957 = vst.msk [vmem:[#allocation2 + $0xf8] sm:$0xff] %vm925, %v924
        $region136: #{tpu_custom_call.1} parent=75 // pred_fallthru
          _
        %v958 = vld [vmem:[#allocation2] sm:$0xff]
        %v959 = vld [vmem:[#allocation2 + $0x8] sm:$0xff]
        %v960 = vld [vmem:[#allocation2 + $0x10] sm:$0xff]
        %v961 = vld [vmem:[#allocation2 + $0x18] sm:$0xff]
        %v962 = vld [vmem:[#allocation2 + $0x20] sm:$0xff]
        %v963 = vld [vmem:[#allocation2 + $0x28] sm:$0xff]
        %v964 = vld [vmem:[#allocation2 + $0x30] sm:$0xff]
        %v965 = vld [vmem:[#allocation2 + $0x38] sm:$0xff]
        %v966 = vld [vmem:[#allocation2 + $0x40] sm:$0xff]
        %v967 = vld [vmem:[#allocation2 + $0x48] sm:$0xff]
        %v968 = vld [vmem:[#allocation2 + $0x50] sm:$0xff]
        %v969 = vld [vmem:[#allocation2 + $0x58] sm:$0xff]
        %v970 = vld [vmem:[#allocation2 + $0x60] sm:$0xff]
        %v971 = vld [vmem:[#allocation2 + $0x68] sm:$0xff]
        %v972 = vld [vmem:[#allocation2 + $0x70] sm:$0xff]
        %v973 = vld [vmem:[#allocation2 + $0x78] sm:$0xff]
        %v974 = vld [vmem:[#allocation2 + $0x80] sm:$0xff]
        %v975 = vld [vmem:[#allocation2 + $0x88] sm:$0xff]
        %v976 = vld [vmem:[#allocation2 + $0x90] sm:$0xff]
        %v977 = vld [vmem:[#allocation2 + $0x98] sm:$0xff]
        %v978 = vld [vmem:[#allocation2 + $0xa0] sm:$0xff]
        %v979 = vld [vmem:[#allocation2 + $0xa8] sm:$0xff]
        %v980 = vld [vmem:[#allocation2 + $0xb0] sm:$0xff]
        %v981 = vld [vmem:[#allocation2 + $0xb8] sm:$0xff]
        %v982 = vld [vmem:[#allocation2 + $0xc0] sm:$0xff]
        %v983 = vld [vmem:[#allocation2 + $0xc8] sm:$0xff]
        %v984 = vld [vmem:[#allocation2 + $0xd0] sm:$0xff]
        %v985 = vld [vmem:[#allocation2 + $0xd8] sm:$0xff]
        %v986 = vld [vmem:[#allocation2 + $0xe0] sm:$0xff]
        %v987 = vld [vmem:[#allocation2 + $0xe8] sm:$0xff]
        %v988 = vld [vmem:[#allocation2 + $0xf0] sm:$0xff]
        %v989 = vld [vmem:[#allocation2 + $0xf8] sm:$0xff]
        %v990 = vld [vmem:[%s707] sm:$0x1]
        %v991 = vld [vmem:[%s715] sm:$0x1]
        %vm992 = vcmask 261120
        %v993 = vsel %vm992, %v958, 0.0
        %994 = vadd.xlane.f32.xlu0 %v993
        %v995 = vpop.xlane.xlu0 %994
        %v996 = vsel %vm992, %v959, 0.0
        %997 = vadd.xlane.f32.xlu0 %v996
        %v998 = vpop.xlane.xlu0 %997
        %v999 = vsel %vm992, %v960, 0.0
        %1000 = vadd.xlane.f32.xlu0 %v999
        %v1001 = vpop.xlane.xlu0 %1000
        %v1002 = vsel %vm992, %v961, 0.0
        %1003 = vadd.xlane.f32.xlu0 %v1002
        %v1004 = vpop.xlane.xlu0 %1003
        %v1005 = vsel %vm992, %v962, 0.0
        %1006 = vadd.xlane.f32.xlu0 %v1005
        %v1007 = vpop.xlane.xlu0 %1006
        %v1008 = vsel %vm992, %v963, 0.0
        %1009 = vadd.xlane.f32.xlu0 %v1008
        %v1010 = vpop.xlane.xlu0 %1009
        %v1011 = vsel %vm992, %v964, 0.0
        %1012 = vadd.xlane.f32.xlu0 %v1011
        %v1013 = vpop.xlane.xlu0 %1012
        %v1014 = vsel %vm992, %v965, 0.0
        %1015 = vadd.xlane.f32.xlu0 %v1014
        %v1016 = vpop.xlane.xlu0 %1015
        %v1017 = vsel %vm992, %v966, 0.0
        %1018 = vadd.xlane.f32.xlu0 %v1017
        %v1019 = vpop.xlane.xlu0 %1018
        %v1020 = vsel %vm992, %v967, 0.0
        %1021 = vadd.xlane.f32.xlu0 %v1020
        %v1022 = vpop.xlane.xlu0 %1021
        %v1023 = vsel %vm992, %v968, 0.0
        %1024 = vadd.xlane.f32.xlu0 %v1023
        %v1025 = vpop.xlane.xlu0 %1024
        %v1026 = vsel %vm992, %v969, 0.0
        %1027 = vadd.xlane.f32.xlu0 %v1026
        %v1028 = vpop.xlane.xlu0 %1027
        %v1029 = vsel %vm992, %v970, 0.0
        %1030 = vadd.xlane.f32.xlu0 %v1029
        %v1031 = vpop.xlane.xlu0 %1030
        %v1032 = vsel %vm992, %v971, 0.0
        %1033 = vadd.xlane.f32.xlu0 %v1032
        %v1034 = vpop.xlane.xlu0 %1033
        %v1035 = vsel %vm992, %v972, 0.0
        %1036 = vadd.xlane.f32.xlu0 %v1035
        %v1037 = vpop.xlane.xlu0 %1036
        %v1038 = vsel %vm992, %v973, 0.0
        %1039 = vadd.xlane.f32.xlu0 %v1038
        %v1040 = vpop.xlane.xlu0 %1039
        %v1041 = vsel %vm992, %v974, 0.0
        %1042 = vadd.xlane.f32.xlu0 %v1041
        %v1043 = vpop.xlane.xlu0 %1042
        %v1044 = vsel %vm992, %v975, 0.0
        %1045 = vadd.xlane.f32.xlu0 %v1044
        %v1046 = vpop.xlane.xlu0 %1045
        %v1047 = vsel %vm992, %v976, 0.0
        %1048 = vadd.xlane.f32.xlu0 %v1047
        %v1049 = vpop.xlane.xlu0 %1048
        %v1050 = vsel %vm992, %v977, 0.0
        %1051 = vadd.xlane.f32.xlu0 %v1050
        %v1052 = vpop.xlane.xlu0 %1051
        %v1053 = vsel %vm992, %v978, 0.0
        %1054 = vadd.xlane.f32.xlu0 %v1053
        %v1055 = vpop.xlane.xlu0 %1054
        %v1056 = vsel %vm992, %v979, 0.0
        %1057 = vadd.xlane.f32.xlu0 %v1056
        %v1058 = vpop.xlane.xlu0 %1057
        %v1059 = vsel %vm992, %v980, 0.0
        %1060 = vadd.xlane.f32.xlu0 %v1059
        %v1061 = vpop.xlane.xlu0 %1060
        %v1062 = vsel %vm992, %v981, 0.0
        %1063 = vadd.xlane.f32.xlu0 %v1062
        %v1064 = vpop.xlane.xlu0 %1063
        %v1065 = vsel %vm992, %v982, 0.0
        %1066 = vadd.xlane.f32.xlu0 %v1065
        %v1067 = vpop.xlane.xlu0 %1066
        %v1068 = vsel %vm992, %v983, 0.0
        %1069 = vadd.xlane.f32.xlu0 %v1068
        %v1070 = vpop.xlane.xlu0 %1069
        %v1071 = vsel %vm992, %v984, 0.0
        %1072 = vadd.xlane.f32.xlu0 %v1071
        %v1073 = vpop.xlane.xlu0 %1072
        %v1074 = vsel %vm992, %v985, 0.0
        %1075 = vadd.xlane.f32.xlu0 %v1074
        %v1076 = vpop.xlane.xlu0 %1075
        %v1077 = vsel %vm992, %v986, 0.0
        %1078 = vadd.xlane.f32.xlu0 %v1077
        %v1079 = vpop.xlane.xlu0 %1078
        %v1080 = vsel %vm992, %v987, 0.0
        %1081 = vadd.xlane.f32.xlu0 %v1080
        %v1082 = vpop.xlane.xlu0 %1081
        %v1083 = vsel %vm992, %v988, 0.0
        %1084 = vadd.xlane.f32.xlu0 %v1083
        %v1085 = vpop.xlane.xlu0 %1084
        %v1086 = vsel %vm992, %v989, 0.0
        %1087 = vadd.xlane.f32.xlu0 %v1086
        %v1088 = vpop.xlane.xlu0 %1087
        %v1089 = vrcp.pop 32.0
        %v1090 = vmul.f32 %v995, %v1089
        %v1091 = vmul.f32 %v998, %v1089
        %v1092 = vmul.f32 %v1001, %v1089
        %v1093 = vmul.f32 %v1004, %v1089
        %v1094 = vmul.f32 %v1007, %v1089
        %v1095 = vmul.f32 %v1010, %v1089
        %v1096 = vmul.f32 %v1013, %v1089
        %v1097 = vmul.f32 %v1016, %v1089
        %v1098 = vmul.f32 %v1019, %v1089
        %v1099 = vmul.f32 %v1022, %v1089
        %v1100 = vmul.f32 %v1025, %v1089
        %v1101 = vmul.f32 %v1028, %v1089
        %v1102 = vmul.f32 %v1031, %v1089
        %v1103 = vmul.f32 %v1034, %v1089
        %v1104 = vmul.f32 %v1037, %v1089
        %v1105 = vmul.f32 %v1040, %v1089
        %v1106 = vmul.f32 %v1043, %v1089
        %v1107 = vmul.f32 %v1046, %v1089
        %v1108 = vmul.f32 %v1049, %v1089
        %v1109 = vmul.f32 %v1052, %v1089
        %v1110 = vmul.f32 %v1055, %v1089
        %v1111 = vmul.f32 %v1058, %v1089
        %v1112 = vmul.f32 %v1061, %v1089
        %v1113 = vmul.f32 %v1064, %v1089
        %v1114 = vmul.f32 %v1067, %v1089
        %v1115 = vmul.f32 %v1070, %v1089
        %v1116 = vmul.f32 %v1073, %v1089
        %v1117 = vmul.f32 %v1076, %v1089
        %v1118 = vmul.f32 %v1079, %v1089
        %v1119 = vmul.f32 %v1082, %v1089
        %v1120 = vmul.f32 %v1085, %v1089
        %v1121 = vmul.f32 %v1088, %v1089
        %v1122 = vsub.f32 %v958, %v1090
        %v1123 = vsub.f32 %v959, %v1091
        %v1124 = vsub.f32 %v960, %v1092
        %v1125 = vsub.f32 %v961, %v1093
        %v1126 = vsub.f32 %v962, %v1094
        %v1127 = vsub.f32 %v963, %v1095
        %v1128 = vsub.f32 %v964, %v1096
        %v1129 = vsub.f32 %v965, %v1097
        %v1130 = vsub.f32 %v966, %v1098
        %v1131 = vsub.f32 %v967, %v1099
        %v1132 = vsub.f32 %v968, %v1100
        %v1133 = vsub.f32 %v969, %v1101
        %v1134 = vsub.f32 %v970, %v1102
        %v1135 = vsub.f32 %v971, %v1103
        %v1136 = vsub.f32 %v972, %v1104
        %v1137 = vsub.f32 %v973, %v1105
        %v1138 = vsub.f32 %v974, %v1106
        %v1139 = vsub.f32 %v975, %v1107
        %v1140 = vsub.f32 %v976, %v1108
        %v1141 = vsub.f32 %v977, %v1109
        %v1142 = vsub.f32 %v978, %v1110
        %v1143 = vsub.f32 %v979, %v1111
        %v1144 = vsub.f32 %v980, %v1112
        %v1145 = vsub.f32 %v981, %v1113
        %v1146 = vsub.f32 %v982, %v1114
        %v1147 = vsub.f32 %v983, %v1115
        %v1148 = vsub.f32 %v984, %v1116
        %v1149 = vsub.f32 %v985, %v1117
        %v1150 = vsub.f32 %v986, %v1118
        %v1151 = vsub.f32 %v987, %v1119
        %v1152 = vsub.f32 %v988, %v1120
        %v1153 = vsub.f32 %v989, %v1121
        %v1154 = vmul.f32 %v1122, %v1122
        %v1155 = vmul.f32 %v1123, %v1123
        %v1156 = vmul.f32 %v1124, %v1124
        %v1157 = vmul.f32 %v1125, %v1125
        %v1158 = vmul.f32 %v1126, %v1126
        %v1159 = vmul.f32 %v1127, %v1127
        %v1160 = vmul.f32 %v1128, %v1128
        %v1161 = vmul.f32 %v1129, %v1129
        %v1162 = vmul.f32 %v1130, %v1130
        %v1163 = vmul.f32 %v1131, %v1131
        %v1164 = vmul.f32 %v1132, %v1132
        %v1165 = vmul.f32 %v1133, %v1133
        %v1166 = vmul.f32 %v1134, %v1134
        %v1167 = vmul.f32 %v1135, %v1135
        %v1168 = vmul.f32 %v1136, %v1136
        %v1169 = vmul.f32 %v1137, %v1137
        %v1170 = vmul.f32 %v1138, %v1138
        %v1171 = vmul.f32 %v1139, %v1139
        %v1172 = vmul.f32 %v1140, %v1140
        %v1173 = vmul.f32 %v1141, %v1141
        %v1174 = vmul.f32 %v1142, %v1142
        %v1175 = vmul.f32 %v1143, %v1143
        %v1176 = vmul.f32 %v1144, %v1144
        %v1177 = vmul.f32 %v1145, %v1145
        %v1178 = vmul.f32 %v1146, %v1146
        %v1179 = vmul.f32 %v1147, %v1147
        %v1180 = vmul.f32 %v1148, %v1148
        %v1181 = vmul.f32 %v1149, %v1149
        %v1182 = vmul.f32 %v1150, %v1150
        %v1183 = vmul.f32 %v1151, %v1151
        %v1184 = vmul.f32 %v1152, %v1152
        %v1185 = vmul.f32 %v1153, %v1153
        %v1186 = vsel %vm992, %v1154, 0.0
        %1187 = vadd.xlane.f32.xlu0 %v1186
        %v1188 = vpop.xlane.xlu0 %1187
        %v1189 = vsel %vm992, %v1155, 0.0
        %1190 = vadd.xlane.f32.xlu0 %v1189
        %v1191 = vpop.xlane.xlu0 %1190
        %v1192 = vsel %vm992, %v1156, 0.0
        %1193 = vadd.xlane.f32.xlu0 %v1192
        %v1194 = vpop.xlane.xlu0 %1193
        %v1195 = vsel %vm992, %v1157, 0.0
        %1196 = vadd.xlane.f32.xlu0 %v1195
        %v1197 = vpop.xlane.xlu0 %1196
        %v1198 = vsel %vm992, %v1158, 0.0
        %1199 = vadd.xlane.f32.xlu0 %v1198
        %v1200 = vpop.xlane.xlu0 %1199
        %v1201 = vsel %vm992, %v1159, 0.0
        %1202 = vadd.xlane.f32.xlu0 %v1201
        %v1203 = vpop.xlane.xlu0 %1202
        %v1204 = vsel %vm992, %v1160, 0.0
        %1205 = vadd.xlane.f32.xlu0 %v1204
        %v1206 = vpop.xlane.xlu0 %1205
        %v1207 = vsel %vm992, %v1161, 0.0
        %1208 = vadd.xlane.f32.xlu0 %v1207
        %v1209 = vpop.xlane.xlu0 %1208
        %v1210 = vsel %vm992, %v1162, 0.0
        %1211 = vadd.xlane.f32.xlu0 %v1210
        %v1212 = vpop.xlane.xlu0 %1211
        %v1213 = vsel %vm992, %v1163, 0.0
        %1214 = vadd.xlane.f32.xlu0 %v1213
        %v1215 = vpop.xlane.xlu0 %1214
        %v1216 = vsel %vm992, %v1164, 0.0
        %1217 = vadd.xlane.f32.xlu0 %v1216
        %v1218 = vpop.xlane.xlu0 %1217
        %v1219 = vsel %vm992, %v1165, 0.0
        %1220 = vadd.xlane.f32.xlu0 %v1219
        %v1221 = vpop.xlane.xlu0 %1220
        %v1222 = vsel %vm992, %v1166, 0.0
        %1223 = vadd.xlane.f32.xlu0 %v1222
        %v1224 = vpop.xlane.xlu0 %1223
        %v1225 = vsel %vm992, %v1167, 0.0
        %1226 = vadd.xlane.f32.xlu0 %v1225
        %v1227 = vpop.xlane.xlu0 %1226
        %v1228 = vsel %vm992, %v1168, 0.0
        %1229 = vadd.xlane.f32.xlu0 %v1228
        %v1230 = vpop.xlane.xlu0 %1229
        %v1231 = vsel %vm992, %v1169, 0.0
        %1232 = vadd.xlane.f32.xlu0 %v1231
        %v1233 = vpop.xlane.xlu0 %1232
        %v1234 = vsel %vm992, %v1170, 0.0
        %1235 = vadd.xlane.f32.xlu0 %v1234
        %v1236 = vpop.xlane.xlu0 %1235
        %v1237 = vsel %vm992, %v1171, 0.0
        %1238 = vadd.xlane.f32.xlu0 %v1237
        %v1239 = vpop.xlane.xlu0 %1238
        %v1240 = vsel %vm992, %v1172, 0.0
        %1241 = vadd.xlane.f32.xlu0 %v1240
        %v1242 = vpop.xlane.xlu0 %1241
        %v1243 = vsel %vm992, %v1173, 0.0
        %1244 = vadd.xlane.f32.xlu0 %v1243
        %v1245 = vpop.xlane.xlu0 %1244
        %v1246 = vsel %vm992, %v1174, 0.0
        %1247 = vadd.xlane.f32.xlu0 %v1246
        %v1248 = vpop.xlane.xlu0 %1247
        %v1249 = vsel %vm992, %v1175, 0.0
        %1250 = vadd.xlane.f32.xlu0 %v1249
        %v1251 = vpop.xlane.xlu0 %1250
        %v1252 = vsel %vm992, %v1176, 0.0
        %1253 = vadd.xlane.f32.xlu0 %v1252
        %v1254 = vpop.xlane.xlu0 %1253
        %v1255 = vsel %vm992, %v1177, 0.0
        %1256 = vadd.xlane.f32.xlu0 %v1255
        %v1257 = vpop.xlane.xlu0 %1256
        %v1258 = vsel %vm992, %v1178, 0.0
        %1259 = vadd.xlane.f32.xlu0 %v1258
        %v1260 = vpop.xlane.xlu0 %1259
        %v1261 = vsel %vm992, %v1179, 0.0
        %1262 = vadd.xlane.f32.xlu0 %v1261
        %v1263 = vpop.xlane.xlu0 %1262
        %v1264 = vsel %vm992, %v1180, 0.0
        %1265 = vadd.xlane.f32.xlu0 %v1264
        %v1266 = vpop.xlane.xlu0 %1265
        %v1267 = vsel %vm992, %v1181, 0.0
        %1268 = vadd.xlane.f32.xlu0 %v1267
        %v1269 = vpop.xlane.xlu0 %1268
        %v1270 = vsel %vm992, %v1182, 0.0
        %1271 = vadd.xlane.f32.xlu0 %v1270
        %v1272 = vpop.xlane.xlu0 %1271
        %v1273 = vsel %vm992, %v1183, 0.0
        %1274 = vadd.xlane.f32.xlu0 %v1273
        %v1275 = vpop.xlane.xlu0 %1274
        %v1276 = vsel %vm992, %v1184, 0.0
        %1277 = vadd.xlane.f32.xlu0 %v1276
        %v1278 = vpop.xlane.xlu0 %1277
        %v1279 = vsel %vm992, %v1185, 0.0
        %1280 = vadd.xlane.f32.xlu0 %v1279
        %v1281 = vpop.xlane.xlu0 %1280
        %v1282 = vmul.f32 %v1188, %v1089
        %v1283 = vmul.f32 %v1191, %v1089
        %v1284 = vmul.f32 %v1194, %v1089
        %v1285 = vmul.f32 %v1197, %v1089
        %v1286 = vmul.f32 %v1200, %v1089
        %v1287 = vmul.f32 %v1203, %v1089
        %v1288 = vmul.f32 %v1206, %v1089
        %v1289 = vmul.f32 %v1209, %v1089
        %v1290 = vmul.f32 %v1212, %v1089
        %v1291 = vmul.f32 %v1215, %v1089
        %v1292 = vmul.f32 %v1218, %v1089
        %v1293 = vmul.f32 %v1221, %v1089
        %v1294 = vmul.f32 %v1224, %v1089
        %v1295 = vmul.f32 %v1227, %v1089
        %v1296 = vmul.f32 %v1230, %v1089
        %v1297 = vmul.f32 %v1233, %v1089
        %v1298 = vmul.f32 %v1236, %v1089
        %v1299 = vmul.f32 %v1239, %v1089
        %v1300 = vmul.f32 %v1242, %v1089
        %v1301 = vmul.f32 %v1245, %v1089
        %v1302 = vmul.f32 %v1248, %v1089
        %v1303 = vmul.f32 %v1251, %v1089
        %v1304 = vmul.f32 %v1254, %v1089
        %v1305 = vmul.f32 %v1257, %v1089
        %v1306 = vmul.f32 %v1260, %v1089
        %v1307 = vmul.f32 %v1263, %v1089
        %v1308 = vmul.f32 %v1266, %v1089
        %v1309 = vmul.f32 %v1269, %v1089
        %v1310 = vmul.f32 %v1272, %v1089
        %v1311 = vmul.f32 %v1275, %v1089
        %v1312 = vmul.f32 %v1278, %v1089
        %v1313 = vmul.f32 %v1281, %v1089
        %v1314 = vadd.f32 %v1282, 1e-05
        %v1315 = vadd.f32 %v1283, 1e-05
        %v1316 = vadd.f32 %v1284, 1e-05
        %v1317 = vadd.f32 %v1285, 1e-05
        %v1318 = vadd.f32 %v1286, 1e-05
        %v1319 = vadd.f32 %v1287, 1e-05
        %v1320 = vadd.f32 %v1288, 1e-05
        %v1321 = vadd.f32 %v1289, 1e-05
        %v1322 = vadd.f32 %v1290, 1e-05
        %v1323 = vadd.f32 %v1291, 1e-05
        %v1324 = vadd.f32 %v1292, 1e-05
        %v1325 = vadd.f32 %v1293, 1e-05
        %v1326 = vadd.f32 %v1294, 1e-05
        %v1327 = vadd.f32 %v1295, 1e-05
        %v1328 = vadd.f32 %v1296, 1e-05
        %v1329 = vadd.f32 %v1297, 1e-05
        %v1330 = vadd.f32 %v1298, 1e-05
        %v1331 = vadd.f32 %v1299, 1e-05
        %v1332 = vadd.f32 %v1300, 1e-05
        %v1333 = vadd.f32 %v1301, 1e-05
        %v1334 = vadd.f32 %v1302, 1e-05
        %v1335 = vadd.f32 %v1303, 1e-05
        %v1336 = vadd.f32 %v1304, 1e-05
        %v1337 = vadd.f32 %v1305, 1e-05
        %v1338 = vadd.f32 %v1306, 1e-05
        %v1339 = vadd.f32 %v1307, 1e-05
        %v1340 = vadd.f32 %v1308, 1e-05
        %v1341 = vadd.f32 %v1309, 1e-05
        %v1342 = vadd.f32 %v1310, 1e-05
        %v1343 = vadd.f32 %v1311, 1e-05
        %v1344 = vadd.f32 %v1312, 1e-05
        %v1345 = vadd.f32 %v1313, 1e-05
        %v1346 = vrsqrt.pop %v1314
        %v1347 = vrsqrt.pop %v1315
        %v1348 = vrsqrt.pop %v1316
        %v1349 = vrsqrt.pop %v1317
        %v1350 = vrsqrt.pop %v1318
        %v1351 = vrsqrt.pop %v1319
        %v1352 = vrsqrt.pop %v1320
        %v1353 = vrsqrt.pop %v1321
        %v1354 = vrsqrt.pop %v1322
        %v1355 = vrsqrt.pop %v1323
        %v1356 = vrsqrt.pop %v1324
        %v1357 = vrsqrt.pop %v1325
        %v1358 = vrsqrt.pop %v1326
        %v1359 = vrsqrt.pop %v1327
        %v1360 = vrsqrt.pop %v1328
        %v1361 = vrsqrt.pop %v1329
        %v1362 = vrsqrt.pop %v1330
        %v1363 = vrsqrt.pop %v1331
        %v1364 = vrsqrt.pop %v1332
        %v1365 = vrsqrt.pop %v1333
        %v1366 = vrsqrt.pop %v1334
        %v1367 = vrsqrt.pop %v1335
        %v1368 = vrsqrt.pop %v1336
        %v1369 = vrsqrt.pop %v1337
        %v1370 = vrsqrt.pop %v1338
        %v1371 = vrsqrt.pop %v1339
        %v1372 = vrsqrt.pop %v1340
        %v1373 = vrsqrt.pop %v1341
        %v1374 = vrsqrt.pop %v1342
        %v1375 = vrsqrt.pop %v1343
        %v1376 = vrsqrt.pop %v1344
        %v1377 = vrsqrt.pop %v1345
        %v1378 = vmul.f32 %v1122, %v1346
        %v1379 = vmul.f32 %v1123, %v1347
        %v1380 = vmul.f32 %v1124, %v1348
        %v1381 = vmul.f32 %v1125, %v1349
        %v1382 = vmul.f32 %v1126, %v1350
        %v1383 = vmul.f32 %v1127, %v1351
        %v1384 = vmul.f32 %v1128, %v1352
        %v1385 = vmul.f32 %v1129, %v1353
        %v1386 = vmul.f32 %v1130, %v1354
        %v1387 = vmul.f32 %v1131, %v1355
        %v1388 = vmul.f32 %v1132, %v1356
        %v1389 = vmul.f32 %v1133, %v1357
        %v1390 = vmul.f32 %v1134, %v1358
        %v1391 = vmul.f32 %v1135, %v1359
        %v1392 = vmul.f32 %v1136, %v1360
        %v1393 = vmul.f32 %v1137, %v1361
        %v1394 = vmul.f32 %v1138, %v1362
        %v1395 = vmul.f32 %v1139, %v1363
        %v1396 = vmul.f32 %v1140, %v1364
        %v1397 = vmul.f32 %v1141, %v1365
        %v1398 = vmul.f32 %v1142, %v1366
        %v1399 = vmul.f32 %v1143, %v1367
        %v1400 = vmul.f32 %v1144, %v1368
        %v1401 = vmul.f32 %v1145, %v1369
        %v1402 = vmul.f32 %v1146, %v1370
        %v1403 = vmul.f32 %v1147, %v1371
        %v1404 = vmul.f32 %v1148, %v1372
        %v1405 = vmul.f32 %v1149, %v1373
        %v1406 = vmul.f32 %v1150, %v1374
        %v1407 = vmul.f32 %v1151, %v1375
        %v1408 = vmul.f32 %v1152, %v1376
        %v1409 = vmul.f32 %v1153, %v1377
        %v1411 = vlaneseq
        %v1412 = vshrl.u32 %v1411, 7
        %v1413 = vsub.s32 0, %v1412
        %v1414 = vrot.slane %v990, %v1413
        %v1416 = vmul.f32 %v1378, %v1414
        %v1417 = vmul.f32 %v1379, %v1414
        %v1418 = vmul.f32 %v1380, %v1414
        %v1419 = vmul.f32 %v1381, %v1414
        %v1420 = vmul.f32 %v1382, %v1414
        %v1421 = vmul.f32 %v1383, %v1414
        %v1422 = vmul.f32 %v1384, %v1414
        %v1423 = vmul.f32 %v1385, %v1414
        %v1424 = vmul.f32 %v1386, %v1414
        %v1425 = vmul.f32 %v1387, %v1414
        %v1426 = vmul.f32 %v1388, %v1414
        %v1427 = vmul.f32 %v1389, %v1414
        %v1428 = vmul.f32 %v1390, %v1414
        %v1429 = vmul.f32 %v1391, %v1414
        %v1430 = vmul.f32 %v1392, %v1414
        %v1431 = vmul.f32 %v1393, %v1414
        %v1432 = vmul.f32 %v1394, %v1414
        %v1433 = vmul.f32 %v1395, %v1414
        %v1434 = vmul.f32 %v1396, %v1414
        %v1435 = vmul.f32 %v1397, %v1414
        %v1436 = vmul.f32 %v1398, %v1414
        %v1437 = vmul.f32 %v1399, %v1414
        %v1438 = vmul.f32 %v1400, %v1414
        %v1439 = vmul.f32 %v1401, %v1414
        %v1440 = vmul.f32 %v1402, %v1414
        %v1441 = vmul.f32 %v1403, %v1414
        %v1442 = vmul.f32 %v1404, %v1414
        %v1443 = vmul.f32 %v1405, %v1414
        %v1444 = vmul.f32 %v1406, %v1414
        %v1445 = vmul.f32 %v1407, %v1414
        %v1446 = vmul.f32 %v1408, %v1414
        %v1447 = vmul.f32 %v1409, %v1414
        %v1449 = vlaneseq
        %v1450 = vshrl.u32 %v1449, 7
        %v1451 = vsub.s32 0, %v1450
        %v1452 = vrot.slane %v991, %v1451
        %v1454 = vadd.f32 %v1416, %v1452
        %v1455 = vadd.f32 %v1417, %v1452
        %v1456 = vadd.f32 %v1418, %v1452
        %v1457 = vadd.f32 %v1419, %v1452
        %v1458 = vadd.f32 %v1420, %v1452
        %v1459 = vadd.f32 %v1421, %v1452
        %v1460 = vadd.f32 %v1422, %v1452
        %v1461 = vadd.f32 %v1423, %v1452
        %v1462 = vadd.f32 %v1424, %v1452
        %v1463 = vadd.f32 %v1425, %v1452
        %v1464 = vadd.f32 %v1426, %v1452
        %v1465 = vadd.f32 %v1427, %v1452
        %v1466 = vadd.f32 %v1428, %v1452
        %v1467 = vadd.f32 %v1429, %v1452
        %v1468 = vadd.f32 %v1430, %v1452
        %v1469 = vadd.f32 %v1431, %v1452
        %v1470 = vadd.f32 %v1432, %v1452
        %v1471 = vadd.f32 %v1433, %v1452
        %v1472 = vadd.f32 %v1434, %v1452
        %v1473 = vadd.f32 %v1435, %v1452
        %v1474 = vadd.f32 %v1436, %v1452
        %v1475 = vadd.f32 %v1437, %v1452
        %v1476 = vadd.f32 %v1438, %v1452
        %v1477 = vadd.f32 %v1439, %v1452
        %v1478 = vadd.f32 %v1440, %v1452
        %v1479 = vadd.f32 %v1441, %v1452
        %v1480 = vadd.f32 %v1442, %v1452
        %v1481 = vadd.f32 %v1443, %v1452
        %v1482 = vadd.f32 %v1444, %v1452
        %v1483 = vadd.f32 %v1445, %v1452
        %v1484 = vadd.f32 %v1446, %v1452
        %v1485 = vadd.f32 %v1447, %v1452
        %v1486 = vpack.c.bf16 %v1455, %v1454
        %v1487 = vpack.c.bf16 %v1457, %v1456
        %v1488 = vpack.c.bf16 %v1459, %v1458
        %v1489 = vpack.c.bf16 %v1461, %v1460
        %v1490 = vpack.c.bf16 %v1463, %v1462
        %v1491 = vpack.c.bf16 %v1465, %v1464
        %v1492 = vpack.c.bf16 %v1467, %v1466
        %v1493 = vpack.c.bf16 %v1469, %v1468
        %v1494 = vpack.c.bf16 %v1471, %v1470
        %v1495 = vpack.c.bf16 %v1473, %v1472
        %v1496 = vpack.c.bf16 %v1475, %v1474
        %v1497 = vpack.c.bf16 %v1477, %v1476
        %v1498 = vpack.c.bf16 %v1479, %v1478
        %v1499 = vpack.c.bf16 %v1481, %v1480
        %v1500 = vpack.c.bf16 %v1483, %v1482
        %v1501 = vpack.c.bf16 %v1485, %v1484
        %v1502 = vld [vmem:[%s724] sm:$0xf]
        %v1503 = vld [vmem:[%s724 + $0x4] sm:$0xf]
        %v1504 = vld [vmem:[%s724 + $0x8] sm:$0xf]
        %v1505 = vld [vmem:[%s724 + $0xc] sm:$0xf]
        %v1506 = vld [vmem:[%s732] sm:$0x1]
        %v1508 = vlaneseq
        %v1509 = vshrl.u32 %v1508, 7
        %v1510 = vsub.s32 0, %v1509
        %v1511 = vrot.slane %v1506, %v1510
        %v1517 = vunpack.c.l.b16 %v1502
        %v1518 = vunpack.c.l.b16 %v1503
        %v1519 = vunpack.c.l.b16 %v1504
        %v1520 = vunpack.c.l.b16 %v1505
        %v1521 = vpack.c.b16 %v1518, %v1517
        %v1522 = vpack.c.b16 %v1520, %v1519
        %v1526 = vsel %vm992, %v1486, 0
        %v1529 = vsel %vm992, %v1487, 0
        %v1532 = vsel %vm992, %v1488, 0
        %v1535 = vsel %vm992, %v1489, 0
        %v1538 = vsel %vm992, %v1490, 0
        %v1541 = vsel %vm992, %v1491, 0
        %v1544 = vsel %vm992, %v1492, 0
        %v1547 = vsel %vm992, %v1493, 0
        %v1550 = vsel %vm992, %v1494, 0
        %v1553 = vsel %vm992, %v1495, 0
        %v1556 = vsel %vm992, %v1496, 0
        %v1559 = vsel %vm992, %v1497, 0
        %v1562 = vsel %vm992, %v1498, 0
        %v1565 = vsel %vm992, %v1499, 0
        %v1568 = vsel %vm992, %v1500, 0
        %v1571 = vsel %vm992, %v1501, 0
        %1573 = vmatprep.subr.bf16.mxu0 0
        %1574 = vmatpush1.bf16.msra.mxu0 %v1521
        %1575 = vmatprep.subr.bf16.mxu0 0
        %1576 = vmatpush1.bf16.msra.mxu0 %v1522
        %1577 = vmatprep.subr.bf16.mxu0 0
        %1578 = vmatpush1.bf16.msra.mxu0 0
        %1579 = vmatprep.subr.bf16.mxu0 0
        %1580 = vmatpush1.bf16.msra.mxu0 0
        %1581 = vmatprep.subr.bf16.mxu0 0
        %1582 = vmatpush1.bf16.msra.mxu0 0
        %1583 = vmatprep.subr.bf16.mxu0 0
        %1584 = vmatpush1.bf16.msra.mxu0 0
        %1585 = vmatprep.subr.bf16.mxu0 0
        %1586 = vmatpush1.bf16.msra.mxu0 0
        %1587 = vmatprep.subr.bf16.mxu0 0
        %1588 = vmatpush1.bf16.msra.mxu0 0
        %1589 = vmatprep.subr.bf16.mxu0 0
        %1590 = vmatpush1.bf16.msra.mxu0 0
        %1591 = vmatprep.subr.bf16.mxu0 0
        %1592 = vmatpush1.bf16.msra.mxu0 0
        %1593 = vmatprep.subr.bf16.mxu0 0
        %1594 = vmatpush1.bf16.msra.mxu0 0
        %1595 = vmatprep.subr.bf16.mxu0 0
        %1596 = vmatpush1.bf16.msra.mxu0 0
        %1597 = vmatprep.subr.bf16.mxu0 0
        %1598 = vmatpush1.bf16.msra.mxu0 0
        %1599 = vmatprep.subr.bf16.mxu0 0
        %1600 = vmatpush1.bf16.msra.mxu0 0
        %1601 = vmatprep.subr.bf16.mxu0 0
        %1602 = vmatpush1.bf16.msra.mxu0 0
        %1603 = vmatprep.subr.bf16.mxu0 0
        %1604 = vmatpush1.bf16.msra.mxu0 0
        %1605 = vmatprep.mubr.bf16.mxu0 0
        %1606 = vmatmul.mubr.bf16.gmra.mrb[0].mxu0 %v1526
        %v1607 = vpop.f32.mrb[0].mxu0
        %v1608 = vadd.f32 %v1511, %v1607
        %v1609 = vpop.f32.mrb[0].mxu0
        %v1610 = vpop.f32.mrb[0].mxu0
        %v1611 = vadd.f32 %v1511, %v1610
        %v1612 = vpop.f32.mrb[0].mxu0
        %1613 = vmatprep.mubr.bf16.mxu0 0
        %1614 = vmatmul.mubr.bf16.gmra.mrb[0].mxu0 %v1529
        %v1615 = vpop.f32.mrb[0].mxu0
        %v1616 = vadd.f32 %v1511, %v1615
        %v1617 = vpop.f32.mrb[0].mxu0
        %v1618 = vpop.f32.mrb[0].mxu0
        %v1619 = vadd.f32 %v1511, %v1618
        %v1620 = vpop.f32.mrb[0].mxu0
        %1621 = vmatprep.mubr.bf16.mxu0 0
        %1622 = vmatmul.mubr.bf16.gmra.mrb[0].mxu0 %v1532
        %v1623 = vpop.f32.mrb[0].mxu0
        %v1624 = vadd.f32 %v1511, %v1623
        %v1625 = vpop.f32.mrb[0].mxu0
        %v1626 = vpop.f32.mrb[0].mxu0
        %v1627 = vadd.f32 %v1511, %v1626
        %v1628 = vpop.f32.mrb[0].mxu0
        %1629 = vmatprep.mubr.bf16.mxu0 0
        %1630 = vmatmul.mubr.bf16.gmra.mrb[0].mxu0 %v1535
        %v1631 = vpop.f32.mrb[0].mxu0
        %v1632 = vadd.f32 %v1511, %v1631
        %v1633 = vpop.f32.mrb[0].mxu0
        %v1634 = vpop.f32.mrb[0].mxu0
        %v1635 = vadd.f32 %v1511, %v1634
        %v1636 = vpop.f32.mrb[0].mxu0
        %1637 = vmatprep.mubr.bf16.mxu0 0
        %1638 = vmatmul.mubr.bf16.gmra.mrb[0].mxu0 %v1538
        %v1639 = vpop.f32.mrb[0].mxu0
        %v1640 = vadd.f32 %v1511, %v1639
        %v1641 = vpop.f32.mrb[0].mxu0
        %v1642 = vpop.f32.mrb[0].mxu0
        %v1643 = vadd.f32 %v1511, %v1642
        %v1644 = vpop.f32.mrb[0].mxu0
        %1645 = vmatprep.mubr.bf16.mxu0 0
        %1646 = vmatmul.mubr.bf16.gmra.mrb[0].mxu0 %v1541
        %v1647 = vpop.f32.mrb[0].mxu0
        %v1648 = vadd.f32 %v1511, %v1647
        %v1649 = vpop.f32.mrb[0].mxu0
        %v1650 = vpop.f32.mrb[0].mxu0
        %v1651 = vadd.f32 %v1511, %v1650
        %v1652 = vpop.f32.mrb[0].mxu0
        %1653 = vmatprep.mubr.bf16.mxu0 0
        %1654 = vmatmul.mubr.bf16.gmra.mrb[0].mxu0 %v1544
        %v1655 = vpop.f32.mrb[0].mxu0
        %v1656 = vadd.f32 %v1511, %v1655
        %v1657 = vpop.f32.mrb[0].mxu0
        %v1658 = vpop.f32.mrb[0].mxu0
        %v1659 = vadd.f32 %v1511, %v1658
        %v1660 = vpop.f32.mrb[0].mxu0
        %1661 = vmatprep.mubr.bf16.mxu0 0
        %1662 = vmatmul.mubr.bf16.gmra.mrb[0].mxu0 %v1547
        %v1663 = vpop.f32.mrb[0].mxu0
        %v1664 = vadd.f32 %v1511, %v1663
        %v1665 = vpop.f32.mrb[0].mxu0
        %v1666 = vpop.f32.mrb[0].mxu0
        %v1667 = vadd.f32 %v1511, %v1666
        %v1668 = vpop.f32.mrb[0].mxu0
        %1669 = vmatprep.mubr.bf16.mxu0 0
        %1670 = vmatmul.mubr.bf16.gmra.mrb[0].mxu0 %v1550
        %v1671 = vpop.f32.mrb[0].mxu0
        %v1672 = vadd.f32 %v1511, %v1671
        %v1673 = vpop.f32.mrb[0].mxu0
        %v1674 = vpop.f32.mrb[0].mxu0
        %v1675 = vadd.f32 %v1511, %v1674
        %v1676 = vpop.f32.mrb[0].mxu0
        %1677 = vmatprep.mubr.bf16.mxu0 0
        %1678 = vmatmul.mubr.bf16.gmra.mrb[0].mxu0 %v1553
        %v1679 = vpop.f32.mrb[0].mxu0
        %v1680 = vadd.f32 %v1511, %v1679
        %v1681 = vpop.f32.mrb[0].mxu0
        %v1682 = vpop.f32.mrb[0].mxu0
        %v1683 = vadd.f32 %v1511, %v1682
        %v1684 = vpop.f32.mrb[0].mxu0
        %1685 = vmatprep.mubr.bf16.mxu0 0
        %1686 = vmatmul.mubr.bf16.gmra.mrb[0].mxu0 %v1556
        %v1687 = vpop.f32.mrb[0].mxu0
        %v1688 = vadd.f32 %v1511, %v1687
        %v1689 = vpop.f32.mrb[0].mxu0
        %v1690 = vpop.f32.mrb[0].mxu0
        %v1691 = vadd.f32 %v1511, %v1690
        %v1692 = vpop.f32.mrb[0].mxu0
        %1693 = vmatprep.mubr.bf16.mxu0 0
        %1694 = vmatmul.mubr.bf16.gmra.mrb[0].mxu0 %v1559
        %v1695 = vpop.f32.mrb[0].mxu0
        %v1696 = vadd.f32 %v1511, %v1695
        %v1697 = vpop.f32.mrb[0].mxu0
        %v1698 = vpop.f32.mrb[0].mxu0
        %v1699 = vadd.f32 %v1511, %v1698
        %v1700 = vpop.f32.mrb[0].mxu0
        %1701 = vmatprep.mubr.bf16.mxu0 0
        %1702 = vmatmul.mubr.bf16.gmra.mrb[0].mxu0 %v1562
        %v1703 = vpop.f32.mrb[0].mxu0
        %v1704 = vadd.f32 %v1511, %v1703
        %v1705 = vpop.f32.mrb[0].mxu0
        %v1706 = vpop.f32.mrb[0].mxu0
        %v1707 = vadd.f32 %v1511, %v1706
        %v1708 = vpop.f32.mrb[0].mxu0
        %1709 = vmatprep.mubr.bf16.mxu0 0
        %1710 = vmatmul.mubr.bf16.gmra.mrb[0].mxu0 %v1565
        %v1711 = vpop.f32.mrb[0].mxu0
        %v1712 = vadd.f32 %v1511, %v1711
        %v1713 = vpop.f32.mrb[0].mxu0
        %v1714 = vpop.f32.mrb[0].mxu0
        %v1715 = vadd.f32 %v1511, %v1714
        %v1716 = vpop.f32.mrb[0].mxu0
        %1717 = vmatprep.mubr.bf16.mxu0 0
        %1718 = vmatmul.mubr.bf16.gmra.mrb[0].mxu0 %v1568
        %v1719 = vpop.f32.mrb[0].mxu0
        %v1720 = vadd.f32 %v1511, %v1719
        %v1721 = vpop.f32.mrb[0].mxu0
        %v1722 = vpop.f32.mrb[0].mxu0
        %v1723 = vadd.f32 %v1511, %v1722
        %v1724 = vpop.f32.mrb[0].mxu0
        %1725 = vmatprep.mubr.bf16.mxu0 0
        %1726 = vmatmul.mubr.bf16.gmra.mrb[0].mxu0 %v1571
        %v1727 = vpop.f32.mrb[0].mxu0
        %v1728 = vadd.f32 %v1511, %v1727
        %v1729 = vpop.f32.mrb[0].mxu0
        %v1730 = vpop.f32.mrb[0].mxu0
        %v1731 = vadd.f32 %v1511, %v1730
        %v1732 = vpop.f32.mrb[0].mxu0
        %1733 = vdwg.mxu0
        %v1734 = vpack.c.bf16 %v1611, %v1608
        %v1735 = vpack.c.bf16 %v1619, %v1616
        %v1736 = vpack.c.bf16 %v1627, %v1624
        %v1737 = vpack.c.bf16 %v1635, %v1632
        %v1738 = vpack.c.bf16 %v1643, %v1640
        %v1739 = vpack.c.bf16 %v1651, %v1648
        %v1740 = vpack.c.bf16 %v1659, %v1656
        %v1741 = vpack.c.bf16 %v1667, %v1664
        %v1742 = vpack.c.bf16 %v1675, %v1672
        %v1743 = vpack.c.bf16 %v1683, %v1680
        %v1744 = vpack.c.bf16 %v1691, %v1688
        %v1745 = vpack.c.bf16 %v1699, %v1696
        %v1746 = vpack.c.bf16 %v1707, %v1704
        %v1747 = vpack.c.bf16 %v1715, %v1712
        %v1748 = vpack.c.bf16 %v1723, %v1720
        %v1749 = vpack.c.bf16 %v1731, %v1728
        %v1750 = vld [vmem:[#allocation7] sm:$0xff]
        %v1751 = vld [vmem:[#allocation7 + $0x8] sm:$0xff]
        %v1752 = vld [vmem:[#allocation7 + $0x10] sm:$0xff]
        %v1753 = vld [vmem:[#allocation7 + $0x18] sm:$0xff]
        %v1754 = vld [vmem:[#allocation7 + $0x20] sm:$0xff]
        %v1755 = vld [vmem:[#allocation7 + $0x28] sm:$0xff]
        %v1756 = vld [vmem:[#allocation7 + $0x30] sm:$0xff]
        %v1757 = vld [vmem:[#allocation7 + $0x38] sm:$0xff]
        %v1758 = vld [vmem:[#allocation7 + $0x40] sm:$0xff]
        %v1759 = vld [vmem:[#allocation7 + $0x48] sm:$0xff]
        %v1760 = vld [vmem:[#allocation7 + $0x50] sm:$0xff]
        %v1761 = vld [vmem:[#allocation7 + $0x58] sm:$0xff]
        %v1762 = vld [vmem:[#allocation7 + $0x60] sm:$0xff]
        %v1763 = vld [vmem:[#allocation7 + $0x68] sm:$0xff]
        %v1764 = vld [vmem:[#allocation7 + $0x70] sm:$0xff]
        %v1765 = vld [vmem:[#allocation7 + $0x78] sm:$0xff]
        %1774 = vrot.lane.b32.xlu0 %v1734, 96
        %v1775 = vpop.permute.xlu0 %1774
        %1776 = vrot.lane.b32.xlu0 %v1735, 96
        %v1777 = vpop.permute.xlu0 %1776
        %1778 = vrot.lane.b32.xlu0 %v1736, 96
        %v1779 = vpop.permute.xlu0 %1778
        %1780 = vrot.lane.b32.xlu0 %v1737, 96
        %v1781 = vpop.permute.xlu0 %1780
        %1782 = vrot.lane.b32.xlu0 %v1738, 96
        %v1783 = vpop.permute.xlu0 %1782
        %1784 = vrot.lane.b32.xlu0 %v1739, 96
        %v1785 = vpop.permute.xlu0 %1784
        %1786 = vrot.lane.b32.xlu0 %v1740, 96
        %v1787 = vpop.permute.xlu0 %1786
        %1788 = vrot.lane.b32.xlu0 %v1741, 96
        %v1789 = vpop.permute.xlu0 %1788
        %vm1790 = vcmask 64512
        %v1792 = vsel %vm1790, %v1734, 0
        %v1795 = vsel %vm1790, %v1735, 0
        %v1798 = vsel %vm1790, %v1736, 0
        %v1801 = vsel %vm1790, %v1737, 0
        %v1804 = vsel %vm1790, %v1738, 0
        %v1807 = vsel %vm1790, %v1739, 0
        %v1810 = vsel %vm1790, %v1740, 0
        %v1813 = vsel %vm1790, %v1741, 0
        %v1816 = vsel %vm1790, %v1775, 0
        %v1819 = vsel %vm1790, %v1777, 0
        %v1822 = vsel %vm1790, %v1779, 0
        %v1825 = vsel %vm1790, %v1781, 0
        %v1828 = vsel %vm1790, %v1783, 0
        %v1831 = vsel %vm1790, %v1785, 0
        %v1834 = vsel %vm1790, %v1787, 0
        %v1837 = vsel %vm1790, %v1789, 0
        %1839 = vmatprep.subr.bf16.mxu0 0
        %1840 = vmatpush1.bf16.xpose.msra.mxu0 %v1816
        %1841 = vmatprep.subr.bf16.mxu0 0
        %1842 = vmatpush1.bf16.xpose.msra.mxu0 %v1819
        %1843 = vmatprep.subr.bf16.mxu0 0
        %1844 = vmatpush1.bf16.xpose.msra.mxu0 %v1822
        %1845 = vmatprep.subr.bf16.mxu0 0
        %1846 = vmatpush1.bf16.xpose.msra.mxu0 %v1825
        %1847 = vmatprep.subr.bf16.mxu0 0
        %1848 = vmatpush1.bf16.xpose.msra.mxu0 %v1828
        %1849 = vmatprep.subr.bf16.mxu0 0
        %1850 = vmatpush1.bf16.xpose.msra.mxu0 %v1831
        %1851 = vmatprep.subr.bf16.mxu0 0
        %1852 = vmatpush1.bf16.xpose.msra.mxu0 %v1834
        %1853 = vmatprep.subr.bf16.mxu0 0
        %1854 = vmatpush1.bf16.xpose.msra.mxu0 %v1837
        %1855 = vmatprep.subr.bf16.mxu0 0
        %1856 = vmatpush1.bf16.xpose.msra.mxu0 0
        %1857 = vmatprep.subr.bf16.mxu0 0
        %1858 = vmatpush1.bf16.xpose.msra.mxu0 0
        %1859 = vmatprep.subr.bf16.mxu0 0
        %1860 = vmatpush1.bf16.xpose.msra.mxu0 0
        %1861 = vmatprep.subr.bf16.mxu0 0
        %1862 = vmatpush1.bf16.xpose.msra.mxu0 0
        %1863 = vmatprep.subr.bf16.mxu0 0
        %1864 = vmatpush1.bf16.xpose.msra.mxu0 0
        %1865 = vmatprep.subr.bf16.mxu0 0
        %1866 = vmatpush1.bf16.xpose.msra.mxu0 0
        %1867 = vmatprep.subr.bf16.mxu0 0
        %1868 = vmatpush1.bf16.xpose.msra.mxu0 0
        %1869 = vmatprep.subr.bf16.mxu0 0
        %1870 = vmatpush1.bf16.xpose.msra.mxu0 0
        %1871 = vmatprep.mubr.bf16.mxu0 0
        %1872 = vmatmul.mubr.bf16.gmra.mrb[0].mxu0 %v1792
        %v1873 = vpop.f32.mrb[0].mxu0
        %v1874 = vadd.f32 %v1750, %v1873
        %v1875 = vpop.f32.mrb[0].mxu0
        %v1876 = vpop.f32.mrb[0].mxu0
        %v1877 = vadd.f32 %v1751, %v1876
        %v1878 = vpop.f32.mrb[0].mxu0
        %1879 = vmatprep.mubr.bf16.mxu0 0
        %1880 = vmatmul.mubr.bf16.gmra.mrb[0].mxu0 %v1795
        %v1881 = vpop.f32.mrb[0].mxu0
        %v1882 = vadd.f32 %v1752, %v1881
        %v1883 = vpop.f32.mrb[0].mxu0
        %v1884 = vpop.f32.mrb[0].mxu0
        %v1885 = vadd.f32 %v1753, %v1884
        %v1886 = vpop.f32.mrb[0].mxu0
        %1887 = vmatprep.mubr.bf16.mxu0 0
        %1888 = vmatmul.mubr.bf16.gmra.mrb[0].mxu0 %v1798
        %v1889 = vpop.f32.mrb[0].mxu0
        %v1890 = vadd.f32 %v1754, %v1889
        %v1891 = vpop.f32.mrb[0].mxu0
        %v1892 = vpop.f32.mrb[0].mxu0
        %v1893 = vadd.f32 %v1755, %v1892
        %v1894 = vpop.f32.mrb[0].mxu0
        %1895 = vmatprep.mubr.bf16.mxu0 0
        %1896 = vmatmul.mubr.bf16.gmra.mrb[0].mxu0 %v1801
        %v1897 = vpop.f32.mrb[0].mxu0
        %v1898 = vadd.f32 %v1756, %v1897
        %v1899 = vpop.f32.mrb[0].mxu0
        %v1900 = vpop.f32.mrb[0].mxu0
        %v1901 = vadd.f32 %v1757, %v1900
        %v1902 = vpop.f32.mrb[0].mxu0
        %1903 = vmatprep.mubr.bf16.mxu0 0
        %1904 = vmatmul.mubr.bf16.gmra.mrb[0].mxu0 %v1804
        %v1905 = vpop.f32.mrb[0].mxu0
        %v1906 = vadd.f32 %v1758, %v1905
        %v1907 = vpop.f32.mrb[0].mxu0
        %v1908 = vpop.f32.mrb[0].mxu0
        %v1909 = vadd.f32 %v1759, %v1908
        %v1910 = vpop.f32.mrb[0].mxu0
        %1911 = vmatprep.mubr.bf16.mxu0 0
        %1912 = vmatmul.mubr.bf16.gmra.mrb[0].mxu0 %v1807
        %v1913 = vpop.f32.mrb[0].mxu0
        %v1914 = vadd.f32 %v1760, %v1913
        %v1915 = vpop.f32.mrb[0].mxu0
        %v1916 = vpop.f32.mrb[0].mxu0
        %v1917 = vadd.f32 %v1761, %v1916
        %v1918 = vpop.f32.mrb[0].mxu0
        %1919 = vmatprep.mubr.bf16.mxu0 0
        %1920 = vmatmul.mubr.bf16.gmra.mrb[0].mxu0 %v1810
        %v1921 = vpop.f32.mrb[0].mxu0
        %v1922 = vadd.f32 %v1762, %v1921
        %v1923 = vpop.f32.mrb[0].mxu0
        %v1924 = vpop.f32.mrb[0].mxu0
        %v1925 = vadd.f32 %v1763, %v1924
        %v1926 = vpop.f32.mrb[0].mxu0
        %1927 = vmatprep.mubr.bf16.mxu0 0
        %1928 = vmatmul.mubr.bf16.gmra.mrb[0].mxu0 %v1813
        %v1929 = vpop.f32.mrb[0].mxu0
        %v1930 = vadd.f32 %v1764, %v1929
        %v1931 = vpop.f32.mrb[0].mxu0
        %v1932 = vpop.f32.mrb[0].mxu0
        %v1933 = vadd.f32 %v1765, %v1932
        %v1934 = vpop.f32.mrb[0].mxu0
        %1935 = vdwg.mxu0
        %1944 = vrot.lane.b32.xlu0 %v1742, 96
        %v1945 = vpop.permute.xlu0 %1944
        %1946 = vrot.lane.b32.xlu0 %v1743, 96
        %v1947 = vpop.permute.xlu0 %1946
        %1948 = vrot.lane.b32.xlu0 %v1744, 96
        %v1949 = vpop.permute.xlu0 %1948
        %1950 = vrot.lane.b32.xlu0 %v1745, 96
        %v1951 = vpop.permute.xlu0 %1950
        %1952 = vrot.lane.b32.xlu0 %v1746, 96
        %v1953 = vpop.permute.xlu0 %1952
        %1954 = vrot.lane.b32.xlu0 %v1747, 96
        %v1955 = vpop.permute.xlu0 %1954
        %1956 = vrot.lane.b32.xlu0 %v1748, 96
        %v1957 = vpop.permute.xlu0 %1956
        %1958 = vrot.lane.b32.xlu0 %v1749, 96
        %v1959 = vpop.permute.xlu0 %1958
        %v1961 = vsel %vm1790, %v1742, 0
        %v1964 = vsel %vm1790, %v1743, 0
        %v1967 = vsel %vm1790, %v1744, 0
        %v1970 = vsel %vm1790, %v1745, 0
        %v1973 = vsel %vm1790, %v1746, 0
        %v1976 = vsel %vm1790, %v1747, 0
        %v1979 = vsel %vm1790, %v1748, 0
        %v1982 = vsel %vm1790, %v1749, 0
        %v1985 = vsel %vm1790, %v1945, 0
        %v1988 = vsel %vm1790, %v1947, 0
        %v1991 = vsel %vm1790, %v1949, 0
        %v1994 = vsel %vm1790, %v1951, 0
        %v1997 = vsel %vm1790, %v1953, 0
        %v2000 = vsel %vm1790, %v1955, 0
        %v2003 = vsel %vm1790, %v1957, 0
        %v2006 = vsel %vm1790, %v1959, 0
        %2008 = vmatprep.subr.bf16.mxu0 0
        %2009 = vmatpush1.bf16.xpose.msra.mxu0 %v1985
        %2010 = vmatprep.subr.bf16.mxu0 0
        %2011 = vmatpush1.bf16.xpose.msra.mxu0 %v1988
        %2012 = vmatprep.subr.bf16.mxu0 0
        %2013 = vmatpush1.bf16.xpose.msra.mxu0 %v1991
        %2014 = vmatprep.subr.bf16.mxu0 0
        %2015 = vmatpush1.bf16.xpose.msra.mxu0 %v1994
        %2016 = vmatprep.subr.bf16.mxu0 0
        %2017 = vmatpush1.bf16.xpose.msra.mxu0 %v1997
        %2018 = vmatprep.subr.bf16.mxu0 0
        %2019 = vmatpush1.bf16.xpose.msra.mxu0 %v2000
        %2020 = vmatprep.subr.bf16.mxu0 0
        %2021 = vmatpush1.bf16.xpose.msra.mxu0 %v2003
        %2022 = vmatprep.subr.bf16.mxu0 0
        %2023 = vmatpush1.bf16.xpose.msra.mxu0 %v2006
        %2024 = vmatprep.subr.bf16.mxu0 0
        %2025 = vmatpush1.bf16.xpose.msra.mxu0 0
        %2026 = vmatprep.subr.bf16.mxu0 0
        %2027 = vmatpush1.bf16.xpose.msra.mxu0 0
        %2028 = vmatprep.subr.bf16.mxu0 0
        %2029 = vmatpush1.bf16.xpose.msra.mxu0 0
        %2030 = vmatprep.subr.bf16.mxu0 0
        %2031 = vmatpush1.bf16.xpose.msra.mxu0 0
        %2032 = vmatprep.subr.bf16.mxu0 0
        %2033 = vmatpush1.bf16.xpose.msra.mxu0 0
        %2034 = vmatprep.subr.bf16.mxu0 0
        %2035 = vmatpush1.bf16.xpose.msra.mxu0 0
        %2036 = vmatprep.subr.bf16.mxu0 0
        %2037 = vmatpush1.bf16.xpose.msra.mxu0 0
        %2038 = vmatprep.subr.bf16.mxu0 0
        %2039 = vmatpush1.bf16.xpose.msra.mxu0 0
        %2040 = vmatprep.mubr.bf16.mxu0 0
        %2041 = vmatmul.mubr.bf16.gmra.mrb[0].mxu0 %v1961
        %v2042 = vpop.f32.mrb[0].mxu0
        %v2043 = vadd.f32 %v1750, %v2042
        %v2044 = vpop.f32.mrb[0].mxu0
        %v2045 = vpop.f32.mrb[0].mxu0
        %v2046 = vadd.f32 %v1751, %v2045
        %v2047 = vpop.f32.mrb[0].mxu0
        %2048 = vmatprep.mubr.bf16.mxu0 0
        %2049 = vmatmul.mubr.bf16.gmra.mrb[0].mxu0 %v1964
        %v2050 = vpop.f32.mrb[0].mxu0
        %v2051 = vadd.f32 %v1752, %v2050
        %v2052 = vpop.f32.mrb[0].mxu0
        %v2053 = vpop.f32.mrb[0].mxu0
        %v2054 = vadd.f32 %v1753, %v2053
        %v2055 = vpop.f32.mrb[0].mxu0
        %2056 = vmatprep.mubr.bf16.mxu0 0
        %2057 = vmatmul.mubr.bf16.gmra.mrb[0].mxu0 %v1967
        %v2058 = vpop.f32.mrb[0].mxu0
        %v2059 = vadd.f32 %v1754, %v2058
        %v2060 = vpop.f32.mrb[0].mxu0
        %v2061 = vpop.f32.mrb[0].mxu0
        %v2062 = vadd.f32 %v1755, %v2061
        %v2063 = vpop.f32.mrb[0].mxu0
        %2064 = vmatprep.mubr.bf16.mxu0 0
        %2065 = vmatmul.mubr.bf16.gmra.mrb[0].mxu0 %v1970
        %v2066 = vpop.f32.mrb[0].mxu0
        %v2067 = vadd.f32 %v1756, %v2066
        %v2068 = vpop.f32.mrb[0].mxu0
        %v2069 = vpop.f32.mrb[0].mxu0
        %v2070 = vadd.f32 %v1757, %v2069
        %v2071 = vpop.f32.mrb[0].mxu0
        %2072 = vmatprep.mubr.bf16.mxu0 0
        %2073 = vmatmul.mubr.bf16.gmra.mrb[0].mxu0 %v1973
        %v2074 = vpop.f32.mrb[0].mxu0
        %v2075 = vadd.f32 %v1758, %v2074
        %v2076 = vpop.f32.mrb[0].mxu0
        %v2077 = vpop.f32.mrb[0].mxu0
        %v2078 = vadd.f32 %v1759, %v2077
        %v2079 = vpop.f32.mrb[0].mxu0
        %2080 = vmatprep.mubr.bf16.mxu0 0
        %2081 = vmatmul.mubr.bf16.gmra.mrb[0].mxu0 %v1976
        %v2082 = vpop.f32.mrb[0].mxu0
        %v2083 = vadd.f32 %v1760, %v2082
        %v2084 = vpop.f32.mrb[0].mxu0
        %v2085 = vpop.f32.mrb[0].mxu0
        %v2086 = vadd.f32 %v1761, %v2085
        %v2087 = vpop.f32.mrb[0].mxu0
        %2088 = vmatprep.mubr.bf16.mxu0 0
        %2089 = vmatmul.mubr.bf16.gmra.mrb[0].mxu0 %v1979
        %v2090 = vpop.f32.mrb[0].mxu0
        %v2091 = vadd.f32 %v1762, %v2090
        %v2092 = vpop.f32.mrb[0].mxu0
        %v2093 = vpop.f32.mrb[0].mxu0
        %v2094 = vadd.f32 %v1763, %v2093
        %v2095 = vpop.f32.mrb[0].mxu0
        %2096 = vmatprep.mubr.bf16.mxu0 0
        %2097 = vmatmul.mubr.bf16.gmra.mrb[0].mxu0 %v1982
        %v2098 = vpop.f32.mrb[0].mxu0
        %v2099 = vadd.f32 %v1764, %v2098
        %v2100 = vpop.f32.mrb[0].mxu0
        %v2101 = vpop.f32.mrb[0].mxu0
        %v2102 = vadd.f32 %v1765, %v2101
        %v2103 = vpop.f32.mrb[0].mxu0
        %2104 = vdwg.mxu0
        %2105 = vmax.xlane.f32.xlu0 %v1874
        %v2106 = vpop.xlane.xlu0 %2105
        %2107 = vmax.xlane.f32.xlu0 %v1877
        %v2108 = vpop.xlane.xlu0 %2107
        %2109 = vmax.xlane.f32.xlu0 %v1882
        %v2110 = vpop.xlane.xlu0 %2109
        %2111 = vmax.xlane.f32.xlu0 %v1885
        %v2112 = vpop.xlane.xlu0 %2111
        %2113 = vmax.xlane.f32.xlu0 %v1890
        %v2114 = vpop.xlane.xlu0 %2113
        %2115 = vmax.xlane.f32.xlu0 %v1893
        %v2116 = vpop.xlane.xlu0 %2115
        %2117 = vmax.xlane.f32.xlu0 %v1898
        %v2118 = vpop.xlane.xlu0 %2117
        %2119 = vmax.xlane.f32.xlu0 %v1901
        %v2120 = vpop.xlane.xlu0 %2119
        %2121 = vmax.xlane.f32.xlu0 %v1906
        %v2122 = vpop.xlane.xlu0 %2121
        %2123 = vmax.xlane.f32.xlu0 %v1909
        %v2124 = vpop.xlane.xlu0 %2123
        %2125 = vmax.xlane.f32.xlu0 %v1914
        %v2126 = vpop.xlane.xlu0 %2125
        %2127 = vmax.xlane.f32.xlu0 %v1917
        %v2128 = vpop.xlane.xlu0 %2127
        %2129 = vmax.xlane.f32.xlu0 %v1922
        %v2130 = vpop.xlane.xlu0 %2129
        %2131 = vmax.xlane.f32.xlu0 %v1925
        %v2132 = vpop.xlane.xlu0 %2131
        %2133 = vmax.xlane.f32.xlu0 %v1930
        %v2134 = vpop.xlane.xlu0 %2133
        %2135 = vmax.xlane.f32.xlu0 %v1933
        %v2136 = vpop.xlane.xlu0 %2135
        %2137 = vmax.xlane.f32.xlu0 %v2043
        %v2138 = vpop.xlane.xlu0 %2137
        %2139 = vmax.xlane.f32.xlu0 %v2046
        %v2140 = vpop.xlane.xlu0 %2139
        %2141 = vmax.xlane.f32.xlu0 %v2051
        %v2142 = vpop.xlane.xlu0 %2141
        %2143 = vmax.xlane.f32.xlu0 %v2054
        %v2144 = vpop.xlane.xlu0 %2143
        %2145 = vmax.xlane.f32.xlu0 %v2059
        %v2146 = vpop.xlane.xlu0 %2145
        %2147 = vmax.xlane.f32.xlu0 %v2062
        %v2148 = vpop.xlane.xlu0 %2147
        %2149 = vmax.xlane.f32.xlu0 %v2067
        %v2150 = vpop.xlane.xlu0 %2149
        %2151 = vmax.xlane.f32.xlu0 %v2070
        %v2152 = vpop.xlane.xlu0 %2151
        %2153 = vmax.xlane.f32.xlu0 %v2075
        %v2154 = vpop.xlane.xlu0 %2153
        %2155 = vmax.xlane.f32.xlu0 %v2078
        %v2156 = vpop.xlane.xlu0 %2155
        %2157 = vmax.xlane.f32.xlu0 %v2083
        %v2158 = vpop.xlane.xlu0 %2157
        %2159 = vmax.xlane.f32.xlu0 %v2086
        %v2160 = vpop.xlane.xlu0 %2159
        %2161 = vmax.xlane.f32.xlu0 %v2091
        %v2162 = vpop.xlane.xlu0 %2161
        %2163 = vmax.xlane.f32.xlu0 %v2094
        %v2164 = vpop.xlane.xlu0 %2163
        %2165 = vmax.xlane.f32.xlu0 %v2099
        %v2166 = vpop.xlane.xlu0 %2165
        %2167 = vmax.xlane.f32.xlu0 %v2102
        %v2168 = vpop.xlane.xlu0 %2167
        %v2169 = vsub.f32 %v1874, %v2106
        %v2170 = vsub.f32 %v1877, %v2108
        %v2171 = vsub.f32 %v1882, %v2110
        %v2172 = vsub.f32 %v1885, %v2112
        %v2173 = vsub.f32 %v1890, %v2114
        %v2174 = vsub.f32 %v1893, %v2116
        %v2175 = vsub.f32 %v1898, %v2118
        %v2176 = vsub.f32 %v1901, %v2120
        %v2177 = vsub.f32 %v1906, %v2122
        %v2178 = vsub.f32 %v1909, %v2124
        %v2179 = vsub.f32 %v1914, %v2126
        %v2180 = vsub.f32 %v1917, %v2128
        %v2181 = vsub.f32 %v1922, %v2130
        %v2182 = vsub.f32 %v1925, %v2132
        %v2183 = vsub.f32 %v1930, %v2134
        %v2184 = vsub.f32 %v1933, %v2136
        %v2185 = vsub.f32 %v2043, %v2138
        %v2186 = vsub.f32 %v2046, %v2140
        %v2187 = vsub.f32 %v2051, %v2142
        %v2188 = vsub.f32 %v2054, %v2144
        %v2189 = vsub.f32 %v2059, %v2146
        %v2190 = vsub.f32 %v2062, %v2148
        %v2191 = vsub.f32 %v2067, %v2150
        %v2192 = vsub.f32 %v2070, %v2152
        %v2193 = vsub.f32 %v2075, %v2154
        %v2194 = vsub.f32 %v2078, %v2156
        %v2195 = vsub.f32 %v2083, %v2158
        %v2196 = vsub.f32 %v2086, %v2160
        %v2197 = vsub.f32 %v2091, %v2162
        %v2198 = vsub.f32 %v2094, %v2164
        %v2199 = vsub.f32 %v2099, %v2166
        %v2200 = vsub.f32 %v2102, %v2168
        %v2201 = vmul.f32 %v2169, 1.442695
        %v2202 = vpow.pop %v2201
        %v2203 = vmul.f32 %v2170, 1.442695
        %v2204 = vpow.pop %v2203
        %v2205 = vmul.f32 %v2171, 1.442695
        %v2206 = vpow.pop %v2205
        %v2207 = vmul.f32 %v2172, 1.442695
        %v2208 = vpow.pop %v2207
        %v2209 = vmul.f32 %v2173, 1.442695
        %v2210 = vpow.pop %v2209
        %v2211 = vmul.f32 %v2174, 1.442695
        %v2212 = vpow.pop %v2211
        %v2213 = vmul.f32 %v2175, 1.442695
        %v2214 = vpow.pop %v2213
        %v2215 = vmul.f32 %v2176, 1.442695
        %v2216 = vpow.pop %v2215
        %v2217 = vmul.f32 %v2177, 1.442695
        %v2218 = vpow.pop %v2217
        %v2219 = vmul.f32 %v2178, 1.442695
        %v2220 = vpow.pop %v2219
        %v2221 = vmul.f32 %v2179, 1.442695
        %v2222 = vpow.pop %v2221
        %v2223 = vmul.f32 %v2180, 1.442695
        %v2224 = vpow.pop %v2223
        %v2225 = vmul.f32 %v2181, 1.442695
        %v2226 = vpow.pop %v2225
        %v2227 = vmul.f32 %v2182, 1.442695
        %v2228 = vpow.pop %v2227
        %v2229 = vmul.f32 %v2183, 1.442695
        %v2230 = vpow.pop %v2229
        %v2231 = vmul.f32 %v2184, 1.442695
        %v2232 = vpow.pop %v2231
        %v2233 = vmul.f32 %v2185, 1.442695
        %v2234 = vpow.pop %v2233
        %v2235 = vmul.f32 %v2186, 1.442695
        %v2236 = vpow.pop %v2235
        %v2237 = vmul.f32 %v2187, 1.442695
        %v2238 = vpow.pop %v2237
        %v2239 = vmul.f32 %v2188, 1.442695
        %v2240 = vpow.pop %v2239
        %v2241 = vmul.f32 %v2189, 1.442695
        %v2242 = vpow.pop %v2241
        %v2243 = vmul.f32 %v2190, 1.442695
        %v2244 = vpow.pop %v2243
        %v2245 = vmul.f32 %v2191, 1.442695
        %v2246 = vpow.pop %v2245
        %v2247 = vmul.f32 %v2192, 1.442695
        %v2248 = vpow.pop %v2247
        %v2249 = vmul.f32 %v2193, 1.442695
        %v2250 = vpow.pop %v2249
        %v2251 = vmul.f32 %v2194, 1.442695
        %v2252 = vpow.pop %v2251
        %v2253 = vmul.f32 %v2195, 1.442695
        %v2254 = vpow.pop %v2253
        %v2255 = vmul.f32 %v2196, 1.442695
        %v2256 = vpow.pop %v2255
        %v2257 = vmul.f32 %v2197, 1.442695
        %v2258 = vpow.pop %v2257
        %v2259 = vmul.f32 %v2198, 1.442695
        %v2260 = vpow.pop %v2259
        %v2261 = vmul.f32 %v2199, 1.442695
        %v2262 = vpow.pop %v2261
        %v2263 = vmul.f32 %v2200, 1.442695
        %v2264 = vpow.pop %v2263
        %2265 = vadd.xlane.f32.xlu0 %v2202
        %v2266 = vpop.xlane.xlu0 %2265
        %2267 = vadd.xlane.f32.xlu0 %v2204
        %v2268 = vpop.xlane.xlu0 %2267
        %2269 = vadd.xlane.f32.xlu0 %v2206
        %v2270 = vpop.xlane.xlu0 %2269
        %2271 = vadd.xlane.f32.xlu0 %v2208
        %v2272 = vpop.xlane.xlu0 %2271
        %2273 = vadd.xlane.f32.xlu0 %v2210
        %v2274 = vpop.xlane.xlu0 %2273
        %2275 = vadd.xlane.f32.xlu0 %v2212
        %v2276 = vpop.xlane.xlu0 %2275
        %2277 = vadd.xlane.f32.xlu0 %v2214
        %v2278 = vpop.xlane.xlu0 %2277
        %2279 = vadd.xlane.f32.xlu0 %v2216
        %v2280 = vpop.xlane.xlu0 %2279
        %2281 = vadd.xlane.f32.xlu0 %v2218
        %v2282 = vpop.xlane.xlu0 %2281
        %2283 = vadd.xlane.f32.xlu0 %v2220
        %v2284 = vpop.xlane.xlu0 %2283
        %2285 = vadd.xlane.f32.xlu0 %v2222
        %v2286 = vpop.xlane.xlu0 %2285
        %2287 = vadd.xlane.f32.xlu0 %v2224
        %v2288 = vpop.xlane.xlu0 %2287
        %2289 = vadd.xlane.f32.xlu0 %v2226
        %v2290 = vpop.xlane.xlu0 %2289
        %2291 = vadd.xlane.f32.xlu0 %v2228
        %v2292 = vpop.xlane.xlu0 %2291
        %2293 = vadd.xlane.f32.xlu0 %v2230
        %v2294 = vpop.xlane.xlu0 %2293
        %2295 = vadd.xlane.f32.xlu0 %v2232
        %v2296 = vpop.xlane.xlu0 %2295
        %2297 = vadd.xlane.f32.xlu0 %v2234
        %v2298 = vpop.xlane.xlu0 %2297
        %2299 = vadd.xlane.f32.xlu0 %v2236
        %v2300 = vpop.xlane.xlu0 %2299
        %2301 = vadd.xlane.f32.xlu0 %v2238
        %v2302 = vpop.xlane.xlu0 %2301
        %2303 = vadd.xlane.f32.xlu0 %v2240
        %v2304 = vpop.xlane.xlu0 %2303
        %2305 = vadd.xlane.f32.xlu0 %v2242
        %v2306 = vpop.xlane.xlu0 %2305
        %2307 = vadd.xlane.f32.xlu0 %v2244
        %v2308 = vpop.xlane.xlu0 %2307
        %2309 = vadd.xlane.f32.xlu0 %v2246
        %v2310 = vpop.xlane.xlu0 %2309
        %2311 = vadd.xlane.f32.xlu0 %v2248
        %v2312 = vpop.xlane.xlu0 %2311
        %2313 = vadd.xlane.f32.xlu0 %v2250
        %v2314 = vpop.xlane.xlu0 %2313
        %2315 = vadd.xlane.f32.xlu0 %v2252
        %v2316 = vpop.xlane.xlu0 %2315
        %2317 = vadd.xlane.f32.xlu0 %v2254
        %v2318 = vpop.xlane.xlu0 %2317
        %2319 = vadd.xlane.f32.xlu0 %v2256
        %v2320 = vpop.xlane.xlu0 %2319
        %2321 = vadd.xlane.f32.xlu0 %v2258
        %v2322 = vpop.xlane.xlu0 %2321
        %2323 = vadd.xlane.f32.xlu0 %v2260
        %v2324 = vpop.xlane.xlu0 %2323
        %2325 = vadd.xlane.f32.xlu0 %v2262
        %v2326 = vpop.xlane.xlu0 %2325
        %2327 = vadd.xlane.f32.xlu0 %v2264
        %v2328 = vpop.xlane.xlu0 %2327
        %v2329 = vrcp.pop %v2266
        %v2330 = vrcp.pop %v2268
        %v2331 = vrcp.pop %v2270
        %v2332 = vrcp.pop %v2272
        %v2333 = vrcp.pop %v2274
        %v2334 = vrcp.pop %v2276
        %v2335 = vrcp.pop %v2278
        %v2336 = vrcp.pop %v2280
        %v2337 = vrcp.pop %v2282
        %v2338 = vrcp.pop %v2284
        %v2339 = vrcp.pop %v2286
        %v2340 = vrcp.pop %v2288
        %v2341 = vrcp.pop %v2290
        %v2342 = vrcp.pop %v2292
        %v2343 = vrcp.pop %v2294
        %v2344 = vrcp.pop %v2296
        %v2345 = vrcp.pop %v2298
        %v2346 = vrcp.pop %v2300
        %v2347 = vrcp.pop %v2302
        %v2348 = vrcp.pop %v2304
        %v2349 = vrcp.pop %v2306
        %v2350 = vrcp.pop %v2308
        %v2351 = vrcp.pop %v2310
        %v2352 = vrcp.pop %v2312
        %v2353 = vrcp.pop %v2314
        %v2354 = vrcp.pop %v2316
        %v2355 = vrcp.pop %v2318
        %v2356 = vrcp.pop %v2320
        %v2357 = vrcp.pop %v2322
        %v2358 = vrcp.pop %v2324
        %v2359 = vrcp.pop %v2326
        %v2360 = vrcp.pop %v2328
        %v2361 = vmul.f32 %v2202, %v2329
        %v2362 = vmul.f32 %v2204, %v2330
        %v2363 = vmul.f32 %v2206, %v2331
        %v2364 = vmul.f32 %v2208, %v2332
        %v2365 = vmul.f32 %v2210, %v2333
        %v2366 = vmul.f32 %v2212, %v2334
        %v2367 = vmul.f32 %v2214, %v2335
        %v2368 = vmul.f32 %v2216, %v2336
        %v2369 = vmul.f32 %v2218, %v2337
        %v2370 = vmul.f32 %v2220, %v2338
        %v2371 = vmul.f32 %v2222, %v2339
        %v2372 = vmul.f32 %v2224, %v2340
        %v2373 = vmul.f32 %v2226, %v2341
        %v2374 = vmul.f32 %v2228, %v2342
        %v2375 = vmul.f32 %v2230, %v2343
        %v2376 = vmul.f32 %v2232, %v2344
        %v2377 = vmul.f32 %v2234, %v2345
        %v2378 = vmul.f32 %v2236, %v2346
        %v2379 = vmul.f32 %v2238, %v2347
        %v2380 = vmul.f32 %v2240, %v2348
        %v2381 = vmul.f32 %v2242, %v2349
        %v2382 = vmul.f32 %v2244, %v2350
        %v2383 = vmul.f32 %v2246, %v2351
        %v2384 = vmul.f32 %v2248, %v2352
        %v2385 = vmul.f32 %v2250, %v2353
        %v2386 = vmul.f32 %v2252, %v2354
        %v2387 = vmul.f32 %v2254, %v2355
        %v2388 = vmul.f32 %v2256, %v2356
        %v2389 = vmul.f32 %v2258, %v2357
        %v2390 = vmul.f32 %v2260, %v2358
        %v2391 = vmul.f32 %v2262, %v2359
        %v2392 = vmul.f32 %v2264, %v2360
        %v2393 = vpack.c.bf16 %v2362, %v2361
        %v2394 = vpack.c.bf16 %v2364, %v2363
        %v2395 = vpack.c.bf16 %v2366, %v2365
        %v2396 = vpack.c.bf16 %v2368, %v2367
        %v2397 = vpack.c.bf16 %v2370, %v2369
        %v2398 = vpack.c.bf16 %v2372, %v2371
        %v2399 = vpack.c.bf16 %v2374, %v2373
        %v2400 = vpack.c.bf16 %v2376, %v2375
        %v2401 = vpack.c.bf16 %v2378, %v2377
        %v2402 = vpack.c.bf16 %v2380, %v2379
        %v2403 = vpack.c.bf16 %v2382, %v2381
        %v2404 = vpack.c.bf16 %v2384, %v2383
        %v2405 = vpack.c.bf16 %v2386, %v2385
        %v2406 = vpack.c.bf16 %v2388, %v2387
        %v2407 = vpack.c.bf16 %v2390, %v2389
        %v2408 = vpack.c.bf16 %v2392, %v2391
        %2409 = vrot.lane.b32.xlu0 %v1734, 64
        %v2410 = vpop.permute.xlu0 %2409
        %2411 = vrot.lane.b32.xlu0 %v1735, 64
        %v2412 = vpop.permute.xlu0 %2411
        %2413 = vrot.lane.b32.xlu0 %v1736, 64
        %v2414 = vpop.permute.xlu0 %2413
        %2415 = vrot.lane.b32.xlu0 %v1737, 64
        %v2416 = vpop.permute.xlu0 %2415
        %2417 = vrot.lane.b32.xlu0 %v1738, 64
        %v2418 = vpop.permute.xlu0 %2417
        %2419 = vrot.lane.b32.xlu0 %v1739, 64
        %v2420 = vpop.permute.xlu0 %2419
        %2421 = vrot.lane.b32.xlu0 %v1740, 64
        %v2422 = vpop.permute.xlu0 %2421
        %2423 = vrot.lane.b32.xlu0 %v1741, 64
        %v2424 = vpop.permute.xlu0 %2423
        %2433 = vmatprep.subr.bf16.mxu0 0
        %2434 = vmatpush1.bf16.msra.mxu0 %v2410
        %2435 = vmatprep.subr.bf16.mxu0 0
        %2436 = vmatpush1.bf16.msra.mxu0 %v2412
        %2437 = vmatprep.subr.bf16.mxu0 0
        %2438 = vmatpush1.bf16.msra.mxu0 %v2414
        %2439 = vmatprep.subr.bf16.mxu0 0
        %2440 = vmatpush1.bf16.msra.mxu0 %v2416
        %2441 = vmatprep.subr.bf16.mxu0 0
        %2442 = vmatpush1.bf16.msra.mxu0 %v2418
        %2443 = vmatprep.subr.bf16.mxu0 0
        %2444 = vmatpush1.bf16.msra.mxu0 %v2420
        %2445 = vmatprep.subr.bf16.mxu0 0
        %2446 = vmatpush1.bf16.msra.mxu0 %v2422
        %2447 = vmatprep.subr.bf16.mxu0 0
        %2448 = vmatpush1.bf16.msra.mxu0 %v2424
        %2449 = vmatprep.subr.bf16.mxu0 0
        %2450 = vmatpush1.bf16.msra.mxu0 0
        %2451 = vmatprep.subr.bf16.mxu0 0
        %2452 = vmatpush1.bf16.msra.mxu0 0
        %2453 = vmatprep.subr.bf16.mxu0 0
        %2454 = vmatpush1.bf16.msra.mxu0 0
        %2455 = vmatprep.subr.bf16.mxu0 0
        %2456 = vmatpush1.bf16.msra.mxu0 0
        %2457 = vmatprep.subr.bf16.mxu0 0
        %2458 = vmatpush1.bf16.msra.mxu0 0
        %2459 = vmatprep.subr.bf16.mxu0 0
        %2460 = vmatpush1.bf16.msra.mxu0 0
        %2461 = vmatprep.subr.bf16.mxu0 0
        %2462 = vmatpush1.bf16.msra.mxu0 0
        %2463 = vmatprep.subr.bf16.mxu0 0
        %2464 = vmatpush1.bf16.msra.mxu0 0
        %2465 = vmatprep.mubr.bf16.mxu0 0
        %2466 = vmatmul.mubr.bf16.gmra.mrb[0].mxu0 %v2393
        %v2467 = vpop.f32.mrb[0].mxu0
        %v2468 = vadd.f32 0.0, %v2467
        %v2469 = vpop.f32.mrb[0].mxu0
        %v2470 = vpop.f32.mrb[0].mxu0
        %v2471 = vadd.f32 0.0, %v2470
        %v2472 = vpop.f32.mrb[0].mxu0
        %2473 = vmatprep.mubr.bf16.mxu0 0
        %2474 = vmatmul.mubr.bf16.gmra.mrb[0].mxu0 %v2394
        %v2475 = vpop.f32.mrb[0].mxu0
        %v2476 = vadd.f32 0.0, %v2475
        %v2477 = vpop.f32.mrb[0].mxu0
        %v2478 = vpop.f32.mrb[0].mxu0
        %v2479 = vadd.f32 0.0, %v2478
        %v2480 = vpop.f32.mrb[0].mxu0
        %2481 = vmatprep.mubr.bf16.mxu0 0
        %2482 = vmatmul.mubr.bf16.gmra.mrb[0].mxu0 %v2395
        %v2483 = vpop.f32.mrb[0].mxu0
        %v2484 = vadd.f32 0.0, %v2483
        %v2485 = vpop.f32.mrb[0].mxu0
        %v2486 = vpop.f32.mrb[0].mxu0
        %v2487 = vadd.f32 0.0, %v2486
        %v2488 = vpop.f32.mrb[0].mxu0
        %2489 = vmatprep.mubr.bf16.mxu0 0
        %2490 = vmatmul.mubr.bf16.gmra.mrb[0].mxu0 %v2396
        %v2491 = vpop.f32.mrb[0].mxu0
        %v2492 = vadd.f32 0.0, %v2491
        %v2493 = vpop.f32.mrb[0].mxu0
        %v2494 = vpop.f32.mrb[0].mxu0
        %v2495 = vadd.f32 0.0, %v2494
        %v2496 = vpop.f32.mrb[0].mxu0
        %2497 = vmatprep.mubr.bf16.mxu0 0
        %2498 = vmatmul.mubr.bf16.gmra.mrb[0].mxu0 %v2397
        %v2499 = vpop.f32.mrb[0].mxu0
        %v2500 = vadd.f32 0.0, %v2499
        %v2501 = vpop.f32.mrb[0].mxu0
        %v2502 = vpop.f32.mrb[0].mxu0
        %v2503 = vadd.f32 0.0, %v2502
        %v2504 = vpop.f32.mrb[0].mxu0
        %2505 = vmatprep.mubr.bf16.mxu0 0
        %2506 = vmatmul.mubr.bf16.gmra.mrb[0].mxu0 %v2398
        %v2507 = vpop.f32.mrb[0].mxu0
        %v2508 = vadd.f32 0.0, %v2507
        %v2509 = vpop.f32.mrb[0].mxu0
        %v2510 = vpop.f32.mrb[0].mxu0
        %v2511 = vadd.f32 0.0, %v2510
        %v2512 = vpop.f32.mrb[0].mxu0
        %2513 = vmatprep.mubr.bf16.mxu0 0
        %2514 = vmatmul.mubr.bf16.gmra.mrb[0].mxu0 %v2399
        %v2515 = vpop.f32.mrb[0].mxu0
        %v2516 = vadd.f32 0.0, %v2515
        %v2517 = vpop.f32.mrb[0].mxu0
        %v2518 = vpop.f32.mrb[0].mxu0
        %v2519 = vadd.f32 0.0, %v2518
        %v2520 = vpop.f32.mrb[0].mxu0
        %2521 = vmatprep.mubr.bf16.mxu0 0
        %2522 = vmatmul.mubr.bf16.gmra.mrb[0].mxu0 %v2400
        %v2523 = vpop.f32.mrb[0].mxu0
        %v2524 = vadd.f32 0.0, %v2523
        %v2525 = vpop.f32.mrb[0].mxu0
        %v2526 = vpop.f32.mrb[0].mxu0
        %v2527 = vadd.f32 0.0, %v2526
        %v2528 = vpop.f32.mrb[0].mxu0
        %2529 = vdwg.mxu0
        %2530 = vrot.lane.b32.xlu0 %v1742, 64
        %v2531 = vpop.permute.xlu0 %2530
        %2532 = vrot.lane.b32.xlu0 %v1743, 64
        %v2533 = vpop.permute.xlu0 %2532
        %2534 = vrot.lane.b32.xlu0 %v1744, 64
        %v2535 = vpop.permute.xlu0 %2534
        %2536 = vrot.lane.b32.xlu0 %v1745, 64
        %v2537 = vpop.permute.xlu0 %2536
        %2538 = vrot.lane.b32.xlu0 %v1746, 64
        %v2539 = vpop.permute.xlu0 %2538
        %2540 = vrot.lane.b32.xlu0 %v1747, 64
        %v2541 = vpop.permute.xlu0 %2540
        %2542 = vrot.lane.b32.xlu0 %v1748, 64
        %v2543 = vpop.permute.xlu0 %2542
        %2544 = vrot.lane.b32.xlu0 %v1749, 64
        %v2545 = vpop.permute.xlu0 %2544
        %2554 = vmatprep.subr.bf16.mxu0 0
        %2555 = vmatpush1.bf16.msra.mxu0 %v2531
        %2556 = vmatprep.subr.bf16.mxu0 0
        %2557 = vmatpush1.bf16.msra.mxu0 %v2533
        %2558 = vmatprep.subr.bf16.mxu0 0
        %2559 = vmatpush1.bf16.msra.mxu0 %v2535
        %2560 = vmatprep.subr.bf16.mxu0 0
        %2561 = vmatpush1.bf16.msra.mxu0 %v2537
        %2562 = vmatprep.subr.bf16.mxu0 0
        %2563 = vmatpush1.bf16.msra.mxu0 %v2539
        %2564 = vmatprep.subr.bf16.mxu0 0
        %2565 = vmatpush1.bf16.msra.mxu0 %v2541
        %2566 = vmatprep.subr.bf16.mxu0 0
        %2567 = vmatpush1.bf16.msra.mxu0 %v2543
        %2568 = vmatprep.subr.bf16.mxu0 0
        %2569 = vmatpush1.bf16.msra.mxu0 %v2545
        %2570 = vmatprep.subr.bf16.mxu0 0
        %2571 = vmatpush1.bf16.msra.mxu0 0
        %2572 = vmatprep.subr.bf16.mxu0 0
        %2573 = vmatpush1.bf16.msra.mxu0 0
        %2574 = vmatprep.subr.bf16.mxu0 0
        %2575 = vmatpush1.bf16.msra.mxu0 0
        %2576 = vmatprep.subr.bf16.mxu0 0
        %2577 = vmatpush1.bf16.msra.mxu0 0
        %2578 = vmatprep.subr.bf16.mxu0 0
        %2579 = vmatpush1.bf16.msra.mxu0 0
        %2580 = vmatprep.subr.bf16.mxu0 0
        %2581 = vmatpush1.bf16.msra.mxu0 0
        %2582 = vmatprep.subr.bf16.mxu0 0
        %2583 = vmatpush1.bf16.msra.mxu0 0
        %2584 = vmatprep.subr.bf16.mxu0 0
        %2585 = vmatpush1.bf16.msra.mxu0 0
        %2586 = vmatprep.mubr.bf16.mxu0 0
        %2587 = vmatmul.mubr.bf16.gmra.mrb[0].mxu0 %v2401
        %v2588 = vpop.f32.mrb[0].mxu0
        %v2589 = vadd.f32 0.0, %v2588
        %v2590 = vpop.f32.mrb[0].mxu0
        %v2591 = vpop.f32.mrb[0].mxu0
        %v2592 = vadd.f32 0.0, %v2591
        %v2593 = vpop.f32.mrb[0].mxu0
        %2594 = vmatprep.mubr.bf16.mxu0 0
        %2595 = vmatmul.mubr.bf16.gmra.mrb[0].mxu0 %v2402
        %v2596 = vpop.f32.mrb[0].mxu0
        %v2597 = vadd.f32 0.0, %v2596
        %v2598 = vpop.f32.mrb[0].mxu0
        %v2599 = vpop.f32.mrb[0].mxu0
        %v2600 = vadd.f32 0.0, %v2599
        %v2601 = vpop.f32.mrb[0].mxu0
        %2602 = vmatprep.mubr.bf16.mxu0 0
        %2603 = vmatmul.mubr.bf16.gmra.mrb[0].mxu0 %v2403
        %v2604 = vpop.f32.mrb[0].mxu0
        %v2605 = vadd.f32 0.0, %v2604
        %v2606 = vpop.f32.mrb[0].mxu0
        %v2607 = vpop.f32.mrb[0].mxu0
        %v2608 = vadd.f32 0.0, %v2607
        %v2609 = vpop.f32.mrb[0].mxu0
        %2610 = vmatprep.mubr.bf16.mxu0 0
        %2611 = vmatmul.mubr.bf16.gmra.mrb[0].mxu0 %v2404
        %v2612 = vpop.f32.mrb[0].mxu0
        %v2613 = vadd.f32 0.0, %v2612
        %v2614 = vpop.f32.mrb[0].mxu0
        %v2615 = vpop.f32.mrb[0].mxu0
        %v2616 = vadd.f32 0.0, %v2615
        %v2617 = vpop.f32.mrb[0].mxu0
        %2618 = vmatprep.mubr.bf16.mxu0 0
        %2619 = vmatmul.mubr.bf16.gmra.mrb[0].mxu0 %v2405
        %v2620 = vpop.f32.mrb[0].mxu0
        %v2621 = vadd.f32 0.0, %v2620
        %v2622 = vpop.f32.mrb[0].mxu0
        %v2623 = vpop.f32.mrb[0].mxu0
        %v2624 = vadd.f32 0.0, %v2623
        %v2625 = vpop.f32.mrb[0].mxu0
        %2626 = vmatprep.mubr.bf16.mxu0 0
        %2627 = vmatmul.mubr.bf16.gmra.mrb[0].mxu0 %v2406
        %v2628 = vpop.f32.mrb[0].mxu0
        %v2629 = vadd.f32 0.0, %v2628
        %v2630 = vpop.f32.mrb[0].mxu0
        %v2631 = vpop.f32.mrb[0].mxu0
        %v2632 = vadd.f32 0.0, %v2631
        %v2633 = vpop.f32.mrb[0].mxu0
        %2634 = vmatprep.mubr.bf16.mxu0 0
        %2635 = vmatmul.mubr.bf16.gmra.mrb[0].mxu0 %v2407
        %v2636 = vpop.f32.mrb[0].mxu0
        %v2637 = vadd.f32 0.0, %v2636
        %v2638 = vpop.f32.mrb[0].mxu0
        %v2639 = vpop.f32.mrb[0].mxu0
        %v2640 = vadd.f32 0.0, %v2639
        %v2641 = vpop.f32.mrb[0].mxu0
        %2642 = vmatprep.mubr.bf16.mxu0 0
        %2643 = vmatmul.mubr.bf16.gmra.mrb[0].mxu0 %v2408
        %v2644 = vpop.f32.mrb[0].mxu0
        %v2645 = vadd.f32 0.0, %v2644
        %v2646 = vpop.f32.mrb[0].mxu0
        %v2647 = vpop.f32.mrb[0].mxu0
        %v2648 = vadd.f32 0.0, %v2647
        %v2649 = vpop.f32.mrb[0].mxu0
        %2650 = vdwg.mxu0
        %2651 = vrot.lane.b32.xlu0 %v1734, 120
        %v2652 = vpop.permute.xlu0 %2651
        %2653 = vrot.lane.b32.xlu0 %v1735, 120
        %v2654 = vpop.permute.xlu0 %2653
        %2655 = vrot.lane.b32.xlu0 %v1736, 120
        %v2656 = vpop.permute.xlu0 %2655
        %2657 = vrot.lane.b32.xlu0 %v1737, 120
        %v2658 = vpop.permute.xlu0 %2657
        %2659 = vrot.lane.b32.xlu0 %v1738, 120
        %v2660 = vpop.permute.xlu0 %2659
        %2661 = vrot.lane.b32.xlu0 %v1739, 120
        %v2662 = vpop.permute.xlu0 %2661
        %2663 = vrot.lane.b32.xlu0 %v1740, 120
        %v2664 = vpop.permute.xlu0 %2663
        %2665 = vrot.lane.b32.xlu0 %v1741, 120
        %v2666 = vpop.permute.xlu0 %2665
        %2667 = vrot.lane.b32.xlu0 %v1734, 88
        %v2668 = vpop.permute.xlu0 %2667
        %2669 = vrot.lane.b32.xlu0 %v1735, 88
        %v2670 = vpop.permute.xlu0 %2669
        %2671 = vrot.lane.b32.xlu0 %v1736, 88
        %v2672 = vpop.permute.xlu0 %2671
        %2673 = vrot.lane.b32.xlu0 %v1737, 88
        %v2674 = vpop.permute.xlu0 %2673
        %2675 = vrot.lane.b32.xlu0 %v1738, 88
        %v2676 = vpop.permute.xlu0 %2675
        %2677 = vrot.lane.b32.xlu0 %v1739, 88
        %v2678 = vpop.permute.xlu0 %2677
        %2679 = vrot.lane.b32.xlu0 %v1740, 88
        %v2680 = vpop.permute.xlu0 %2679
        %2681 = vrot.lane.b32.xlu0 %v1741, 88
        %v2682 = vpop.permute.xlu0 %2681
        %v2684 = vsel %vm1790, %v2652, 0
        %v2687 = vsel %vm1790, %v2654, 0
        %v2690 = vsel %vm1790, %v2656, 0
        %v2693 = vsel %vm1790, %v2658, 0
        %v2696 = vsel %vm1790, %v2660, 0
        %v2699 = vsel %vm1790, %v2662, 0
        %v2702 = vsel %vm1790, %v2664, 0
        %v2705 = vsel %vm1790, %v2666, 0
        %v2708 = vsel %vm1790, %v2668, 0
        %v2711 = vsel %vm1790, %v2670, 0
        %v2714 = vsel %vm1790, %v2672, 0
        %v2717 = vsel %vm1790, %v2674, 0
        %v2720 = vsel %vm1790, %v2676, 0
        %v2723 = vsel %vm1790, %v2678, 0
        %v2726 = vsel %vm1790, %v2680, 0
        %v2729 = vsel %vm1790, %v2682, 0
        %2731 = vmatprep.subr.bf16.mxu0 0
        %2732 = vmatpush1.bf16.xpose.msra.mxu0 %v2708
        %2733 = vmatprep.subr.bf16.mxu0 0
        %2734 = vmatpush1.bf16.xpose.msra.mxu0 %v2711
        %2735 = vmatprep.subr.bf16.mxu0 0
        %2736 = vmatpush1.bf16.xpose.msra.mxu0 %v2714
        %2737 = vmatprep.subr.bf16.mxu0 0
        %2738 = vmatpush1.bf16.xpose.msra.mxu0 %v2717
        %2739 = vmatprep.subr.bf16.mxu0 0
        %2740 = vmatpush1.bf16.xpose.msra.mxu0 %v2720
        %2741 = vmatprep.subr.bf16.mxu0 0
        %2742 = vmatpush1.bf16.xpose.msra.mxu0 %v2723
        %2743 = vmatprep.subr.bf16.mxu0 0
        %2744 = vmatpush1.bf16.xpose.msra.mxu0 %v2726
        %2745 = vmatprep.subr.bf16.mxu0 0
        %2746 = vmatpush1.bf16.xpose.msra.mxu0 %v2729
        %2747 = vmatprep.subr.bf16.mxu0 0
        %2748 = vmatpush1.bf16.xpose.msra.mxu0 0
        %2749 = vmatprep.subr.bf16.mxu0 0
        %2750 = vmatpush1.bf16.xpose.msra.mxu0 0
        %2751 = vmatprep.subr.bf16.mxu0 0
        %2752 = vmatpush1.bf16.xpose.msra.mxu0 0
        %2753 = vmatprep.subr.bf16.mxu0 0
        %2754 = vmatpush1.bf16.xpose.msra.mxu0 0
        %2755 = vmatprep.subr.bf16.mxu0 0
        %2756 = vmatpush1.bf16.xpose.msra.mxu0 0
        %2757 = vmatprep.subr.bf16.mxu0 0
        %2758 = vmatpush1.bf16.xpose.msra.mxu0 0
        %2759 = vmatprep.subr.bf16.mxu0 0
        %2760 = vmatpush1.bf16.xpose.msra.mxu0 0
        %2761 = vmatprep.subr.bf16.mxu0 0
        %2762 = vmatpush1.bf16.xpose.msra.mxu0 0
        %2763 = vmatprep.mubr.bf16.mxu0 0
        %2764 = vmatmul.mubr.bf16.gmra.mrb[0].mxu0 %v2684
        %v2765 = vpop.f32.mrb[0].mxu0
        %v2766 = vadd.f32 %v1750, %v2765
        %v2767 = vpop.f32.mrb[0].mxu0
        %v2768 = vpop.f32.mrb[0].mxu0
        %v2769 = vadd.f32 %v1751, %v2768
        %v2770 = vpop.f32.mrb[0].mxu0
        %2771 = vmatprep.mubr.bf16.mxu0 0
        %2772 = vmatmul.mubr.bf16.gmra.mrb[0].mxu0 %v2687
        %v2773 = vpop.f32.mrb[0].mxu0
        %v2774 = vadd.f32 %v1752, %v2773
        %v2775 = vpop.f32.mrb[0].mxu0
        %v2776 = vpop.f32.mrb[0].mxu0
        %v2777 = vadd.f32 %v1753, %v2776
        %v2778 = vpop.f32.mrb[0].mxu0
        %2779 = vmatprep.mubr.bf16.mxu0 0
        %2780 = vmatmul.mubr.bf16.gmra.mrb[0].mxu0 %v2690
        %v2781 = vpop.f32.mrb[0].mxu0
        %v2782 = vadd.f32 %v1754, %v2781
        %v2783 = vpop.f32.mrb[0].mxu0
        %v2784 = vpop.f32.mrb[0].mxu0
        %v2785 = vadd.f32 %v1755, %v2784
        %v2786 = vpop.f32.mrb[0].mxu0
        %2787 = vmatprep.mubr.bf16.mxu0 0
        %2788 = vmatmul.mubr.bf16.gmra.mrb[0].mxu0 %v2693
        %v2789 = vpop.f32.mrb[0].mxu0
        %v2790 = vadd.f32 %v1756, %v2789
        %v2791 = vpop.f32.mrb[0].mxu0
        %v2792 = vpop.f32.mrb[0].mxu0
        %v2793 = vadd.f32 %v1757, %v2792
        %v2794 = vpop.f32.mrb[0].mxu0
        %2795 = vmatprep.mubr.bf16.mxu0 0
        %2796 = vmatmul.mubr.bf16.gmra.mrb[0].mxu0 %v2696
        %v2797 = vpop.f32.mrb[0].mxu0
        %v2798 = vadd.f32 %v1758, %v2797
        %v2799 = vpop.f32.mrb[0].mxu0
        %v2800 = vpop.f32.mrb[0].mxu0
        %v2801 = vadd.f32 %v1759, %v2800
        %v2802 = vpop.f32.mrb[0].mxu0
        %2803 = vmatprep.mubr.bf16.mxu0 0
        %2804 = vmatmul.mubr.bf16.gmra.mrb[0].mxu0 %v2699
        %v2805 = vpop.f32.mrb[0].mxu0
        %v2806 = vadd.f32 %v1760, %v2805
        %v2807 = vpop.f32.mrb[0].mxu0
        %v2808 = vpop.f32.mrb[0].mxu0
        %v2809 = vadd.f32 %v1761, %v2808
        %v2810 = vpop.f32.mrb[0].mxu0
        %2811 = vmatprep.mubr.bf16.mxu0 0
        %2812 = vmatmul.mubr.bf16.gmra.mrb[0].mxu0 %v2702
        %v2813 = vpop.f32.mrb[0].mxu0
        %v2814 = vadd.f32 %v1762, %v2813
        %v2815 = vpop.f32.mrb[0].mxu0
        %v2816 = vpop.f32.mrb[0].mxu0
        %v2817 = vadd.f32 %v1763, %v2816
        %v2818 = vpop.f32.mrb[0].mxu0
        %2819 = vmatprep.mubr.bf16.mxu0 0
        %2820 = vmatmul.mubr.bf16.gmra.mrb[0].mxu0 %v2705
        %v2821 = vpop.f32.mrb[0].mxu0
        %v2822 = vadd.f32 %v1764, %v2821
        %v2823 = vpop.f32.mrb[0].mxu0
        %v2824 = vpop.f32.mrb[0].mxu0
        %v2825 = vadd.f32 %v1765, %v2824
        %v2826 = vpop.f32.mrb[0].mxu0
        %2827 = vdwg.mxu0
        %2828 = vrot.lane.b32.xlu0 %v1742, 120
        %v2829 = vpop.permute.xlu0 %2828
        %2830 = vrot.lane.b32.xlu0 %v1743, 120
        %v2831 = vpop.permute.xlu0 %2830
        %2832 = vrot.lane.b32.xlu0 %v1744, 120
        %v2833 = vpop.permute.xlu0 %2832
        %2834 = vrot.lane.b32.xlu0 %v1745, 120
        %v2835 = vpop.permute.xlu0 %2834
        %2836 = vrot.lane.b32.xlu0 %v1746, 120
        %v2837 = vpop.permute.xlu0 %2836
        %2838 = vrot.lane.b32.xlu0 %v1747, 120
        %v2839 = vpop.permute.xlu0 %2838
        %2840 = vrot.lane.b32.xlu0 %v1748, 120
        %v2841 = vpop.permute.xlu0 %2840
        %2842 = vrot.lane.b32.xlu0 %v1749, 120
        %v2843 = vpop.permute.xlu0 %2842
        %2844 = vrot.lane.b32.xlu0 %v1742, 88
        %v2845 = vpop.permute.xlu0 %2844
        %2846 = vrot.lane.b32.xlu0 %v1743, 88
        %v2847 = vpop.permute.xlu0 %2846
        %2848 = vrot.lane.b32.xlu0 %v1744, 88
        %v2849 = vpop.permute.xlu0 %2848
        %2850 = vrot.lane.b32.xlu0 %v1745, 88
        %v2851 = vpop.permute.xlu0 %2850
        %2852 = vrot.lane.b32.xlu0 %v1746, 88
        %v2853 = vpop.permute.xlu0 %2852
        %2854 = vrot.lane.b32.xlu0 %v1747, 88
        %v2855 = vpop.permute.xlu0 %2854
        %2856 = vrot.lane.b32.xlu0 %v1748, 88
        %v2857 = vpop.permute.xlu0 %2856
        %2858 = vrot.lane.b32.xlu0 %v1749, 88
        %v2859 = vpop.permute.xlu0 %2858
        %v2861 = vsel %vm1790, %v2829, 0
        %v2864 = vsel %vm1790, %v2831, 0
        %v2867 = vsel %vm1790, %v2833, 0
        %v2870 = vsel %vm1790, %v2835, 0
        %v2873 = vsel %vm1790, %v2837, 0
        %v2876 = vsel %vm1790, %v2839, 0
        %v2879 = vsel %vm1790, %v2841, 0
        %v2882 = vsel %vm1790, %v2843, 0
        %v2885 = vsel %vm1790, %v2845, 0
        %v2888 = vsel %vm1790, %v2847, 0
        %v2891 = vsel %vm1790, %v2849, 0
        %v2894 = vsel %vm1790, %v2851, 0
        %v2897 = vsel %vm1790, %v2853, 0
        %v2900 = vsel %vm1790, %v2855, 0
        %v2903 = vsel %vm1790, %v2857, 0
        %v2906 = vsel %vm1790, %v2859, 0
        %2908 = vmatprep.subr.bf16.mxu0 0
        %2909 = vmatpush1.bf16.xpose.msra.mxu0 %v2885
        %2910 = vmatprep.subr.bf16.mxu0 0
        %2911 = vmatpush1.bf16.xpose.msra.mxu0 %v2888
        %2912 = vmatprep.subr.bf16.mxu0 0
        %2913 = vmatpush1.bf16.xpose.msra.mxu0 %v2891
        %2914 = vmatprep.subr.bf16.mxu0 0
        %2915 = vmatpush1.bf16.xpose.msra.mxu0 %v2894
        %2916 = vmatprep.subr.bf16.mxu0 0
        %2917 = vmatpush1.bf16.xpose.msra.mxu0 %v2897
        %2918 = vmatprep.subr.bf16.mxu0 0
        %2919 = vmatpush1.bf16.xpose.msra.mxu0 %v2900
        %2920 = vmatprep.subr.bf16.mxu0 0
        %2921 = vmatpush1.bf16.xpose.msra.mxu0 %v2903
        %2922 = vmatprep.subr.bf16.mxu0 0
        %2923 = vmatpush1.bf16.xpose.msra.mxu0 %v2906
        %2924 = vmatprep.subr.bf16.mxu0 0
        %2925 = vmatpush1.bf16.xpose.msra.mxu0 0
        %2926 = vmatprep.subr.bf16.mxu0 0
        %2927 = vmatpush1.bf16.xpose.msra.mxu0 0
        %2928 = vmatprep.subr.bf16.mxu0 0
        %2929 = vmatpush1.bf16.xpose.msra.mxu0 0
        %2930 = vmatprep.subr.bf16.mxu0 0
        %2931 = vmatpush1.bf16.xpose.msra.mxu0 0
        %2932 = vmatprep.subr.bf16.mxu0 0
        %2933 = vmatpush1.bf16.xpose.msra.mxu0 0
        %2934 = vmatprep.subr.bf16.mxu0 0
        %2935 = vmatpush1.bf16.xpose.msra.mxu0 0
        %2936 = vmatprep.subr.bf16.mxu0 0
        %2937 = vmatpush1.bf16.xpose.msra.mxu0 0
        %2938 = vmatprep.subr.bf16.mxu0 0
        %2939 = vmatpush1.bf16.xpose.msra.mxu0 0
        %2940 = vmatprep.mubr.bf16.mxu0 0
        %2941 = vmatmul.mubr.bf16.gmra.mrb[0].mxu0 %v2861
        %v2942 = vpop.f32.mrb[0].mxu0
        %v2943 = vadd.f32 %v1750, %v2942
        %v2944 = vpop.f32.mrb[0].mxu0
        %v2945 = vpop.f32.mrb[0].mxu0
        %v2946 = vadd.f32 %v1751, %v2945
        %v2947 = vpop.f32.mrb[0].mxu0
        %2948 = vmatprep.mubr.bf16.mxu0 0
        %2949 = vmatmul.mubr.bf16.gmra.mrb[0].mxu0 %v2864
        %v2950 = vpop.f32.mrb[0].mxu0
        %v2951 = vadd.f32 %v1752, %v2950
        %v2952 = vpop.f32.mrb[0].mxu0
        %v2953 = vpop.f32.mrb[0].mxu0
        %v2954 = vadd.f32 %v1753, %v2953
        %v2955 = vpop.f32.mrb[0].mxu0
        %2956 = vmatprep.mubr.bf16.mxu0 0
        %2957 = vmatmul.mubr.bf16.gmra.mrb[0].mxu0 %v2867
        %v2958 = vpop.f32.mrb[0].mxu0
        %v2959 = vadd.f32 %v1754, %v2958
        %v2960 = vpop.f32.mrb[0].mxu0
        %v2961 = vpop.f32.mrb[0].mxu0
        %v2962 = vadd.f32 %v1755, %v2961
        %v2963 = vpop.f32.mrb[0].mxu0
        %2964 = vmatprep.mubr.bf16.mxu0 0
        %2965 = vmatmul.mubr.bf16.gmra.mrb[0].mxu0 %v2870
        %v2966 = vpop.f32.mrb[0].mxu0
        %v2967 = vadd.f32 %v1756, %v2966
        %v2968 = vpop.f32.mrb[0].mxu0
        %v2969 = vpop.f32.mrb[0].mxu0
        %v2970 = vadd.f32 %v1757, %v2969
        %v2971 = vpop.f32.mrb[0].mxu0
        %2972 = vmatprep.mubr.bf16.mxu0 0
        %2973 = vmatmul.mubr.bf16.gmra.mrb[0].mxu0 %v2873
        %v2974 = vpop.f32.mrb[0].mxu0
        %v2975 = vadd.f32 %v1758, %v2974
        %v2976 = vpop.f32.mrb[0].mxu0
        %v2977 = vpop.f32.mrb[0].mxu0
        %v2978 = vadd.f32 %v1759, %v2977
        %v2979 = vpop.f32.mrb[0].mxu0
        %2980 = vmatprep.mubr.bf16.mxu0 0
        %2981 = vmatmul.mubr.bf16.gmra.mrb[0].mxu0 %v2876
        %v2982 = vpop.f32.mrb[0].mxu0
        %v2983 = vadd.f32 %v1760, %v2982
        %v2984 = vpop.f32.mrb[0].mxu0
        %v2985 = vpop.f32.mrb[0].mxu0
        %v2986 = vadd.f32 %v1761, %v2985
        %v2987 = vpop.f32.mrb[0].mxu0
        %2988 = vmatprep.mubr.bf16.mxu0 0
        %2989 = vmatmul.mubr.bf16.gmra.mrb[0].mxu0 %v2879
        %v2990 = vpop.f32.mrb[0].mxu0
        %v2991 = vadd.f32 %v1762, %v2990
        %v2992 = vpop.f32.mrb[0].mxu0
        %v2993 = vpop.f32.mrb[0].mxu0
        %v2994 = vadd.f32 %v1763, %v2993
        %v2995 = vpop.f32.mrb[0].mxu0
        %2996 = vmatprep.mubr.bf16.mxu0 0
        %2997 = vmatmul.mubr.bf16.gmra.mrb[0].mxu0 %v2882
        %v2998 = vpop.f32.mrb[0].mxu0
        %v2999 = vadd.f32 %v1764, %v2998
        %v3000 = vpop.f32.mrb[0].mxu0
        %v3001 = vpop.f32.mrb[0].mxu0
        %v3002 = vadd.f32 %v1765, %v3001
        %v3003 = vpop.f32.mrb[0].mxu0
        %3004 = vdwg.mxu0
        %3005 = vmax.xlane.f32.xlu0 %v2766
        %v3006 = vpop.xlane.xlu0 %3005
        %3007 = vmax.xlane.f32.xlu0 %v2769
        %v3008 = vpop.xlane.xlu0 %3007
        %3009 = vmax.xlane.f32.xlu0 %v2774
        %v3010 = vpop.xlane.xlu0 %3009
        %3011 = vmax.xlane.f32.xlu0 %v2777
        %v3012 = vpop.xlane.xlu0 %3011
        %3013 = vmax.xlane.f32.xlu0 %v2782
        %v3014 = vpop.xlane.xlu0 %3013
        %3015 = vmax.xlane.f32.xlu0 %v2785
        %v3016 = vpop.xlane.xlu0 %3015
        %3017 = vmax.xlane.f32.xlu0 %v2790
        %v3018 = vpop.xlane.xlu0 %3017
        %3019 = vmax.xlane.f32.xlu0 %v2793
        %v3020 = vpop.xlane.xlu0 %3019
        %3021 = vmax.xlane.f32.xlu0 %v2798
        %v3022 = vpop.xlane.xlu0 %3021
        %3023 = vmax.xlane.f32.xlu0 %v2801
        %v3024 = vpop.xlane.xlu0 %3023
        %3025 = vmax.xlane.f32.xlu0 %v2806
        %v3026 = vpop.xlane.xlu0 %3025
        %3027 = vmax.xlane.f32.xlu0 %v2809
        %v3028 = vpop.xlane.xlu0 %3027
        %3029 = vmax.xlane.f32.xlu0 %v2814
        %v3030 = vpop.xlane.xlu0 %3029
        %3031 = vmax.xlane.f32.xlu0 %v2817
        %v3032 = vpop.xlane.xlu0 %3031
        %3033 = vmax.xlane.f32.xlu0 %v2822
        %v3034 = vpop.xlane.xlu0 %3033
        %3035 = vmax.xlane.f32.xlu0 %v2825
        %v3036 = vpop.xlane.xlu0 %3035
        %3037 = vmax.xlane.f32.xlu0 %v2943
        %v3038 = vpop.xlane.xlu0 %3037
        %3039 = vmax.xlane.f32.xlu0 %v2946
        %v3040 = vpop.xlane.xlu0 %3039
        %3041 = vmax.xlane.f32.xlu0 %v2951
        %v3042 = vpop.xlane.xlu0 %3041
        %3043 = vmax.xlane.f32.xlu0 %v2954
        %v3044 = vpop.xlane.xlu0 %3043
        %3045 = vmax.xlane.f32.xlu0 %v2959
        %v3046 = vpop.xlane.xlu0 %3045
        %3047 = vmax.xlane.f32.xlu0 %v2962
        %v3048 = vpop.xlane.xlu0 %3047
        %3049 = vmax.xlane.f32.xlu0 %v2967
        %v3050 = vpop.xlane.xlu0 %3049
        %3051 = vmax.xlane.f32.xlu0 %v2970
        %v3052 = vpop.xlane.xlu0 %3051
        %3053 = vmax.xlane.f32.xlu0 %v2975
        %v3054 = vpop.xlane.xlu0 %3053
        %3055 = vmax.xlane.f32.xlu0 %v2978
        %v3056 = vpop.xlane.xlu0 %3055
        %3057 = vmax.xlane.f32.xlu0 %v2983
        %v3058 = vpop.xlane.xlu0 %3057
        %3059 = vmax.xlane.f32.xlu0 %v2986
        %v3060 = vpop.xlane.xlu0 %3059
        %3061 = vmax.xlane.f32.xlu0 %v2991
        %v3062 = vpop.xlane.xlu0 %3061
        %3063 = vmax.xlane.f32.xlu0 %v2994
        %v3064 = vpop.xlane.xlu0 %3063
        %3065 = vmax.xlane.f32.xlu0 %v2999
        %v3066 = vpop.xlane.xlu0 %3065
        %3067 = vmax.xlane.f32.xlu0 %v3002
        %v3068 = vpop.xlane.xlu0 %3067
        %v3069 = vsub.f32 %v2766, %v3006
        %v3070 = vsub.f32 %v2769, %v3008
        %v3071 = vsub.f32 %v2774, %v3010
        %v3072 = vsub.f32 %v2777, %v3012
        %v3073 = vsub.f32 %v2782, %v3014
        %v3074 = vsub.f32 %v2785, %v3016
        %v3075 = vsub.f32 %v2790, %v3018
        %v3076 = vsub.f32 %v2793, %v3020
        %v3077 = vsub.f32 %v2798, %v3022
        %v3078 = vsub.f32 %v2801, %v3024
        %v3079 = vsub.f32 %v2806, %v3026
        %v3080 = vsub.f32 %v2809, %v3028
        %v3081 = vsub.f32 %v2814, %v3030
        %v3082 = vsub.f32 %v2817, %v3032
        %v3083 = vsub.f32 %v2822, %v3034
        %v3084 = vsub.f32 %v2825, %v3036
        %v3085 = vsub.f32 %v2943, %v3038
        %v3086 = vsub.f32 %v2946, %v3040
        %v3087 = vsub.f32 %v2951, %v3042
        %v3088 = vsub.f32 %v2954, %v3044
        %v3089 = vsub.f32 %v2959, %v3046
        %v3090 = vsub.f32 %v2962, %v3048
        %v3091 = vsub.f32 %v2967, %v3050
        %v3092 = vsub.f32 %v2970, %v3052
        %v3093 = vsub.f32 %v2975, %v3054
        %v3094 = vsub.f32 %v2978, %v3056
        %v3095 = vsub.f32 %v2983, %v3058
        %v3096 = vsub.f32 %v2986, %v3060
        %v3097 = vsub.f32 %v2991, %v3062
        %v3098 = vsub.f32 %v2994, %v3064
        %v3099 = vsub.f32 %v2999, %v3066
        %v3100 = vsub.f32 %v3002, %v3068
        %v3101 = vmul.f32 %v3069, 1.442695
        %v3102 = vpow.pop %v3101
        %v3103 = vmul.f32 %v3070, 1.442695
        %v3104 = vpow.pop %v3103
        %v3105 = vmul.f32 %v3071, 1.442695
        %v3106 = vpow.pop %v3105
        %v3107 = vmul.f32 %v3072, 1.442695
        %v3108 = vpow.pop %v3107
        %v3109 = vmul.f32 %v3073, 1.442695
        %v3110 = vpow.pop %v3109
        %v3111 = vmul.f32 %v3074, 1.442695
        %v3112 = vpow.pop %v3111
        %v3113 = vmul.f32 %v3075, 1.442695
        %v3114 = vpow.pop %v3113
        %v3115 = vmul.f32 %v3076, 1.442695
        %v3116 = vpow.pop %v3115
        %v3117 = vmul.f32 %v3077, 1.442695
        %v3118 = vpow.pop %v3117
        %v3119 = vmul.f32 %v3078, 1.442695
        %v3120 = vpow.pop %v3119
        %v3121 = vmul.f32 %v3079, 1.442695
        %v3122 = vpow.pop %v3121
        %v3123 = vmul.f32 %v3080, 1.442695
        %v3124 = vpow.pop %v3123
        %v3125 = vmul.f32 %v3081, 1.442695
        %v3126 = vpow.pop %v3125
        %v3127 = vmul.f32 %v3082, 1.442695
        %v3128 = vpow.pop %v3127
        %v3129 = vmul.f32 %v3083, 1.442695
        %v3130 = vpow.pop %v3129
        %v3131 = vmul.f32 %v3084, 1.442695
        %v3132 = vpow.pop %v3131
        %v3133 = vmul.f32 %v3085, 1.442695
        %v3134 = vpow.pop %v3133
        %v3135 = vmul.f32 %v3086, 1.442695
        %v3136 = vpow.pop %v3135
        %v3137 = vmul.f32 %v3087, 1.442695
        %v3138 = vpow.pop %v3137
        %v3139 = vmul.f32 %v3088, 1.442695
        %v3140 = vpow.pop %v3139
        %v3141 = vmul.f32 %v3089, 1.442695
        %v3142 = vpow.pop %v3141
        %v3143 = vmul.f32 %v3090, 1.442695
        %v3144 = vpow.pop %v3143
        %v3145 = vmul.f32 %v3091, 1.442695
        %v3146 = vpow.pop %v3145
        %v3147 = vmul.f32 %v3092, 1.442695
        %v3148 = vpow.pop %v3147
        %v3149 = vmul.f32 %v3093, 1.442695
        %v3150 = vpow.pop %v3149
        %v3151 = vmul.f32 %v3094, 1.442695
        %v3152 = vpow.pop %v3151
        %v3153 = vmul.f32 %v3095, 1.442695
        %v3154 = vpow.pop %v3153
        %v3155 = vmul.f32 %v3096, 1.442695
        %v3156 = vpow.pop %v3155
        %v3157 = vmul.f32 %v3097, 1.442695
        %v3158 = vpow.pop %v3157
        %v3159 = vmul.f32 %v3098, 1.442695
        %v3160 = vpow.pop %v3159
        %v3161 = vmul.f32 %v3099, 1.442695
        %v3162 = vpow.pop %v3161
        %v3163 = vmul.f32 %v3100, 1.442695
        %v3164 = vpow.pop %v3163
        %3165 = vadd.xlane.f32.xlu0 %v3102
        %v3166 = vpop.xlane.xlu0 %3165
        %3167 = vadd.xlane.f32.xlu0 %v3104
        %v3168 = vpop.xlane.xlu0 %3167
        %3169 = vadd.xlane.f32.xlu0 %v3106
        %v3170 = vpop.xlane.xlu0 %3169
        %3171 = vadd.xlane.f32.xlu0 %v3108
        %v3172 = vpop.xlane.xlu0 %3171
        %3173 = vadd.xlane.f32.xlu0 %v3110
        %v3174 = vpop.xlane.xlu0 %3173
        %3175 = vadd.xlane.f32.xlu0 %v3112
        %v3176 = vpop.xlane.xlu0 %3175
        %3177 = vadd.xlane.f32.xlu0 %v3114
        %v3178 = vpop.xlane.xlu0 %3177
        %3179 = vadd.xlane.f32.xlu0 %v3116
        %v3180 = vpop.xlane.xlu0 %3179
        %3181 = vadd.xlane.f32.xlu0 %v3118
        %v3182 = vpop.xlane.xlu0 %3181
        %3183 = vadd.xlane.f32.xlu0 %v3120
        %v3184 = vpop.xlane.xlu0 %3183
        %3185 = vadd.xlane.f32.xlu0 %v3122
        %v3186 = vpop.xlane.xlu0 %3185
        %3187 = vadd.xlane.f32.xlu0 %v3124
        %v3188 = vpop.xlane.xlu0 %3187
        %3189 = vadd.xlane.f32.xlu0 %v3126
        %v3190 = vpop.xlane.xlu0 %3189
        %3191 = vadd.xlane.f32.xlu0 %v3128
        %v3192 = vpop.xlane.xlu0 %3191
        %3193 = vadd.xlane.f32.xlu0 %v3130
        %v3194 = vpop.xlane.xlu0 %3193
        %3195 = vadd.xlane.f32.xlu0 %v3132
        %v3196 = vpop.xlane.xlu0 %3195
        %3197 = vadd.xlane.f32.xlu0 %v3134
        %v3198 = vpop.xlane.xlu0 %3197
        %3199 = vadd.xlane.f32.xlu0 %v3136
        %v3200 = vpop.xlane.xlu0 %3199
        %3201 = vadd.xlane.f32.xlu0 %v3138
        %v3202 = vpop.xlane.xlu0 %3201
        %3203 = vadd.xlane.f32.xlu0 %v3140
        %v3204 = vpop.xlane.xlu0 %3203
        %3205 = vadd.xlane.f32.xlu0 %v3142
        %v3206 = vpop.xlane.xlu0 %3205
        %3207 = vadd.xlane.f32.xlu0 %v3144
        %v3208 = vpop.xlane.xlu0 %3207
        %3209 = vadd.xlane.f32.xlu0 %v3146
        %v3210 = vpop.xlane.xlu0 %3209
        %3211 = vadd.xlane.f32.xlu0 %v3148
        %v3212 = vpop.xlane.xlu0 %3211
        %3213 = vadd.xlane.f32.xlu0 %v3150
        %v3214 = vpop.xlane.xlu0 %3213
        %3215 = vadd.xlane.f32.xlu0 %v3152
        %v3216 = vpop.xlane.xlu0 %3215
        %3217 = vadd.xlane.f32.xlu0 %v3154
        %v3218 = vpop.xlane.xlu0 %3217
        %3219 = vadd.xlane.f32.xlu0 %v3156
        %v3220 = vpop.xlane.xlu0 %3219
        %3221 = vadd.xlane.f32.xlu0 %v3158
        %v3222 = vpop.xlane.xlu0 %3221
        %3223 = vadd.xlane.f32.xlu0 %v3160
        %v3224 = vpop.xlane.xlu0 %3223
        %3225 = vadd.xlane.f32.xlu0 %v3162
        %v3226 = vpop.xlane.xlu0 %3225
        %3227 = vadd.xlane.f32.xlu0 %v3164
        %v3228 = vpop.xlane.xlu0 %3227
        %v3229 = vrcp.pop %v3166
        %v3230 = vrcp.pop %v3168
        %v3231 = vrcp.pop %v3170
        %v3232 = vrcp.pop %v3172
        %v3233 = vrcp.pop %v3174
        %v3234 = vrcp.pop %v3176
        %v3235 = vrcp.pop %v3178
        %v3236 = vrcp.pop %v3180
        %v3237 = vrcp.pop %v3182
        %v3238 = vrcp.pop %v3184
        %v3239 = vrcp.pop %v3186
        %v3240 = vrcp.pop %v3188
        %v3241 = vrcp.pop %v3190
        %v3242 = vrcp.pop %v3192
        %v3243 = vrcp.pop %v3194
        %v3244 = vrcp.pop %v3196
        %v3245 = vrcp.pop %v3198
        %v3246 = vrcp.pop %v3200
        %v3247 = vrcp.pop %v3202
        %v3248 = vrcp.pop %v3204
        %v3249 = vrcp.pop %v3206
        %v3250 = vrcp.pop %v3208
        %v3251 = vrcp.pop %v3210
        %v3252 = vrcp.pop %v3212
        %v3253 = vrcp.pop %v3214
        %v3254 = vrcp.pop %v3216
        %v3255 = vrcp.pop %v3218
        %v3256 = vrcp.pop %v3220
        %v3257 = vrcp.pop %v3222
        %v3258 = vrcp.pop %v3224
        %v3259 = vrcp.pop %v3226
        %v3260 = vrcp.pop %v3228
        %v3261 = vmul.f32 %v3102, %v3229
        %v3262 = vmul.f32 %v3104, %v3230
        %v3263 = vmul.f32 %v3106, %v3231
        %v3264 = vmul.f32 %v3108, %v3232
        %v3265 = vmul.f32 %v3110, %v3233
        %v3266 = vmul.f32 %v3112, %v3234
        %v3267 = vmul.f32 %v3114, %v3235
        %v3268 = vmul.f32 %v3116, %v3236
        %v3269 = vmul.f32 %v3118, %v3237
        %v3270 = vmul.f32 %v3120, %v3238
        %v3271 = vmul.f32 %v3122, %v3239
        %v3272 = vmul.f32 %v3124, %v3240
        %v3273 = vmul.f32 %v3126, %v3241
        %v3274 = vmul.f32 %v3128, %v3242
        %v3275 = vmul.f32 %v3130, %v3243
        %v3276 = vmul.f32 %v3132, %v3244
        %v3277 = vmul.f32 %v3134, %v3245
        %v3278 = vmul.f32 %v3136, %v3246
        %v3279 = vmul.f32 %v3138, %v3247
        %v3280 = vmul.f32 %v3140, %v3248
        %v3281 = vmul.f32 %v3142, %v3249
        %v3282 = vmul.f32 %v3144, %v3250
        %v3283 = vmul.f32 %v3146, %v3251
        %v3284 = vmul.f32 %v3148, %v3252
        %v3285 = vmul.f32 %v3150, %v3253
        %v3286 = vmul.f32 %v3152, %v3254
        %v3287 = vmul.f32 %v3154, %v3255
        %v3288 = vmul.f32 %v3156, %v3256
        %v3289 = vmul.f32 %v3158, %v3257
        %v3290 = vmul.f32 %v3160, %v3258
        %v3291 = vmul.f32 %v3162, %v3259
        %v3292 = vmul.f32 %v3164, %v3260
        %v3293 = vpack.c.bf16 %v3262, %v3261
        %v3294 = vpack.c.bf16 %v3264, %v3263
        %v3295 = vpack.c.bf16 %v3266, %v3265
        %v3296 = vpack.c.bf16 %v3268, %v3267
        %v3297 = vpack.c.bf16 %v3270, %v3269
        %v3298 = vpack.c.bf16 %v3272, %v3271
        %v3299 = vpack.c.bf16 %v3274, %v3273
        %v3300 = vpack.c.bf16 %v3276, %v3275
        %v3301 = vpack.c.bf16 %v3278, %v3277
        %v3302 = vpack.c.bf16 %v3280, %v3279
        %v3303 = vpack.c.bf16 %v3282, %v3281
        %v3304 = vpack.c.bf16 %v3284, %v3283
        %v3305 = vpack.c.bf16 %v3286, %v3285
        %v3306 = vpack.c.bf16 %v3288, %v3287
        %v3307 = vpack.c.bf16 %v3290, %v3289
        %v3308 = vpack.c.bf16 %v3292, %v3291
        %3309 = vrot.lane.b32.xlu0 %v1734, 56
        %v3310 = vpop.permute.xlu0 %3309
        %3311 = vrot.lane.b32.xlu0 %v1735, 56
        %v3312 = vpop.permute.xlu0 %3311
        %3313 = vrot.lane.b32.xlu0 %v1736, 56
        %v3314 = vpop.permute.xlu0 %3313
        %3315 = vrot.lane.b32.xlu0 %v1737, 56
        %v3316 = vpop.permute.xlu0 %3315
        %3317 = vrot.lane.b32.xlu0 %v1738, 56
        %v3318 = vpop.permute.xlu0 %3317
        %3319 = vrot.lane.b32.xlu0 %v1739, 56
        %v3320 = vpop.permute.xlu0 %3319
        %3321 = vrot.lane.b32.xlu0 %v1740, 56
        %v3322 = vpop.permute.xlu0 %3321
        %3323 = vrot.lane.b32.xlu0 %v1741, 56
        %v3324 = vpop.permute.xlu0 %3323
        %3333 = vmatprep.subr.bf16.mxu0 0
        %3334 = vmatpush1.bf16.msra.mxu0 %v3310
        %3335 = vmatprep.subr.bf16.mxu0 0
        %3336 = vmatpush1.bf16.msra.mxu0 %v3312
        %3337 = vmatprep.subr.bf16.mxu0 0
        %3338 = vmatpush1.bf16.msra.mxu0 %v3314
        %3339 = vmatprep.subr.bf16.mxu0 0
        %3340 = vmatpush1.bf16.msra.mxu0 %v3316
        %3341 = vmatprep.subr.bf16.mxu0 0
        %3342 = vmatpush1.bf16.msra.mxu0 %v3318
        %3343 = vmatprep.subr.bf16.mxu0 0
        %3344 = vmatpush1.bf16.msra.mxu0 %v3320
        %3345 = vmatprep.subr.bf16.mxu0 0
        %3346 = vmatpush1.bf16.msra.mxu0 %v3322
        %3347 = vmatprep.subr.bf16.mxu0 0
        %3348 = vmatpush1.bf16.msra.mxu0 %v3324
        %3349 = vmatprep.subr.bf16.mxu0 0
        %3350 = vmatpush1.bf16.msra.mxu0 0
        %3351 = vmatprep.subr.bf16.mxu0 0
        %3352 = vmatpush1.bf16.msra.mxu0 0
        %3353 = vmatprep.subr.bf16.mxu0 0
        %3354 = vmatpush1.bf16.msra.mxu0 0
        %3355 = vmatprep.subr.bf16.mxu0 0
        %3356 = vmatpush1.bf16.msra.mxu0 0
        %3357 = vmatprep.subr.bf16.mxu0 0
        %3358 = vmatpush1.bf16.msra.mxu0 0
        %3359 = vmatprep.subr.bf16.mxu0 0
        %3360 = vmatpush1.bf16.msra.mxu0 0
        %3361 = vmatprep.subr.bf16.mxu0 0
        %3362 = vmatpush1.bf16.msra.mxu0 0
        %3363 = vmatprep.subr.bf16.mxu0 0
        %3364 = vmatpush1.bf16.msra.mxu0 0
        %3365 = vmatprep.mubr.bf16.mxu0 0
        %3366 = vmatmul.mubr.bf16.gmra.mrb[0].mxu0 %v3293
        %v3367 = vpop.f32.mrb[0].mxu0
        %v3368 = vadd.f32 0.0, %v3367
        %v3369 = vpop.f32.mrb[0].mxu0
        %v3370 = vpop.f32.mrb[0].mxu0
        %v3371 = vadd.f32 0.0, %v3370
        %v3372 = vpop.f32.mrb[0].mxu0
        %3373 = vmatprep.mubr.bf16.mxu0 0
        %3374 = vmatmul.mubr.bf16.gmra.mrb[0].mxu0 %v3294
        %v3375 = vpop.f32.mrb[0].mxu0
        %v3376 = vadd.f32 0.0, %v3375
        %v3377 = vpop.f32.mrb[0].mxu0
        %v3378 = vpop.f32.mrb[0].mxu0
        %v3379 = vadd.f32 0.0, %v3378
        %v3380 = vpop.f32.mrb[0].mxu0
        %3381 = vmatprep.mubr.bf16.mxu0 0
        %3382 = vmatmul.mubr.bf16.gmra.mrb[0].mxu0 %v3295
        %v3383 = vpop.f32.mrb[0].mxu0
        %v3384 = vadd.f32 0.0, %v3383
        %v3385 = vpop.f32.mrb[0].mxu0
        %v3386 = vpop.f32.mrb[0].mxu0
        %v3387 = vadd.f32 0.0, %v3386
        %v3388 = vpop.f32.mrb[0].mxu0
        %3389 = vmatprep.mubr.bf16.mxu0 0
        %3390 = vmatmul.mubr.bf16.gmra.mrb[0].mxu0 %v3296
        %v3391 = vpop.f32.mrb[0].mxu0
        %v3392 = vadd.f32 0.0, %v3391
        %v3393 = vpop.f32.mrb[0].mxu0
        %v3394 = vpop.f32.mrb[0].mxu0
        %v3395 = vadd.f32 0.0, %v3394
        %v3396 = vpop.f32.mrb[0].mxu0
        %3397 = vmatprep.mubr.bf16.mxu0 0
        %3398 = vmatmul.mubr.bf16.gmra.mrb[0].mxu0 %v3297
        %v3399 = vpop.f32.mrb[0].mxu0
        %v3400 = vadd.f32 0.0, %v3399
        %v3401 = vpop.f32.mrb[0].mxu0
        %v3402 = vpop.f32.mrb[0].mxu0
        %v3403 = vadd.f32 0.0, %v3402
        %v3404 = vpop.f32.mrb[0].mxu0
        %3405 = vmatprep.mubr.bf16.mxu0 0
        %3406 = vmatmul.mubr.bf16.gmra.mrb[0].mxu0 %v3298
        %v3407 = vpop.f32.mrb[0].mxu0
        %v3408 = vadd.f32 0.0, %v3407
        %v3409 = vpop.f32.mrb[0].mxu0
        %v3410 = vpop.f32.mrb[0].mxu0
        %v3411 = vadd.f32 0.0, %v3410
        %v3412 = vpop.f32.mrb[0].mxu0
        %3413 = vmatprep.mubr.bf16.mxu0 0
        %3414 = vmatmul.mubr.bf16.gmra.mrb[0].mxu0 %v3299
        %v3415 = vpop.f32.mrb[0].mxu0
        %v3416 = vadd.f32 0.0, %v3415
        %v3417 = vpop.f32.mrb[0].mxu0
        %v3418 = vpop.f32.mrb[0].mxu0
        %v3419 = vadd.f32 0.0, %v3418
        %v3420 = vpop.f32.mrb[0].mxu0
        %3421 = vmatprep.mubr.bf16.mxu0 0
        %3422 = vmatmul.mubr.bf16.gmra.mrb[0].mxu0 %v3300
        %v3423 = vpop.f32.mrb[0].mxu0
        %v3424 = vadd.f32 0.0, %v3423
        %v3425 = vpop.f32.mrb[0].mxu0
        %v3426 = vpop.f32.mrb[0].mxu0
        %v3427 = vadd.f32 0.0, %v3426
        %v3428 = vpop.f32.mrb[0].mxu0
        %3429 = vdwg.mxu0
        %3430 = vrot.lane.b32.xlu0 %v1742, 56
        %v3431 = vpop.permute.xlu0 %3430
        %3432 = vrot.lane.b32.xlu0 %v1743, 56
        %v3433 = vpop.permute.xlu0 %3432
        %3434 = vrot.lane.b32.xlu0 %v1744, 56
        %v3435 = vpop.permute.xlu0 %3434
        %3436 = vrot.lane.b32.xlu0 %v1745, 56
        %v3437 = vpop.permute.xlu0 %3436
        %3438 = vrot.lane.b32.xlu0 %v1746, 56
        %v3439 = vpop.permute.xlu0 %3438
        %3440 = vrot.lane.b32.xlu0 %v1747, 56
        %v3441 = vpop.permute.xlu0 %3440
        %3442 = vrot.lane.b32.xlu0 %v1748, 56
        %v3443 = vpop.permute.xlu0 %3442
        %3444 = vrot.lane.b32.xlu0 %v1749, 56
        %v3445 = vpop.permute.xlu0 %3444
        %3454 = vmatprep.subr.bf16.mxu0 0
        %3455 = vmatpush1.bf16.msra.mxu0 %v3431
        %3456 = vmatprep.subr.bf16.mxu0 0
        %3457 = vmatpush1.bf16.msra.mxu0 %v3433
        %3458 = vmatprep.subr.bf16.mxu0 0
        %3459 = vmatpush1.bf16.msra.mxu0 %v3435
        %3460 = vmatprep.subr.bf16.mxu0 0
        %3461 = vmatpush1.bf16.msra.mxu0 %v3437
        %3462 = vmatprep.subr.bf16.mxu0 0
        %3463 = vmatpush1.bf16.msra.mxu0 %v3439
        %3464 = vmatprep.subr.bf16.mxu0 0
        %3465 = vmatpush1.bf16.msra.mxu0 %v3441
        %3466 = vmatprep.subr.bf16.mxu0 0
        %3467 = vmatpush1.bf16.msra.mxu0 %v3443
        %3468 = vmatprep.subr.bf16.mxu0 0
        %3469 = vmatpush1.bf16.msra.mxu0 %v3445
        %3470 = vmatprep.subr.bf16.mxu0 0
        %3471 = vmatpush1.bf16.msra.mxu0 0
        %3472 = vmatprep.subr.bf16.mxu0 0
        %3473 = vmatpush1.bf16.msra.mxu0 0
        %3474 = vmatprep.subr.bf16.mxu0 0
        %3475 = vmatpush1.bf16.msra.mxu0 0
        %3476 = vmatprep.subr.bf16.mxu0 0
        %3477 = vmatpush1.bf16.msra.mxu0 0
        %3478 = vmatprep.subr.bf16.mxu0 0
        %3479 = vmatpush1.bf16.msra.mxu0 0
        %3480 = vmatprep.subr.bf16.mxu0 0
        %3481 = vmatpush1.bf16.msra.mxu0 0
        %3482 = vmatprep.subr.bf16.mxu0 0
        %3483 = vmatpush1.bf16.msra.mxu0 0
        %3484 = vmatprep.subr.bf16.mxu0 0
        %3485 = vmatpush1.bf16.msra.mxu0 0
        %3486 = vmatprep.mubr.bf16.mxu0 0
        %3487 = vmatmul.mubr.bf16.gmra.mrb[0].mxu0 %v3301
        %v3488 = vpop.f32.mrb[0].mxu0
        %v3489 = vadd.f32 0.0, %v3488
        %v3490 = vpop.f32.mrb[0].mxu0
        %v3491 = vpop.f32.mrb[0].mxu0
        %v3492 = vadd.f32 0.0, %v3491
        %v3493 = vpop.f32.mrb[0].mxu0
        %3494 = vmatprep.mubr.bf16.mxu0 0
        %3495 = vmatmul.mubr.bf16.gmra.mrb[0].mxu0 %v3302
        %v3496 = vpop.f32.mrb[0].mxu0
        %v3497 = vadd.f32 0.0, %v3496
        %v3498 = vpop.f32.mrb[0].mxu0
        %v3499 = vpop.f32.mrb[0].mxu0
        %v3500 = vadd.f32 0.0, %v3499
        %v3501 = vpop.f32.mrb[0].mxu0
        %3502 = vmatprep.mubr.bf16.mxu0 0
        %3503 = vmatmul.mubr.bf16.gmra.mrb[0].mxu0 %v3303
        %v3504 = vpop.f32.mrb[0].mxu0
        %v3505 = vadd.f32 0.0, %v3504
        %v3506 = vpop.f32.mrb[0].mxu0
        %v3507 = vpop.f32.mrb[0].mxu0
        %v3508 = vadd.f32 0.0, %v3507
        %v3509 = vpop.f32.mrb[0].mxu0
        %3510 = vmatprep.mubr.bf16.mxu0 0
        %3511 = vmatmul.mubr.bf16.gmra.mrb[0].mxu0 %v3304
        %v3512 = vpop.f32.mrb[0].mxu0
        %v3513 = vadd.f32 0.0, %v3512
        %v3514 = vpop.f32.mrb[0].mxu0
        %v3515 = vpop.f32.mrb[0].mxu0
        %v3516 = vadd.f32 0.0, %v3515
        %v3517 = vpop.f32.mrb[0].mxu0
        %3518 = vmatprep.mubr.bf16.mxu0 0
        %3519 = vmatmul.mubr.bf16.gmra.mrb[0].mxu0 %v3305
        %v3520 = vpop.f32.mrb[0].mxu0
        %v3521 = vadd.f32 0.0, %v3520
        %v3522 = vpop.f32.mrb[0].mxu0
        %v3523 = vpop.f32.mrb[0].mxu0
        %v3524 = vadd.f32 0.0, %v3523
        %v3525 = vpop.f32.mrb[0].mxu0
        %3526 = vmatprep.mubr.bf16.mxu0 0
        %3527 = vmatmul.mubr.bf16.gmra.mrb[0].mxu0 %v3306
        %v3528 = vpop.f32.mrb[0].mxu0
        %v3529 = vadd.f32 0.0, %v3528
        %v3530 = vpop.f32.mrb[0].mxu0
        %v3531 = vpop.f32.mrb[0].mxu0
        %v3532 = vadd.f32 0.0, %v3531
        %v3533 = vpop.f32.mrb[0].mxu0
        %3534 = vmatprep.mubr.bf16.mxu0 0
        %3535 = vmatmul.mubr.bf16.gmra.mrb[0].mxu0 %v3307
        %v3536 = vpop.f32.mrb[0].mxu0
        %v3537 = vadd.f32 0.0, %v3536
        %v3538 = vpop.f32.mrb[0].mxu0
        %v3539 = vpop.f32.mrb[0].mxu0
        %v3540 = vadd.f32 0.0, %v3539
        %v3541 = vpop.f32.mrb[0].mxu0
        %3542 = vmatprep.mubr.bf16.mxu0 0
        %3543 = vmatmul.mubr.bf16.gmra.mrb[0].mxu0 %v3308
        %v3544 = vpop.f32.mrb[0].mxu0
        %v3545 = vadd.f32 0.0, %v3544
        %v3546 = vpop.f32.mrb[0].mxu0
        %v3547 = vpop.f32.mrb[0].mxu0
        %v3548 = vadd.f32 0.0, %v3547
        %v3549 = vpop.f32.mrb[0].mxu0
        %3550 = vdwg.mxu0
        %3583 = vrot.lane.b32.xlu0 %v3368, 8
        %v3584 = vpop.permute.xlu0 %3583
        %3585 = vrot.lane.b32.xlu0 %v3371, 8
        %v3586 = vpop.permute.xlu0 %3585
        %3587 = vrot.lane.b32.xlu0 %v3376, 8
        %v3588 = vpop.permute.xlu0 %3587
        %3589 = vrot.lane.b32.xlu0 %v3379, 8
        %v3590 = vpop.permute.xlu0 %3589
        %3591 = vrot.lane.b32.xlu0 %v3384, 8
        %v3592 = vpop.permute.xlu0 %3591
        %3593 = vrot.lane.b32.xlu0 %v3387, 8
        %v3594 = vpop.permute.xlu0 %3593
        %3595 = vrot.lane.b32.xlu0 %v3392, 8
        %v3596 = vpop.permute.xlu0 %3595
        %3597 = vrot.lane.b32.xlu0 %v3395, 8
        %v3598 = vpop.permute.xlu0 %3597
        %3599 = vrot.lane.b32.xlu0 %v3400, 8
        %v3600 = vpop.permute.xlu0 %3599
        %3601 = vrot.lane.b32.xlu0 %v3403, 8
        %v3602 = vpop.permute.xlu0 %3601
        %3603 = vrot.lane.b32.xlu0 %v3408, 8
        %v3604 = vpop.permute.xlu0 %3603
        %3605 = vrot.lane.b32.xlu0 %v3411, 8
        %v3606 = vpop.permute.xlu0 %3605
        %3607 = vrot.lane.b32.xlu0 %v3416, 8
        %v3608 = vpop.permute.xlu0 %3607
        %3609 = vrot.lane.b32.xlu0 %v3419, 8
        %v3610 = vpop.permute.xlu0 %3609
        %3611 = vrot.lane.b32.xlu0 %v3424, 8
        %v3612 = vpop.permute.xlu0 %3611
        %3613 = vrot.lane.b32.xlu0 %v3427, 8
        %v3614 = vpop.permute.xlu0 %3613
        %3615 = vrot.lane.b32.xlu0 %v3489, 8
        %v3616 = vpop.permute.xlu0 %3615
        %3617 = vrot.lane.b32.xlu0 %v3492, 8
        %v3618 = vpop.permute.xlu0 %3617
        %3619 = vrot.lane.b32.xlu0 %v3497, 8
        %v3620 = vpop.permute.xlu0 %3619
        %3621 = vrot.lane.b32.xlu0 %v3500, 8
        %v3622 = vpop.permute.xlu0 %3621
        %3623 = vrot.lane.b32.xlu0 %v3505, 8
        %v3624 = vpop.permute.xlu0 %3623
        %3625 = vrot.lane.b32.xlu0 %v3508, 8
        %v3626 = vpop.permute.xlu0 %3625
        %3627 = vrot.lane.b32.xlu0 %v3513, 8
        %v3628 = vpop.permute.xlu0 %3627
        %3629 = vrot.lane.b32.xlu0 %v3516, 8
        %v3630 = vpop.permute.xlu0 %3629
        %3631 = vrot.lane.b32.xlu0 %v3521, 8
        %v3632 = vpop.permute.xlu0 %3631
        %3633 = vrot.lane.b32.xlu0 %v3524, 8
        %v3634 = vpop.permute.xlu0 %3633
        %3635 = vrot.lane.b32.xlu0 %v3529, 8
        %v3636 = vpop.permute.xlu0 %3635
        %3637 = vrot.lane.b32.xlu0 %v3532, 8
        %v3638 = vpop.permute.xlu0 %3637
        %3639 = vrot.lane.b32.xlu0 %v3537, 8
        %v3640 = vpop.permute.xlu0 %3639
        %3641 = vrot.lane.b32.xlu0 %v3540, 8
        %v3642 = vpop.permute.xlu0 %3641
        %3643 = vrot.lane.b32.xlu0 %v3545, 8
        %v3644 = vpop.permute.xlu0 %3643
        %3645 = vrot.lane.b32.xlu0 %v3548, 8
        %v3646 = vpop.permute.xlu0 %3645
        %v3679 = vsel %vm1790, %v2468, %v3584
        %v3680 = vsel %vm1790, %v2471, %v3586
        %v3681 = vsel %vm1790, %v2476, %v3588
        %v3682 = vsel %vm1790, %v2479, %v3590
        %v3683 = vsel %vm1790, %v2484, %v3592
        %v3684 = vsel %vm1790, %v2487, %v3594
        %v3685 = vsel %vm1790, %v2492, %v3596
        %v3686 = vsel %vm1790, %v2495, %v3598
        %v3687 = vsel %vm1790, %v2500, %v3600
        %v3688 = vsel %vm1790, %v2503, %v3602
        %v3689 = vsel %vm1790, %v2508, %v3604
        %v3690 = vsel %vm1790, %v2511, %v3606
        %v3691 = vsel %vm1790, %v2516, %v3608
        %v3692 = vsel %vm1790, %v2519, %v3610
        %v3693 = vsel %vm1790, %v2524, %v3612
        %v3694 = vsel %vm1790, %v2527, %v3614
        %v3695 = vsel %vm1790, %v2589, %v3616
        %v3696 = vsel %vm1790, %v2592, %v3618
        %v3697 = vsel %vm1790, %v2597, %v3620
        %v3698 = vsel %vm1790, %v2600, %v3622
        %v3699 = vsel %vm1790, %v2605, %v3624
        %v3700 = vsel %vm1790, %v2608, %v3626
        %v3701 = vsel %vm1790, %v2613, %v3628
        %v3702 = vsel %vm1790, %v2616, %v3630
        %v3703 = vsel %vm1790, %v2621, %v3632
        %v3704 = vsel %vm1790, %v2624, %v3634
        %v3705 = vsel %vm1790, %v2629, %v3636
        %v3706 = vsel %vm1790, %v2632, %v3638
        %v3707 = vsel %vm1790, %v2637, %v3640
        %v3708 = vsel %vm1790, %v2640, %v3642
        %v3709 = vsel %vm1790, %v2645, %v3644
        %v3710 = vsel %vm1790, %v2648, %v3646
        %v3711 = vpack.c.bf16 %v3680, %v3679
        %v3712 = vpack.c.bf16 %v3682, %v3681
        %v3713 = vpack.c.bf16 %v3684, %v3683
        %v3714 = vpack.c.bf16 %v3686, %v3685
        %v3715 = vpack.c.bf16 %v3688, %v3687
        %v3716 = vpack.c.bf16 %v3690, %v3689
        %v3717 = vpack.c.bf16 %v3692, %v3691
        %v3718 = vpack.c.bf16 %v3694, %v3693
        %v3719 = vpack.c.bf16 %v3696, %v3695
        %v3720 = vpack.c.bf16 %v3698, %v3697
        %v3721 = vpack.c.bf16 %v3700, %v3699
        %v3722 = vpack.c.bf16 %v3702, %v3701
        %v3723 = vpack.c.bf16 %v3704, %v3703
        %v3724 = vpack.c.bf16 %v3706, %v3705
        %v3725 = vpack.c.bf16 %v3708, %v3707
        %v3726 = vpack.c.bf16 %v3710, %v3709
        %vm3727 = vcmask 130048
        %3728 = vst.msk [vmem:[#allocation3] sm:$0xff] %vm3727, %v3711
        %3729 = vst.msk [vmem:[#allocation3 + $0x8] sm:$0xff] %vm3727, %v3712
        %3730 = vst.msk [vmem:[#allocation3 + $0x10] sm:$0xff] %vm3727, %v3713
        %3731 = vst.msk [vmem:[#allocation3 + $0x18] sm:$0xff] %vm3727, %v3714
        %3732 = vst.msk [vmem:[#allocation3 + $0x20] sm:$0xff] %vm3727, %v3715
        %3733 = vst.msk [vmem:[#allocation3 + $0x28] sm:$0xff] %vm3727, %v3716
        %3734 = vst.msk [vmem:[#allocation3 + $0x30] sm:$0xff] %vm3727, %v3717
        %3735 = vst.msk [vmem:[#allocation3 + $0x38] sm:$0xff] %vm3727, %v3718
        %3736 = vst.msk [vmem:[#allocation3 + $0x40] sm:$0xff] %vm3727, %v3719
        %3737 = vst.msk [vmem:[#allocation3 + $0x48] sm:$0xff] %vm3727, %v3720
        %3738 = vst.msk [vmem:[#allocation3 + $0x50] sm:$0xff] %vm3727, %v3721
        %3739 = vst.msk [vmem:[#allocation3 + $0x58] sm:$0xff] %vm3727, %v3722
        %3740 = vst.msk [vmem:[#allocation3 + $0x60] sm:$0xff] %vm3727, %v3723
        %3741 = vst.msk [vmem:[#allocation3 + $0x68] sm:$0xff] %vm3727, %v3724
        %3742 = vst.msk [vmem:[#allocation3 + $0x70] sm:$0xff] %vm3727, %v3725
        %3743 = vst.msk [vmem:[#allocation3 + $0x78] sm:$0xff] %vm3727, %v3726
        %3744 = vrot.lane.b32.xlu0 %v1734, 112
        %v3745 = vpop.permute.xlu0 %3744
        %3746 = vrot.lane.b32.xlu0 %v1735, 112
        %v3747 = vpop.permute.xlu0 %3746
        %3748 = vrot.lane.b32.xlu0 %v1736, 112
        %v3749 = vpop.permute.xlu0 %3748
        %3750 = vrot.lane.b32.xlu0 %v1737, 112
        %v3751 = vpop.permute.xlu0 %3750
        %3752 = vrot.lane.b32.xlu0 %v1738, 112
        %v3753 = vpop.permute.xlu0 %3752
        %3754 = vrot.lane.b32.xlu0 %v1739, 112
        %v3755 = vpop.permute.xlu0 %3754
        %3756 = vrot.lane.b32.xlu0 %v1740, 112
        %v3757 = vpop.permute.xlu0 %3756
        %3758 = vrot.lane.b32.xlu0 %v1741, 112
        %v3759 = vpop.permute.xlu0 %3758
        %3760 = vrot.lane.b32.xlu0 %v1734, 80
        %v3761 = vpop.permute.xlu0 %3760
        %3762 = vrot.lane.b32.xlu0 %v1735, 80
        %v3763 = vpop.permute.xlu0 %3762
        %3764 = vrot.lane.b32.xlu0 %v1736, 80
        %v3765 = vpop.permute.xlu0 %3764
        %3766 = vrot.lane.b32.xlu0 %v1737, 80
        %v3767 = vpop.permute.xlu0 %3766
        %3768 = vrot.lane.b32.xlu0 %v1738, 80
        %v3769 = vpop.permute.xlu0 %3768
        %3770 = vrot.lane.b32.xlu0 %v1739, 80
        %v3771 = vpop.permute.xlu0 %3770
        %3772 = vrot.lane.b32.xlu0 %v1740, 80
        %v3773 = vpop.permute.xlu0 %3772
        %3774 = vrot.lane.b32.xlu0 %v1741, 80
        %v3775 = vpop.permute.xlu0 %3774
        %v3777 = vsel %vm1790, %v3745, 0
        %v3780 = vsel %vm1790, %v3747, 0
        %v3783 = vsel %vm1790, %v3749, 0
        %v3786 = vsel %vm1790, %v3751, 0
        %v3789 = vsel %vm1790, %v3753, 0
        %v3792 = vsel %vm1790, %v3755, 0
        %v3795 = vsel %vm1790, %v3757, 0
        %v3798 = vsel %vm1790, %v3759, 0
        %v3801 = vsel %vm1790, %v3761, 0
        %v3804 = vsel %vm1790, %v3763, 0
        %v3807 = vsel %vm1790, %v3765, 0
        %v3810 = vsel %vm1790, %v3767, 0
        %v3813 = vsel %vm1790, %v3769, 0
        %v3816 = vsel %vm1790, %v3771, 0
        %v3819 = vsel %vm1790, %v3773, 0
        %v3822 = vsel %vm1790, %v3775, 0
        %3824 = vmatprep.subr.bf16.mxu0 0
        %3825 = vmatpush1.bf16.xpose.msra.mxu0 %v3801
        %3826 = vmatprep.subr.bf16.mxu0 0
        %3827 = vmatpush1.bf16.xpose.msra.mxu0 %v3804
        %3828 = vmatprep.subr.bf16.mxu0 0
        %3829 = vmatpush1.bf16.xpose.msra.mxu0 %v3807
        %3830 = vmatprep.subr.bf16.mxu0 0
        %3831 = vmatpush1.bf16.xpose.msra.mxu0 %v3810
        %3832 = vmatprep.subr.bf16.mxu0 0
        %3833 = vmatpush1.bf16.xpose.msra.mxu0 %v3813
        %3834 = vmatprep.subr.bf16.mxu0 0
        %3835 = vmatpush1.bf16.xpose.msra.mxu0 %v3816
        %3836 = vmatprep.subr.bf16.mxu0 0
        %3837 = vmatpush1.bf16.xpose.msra.mxu0 %v3819
        %3838 = vmatprep.subr.bf16.mxu0 0
        %3839 = vmatpush1.bf16.xpose.msra.mxu0 %v3822
        %3840 = vmatprep.subr.bf16.mxu0 0
        %3841 = vmatpush1.bf16.xpose.msra.mxu0 0
        %3842 = vmatprep.subr.bf16.mxu0 0
        %3843 = vmatpush1.bf16.xpose.msra.mxu0 0
        %3844 = vmatprep.subr.bf16.mxu0 0
        %3845 = vmatpush1.bf16.xpose.msra.mxu0 0
        %3846 = vmatprep.subr.bf16.mxu0 0
        %3847 = vmatpush1.bf16.xpose.msra.mxu0 0
        %3848 = vmatprep.subr.bf16.mxu0 0
        %3849 = vmatpush1.bf16.xpose.msra.mxu0 0
        %3850 = vmatprep.subr.bf16.mxu0 0
        %3851 = vmatpush1.bf16.xpose.msra.mxu0 0
        %3852 = vmatprep.subr.bf16.mxu0 0
        %3853 = vmatpush1.bf16.xpose.msra.mxu0 0
        %3854 = vmatprep.subr.bf16.mxu0 0
        %3855 = vmatpush1.bf16.xpose.msra.mxu0 0
        %3856 = vmatprep.mubr.bf16.mxu0 0
        %3857 = vmatmul.mubr.bf16.gmra.mrb[0].mxu0 %v3777
        %v3858 = vpop.f32.mrb[0].mxu0
        %v3859 = vadd.f32 %v1750, %v3858
        %v3860 = vpop.f32.mrb[0].mxu0
        %v3861 = vpop.f32.mrb[0].mxu0
        %v3862 = vadd.f32 %v1751, %v3861
        %v3863 = vpop.f32.mrb[0].mxu0
        %3864 = vmatprep.mubr.bf16.mxu0 0
        %3865 = vmatmul.mubr.bf16.gmra.mrb[0].mxu0 %v3780
        %v3866 = vpop.f32.mrb[0].mxu0
        %v3867 = vadd.f32 %v1752, %v3866
        %v3868 = vpop.f32.mrb[0].mxu0
        %v3869 = vpop.f32.mrb[0].mxu0
        %v3870 = vadd.f32 %v1753, %v3869
        %v3871 = vpop.f32.mrb[0].mxu0
        %3872 = vmatprep.mubr.bf16.mxu0 0
        %3873 = vmatmul.mubr.bf16.gmra.mrb[0].mxu0 %v3783
        %v3874 = vpop.f32.mrb[0].mxu0
        %v3875 = vadd.f32 %v1754, %v3874
        %v3876 = vpop.f32.mrb[0].mxu0
        %v3877 = vpop.f32.mrb[0].mxu0
        %v3878 = vadd.f32 %v1755, %v3877
        %v3879 = vpop.f32.mrb[0].mxu0
        %3880 = vmatprep.mubr.bf16.mxu0 0
        %3881 = vmatmul.mubr.bf16.gmra.mrb[0].mxu0 %v3786
        %v3882 = vpop.f32.mrb[0].mxu0
        %v3883 = vadd.f32 %v1756, %v3882
        %v3884 = vpop.f32.mrb[0].mxu0
        %v3885 = vpop.f32.mrb[0].mxu0
        %v3886 = vadd.f32 %v1757, %v3885
        %v3887 = vpop.f32.mrb[0].mxu0
        %3888 = vmatprep.mubr.bf16.mxu0 0
        %3889 = vmatmul.mubr.bf16.gmra.mrb[0].mxu0 %v3789
        %v3890 = vpop.f32.mrb[0].mxu0
        %v3891 = vadd.f32 %v1758, %v3890
        %v3892 = vpop.f32.mrb[0].mxu0
        %v3893 = vpop.f32.mrb[0].mxu0
        %v3894 = vadd.f32 %v1759, %v3893
        %v3895 = vpop.f32.mrb[0].mxu0
        %3896 = vmatprep.mubr.bf16.mxu0 0
        %3897 = vmatmul.mubr.bf16.gmra.mrb[0].mxu0 %v3792
        %v3898 = vpop.f32.mrb[0].mxu0
        %v3899 = vadd.f32 %v1760, %v3898
        %v3900 = vpop.f32.mrb[0].mxu0
        %v3901 = vpop.f32.mrb[0].mxu0
        %v3902 = vadd.f32 %v1761, %v3901
        %v3903 = vpop.f32.mrb[0].mxu0
        %3904 = vmatprep.mubr.bf16.mxu0 0
        %3905 = vmatmul.mubr.bf16.gmra.mrb[0].mxu0 %v3795
        %v3906 = vpop.f32.mrb[0].mxu0
        %v3907 = vadd.f32 %v1762, %v3906
        %v3908 = vpop.f32.mrb[0].mxu0
        %v3909 = vpop.f32.mrb[0].mxu0
        %v3910 = vadd.f32 %v1763, %v3909
        %v3911 = vpop.f32.mrb[0].mxu0
        %3912 = vmatprep.mubr.bf16.mxu0 0
        %3913 = vmatmul.mubr.bf16.gmra.mrb[0].mxu0 %v3798
        %v3914 = vpop.f32.mrb[0].mxu0
        %v3915 = vadd.f32 %v1764, %v3914
        %v3916 = vpop.f32.mrb[0].mxu0
        %v3917 = vpop.f32.mrb[0].mxu0
        %v3918 = vadd.f32 %v1765, %v3917
        %v3919 = vpop.f32.mrb[0].mxu0
        %3920 = vdwg.mxu0
        %3921 = vrot.lane.b32.xlu0 %v1742, 112
        %v3922 = vpop.permute.xlu0 %3921
        %3923 = vrot.lane.b32.xlu0 %v1743, 112
        %v3924 = vpop.permute.xlu0 %3923
        %3925 = vrot.lane.b32.xlu0 %v1744, 112
        %v3926 = vpop.permute.xlu0 %3925
        %3927 = vrot.lane.b32.xlu0 %v1745, 112
        %v3928 = vpop.permute.xlu0 %3927
        %3929 = vrot.lane.b32.xlu0 %v1746, 112
        %v3930 = vpop.permute.xlu0 %3929
        %3931 = vrot.lane.b32.xlu0 %v1747, 112
        %v3932 = vpop.permute.xlu0 %3931
        %3933 = vrot.lane.b32.xlu0 %v1748, 112
        %v3934 = vpop.permute.xlu0 %3933
        %3935 = vrot.lane.b32.xlu0 %v1749, 112
        %v3936 = vpop.permute.xlu0 %3935
        %3937 = vrot.lane.b32.xlu0 %v1742, 80
        %v3938 = vpop.permute.xlu0 %3937
        %3939 = vrot.lane.b32.xlu0 %v1743, 80
        %v3940 = vpop.permute.xlu0 %3939
        %3941 = vrot.lane.b32.xlu0 %v1744, 80
        %v3942 = vpop.permute.xlu0 %3941
        %3943 = vrot.lane.b32.xlu0 %v1745, 80
        %v3944 = vpop.permute.xlu0 %3943
        %3945 = vrot.lane.b32.xlu0 %v1746, 80
        %v3946 = vpop.permute.xlu0 %3945
        %3947 = vrot.lane.b32.xlu0 %v1747, 80
        %v3948 = vpop.permute.xlu0 %3947
        %3949 = vrot.lane.b32.xlu0 %v1748, 80
        %v3950 = vpop.permute.xlu0 %3949
        %3951 = vrot.lane.b32.xlu0 %v1749, 80
        %v3952 = vpop.permute.xlu0 %3951
        %v3954 = vsel %vm1790, %v3922, 0
        %v3957 = vsel %vm1790, %v3924, 0
        %v3960 = vsel %vm1790, %v3926, 0
        %v3963 = vsel %vm1790, %v3928, 0
        %v3966 = vsel %vm1790, %v3930, 0
        %v3969 = vsel %vm1790, %v3932, 0
        %v3972 = vsel %vm1790, %v3934, 0
        %v3975 = vsel %vm1790, %v3936, 0
        %v3978 = vsel %vm1790, %v3938, 0
        %v3981 = vsel %vm1790, %v3940, 0
        %v3984 = vsel %vm1790, %v3942, 0
        %v3987 = vsel %vm1790, %v3944, 0
        %v3990 = vsel %vm1790, %v3946, 0
        %v3993 = vsel %vm1790, %v3948, 0
        %v3996 = vsel %vm1790, %v3950, 0
        %v3999 = vsel %vm1790, %v3952, 0
        %4001 = vmatprep.subr.bf16.mxu0 0
        %4002 = vmatpush1.bf16.xpose.msra.mxu0 %v3978
        %4003 = vmatprep.subr.bf16.mxu0 0
        %4004 = vmatpush1.bf16.xpose.msra.mxu0 %v3981
        %4005 = vmatprep.subr.bf16.mxu0 0
        %4006 = vmatpush1.bf16.xpose.msra.mxu0 %v3984
        %4007 = vmatprep.subr.bf16.mxu0 0
        %4008 = vmatpush1.bf16.xpose.msra.mxu0 %v3987
        %4009 = vmatprep.subr.bf16.mxu0 0
        %4010 = vmatpush1.bf16.xpose.msra.mxu0 %v3990
        %4011 = vmatprep.subr.bf16.mxu0 0
        %4012 = vmatpush1.bf16.xpose.msra.mxu0 %v3993
        %4013 = vmatprep.subr.bf16.mxu0 0
        %4014 = vmatpush1.bf16.xpose.msra.mxu0 %v3996
        %4015 = vmatprep.subr.bf16.mxu0 0
        %4016 = vmatpush1.bf16.xpose.msra.mxu0 %v3999
        %4017 = vmatprep.subr.bf16.mxu0 0
        %4018 = vmatpush1.bf16.xpose.msra.mxu0 0
        %4019 = vmatprep.subr.bf16.mxu0 0
        %4020 = vmatpush1.bf16.xpose.msra.mxu0 0
        %4021 = vmatprep.subr.bf16.mxu0 0
        %4022 = vmatpush1.bf16.xpose.msra.mxu0 0
        %4023 = vmatprep.subr.bf16.mxu0 0
        %4024 = vmatpush1.bf16.xpose.msra.mxu0 0
        %4025 = vmatprep.subr.bf16.mxu0 0
        %4026 = vmatpush1.bf16.xpose.msra.mxu0 0
        %4027 = vmatprep.subr.bf16.mxu0 0
        %4028 = vmatpush1.bf16.xpose.msra.mxu0 0
        %4029 = vmatprep.subr.bf16.mxu0 0
        %4030 = vmatpush1.bf16.xpose.msra.mxu0 0
        %4031 = vmatprep.subr.bf16.mxu0 0
        %4032 = vmatpush1.bf16.xpose.msra.mxu0 0
        %4033 = vmatprep.mubr.bf16.mxu0 0
        %4034 = vmatmul.mubr.bf16.gmra.mrb[0].mxu0 %v3954
        %v4035 = vpop.f32.mrb[0].mxu0
        %v4036 = vadd.f32 %v1750, %v4035
        %v4037 = vpop.f32.mrb[0].mxu0
        %v4038 = vpop.f32.mrb[0].mxu0
        %v4039 = vadd.f32 %v1751, %v4038
        %v4040 = vpop.f32.mrb[0].mxu0
        %4041 = vmatprep.mubr.bf16.mxu0 0
        %4042 = vmatmul.mubr.bf16.gmra.mrb[0].mxu0 %v3957
        %v4043 = vpop.f32.mrb[0].mxu0
        %v4044 = vadd.f32 %v1752, %v4043
        %v4045 = vpop.f32.mrb[0].mxu0
        %v4046 = vpop.f32.mrb[0].mxu0
        %v4047 = vadd.f32 %v1753, %v4046
        %v4048 = vpop.f32.mrb[0].mxu0
        %4049 = vmatprep.mubr.bf16.mxu0 0
        %4050 = vmatmul.mubr.bf16.gmra.mrb[0].mxu0 %v3960
        %v4051 = vpop.f32.mrb[0].mxu0
        %v4052 = vadd.f32 %v1754, %v4051
        %v4053 = vpop.f32.mrb[0].mxu0
        %v4054 = vpop.f32.mrb[0].mxu0
        %v4055 = vadd.f32 %v1755, %v4054
        %v4056 = vpop.f32.mrb[0].mxu0
        %4057 = vmatprep.mubr.bf16.mxu0 0
        %4058 = vmatmul.mubr.bf16.gmra.mrb[0].mxu0 %v3963
        %v4059 = vpop.f32.mrb[0].mxu0
        %v4060 = vadd.f32 %v1756, %v4059
        %v4061 = vpop.f32.mrb[0].mxu0
        %v4062 = vpop.f32.mrb[0].mxu0
        %v4063 = vadd.f32 %v1757, %v4062
        %v4064 = vpop.f32.mrb[0].mxu0
        %4065 = vmatprep.mubr.bf16.mxu0 0
        %4066 = vmatmul.mubr.bf16.gmra.mrb[0].mxu0 %v3966
        %v4067 = vpop.f32.mrb[0].mxu0
        %v4068 = vadd.f32 %v1758, %v4067
        %v4069 = vpop.f32.mrb[0].mxu0
        %v4070 = vpop.f32.mrb[0].mxu0
        %v4071 = vadd.f32 %v1759, %v4070
        %v4072 = vpop.f32.mrb[0].mxu0
        %4073 = vmatprep.mubr.bf16.mxu0 0
        %4074 = vmatmul.mubr.bf16.gmra.mrb[0].mxu0 %v3969
        %v4075 = vpop.f32.mrb[0].mxu0
        %v4076 = vadd.f32 %v1760, %v4075
        %v4077 = vpop.f32.mrb[0].mxu0
        %v4078 = vpop.f32.mrb[0].mxu0
        %v4079 = vadd.f32 %v1761, %v4078
        %v4080 = vpop.f32.mrb[0].mxu0
        %4081 = vmatprep.mubr.bf16.mxu0 0
        %4082 = vmatmul.mubr.bf16.gmra.mrb[0].mxu0 %v3972
        %v4083 = vpop.f32.mrb[0].mxu0
        %v4084 = vadd.f32 %v1762, %v4083
        %v4085 = vpop.f32.mrb[0].mxu0
        %v4086 = vpop.f32.mrb[0].mxu0
        %v4087 = vadd.f32 %v1763, %v4086
        %v4088 = vpop.f32.mrb[0].mxu0
        %4089 = vmatprep.mubr.bf16.mxu0 0
        %4090 = vmatmul.mubr.bf16.gmra.mrb[0].mxu0 %v3975
        %v4091 = vpop.f32.mrb[0].mxu0
        %v4092 = vadd.f32 %v1764, %v4091
        %v4093 = vpop.f32.mrb[0].mxu0
        %v4094 = vpop.f32.mrb[0].mxu0
        %v4095 = vadd.f32 %v1765, %v4094
        %v4096 = vpop.f32.mrb[0].mxu0
        %4097 = vdwg.mxu0
        %4098 = vmax.xlane.f32.xlu0 %v3859
        %v4099 = vpop.xlane.xlu0 %4098
        %4100 = vmax.xlane.f32.xlu0 %v3862
        %v4101 = vpop.xlane.xlu0 %4100
        %4102 = vmax.xlane.f32.xlu0 %v3867
        %v4103 = vpop.xlane.xlu0 %4102
        %4104 = vmax.xlane.f32.xlu0 %v3870
        %v4105 = vpop.xlane.xlu0 %4104
        %4106 = vmax.xlane.f32.xlu0 %v3875
        %v4107 = vpop.xlane.xlu0 %4106
        %4108 = vmax.xlane.f32.xlu0 %v3878
        %v4109 = vpop.xlane.xlu0 %4108
        %4110 = vmax.xlane.f32.xlu0 %v3883
        %v4111 = vpop.xlane.xlu0 %4110
        %4112 = vmax.xlane.f32.xlu0 %v3886
        %v4113 = vpop.xlane.xlu0 %4112
        %4114 = vmax.xlane.f32.xlu0 %v3891
        %v4115 = vpop.xlane.xlu0 %4114
        %4116 = vmax.xlane.f32.xlu0 %v3894
        %v4117 = vpop.xlane.xlu0 %4116
        %4118 = vmax.xlane.f32.xlu0 %v3899
        %v4119 = vpop.xlane.xlu0 %4118
        %4120 = vmax.xlane.f32.xlu0 %v3902
        %v4121 = vpop.xlane.xlu0 %4120
        %4122 = vmax.xlane.f32.xlu0 %v3907
        %v4123 = vpop.xlane.xlu0 %4122
        %4124 = vmax.xlane.f32.xlu0 %v3910
        %v4125 = vpop.xlane.xlu0 %4124
        %4126 = vmax.xlane.f32.xlu0 %v3915
        %v4127 = vpop.xlane.xlu0 %4126
        %4128 = vmax.xlane.f32.xlu0 %v3918
        %v4129 = vpop.xlane.xlu0 %4128
        %4130 = vmax.xlane.f32.xlu0 %v4036
        %v4131 = vpop.xlane.xlu0 %4130
        %4132 = vmax.xlane.f32.xlu0 %v4039
        %v4133 = vpop.xlane.xlu0 %4132
        %4134 = vmax.xlane.f32.xlu0 %v4044
        %v4135 = vpop.xlane.xlu0 %4134
        %4136 = vmax.xlane.f32.xlu0 %v4047
        %v4137 = vpop.xlane.xlu0 %4136
        %4138 = vmax.xlane.f32.xlu0 %v4052
        %v4139 = vpop.xlane.xlu0 %4138
        %4140 = vmax.xlane.f32.xlu0 %v4055
        %v4141 = vpop.xlane.xlu0 %4140
        %4142 = vmax.xlane.f32.xlu0 %v4060
        %v4143 = vpop.xlane.xlu0 %4142
        %4144 = vmax.xlane.f32.xlu0 %v4063
        %v4145 = vpop.xlane.xlu0 %4144
        %4146 = vmax.xlane.f32.xlu0 %v4068
        %v4147 = vpop.xlane.xlu0 %4146
        %4148 = vmax.xlane.f32.xlu0 %v4071
        %v4149 = vpop.xlane.xlu0 %4148
        %4150 = vmax.xlane.f32.xlu0 %v4076
        %v4151 = vpop.xlane.xlu0 %4150
        %4152 = vmax.xlane.f32.xlu0 %v4079
        %v4153 = vpop.xlane.xlu0 %4152
        %4154 = vmax.xlane.f32.xlu0 %v4084
        %v4155 = vpop.xlane.xlu0 %4154
        %4156 = vmax.xlane.f32.xlu0 %v4087
        %v4157 = vpop.xlane.xlu0 %4156
        %4158 = vmax.xlane.f32.xlu0 %v4092
        %v4159 = vpop.xlane.xlu0 %4158
        %4160 = vmax.xlane.f32.xlu0 %v4095
        %v4161 = vpop.xlane.xlu0 %4160
        %v4162 = vsub.f32 %v3859, %v4099
        %v4163 = vsub.f32 %v3862, %v4101
        %v4164 = vsub.f32 %v3867, %v4103
        %v4165 = vsub.f32 %v3870, %v4105
        %v4166 = vsub.f32 %v3875, %v4107
        %v4167 = vsub.f32 %v3878, %v4109
        %v4168 = vsub.f32 %v3883, %v4111
        %v4169 = vsub.f32 %v3886, %v4113
        %v4170 = vsub.f32 %v3891, %v4115
        %v4171 = vsub.f32 %v3894, %v4117
        %v4172 = vsub.f32 %v3899, %v4119
        %v4173 = vsub.f32 %v3902, %v4121
        %v4174 = vsub.f32 %v3907, %v4123
        %v4175 = vsub.f32 %v3910, %v4125
        %v4176 = vsub.f32 %v3915, %v4127
        %v4177 = vsub.f32 %v3918, %v4129
        %v4178 = vsub.f32 %v4036, %v4131
        %v4179 = vsub.f32 %v4039, %v4133
        %v4180 = vsub.f32 %v4044, %v4135
        %v4181 = vsub.f32 %v4047, %v4137
        %v4182 = vsub.f32 %v4052, %v4139
        %v4183 = vsub.f32 %v4055, %v4141
        %v4184 = vsub.f32 %v4060, %v4143
        %v4185 = vsub.f32 %v4063, %v4145
        %v4186 = vsub.f32 %v4068, %v4147
        %v4187 = vsub.f32 %v4071, %v4149
        %v4188 = vsub.f32 %v4076, %v4151
        %v4189 = vsub.f32 %v4079, %v4153
        %v4190 = vsub.f32 %v4084, %v4155
        %v4191 = vsub.f32 %v4087, %v4157
        %v4192 = vsub.f32 %v4092, %v4159
        %v4193 = vsub.f32 %v4095, %v4161
        %v4194 = vmul.f32 %v4162, 1.442695
        %v4195 = vpow.pop %v4194
        %v4196 = vmul.f32 %v4163, 1.442695
        %v4197 = vpow.pop %v4196
        %v4198 = vmul.f32 %v4164, 1.442695
        %v4199 = vpow.pop %v4198
        %v4200 = vmul.f32 %v4165, 1.442695
        %v4201 = vpow.pop %v4200
        %v4202 = vmul.f32 %v4166, 1.442695
        %v4203 = vpow.pop %v4202
        %v4204 = vmul.f32 %v4167, 1.442695
        %v4205 = vpow.pop %v4204
        %v4206 = vmul.f32 %v4168, 1.442695
        %v4207 = vpow.pop %v4206
        %v4208 = vmul.f32 %v4169, 1.442695
        %v4209 = vpow.pop %v4208
        %v4210 = vmul.f32 %v4170, 1.442695
        %v4211 = vpow.pop %v4210
        %v4212 = vmul.f32 %v4171, 1.442695
        %v4213 = vpow.pop %v4212
        %v4214 = vmul.f32 %v4172, 1.442695
        %v4215 = vpow.pop %v4214
        %v4216 = vmul.f32 %v4173, 1.442695
        %v4217 = vpow.pop %v4216
        %v4218 = vmul.f32 %v4174, 1.442695
        %v4219 = vpow.pop %v4218
        %v4220 = vmul.f32 %v4175, 1.442695
        %v4221 = vpow.pop %v4220
        %v4222 = vmul.f32 %v4176, 1.442695
        %v4223 = vpow.pop %v4222
        %v4224 = vmul.f32 %v4177, 1.442695
        %v4225 = vpow.pop %v4224
        %v4226 = vmul.f32 %v4178, 1.442695
        %v4227 = vpow.pop %v4226
        %v4228 = vmul.f32 %v4179, 1.442695
        %v4229 = vpow.pop %v4228
        %v4230 = vmul.f32 %v4180, 1.442695
        %v4231 = vpow.pop %v4230
        %v4232 = vmul.f32 %v4181, 1.442695
        %v4233 = vpow.pop %v4232
        %v4234 = vmul.f32 %v4182, 1.442695
        %v4235 = vpow.pop %v4234
        %v4236 = vmul.f32 %v4183, 1.442695
        %v4237 = vpow.pop %v4236
        %v4238 = vmul.f32 %v4184, 1.442695
        %v4239 = vpow.pop %v4238
        %v4240 = vmul.f32 %v4185, 1.442695
        %v4241 = vpow.pop %v4240
        %v4242 = vmul.f32 %v4186, 1.442695
        %v4243 = vpow.pop %v4242
        %v4244 = vmul.f32 %v4187, 1.442695
        %v4245 = vpow.pop %v4244
        %v4246 = vmul.f32 %v4188, 1.442695
        %v4247 = vpow.pop %v4246
        %v4248 = vmul.f32 %v4189, 1.442695
        %v4249 = vpow.pop %v4248
        %v4250 = vmul.f32 %v4190, 1.442695
        %v4251 = vpow.pop %v4250
        %v4252 = vmul.f32 %v4191, 1.442695
        %v4253 = vpow.pop %v4252
        %v4254 = vmul.f32 %v4192, 1.442695
        %v4255 = vpow.pop %v4254
        %v4256 = vmul.f32 %v4193, 1.442695
        %v4257 = vpow.pop %v4256
        %4258 = vadd.xlane.f32.xlu0 %v4195
        %v4259 = vpop.xlane.xlu0 %4258
        %4260 = vadd.xlane.f32.xlu0 %v4197
        %v4261 = vpop.xlane.xlu0 %4260
        %4262 = vadd.xlane.f32.xlu0 %v4199
        %v4263 = vpop.xlane.xlu0 %4262
        %4264 = vadd.xlane.f32.xlu0 %v4201
        %v4265 = vpop.xlane.xlu0 %4264
        %4266 = vadd.xlane.f32.xlu0 %v4203
        %v4267 = vpop.xlane.xlu0 %4266
        %4268 = vadd.xlane.f32.xlu0 %v4205
        %v4269 = vpop.xlane.xlu0 %4268
        %4270 = vadd.xlane.f32.xlu0 %v4207
        %v4271 = vpop.xlane.xlu0 %4270
        %4272 = vadd.xlane.f32.xlu0 %v4209
        %v4273 = vpop.xlane.xlu0 %4272
        %4274 = vadd.xlane.f32.xlu0 %v4211
        %v4275 = vpop.xlane.xlu0 %4274
        %4276 = vadd.xlane.f32.xlu0 %v4213
        %v4277 = vpop.xlane.xlu0 %4276
        %4278 = vadd.xlane.f32.xlu0 %v4215
        %v4279 = vpop.xlane.xlu0 %4278
        %4280 = vadd.xlane.f32.xlu0 %v4217
        %v4281 = vpop.xlane.xlu0 %4280
        %4282 = vadd.xlane.f32.xlu0 %v4219
        %v4283 = vpop.xlane.xlu0 %4282
        %4284 = vadd.xlane.f32.xlu0 %v4221
        %v4285 = vpop.xlane.xlu0 %4284
        %4286 = vadd.xlane.f32.xlu0 %v4223
        %v4287 = vpop.xlane.xlu0 %4286
        %4288 = vadd.xlane.f32.xlu0 %v4225
        %v4289 = vpop.xlane.xlu0 %4288
        %4290 = vadd.xlane.f32.xlu0 %v4227
        %v4291 = vpop.xlane.xlu0 %4290
        %4292 = vadd.xlane.f32.xlu0 %v4229
        %v4293 = vpop.xlane.xlu0 %4292
        %4294 = vadd.xlane.f32.xlu0 %v4231
        %v4295 = vpop.xlane.xlu0 %4294
        %4296 = vadd.xlane.f32.xlu0 %v4233
        %v4297 = vpop.xlane.xlu0 %4296
        %4298 = vadd.xlane.f32.xlu0 %v4235
        %v4299 = vpop.xlane.xlu0 %4298
        %4300 = vadd.xlane.f32.xlu0 %v4237
        %v4301 = vpop.xlane.xlu0 %4300
        %4302 = vadd.xlane.f32.xlu0 %v4239
        %v4303 = vpop.xlane.xlu0 %4302
        %4304 = vadd.xlane.f32.xlu0 %v4241
        %v4305 = vpop.xlane.xlu0 %4304
        %4306 = vadd.xlane.f32.xlu0 %v4243
        %v4307 = vpop.xlane.xlu0 %4306
        %4308 = vadd.xlane.f32.xlu0 %v4245
        %v4309 = vpop.xlane.xlu0 %4308
        %4310 = vadd.xlane.f32.xlu0 %v4247
        %v4311 = vpop.xlane.xlu0 %4310
        %4312 = vadd.xlane.f32.xlu0 %v4249
        %v4313 = vpop.xlane.xlu0 %4312
        %4314 = vadd.xlane.f32.xlu0 %v4251
        %v4315 = vpop.xlane.xlu0 %4314
        %4316 = vadd.xlane.f32.xlu0 %v4253
        %v4317 = vpop.xlane.xlu0 %4316
        %4318 = vadd.xlane.f32.xlu0 %v4255
        %v4319 = vpop.xlane.xlu0 %4318
        %4320 = vadd.xlane.f32.xlu0 %v4257
        %v4321 = vpop.xlane.xlu0 %4320
        %v4322 = vrcp.pop %v4259
        %v4323 = vrcp.pop %v4261
        %v4324 = vrcp.pop %v4263
        %v4325 = vrcp.pop %v4265
        %v4326 = vrcp.pop %v4267
        %v4327 = vrcp.pop %v4269
        %v4328 = vrcp.pop %v4271
        %v4329 = vrcp.pop %v4273
        %v4330 = vrcp.pop %v4275
        %v4331 = vrcp.pop %v4277
        %v4332 = vrcp.pop %v4279
        %v4333 = vrcp.pop %v4281
        %v4334 = vrcp.pop %v4283
        %v4335 = vrcp.pop %v4285
        %v4336 = vrcp.pop %v4287
        %v4337 = vrcp.pop %v4289
        %v4338 = vrcp.pop %v4291
        %v4339 = vrcp.pop %v4293
        %v4340 = vrcp.pop %v4295
        %v4341 = vrcp.pop %v4297
        %v4342 = vrcp.pop %v4299
        %v4343 = vrcp.pop %v4301
        %v4344 = vrcp.pop %v4303
        %v4345 = vrcp.pop %v4305
        %v4346 = vrcp.pop %v4307
        %v4347 = vrcp.pop %v4309
        %v4348 = vrcp.pop %v4311
        %v4349 = vrcp.pop %v4313
        %v4350 = vrcp.pop %v4315
        %v4351 = vrcp.pop %v4317
        %v4352 = vrcp.pop %v4319
        %v4353 = vrcp.pop %v4321
        %v4354 = vmul.f32 %v4195, %v4322
        %v4355 = vmul.f32 %v4197, %v4323
        %v4356 = vmul.f32 %v4199, %v4324
        %v4357 = vmul.f32 %v4201, %v4325
        %v4358 = vmul.f32 %v4203, %v4326
        %v4359 = vmul.f32 %v4205, %v4327
        %v4360 = vmul.f32 %v4207, %v4328
        %v4361 = vmul.f32 %v4209, %v4329
        %v4362 = vmul.f32 %v4211, %v4330
        %v4363 = vmul.f32 %v4213, %v4331
        %v4364 = vmul.f32 %v4215, %v4332
        %v4365 = vmul.f32 %v4217, %v4333
        %v4366 = vmul.f32 %v4219, %v4334
        %v4367 = vmul.f32 %v4221, %v4335
        %v4368 = vmul.f32 %v4223, %v4336
        %v4369 = vmul.f32 %v4225, %v4337
        %v4370 = vmul.f32 %v4227, %v4338
        %v4371 = vmul.f32 %v4229, %v4339
        %v4372 = vmul.f32 %v4231, %v4340
        %v4373 = vmul.f32 %v4233, %v4341
        %v4374 = vmul.f32 %v4235, %v4342
        %v4375 = vmul.f32 %v4237, %v4343
        %v4376 = vmul.f32 %v4239, %v4344
        %v4377 = vmul.f32 %v4241, %v4345
        %v4378 = vmul.f32 %v4243, %v4346
        %v4379 = vmul.f32 %v4245, %v4347
        %v4380 = vmul.f32 %v4247, %v4348
        %v4381 = vmul.f32 %v4249, %v4349
        %v4382 = vmul.f32 %v4251, %v4350
        %v4383 = vmul.f32 %v4253, %v4351
        %v4384 = vmul.f32 %v4255, %v4352
        %v4385 = vmul.f32 %v4257, %v4353
        %v4386 = vpack.c.bf16 %v4355, %v4354
        %v4387 = vpack.c.bf16 %v4357, %v4356
        %v4388 = vpack.c.bf16 %v4359, %v4358
        %v4389 = vpack.c.bf16 %v4361, %v4360
        %v4390 = vpack.c.bf16 %v4363, %v4362
        %v4391 = vpack.c.bf16 %v4365, %v4364
        %v4392 = vpack.c.bf16 %v4367, %v4366
        %v4393 = vpack.c.bf16 %v4369, %v4368
        %v4394 = vpack.c.bf16 %v4371, %v4370
        %v4395 = vpack.c.bf16 %v4373, %v4372
        %v4396 = vpack.c.bf16 %v4375, %v4374
        %v4397 = vpack.c.bf16 %v4377, %v4376
        %v4398 = vpack.c.bf16 %v4379, %v4378
        %v4399 = vpack.c.bf16 %v4381, %v4380
        %v4400 = vpack.c.bf16 %v4383, %v4382
        %v4401 = vpack.c.bf16 %v4385, %v4384
        %4402 = vrot.lane.b32.xlu0 %v1734, 48
        %v4403 = vpop.permute.xlu0 %4402
        %4404 = vrot.lane.b32.xlu0 %v1735, 48
        %v4405 = vpop.permute.xlu0 %4404
        %4406 = vrot.lane.b32.xlu0 %v1736, 48
        %v4407 = vpop.permute.xlu0 %4406
        %4408 = vrot.lane.b32.xlu0 %v1737, 48
        %v4409 = vpop.permute.xlu0 %4408
        %4410 = vrot.lane.b32.xlu0 %v1738, 48
        %v4411 = vpop.permute.xlu0 %4410
        %4412 = vrot.lane.b32.xlu0 %v1739, 48
        %v4413 = vpop.permute.xlu0 %4412
        %4414 = vrot.lane.b32.xlu0 %v1740, 48
        %v4415 = vpop.permute.xlu0 %4414
        %4416 = vrot.lane.b32.xlu0 %v1741, 48
        %v4417 = vpop.permute.xlu0 %4416
        %4426 = vmatprep.subr.bf16.mxu0 0
        %4427 = vmatpush1.bf16.msra.mxu0 %v4403
        %4428 = vmatprep.subr.bf16.mxu0 0
        %4429 = vmatpush1.bf16.msra.mxu0 %v4405
        %4430 = vmatprep.subr.bf16.mxu0 0
        %4431 = vmatpush1.bf16.msra.mxu0 %v4407
        %4432 = vmatprep.subr.bf16.mxu0 0
        %4433 = vmatpush1.bf16.msra.mxu0 %v4409
        %4434 = vmatprep.subr.bf16.mxu0 0
        %4435 = vmatpush1.bf16.msra.mxu0 %v4411
        %4436 = vmatprep.subr.bf16.mxu0 0
        %4437 = vmatpush1.bf16.msra.mxu0 %v4413
        %4438 = vmatprep.subr.bf16.mxu0 0
        %4439 = vmatpush1.bf16.msra.mxu0 %v4415
        %4440 = vmatprep.subr.bf16.mxu0 0
        %4441 = vmatpush1.bf16.msra.mxu0 %v4417
        %4442 = vmatprep.subr.bf16.mxu0 0
        %4443 = vmatpush1.bf16.msra.mxu0 0
        %4444 = vmatprep.subr.bf16.mxu0 0
        %4445 = vmatpush1.bf16.msra.mxu0 0
        %4446 = vmatprep.subr.bf16.mxu0 0
        %4447 = vmatpush1.bf16.msra.mxu0 0
        %4448 = vmatprep.subr.bf16.mxu0 0
        %4449 = vmatpush1.bf16.msra.mxu0 0
        %4450 = vmatprep.subr.bf16.mxu0 0
        %4451 = vmatpush1.bf16.msra.mxu0 0
        %4452 = vmatprep.subr.bf16.mxu0 0
        %4453 = vmatpush1.bf16.msra.mxu0 0
        %4454 = vmatprep.subr.bf16.mxu0 0
        %4455 = vmatpush1.bf16.msra.mxu0 0
        %4456 = vmatprep.subr.bf16.mxu0 0
        %4457 = vmatpush1.bf16.msra.mxu0 0
        %4458 = vmatprep.mubr.bf16.mxu0 0
        %4459 = vmatmul.mubr.bf16.gmra.mrb[0].mxu0 %v4386
        %v4460 = vpop.f32.mrb[0].mxu0
        %v4461 = vadd.f32 0.0, %v4460
        %v4462 = vpop.f32.mrb[0].mxu0
        %v4463 = vpop.f32.mrb[0].mxu0
        %v4464 = vadd.f32 0.0, %v4463
        %v4465 = vpop.f32.mrb[0].mxu0
        %4466 = vmatprep.mubr.bf16.mxu0 0
        %4467 = vmatmul.mubr.bf16.gmra.mrb[0].mxu0 %v4387
        %v4468 = vpop.f32.mrb[0].mxu0
        %v4469 = vadd.f32 0.0, %v4468
        %v4470 = vpop.f32.mrb[0].mxu0
        %v4471 = vpop.f32.mrb[0].mxu0
        %v4472 = vadd.f32 0.0, %v4471
        %v4473 = vpop.f32.mrb[0].mxu0
        %4474 = vmatprep.mubr.bf16.mxu0 0
        %4475 = vmatmul.mubr.bf16.gmra.mrb[0].mxu0 %v4388
        %v4476 = vpop.f32.mrb[0].mxu0
        %v4477 = vadd.f32 0.0, %v4476
        %v4478 = vpop.f32.mrb[0].mxu0
        %v4479 = vpop.f32.mrb[0].mxu0
        %v4480 = vadd.f32 0.0, %v4479
        %v4481 = vpop.f32.mrb[0].mxu0
        %4482 = vmatprep.mubr.bf16.mxu0 0
        %4483 = vmatmul.mubr.bf16.gmra.mrb[0].mxu0 %v4389
        %v4484 = vpop.f32.mrb[0].mxu0
        %v4485 = vadd.f32 0.0, %v4484
        %v4486 = vpop.f32.mrb[0].mxu0
        %v4487 = vpop.f32.mrb[0].mxu0
        %v4488 = vadd.f32 0.0, %v4487
        %v4489 = vpop.f32.mrb[0].mxu0
        %4490 = vmatprep.mubr.bf16.mxu0 0
        %4491 = vmatmul.mubr.bf16.gmra.mrb[0].mxu0 %v4390
        %v4492 = vpop.f32.mrb[0].mxu0
        %v4493 = vadd.f32 0.0, %v4492
        %v4494 = vpop.f32.mrb[0].mxu0
        %v4495 = vpop.f32.mrb[0].mxu0
        %v4496 = vadd.f32 0.0, %v4495
        %v4497 = vpop.f32.mrb[0].mxu0
        %4498 = vmatprep.mubr.bf16.mxu0 0
        %4499 = vmatmul.mubr.bf16.gmra.mrb[0].mxu0 %v4391
        %v4500 = vpop.f32.mrb[0].mxu0
        %v4501 = vadd.f32 0.0, %v4500
        %v4502 = vpop.f32.mrb[0].mxu0
        %v4503 = vpop.f32.mrb[0].mxu0
        %v4504 = vadd.f32 0.0, %v4503
        %v4505 = vpop.f32.mrb[0].mxu0
        %4506 = vmatprep.mubr.bf16.mxu0 0
        %4507 = vmatmul.mubr.bf16.gmra.mrb[0].mxu0 %v4392
        %v4508 = vpop.f32.mrb[0].mxu0
        %v4509 = vadd.f32 0.0, %v4508
        %v4510 = vpop.f32.mrb[0].mxu0
        %v4511 = vpop.f32.mrb[0].mxu0
        %v4512 = vadd.f32 0.0, %v4511
        %v4513 = vpop.f32.mrb[0].mxu0
        %4514 = vmatprep.mubr.bf16.mxu0 0
        %4515 = vmatmul.mubr.bf16.gmra.mrb[0].mxu0 %v4393
        %v4516 = vpop.f32.mrb[0].mxu0
        %v4517 = vadd.f32 0.0, %v4516
        %v4518 = vpop.f32.mrb[0].mxu0
        %v4519 = vpop.f32.mrb[0].mxu0
        %v4520 = vadd.f32 0.0, %v4519
        %v4521 = vpop.f32.mrb[0].mxu0
        %4522 = vdwg.mxu0
        %4523 = vrot.lane.b32.xlu0 %v1742, 48
        %v4524 = vpop.permute.xlu0 %4523
        %4525 = vrot.lane.b32.xlu0 %v1743, 48
        %v4526 = vpop.permute.xlu0 %4525
        %4527 = vrot.lane.b32.xlu0 %v1744, 48
        %v4528 = vpop.permute.xlu0 %4527
        %4529 = vrot.lane.b32.xlu0 %v1745, 48
        %v4530 = vpop.permute.xlu0 %4529
        %4531 = vrot.lane.b32.xlu0 %v1746, 48
        %v4532 = vpop.permute.xlu0 %4531
        %4533 = vrot.lane.b32.xlu0 %v1747, 48
        %v4534 = vpop.permute.xlu0 %4533
        %4535 = vrot.lane.b32.xlu0 %v1748, 48
        %v4536 = vpop.permute.xlu0 %4535
        %4537 = vrot.lane.b32.xlu0 %v1749, 48
        %v4538 = vpop.permute.xlu0 %4537
        %4547 = vmatprep.subr.bf16.mxu0 0
        %4548 = vmatpush1.bf16.msra.mxu0 %v4524
        %4549 = vmatprep.subr.bf16.mxu0 0
        %4550 = vmatpush1.bf16.msra.mxu0 %v4526
        %4551 = vmatprep.subr.bf16.mxu0 0
        %4552 = vmatpush1.bf16.msra.mxu0 %v4528
        %4553 = vmatprep.subr.bf16.mxu0 0
        %4554 = vmatpush1.bf16.msra.mxu0 %v4530
        %4555 = vmatprep.subr.bf16.mxu0 0
        %4556 = vmatpush1.bf16.msra.mxu0 %v4532
        %4557 = vmatprep.subr.bf16.mxu0 0
        %4558 = vmatpush1.bf16.msra.mxu0 %v4534
        %4559 = vmatprep.subr.bf16.mxu0 0
        %4560 = vmatpush1.bf16.msra.mxu0 %v4536
        %4561 = vmatprep.subr.bf16.mxu0 0
        %4562 = vmatpush1.bf16.msra.mxu0 %v4538
        %4563 = vmatprep.subr.bf16.mxu0 0
        %4564 = vmatpush1.bf16.msra.mxu0 0
        %4565 = vmatprep.subr.bf16.mxu0 0
        %4566 = vmatpush1.bf16.msra.mxu0 0
        %4567 = vmatprep.subr.bf16.mxu0 0
        %4568 = vmatpush1.bf16.msra.mxu0 0
        %4569 = vmatprep.subr.bf16.mxu0 0
        %4570 = vmatpush1.bf16.msra.mxu0 0
        %4571 = vmatprep.subr.bf16.mxu0 0
        %4572 = vmatpush1.bf16.msra.mxu0 0
        %4573 = vmatprep.subr.bf16.mxu0 0
        %4574 = vmatpush1.bf16.msra.mxu0 0
        %4575 = vmatprep.subr.bf16.mxu0 0
        %4576 = vmatpush1.bf16.msra.mxu0 0
        %4577 = vmatprep.subr.bf16.mxu0 0
        %4578 = vmatpush1.bf16.msra.mxu0 0
        %4579 = vmatprep.mubr.bf16.mxu0 0
        %4580 = vmatmul.mubr.bf16.gmra.mrb[0].mxu0 %v4394
        %v4581 = vpop.f32.mrb[0].mxu0
        %v4582 = vadd.f32 0.0, %v4581
        %v4583 = vpop.f32.mrb[0].mxu0
        %v4584 = vpop.f32.mrb[0].mxu0
        %v4585 = vadd.f32 0.0, %v4584
        %v4586 = vpop.f32.mrb[0].mxu0
        %4587 = vmatprep.mubr.bf16.mxu0 0
        %4588 = vmatmul.mubr.bf16.gmra.mrb[0].mxu0 %v4395
        %v4589 = vpop.f32.mrb[0].mxu0
        %v4590 = vadd.f32 0.0, %v4589
        %v4591 = vpop.f32.mrb[0].mxu0
        %v4592 = vpop.f32.mrb[0].mxu0
        %v4593 = vadd.f32 0.0, %v4592
        %v4594 = vpop.f32.mrb[0].mxu0
        %4595 = vmatprep.mubr.bf16.mxu0 0
        %4596 = vmatmul.mubr.bf16.gmra.mrb[0].mxu0 %v4396
        %v4597 = vpop.f32.mrb[0].mxu0
        %v4598 = vadd.f32 0.0, %v4597
        %v4599 = vpop.f32.mrb[0].mxu0
        %v4600 = vpop.f32.mrb[0].mxu0
        %v4601 = vadd.f32 0.0, %v4600
        %v4602 = vpop.f32.mrb[0].mxu0
        %4603 = vmatprep.mubr.bf16.mxu0 0
        %4604 = vmatmul.mubr.bf16.gmra.mrb[0].mxu0 %v4397
        %v4605 = vpop.f32.mrb[0].mxu0
        %v4606 = vadd.f32 0.0, %v4605
        %v4607 = vpop.f32.mrb[0].mxu0
        %v4608 = vpop.f32.mrb[0].mxu0
        %v4609 = vadd.f32 0.0, %v4608
        %v4610 = vpop.f32.mrb[0].mxu0
        %4611 = vmatprep.mubr.bf16.mxu0 0
        %4612 = vmatmul.mubr.bf16.gmra.mrb[0].mxu0 %v4398
        %v4613 = vpop.f32.mrb[0].mxu0
        %v4614 = vadd.f32 0.0, %v4613
        %v4615 = vpop.f32.mrb[0].mxu0
        %v4616 = vpop.f32.mrb[0].mxu0
        %v4617 = vadd.f32 0.0, %v4616
        %v4618 = vpop.f32.mrb[0].mxu0
        %4619 = vmatprep.mubr.bf16.mxu0 0
        %4620 = vmatmul.mubr.bf16.gmra.mrb[0].mxu0 %v4399
        %v4621 = vpop.f32.mrb[0].mxu0
        %v4622 = vadd.f32 0.0, %v4621
        %v4623 = vpop.f32.mrb[0].mxu0
        %v4624 = vpop.f32.mrb[0].mxu0
        %v4625 = vadd.f32 0.0, %v4624
        %v4626 = vpop.f32.mrb[0].mxu0
        %4627 = vmatprep.mubr.bf16.mxu0 0
        %4628 = vmatmul.mubr.bf16.gmra.mrb[0].mxu0 %v4400
        %v4629 = vpop.f32.mrb[0].mxu0
        %v4630 = vadd.f32 0.0, %v4629
        %v4631 = vpop.f32.mrb[0].mxu0
        %v4632 = vpop.f32.mrb[0].mxu0
        %v4633 = vadd.f32 0.0, %v4632
        %v4634 = vpop.f32.mrb[0].mxu0
        %4635 = vmatprep.mubr.bf16.mxu0 0
        %4636 = vmatmul.mubr.bf16.gmra.mrb[0].mxu0 %v4401
        %v4637 = vpop.f32.mrb[0].mxu0
        %v4638 = vadd.f32 0.0, %v4637
        %v4639 = vpop.f32.mrb[0].mxu0
        %v4640 = vpop.f32.mrb[0].mxu0
        %v4641 = vadd.f32 0.0, %v4640
        %v4642 = vpop.f32.mrb[0].mxu0
        %4643 = vdwg.mxu0
        %4644 = vrot.lane.b32.xlu0 %v1734, 104
        %v4645 = vpop.permute.xlu0 %4644
        %4646 = vrot.lane.b32.xlu0 %v1735, 104
        %v4647 = vpop.permute.xlu0 %4646
        %4648 = vrot.lane.b32.xlu0 %v1736, 104
        %v4649 = vpop.permute.xlu0 %4648
        %4650 = vrot.lane.b32.xlu0 %v1737, 104
        %v4651 = vpop.permute.xlu0 %4650
        %4652 = vrot.lane.b32.xlu0 %v1738, 104
        %v4653 = vpop.permute.xlu0 %4652
        %4654 = vrot.lane.b32.xlu0 %v1739, 104
        %v4655 = vpop.permute.xlu0 %4654
        %4656 = vrot.lane.b32.xlu0 %v1740, 104
        %v4657 = vpop.permute.xlu0 %4656
        %4658 = vrot.lane.b32.xlu0 %v1741, 104
        %v4659 = vpop.permute.xlu0 %4658
        %4660 = vrot.lane.b32.xlu0 %v1734, 72
        %v4661 = vpop.permute.xlu0 %4660
        %4662 = vrot.lane.b32.xlu0 %v1735, 72
        %v4663 = vpop.permute.xlu0 %4662
        %4664 = vrot.lane.b32.xlu0 %v1736, 72
        %v4665 = vpop.permute.xlu0 %4664
        %4666 = vrot.lane.b32.xlu0 %v1737, 72
        %v4667 = vpop.permute.xlu0 %4666
        %4668 = vrot.lane.b32.xlu0 %v1738, 72
        %v4669 = vpop.permute.xlu0 %4668
        %4670 = vrot.lane.b32.xlu0 %v1739, 72
        %v4671 = vpop.permute.xlu0 %4670
        %4672 = vrot.lane.b32.xlu0 %v1740, 72
        %v4673 = vpop.permute.xlu0 %4672
        %4674 = vrot.lane.b32.xlu0 %v1741, 72
        %v4675 = vpop.permute.xlu0 %4674
        %v4677 = vsel %vm1790, %v4645, 0
        %v4680 = vsel %vm1790, %v4647, 0
        %v4683 = vsel %vm1790, %v4649, 0
        %v4686 = vsel %vm1790, %v4651, 0
        %v4689 = vsel %vm1790, %v4653, 0
        %v4692 = vsel %vm1790, %v4655, 0
        %v4695 = vsel %vm1790, %v4657, 0
        %v4698 = vsel %vm1790, %v4659, 0
        %v4701 = vsel %vm1790, %v4661, 0
        %v4704 = vsel %vm1790, %v4663, 0
        %v4707 = vsel %vm1790, %v4665, 0
        %v4710 = vsel %vm1790, %v4667, 0
        %v4713 = vsel %vm1790, %v4669, 0
        %v4716 = vsel %vm1790, %v4671, 0
        %v4719 = vsel %vm1790, %v4673, 0
        %v4722 = vsel %vm1790, %v4675, 0
        %4724 = vmatprep.subr.bf16.mxu0 0
        %4725 = vmatpush1.bf16.xpose.msra.mxu0 %v4701
        %4726 = vmatprep.subr.bf16.mxu0 0
        %4727 = vmatpush1.bf16.xpose.msra.mxu0 %v4704
        %4728 = vmatprep.subr.bf16.mxu0 0
        %4729 = vmatpush1.bf16.xpose.msra.mxu0 %v4707
        %4730 = vmatprep.subr.bf16.mxu0 0
        %4731 = vmatpush1.bf16.xpose.msra.mxu0 %v4710
        %4732 = vmatprep.subr.bf16.mxu0 0
        %4733 = vmatpush1.bf16.xpose.msra.mxu0 %v4713
        %4734 = vmatprep.subr.bf16.mxu0 0
        %4735 = vmatpush1.bf16.xpose.msra.mxu0 %v4716
        %4736 = vmatprep.subr.bf16.mxu0 0
        %4737 = vmatpush1.bf16.xpose.msra.mxu0 %v4719
        %4738 = vmatprep.subr.bf16.mxu0 0
        %4739 = vmatpush1.bf16.xpose.msra.mxu0 %v4722
        %4740 = vmatprep.subr.bf16.mxu0 0
        %4741 = vmatpush1.bf16.xpose.msra.mxu0 0
        %4742 = vmatprep.subr.bf16.mxu0 0
        %4743 = vmatpush1.bf16.xpose.msra.mxu0 0
        %4744 = vmatprep.subr.bf16.mxu0 0
        %4745 = vmatpush1.bf16.xpose.msra.mxu0 0
        %4746 = vmatprep.subr.bf16.mxu0 0
        %4747 = vmatpush1.bf16.xpose.msra.mxu0 0
        %4748 = vmatprep.subr.bf16.mxu0 0
        %4749 = vmatpush1.bf16.xpose.msra.mxu0 0
        %4750 = vmatprep.subr.bf16.mxu0 0
        %4751 = vmatpush1.bf16.xpose.msra.mxu0 0
        %4752 = vmatprep.subr.bf16.mxu0 0
        %4753 = vmatpush1.bf16.xpose.msra.mxu0 0
        %4754 = vmatprep.subr.bf16.mxu0 0
        %4755 = vmatpush1.bf16.xpose.msra.mxu0 0
        %4756 = vmatprep.mubr.bf16.mxu0 0
        %4757 = vmatmul.mubr.bf16.gmra.mrb[0].mxu0 %v4677
        %v4758 = vpop.f32.mrb[0].mxu0
        %v4759 = vadd.f32 %v1750, %v4758
        %v4760 = vpop.f32.mrb[0].mxu0
        %v4761 = vpop.f32.mrb[0].mxu0
        %v4762 = vadd.f32 %v1751, %v4761
        %v4763 = vpop.f32.mrb[0].mxu0
        %4764 = vmatprep.mubr.bf16.mxu0 0
        %4765 = vmatmul.mubr.bf16.gmra.mrb[0].mxu0 %v4680
        %v4766 = vpop.f32.mrb[0].mxu0
        %v4767 = vadd.f32 %v1752, %v4766
        %v4768 = vpop.f32.mrb[0].mxu0
        %v4769 = vpop.f32.mrb[0].mxu0
        %v4770 = vadd.f32 %v1753, %v4769
        %v4771 = vpop.f32.mrb[0].mxu0
        %4772 = vmatprep.mubr.bf16.mxu0 0
        %4773 = vmatmul.mubr.bf16.gmra.mrb[0].mxu0 %v4683
        %v4774 = vpop.f32.mrb[0].mxu0
        %v4775 = vadd.f32 %v1754, %v4774
        %v4776 = vpop.f32.mrb[0].mxu0
        %v4777 = vpop.f32.mrb[0].mxu0
        %v4778 = vadd.f32 %v1755, %v4777
        %v4779 = vpop.f32.mrb[0].mxu0
        %4780 = vmatprep.mubr.bf16.mxu0 0
        %4781 = vmatmul.mubr.bf16.gmra.mrb[0].mxu0 %v4686
        %v4782 = vpop.f32.mrb[0].mxu0
        %v4783 = vadd.f32 %v1756, %v4782
        %v4784 = vpop.f32.mrb[0].mxu0
        %v4785 = vpop.f32.mrb[0].mxu0
        %v4786 = vadd.f32 %v1757, %v4785
        %v4787 = vpop.f32.mrb[0].mxu0
        %4788 = vmatprep.mubr.bf16.mxu0 0
        %4789 = vmatmul.mubr.bf16.gmra.mrb[0].mxu0 %v4689
        %v4790 = vpop.f32.mrb[0].mxu0
        %v4791 = vadd.f32 %v1758, %v4790
        %v4792 = vpop.f32.mrb[0].mxu0
        %v4793 = vpop.f32.mrb[0].mxu0
        %v4794 = vadd.f32 %v1759, %v4793
        %v4795 = vpop.f32.mrb[0].mxu0
        %4796 = vmatprep.mubr.bf16.mxu0 0
        %4797 = vmatmul.mubr.bf16.gmra.mrb[0].mxu0 %v4692
        %v4798 = vpop.f32.mrb[0].mxu0
        %v4799 = vadd.f32 %v1760, %v4798
        %v4800 = vpop.f32.mrb[0].mxu0
        %v4801 = vpop.f32.mrb[0].mxu0
        %v4802 = vadd.f32 %v1761, %v4801
        %v4803 = vpop.f32.mrb[0].mxu0
        %4804 = vmatprep.mubr.bf16.mxu0 0
        %4805 = vmatmul.mubr.bf16.gmra.mrb[0].mxu0 %v4695
        %v4806 = vpop.f32.mrb[0].mxu0
        %v4807 = vadd.f32 %v1762, %v4806
        %v4808 = vpop.f32.mrb[0].mxu0
        %v4809 = vpop.f32.mrb[0].mxu0
        %v4810 = vadd.f32 %v1763, %v4809
        %v4811 = vpop.f32.mrb[0].mxu0
        %4812 = vmatprep.mubr.bf16.mxu0 0
        %4813 = vmatmul.mubr.bf16.gmra.mrb[0].mxu0 %v4698
        %v4814 = vpop.f32.mrb[0].mxu0
        %v4815 = vadd.f32 %v1764, %v4814
        %v4816 = vpop.f32.mrb[0].mxu0
        %v4817 = vpop.f32.mrb[0].mxu0
        %v4818 = vadd.f32 %v1765, %v4817
        %v4819 = vpop.f32.mrb[0].mxu0
        %4820 = vdwg.mxu0
        %4821 = vrot.lane.b32.xlu0 %v1742, 104
        %v4822 = vpop.permute.xlu0 %4821
        %4823 = vrot.lane.b32.xlu0 %v1743, 104
        %v4824 = vpop.permute.xlu0 %4823
        %4825 = vrot.lane.b32.xlu0 %v1744, 104
        %v4826 = vpop.permute.xlu0 %4825
        %4827 = vrot.lane.b32.xlu0 %v1745, 104
        %v4828 = vpop.permute.xlu0 %4827
        %4829 = vrot.lane.b32.xlu0 %v1746, 104
        %v4830 = vpop.permute.xlu0 %4829
        %4831 = vrot.lane.b32.xlu0 %v1747, 104
        %v4832 = vpop.permute.xlu0 %4831
        %4833 = vrot.lane.b32.xlu0 %v1748, 104
        %v4834 = vpop.permute.xlu0 %4833
        %4835 = vrot.lane.b32.xlu0 %v1749, 104
        %v4836 = vpop.permute.xlu0 %4835
        %4837 = vrot.lane.b32.xlu0 %v1742, 72
        %v4838 = vpop.permute.xlu0 %4837
        %4839 = vrot.lane.b32.xlu0 %v1743, 72
        %v4840 = vpop.permute.xlu0 %4839
        %4841 = vrot.lane.b32.xlu0 %v1744, 72
        %v4842 = vpop.permute.xlu0 %4841
        %4843 = vrot.lane.b32.xlu0 %v1745, 72
        %v4844 = vpop.permute.xlu0 %4843
        %4845 = vrot.lane.b32.xlu0 %v1746, 72
        %v4846 = vpop.permute.xlu0 %4845
        %4847 = vrot.lane.b32.xlu0 %v1747, 72
        %v4848 = vpop.permute.xlu0 %4847
        %4849 = vrot.lane.b32.xlu0 %v1748, 72
        %v4850 = vpop.permute.xlu0 %4849
        %4851 = vrot.lane.b32.xlu0 %v1749, 72
        %v4852 = vpop.permute.xlu0 %4851
        %v4854 = vsel %vm1790, %v4822, 0
        %v4857 = vsel %vm1790, %v4824, 0
        %v4860 = vsel %vm1790, %v4826, 0
        %v4863 = vsel %vm1790, %v4828, 0
        %v4866 = vsel %vm1790, %v4830, 0
        %v4869 = vsel %vm1790, %v4832, 0
        %v4872 = vsel %vm1790, %v4834, 0
        %v4875 = vsel %vm1790, %v4836, 0
        %v4878 = vsel %vm1790, %v4838, 0
        %v4881 = vsel %vm1790, %v4840, 0
        %v4884 = vsel %vm1790, %v4842, 0
        %v4887 = vsel %vm1790, %v4844, 0
        %v4890 = vsel %vm1790, %v4846, 0
        %v4893 = vsel %vm1790, %v4848, 0
        %v4896 = vsel %vm1790, %v4850, 0
        %v4899 = vsel %vm1790, %v4852, 0
        %4901 = vmatprep.subr.bf16.mxu0 0
        %4902 = vmatpush1.bf16.xpose.msra.mxu0 %v4878
        %4903 = vmatprep.subr.bf16.mxu0 0
        %4904 = vmatpush1.bf16.xpose.msra.mxu0 %v4881
        %4905 = vmatprep.subr.bf16.mxu0 0
        %4906 = vmatpush1.bf16.xpose.msra.mxu0 %v4884
        %4907 = vmatprep.subr.bf16.mxu0 0
        %4908 = vmatpush1.bf16.xpose.msra.mxu0 %v4887
        %4909 = vmatprep.subr.bf16.mxu0 0
        %4910 = vmatpush1.bf16.xpose.msra.mxu0 %v4890
        %4911 = vmatprep.subr.bf16.mxu0 0
        %4912 = vmatpush1.bf16.xpose.msra.mxu0 %v4893
        %4913 = vmatprep.subr.bf16.mxu0 0
        %4914 = vmatpush1.bf16.xpose.msra.mxu0 %v4896
        %4915 = vmatprep.subr.bf16.mxu0 0
        %4916 = vmatpush1.bf16.xpose.msra.mxu0 %v4899
        %4917 = vmatprep.subr.bf16.mxu0 0
        %4918 = vmatpush1.bf16.xpose.msra.mxu0 0
        %4919 = vmatprep.subr.bf16.mxu0 0
        %4920 = vmatpush1.bf16.xpose.msra.mxu0 0
        %4921 = vmatprep.subr.bf16.mxu0 0
        %4922 = vmatpush1.bf16.xpose.msra.mxu0 0
        %4923 = vmatprep.subr.bf16.mxu0 0
        %4924 = vmatpush1.bf16.xpose.msra.mxu0 0
        %4925 = vmatprep.subr.bf16.mxu0 0
        %4926 = vmatpush1.bf16.xpose.msra.mxu0 0
        %4927 = vmatprep.subr.bf16.mxu0 0
        %4928 = vmatpush1.bf16.xpose.msra.mxu0 0
        %4929 = vmatprep.subr.bf16.mxu0 0
        %4930 = vmatpush1.bf16.xpose.msra.mxu0 0
        %4931 = vmatprep.subr.bf16.mxu0 0
        %4932 = vmatpush1.bf16.xpose.msra.mxu0 0
        %4933 = vmatprep.mubr.bf16.mxu0 0
        %4934 = vmatmul.mubr.bf16.gmra.mrb[0].mxu0 %v4854
        %v4935 = vpop.f32.mrb[0].mxu0
        %v4936 = vadd.f32 %v1750, %v4935
        %v4937 = vpop.f32.mrb[0].mxu0
        %v4938 = vpop.f32.mrb[0].mxu0
        %v4939 = vadd.f32 %v1751, %v4938
        %v4940 = vpop.f32.mrb[0].mxu0
        %4941 = vmatprep.mubr.bf16.mxu0 0
        %4942 = vmatmul.mubr.bf16.gmra.mrb[0].mxu0 %v4857
        %v4943 = vpop.f32.mrb[0].mxu0
        %v4944 = vadd.f32 %v1752, %v4943
        %v4945 = vpop.f32.mrb[0].mxu0
        %v4946 = vpop.f32.mrb[0].mxu0
        %v4947 = vadd.f32 %v1753, %v4946
        %v4948 = vpop.f32.mrb[0].mxu0
        %4949 = vmatprep.mubr.bf16.mxu0 0
        %4950 = vmatmul.mubr.bf16.gmra.mrb[0].mxu0 %v4860
        %v4951 = vpop.f32.mrb[0].mxu0
        %v4952 = vadd.f32 %v1754, %v4951
        %v4953 = vpop.f32.mrb[0].mxu0
        %v4954 = vpop.f32.mrb[0].mxu0
        %v4955 = vadd.f32 %v1755, %v4954
        %v4956 = vpop.f32.mrb[0].mxu0
        %4957 = vmatprep.mubr.bf16.mxu0 0
        %4958 = vmatmul.mubr.bf16.gmra.mrb[0].mxu0 %v4863
        %v4959 = vpop.f32.mrb[0].mxu0
        %v4960 = vadd.f32 %v1756, %v4959
        %v4961 = vpop.f32.mrb[0].mxu0
        %v4962 = vpop.f32.mrb[0].mxu0
        %v4963 = vadd.f32 %v1757, %v4962
        %v4964 = vpop.f32.mrb[0].mxu0
        %4965 = vmatprep.mubr.bf16.mxu0 0
        %4966 = vmatmul.mubr.bf16.gmra.mrb[0].mxu0 %v4866
        %v4967 = vpop.f32.mrb[0].mxu0
        %v4968 = vadd.f32 %v1758, %v4967
        %v4969 = vpop.f32.mrb[0].mxu0
        %v4970 = vpop.f32.mrb[0].mxu0
        %v4971 = vadd.f32 %v1759, %v4970
        %v4972 = vpop.f32.mrb[0].mxu0
        %4973 = vmatprep.mubr.bf16.mxu0 0
        %4974 = vmatmul.mubr.bf16.gmra.mrb[0].mxu0 %v4869
        %v4975 = vpop.f32.mrb[0].mxu0
        %v4976 = vadd.f32 %v1760, %v4975
        %v4977 = vpop.f32.mrb[0].mxu0
        %v4978 = vpop.f32.mrb[0].mxu0
        %v4979 = vadd.f32 %v1761, %v4978
        %v4980 = vpop.f32.mrb[0].mxu0
        %4981 = vmatprep.mubr.bf16.mxu0 0
        %4982 = vmatmul.mubr.bf16.gmra.mrb[0].mxu0 %v4872
        %v4983 = vpop.f32.mrb[0].mxu0
        %v4984 = vadd.f32 %v1762, %v4983
        %v4985 = vpop.f32.mrb[0].mxu0
        %v4986 = vpop.f32.mrb[0].mxu0
        %v4987 = vadd.f32 %v1763, %v4986
        %v4988 = vpop.f32.mrb[0].mxu0
        %4989 = vmatprep.mubr.bf16.mxu0 0
        %4990 = vmatmul.mubr.bf16.gmra.mrb[0].mxu0 %v4875
        %v4991 = vpop.f32.mrb[0].mxu0
        %v4992 = vadd.f32 %v1764, %v4991
        %v4993 = vpop.f32.mrb[0].mxu0
        %v4994 = vpop.f32.mrb[0].mxu0
        %v4995 = vadd.f32 %v1765, %v4994
        %v4996 = vpop.f32.mrb[0].mxu0
        %4997 = vdwg.mxu0
        %4998 = vmax.xlane.f32.xlu0 %v4759
        %v4999 = vpop.xlane.xlu0 %4998
        %5000 = vmax.xlane.f32.xlu0 %v4762
        %v5001 = vpop.xlane.xlu0 %5000
        %5002 = vmax.xlane.f32.xlu0 %v4767
        %v5003 = vpop.xlane.xlu0 %5002
        %5004 = vmax.xlane.f32.xlu0 %v4770
        %v5005 = vpop.xlane.xlu0 %5004
        %5006 = vmax.xlane.f32.xlu0 %v4775
        %v5007 = vpop.xlane.xlu0 %5006
        %5008 = vmax.xlane.f32.xlu0 %v4778
        %v5009 = vpop.xlane.xlu0 %5008
        %5010 = vmax.xlane.f32.xlu0 %v4783
        %v5011 = vpop.xlane.xlu0 %5010
        %5012 = vmax.xlane.f32.xlu0 %v4786
        %v5013 = vpop.xlane.xlu0 %5012
        %5014 = vmax.xlane.f32.xlu0 %v4791
        %v5015 = vpop.xlane.xlu0 %5014
        %5016 = vmax.xlane.f32.xlu0 %v4794
        %v5017 = vpop.xlane.xlu0 %5016
        %5018 = vmax.xlane.f32.xlu0 %v4799
        %v5019 = vpop.xlane.xlu0 %5018
        %5020 = vmax.xlane.f32.xlu0 %v4802
        %v5021 = vpop.xlane.xlu0 %5020
        %5022 = vmax.xlane.f32.xlu0 %v4807
        %v5023 = vpop.xlane.xlu0 %5022
        %5024 = vmax.xlane.f32.xlu0 %v4810
        %v5025 = vpop.xlane.xlu0 %5024
        %5026 = vmax.xlane.f32.xlu0 %v4815
        %v5027 = vpop.xlane.xlu0 %5026
        %5028 = vmax.xlane.f32.xlu0 %v4818
        %v5029 = vpop.xlane.xlu0 %5028
        %5030 = vmax.xlane.f32.xlu0 %v4936
        %v5031 = vpop.xlane.xlu0 %5030
        %5032 = vmax.xlane.f32.xlu0 %v4939
        %v5033 = vpop.xlane.xlu0 %5032
        %5034 = vmax.xlane.f32.xlu0 %v4944
        %v5035 = vpop.xlane.xlu0 %5034
        %5036 = vmax.xlane.f32.xlu0 %v4947
        %v5037 = vpop.xlane.xlu0 %5036
        %5038 = vmax.xlane.f32.xlu0 %v4952
        %v5039 = vpop.xlane.xlu0 %5038
        %5040 = vmax.xlane.f32.xlu0 %v4955
        %v5041 = vpop.xlane.xlu0 %5040
        %5042 = vmax.xlane.f32.xlu0 %v4960
        %v5043 = vpop.xlane.xlu0 %5042
        %5044 = vmax.xlane.f32.xlu0 %v4963
        %v5045 = vpop.xlane.xlu0 %5044
        %5046 = vmax.xlane.f32.xlu0 %v4968
        %v5047 = vpop.xlane.xlu0 %5046
        %5048 = vmax.xlane.f32.xlu0 %v4971
        %v5049 = vpop.xlane.xlu0 %5048
        %5050 = vmax.xlane.f32.xlu0 %v4976
        %v5051 = vpop.xlane.xlu0 %5050
        %5052 = vmax.xlane.f32.xlu0 %v4979
        %v5053 = vpop.xlane.xlu0 %5052
        %5054 = vmax.xlane.f32.xlu0 %v4984
        %v5055 = vpop.xlane.xlu0 %5054
        %5056 = vmax.xlane.f32.xlu0 %v4987
        %v5057 = vpop.xlane.xlu0 %5056
        %5058 = vmax.xlane.f32.xlu0 %v4992
        %v5059 = vpop.xlane.xlu0 %5058
        %5060 = vmax.xlane.f32.xlu0 %v4995
        %v5061 = vpop.xlane.xlu0 %5060
        %v5062 = vsub.f32 %v4759, %v4999
        %v5063 = vsub.f32 %v4762, %v5001
        %v5064 = vsub.f32 %v4767, %v5003
        %v5065 = vsub.f32 %v4770, %v5005
        %v5066 = vsub.f32 %v4775, %v5007
        %v5067 = vsub.f32 %v4778, %v5009
        %v5068 = vsub.f32 %v4783, %v5011
        %v5069 = vsub.f32 %v4786, %v5013
        %v5070 = vsub.f32 %v4791, %v5015
        %v5071 = vsub.f32 %v4794, %v5017
        %v5072 = vsub.f32 %v4799, %v5019
        %v5073 = vsub.f32 %v4802, %v5021
        %v5074 = vsub.f32 %v4807, %v5023
        %v5075 = vsub.f32 %v4810, %v5025
        %v5076 = vsub.f32 %v4815, %v5027
        %v5077 = vsub.f32 %v4818, %v5029
        %v5078 = vsub.f32 %v4936, %v5031
        %v5079 = vsub.f32 %v4939, %v5033
        %v5080 = vsub.f32 %v4944, %v5035
        %v5081 = vsub.f32 %v4947, %v5037
        %v5082 = vsub.f32 %v4952, %v5039
        %v5083 = vsub.f32 %v4955, %v5041
        %v5084 = vsub.f32 %v4960, %v5043
        %v5085 = vsub.f32 %v4963, %v5045
        %v5086 = vsub.f32 %v4968, %v5047
        %v5087 = vsub.f32 %v4971, %v5049
        %v5088 = vsub.f32 %v4976, %v5051
        %v5089 = vsub.f32 %v4979, %v5053
        %v5090 = vsub.f32 %v4984, %v5055
        %v5091 = vsub.f32 %v4987, %v5057
        %v5092 = vsub.f32 %v4992, %v5059
        %v5093 = vsub.f32 %v4995, %v5061
        %v5094 = vmul.f32 %v5062, 1.442695
        %v5095 = vpow.pop %v5094
        %v5096 = vmul.f32 %v5063, 1.442695
        %v5097 = vpow.pop %v5096
        %v5098 = vmul.f32 %v5064, 1.442695
        %v5099 = vpow.pop %v5098
        %v5100 = vmul.f32 %v5065, 1.442695
        %v5101 = vpow.pop %v5100
        %v5102 = vmul.f32 %v5066, 1.442695
        %v5103 = vpow.pop %v5102
        %v5104 = vmul.f32 %v5067, 1.442695
        %v5105 = vpow.pop %v5104
        %v5106 = vmul.f32 %v5068, 1.442695
        %v5107 = vpow.pop %v5106
        %v5108 = vmul.f32 %v5069, 1.442695
        %v5109 = vpow.pop %v5108
        %v5110 = vmul.f32 %v5070, 1.442695
        %v5111 = vpow.pop %v5110
        %v5112 = vmul.f32 %v5071, 1.442695
        %v5113 = vpow.pop %v5112
        %v5114 = vmul.f32 %v5072, 1.442695
        %v5115 = vpow.pop %v5114
        %v5116 = vmul.f32 %v5073, 1.442695
        %v5117 = vpow.pop %v5116
        %v5118 = vmul.f32 %v5074, 1.442695
        %v5119 = vpow.pop %v5118
        %v5120 = vmul.f32 %v5075, 1.442695
        %v5121 = vpow.pop %v5120
        %v5122 = vmul.f32 %v5076, 1.442695
        %v5123 = vpow.pop %v5122
        %v5124 = vmul.f32 %v5077, 1.442695
        %v5125 = vpow.pop %v5124
        %v5126 = vmul.f32 %v5078, 1.442695
        %v5127 = vpow.pop %v5126
        %v5128 = vmul.f32 %v5079, 1.442695
        %v5129 = vpow.pop %v5128
        %v5130 = vmul.f32 %v5080, 1.442695
        %v5131 = vpow.pop %v5130
        %v5132 = vmul.f32 %v5081, 1.442695
        %v5133 = vpow.pop %v5132
        %v5134 = vmul.f32 %v5082, 1.442695
        %v5135 = vpow.pop %v5134
        %v5136 = vmul.f32 %v5083, 1.442695
        %v5137 = vpow.pop %v5136
        %v5138 = vmul.f32 %v5084, 1.442695
        %v5139 = vpow.pop %v5138
        %v5140 = vmul.f32 %v5085, 1.442695
        %v5141 = vpow.pop %v5140
        %v5142 = vmul.f32 %v5086, 1.442695
        %v5143 = vpow.pop %v5142
        %v5144 = vmul.f32 %v5087, 1.442695
        %v5145 = vpow.pop %v5144
        %v5146 = vmul.f32 %v5088, 1.442695
        %v5147 = vpow.pop %v5146
        %v5148 = vmul.f32 %v5089, 1.442695
        %v5149 = vpow.pop %v5148
        %v5150 = vmul.f32 %v5090, 1.442695
        %v5151 = vpow.pop %v5150
        %v5152 = vmul.f32 %v5091, 1.442695
        %v5153 = vpow.pop %v5152
        %v5154 = vmul.f32 %v5092, 1.442695
        %v5155 = vpow.pop %v5154
        %v5156 = vmul.f32 %v5093, 1.442695
        %v5157 = vpow.pop %v5156
        %5158 = vadd.xlane.f32.xlu0 %v5095
        %v5159 = vpop.xlane.xlu0 %5158
        %5160 = vadd.xlane.f32.xlu0 %v5097
        %v5161 = vpop.xlane.xlu0 %5160
        %5162 = vadd.xlane.f32.xlu0 %v5099
        %v5163 = vpop.xlane.xlu0 %5162
        %5164 = vadd.xlane.f32.xlu0 %v5101
        %v5165 = vpop.xlane.xlu0 %5164
        %5166 = vadd.xlane.f32.xlu0 %v5103
        %v5167 = vpop.xlane.xlu0 %5166
        %5168 = vadd.xlane.f32.xlu0 %v5105
        %v5169 = vpop.xlane.xlu0 %5168
        %5170 = vadd.xlane.f32.xlu0 %v5107
        %v5171 = vpop.xlane.xlu0 %5170
        %5172 = vadd.xlane.f32.xlu0 %v5109
        %v5173 = vpop.xlane.xlu0 %5172
        %5174 = vadd.xlane.f32.xlu0 %v5111
        %v5175 = vpop.xlane.xlu0 %5174
        %5176 = vadd.xlane.f32.xlu0 %v5113
        %v5177 = vpop.xlane.xlu0 %5176
        %5178 = vadd.xlane.f32.xlu0 %v5115
        %v5179 = vpop.xlane.xlu0 %5178
        %5180 = vadd.xlane.f32.xlu0 %v5117
        %v5181 = vpop.xlane.xlu0 %5180
        %5182 = vadd.xlane.f32.xlu0 %v5119
        %v5183 = vpop.xlane.xlu0 %5182
        %5184 = vadd.xlane.f32.xlu0 %v5121
        %v5185 = vpop.xlane.xlu0 %5184
        %5186 = vadd.xlane.f32.xlu0 %v5123
        %v5187 = vpop.xlane.xlu0 %5186
        %5188 = vadd.xlane.f32.xlu0 %v5125
        %v5189 = vpop.xlane.xlu0 %5188
        %5190 = vadd.xlane.f32.xlu0 %v5127
        %v5191 = vpop.xlane.xlu0 %5190
        %5192 = vadd.xlane.f32.xlu0 %v5129
        %v5193 = vpop.xlane.xlu0 %5192
        %5194 = vadd.xlane.f32.xlu0 %v5131
        %v5195 = vpop.xlane.xlu0 %5194
        %5196 = vadd.xlane.f32.xlu0 %v5133
        %v5197 = vpop.xlane.xlu0 %5196
        %5198 = vadd.xlane.f32.xlu0 %v5135
        %v5199 = vpop.xlane.xlu0 %5198
        %5200 = vadd.xlane.f32.xlu0 %v5137
        %v5201 = vpop.xlane.xlu0 %5200
        %5202 = vadd.xlane.f32.xlu0 %v5139
        %v5203 = vpop.xlane.xlu0 %5202
        %5204 = vadd.xlane.f32.xlu0 %v5141
        %v5205 = vpop.xlane.xlu0 %5204
        %5206 = vadd.xlane.f32.xlu0 %v5143
        %v5207 = vpop.xlane.xlu0 %5206
        %5208 = vadd.xlane.f32.xlu0 %v5145
        %v5209 = vpop.xlane.xlu0 %5208
        %5210 = vadd.xlane.f32.xlu0 %v5147
        %v5211 = vpop.xlane.xlu0 %5210
        %5212 = vadd.xlane.f32.xlu0 %v5149
        %v5213 = vpop.xlane.xlu0 %5212
        %5214 = vadd.xlane.f32.xlu0 %v5151
        %v5215 = vpop.xlane.xlu0 %5214
        %5216 = vadd.xlane.f32.xlu0 %v5153
        %v5217 = vpop.xlane.xlu0 %5216
        %5218 = vadd.xlane.f32.xlu0 %v5155
        %v5219 = vpop.xlane.xlu0 %5218
        %5220 = vadd.xlane.f32.xlu0 %v5157
        %v5221 = vpop.xlane.xlu0 %5220
        %v5222 = vrcp.pop %v5159
        %v5223 = vrcp.pop %v5161
        %v5224 = vrcp.pop %v5163
        %v5225 = vrcp.pop %v5165
        %v5226 = vrcp.pop %v5167
        %v5227 = vrcp.pop %v5169
        %v5228 = vrcp.pop %v5171
        %v5229 = vrcp.pop %v5173
        %v5230 = vrcp.pop %v5175
        %v5231 = vrcp.pop %v5177
        %v5232 = vrcp.pop %v5179
        %v5233 = vrcp.pop %v5181
        %v5234 = vrcp.pop %v5183
        %v5235 = vrcp.pop %v5185
        %v5236 = vrcp.pop %v5187
        %v5237 = vrcp.pop %v5189
        %v5238 = vrcp.pop %v5191
        %v5239 = vrcp.pop %v5193
        %v5240 = vrcp.pop %v5195
        %v5241 = vrcp.pop %v5197
        %v5242 = vrcp.pop %v5199
        %v5243 = vrcp.pop %v5201
        %v5244 = vrcp.pop %v5203
        %v5245 = vrcp.pop %v5205
        %v5246 = vrcp.pop %v5207
        %v5247 = vrcp.pop %v5209
        %v5248 = vrcp.pop %v5211
        %v5249 = vrcp.pop %v5213
        %v5250 = vrcp.pop %v5215
        %v5251 = vrcp.pop %v5217
        %v5252 = vrcp.pop %v5219
        %v5253 = vrcp.pop %v5221
        %v5254 = vmul.f32 %v5095, %v5222
        %v5255 = vmul.f32 %v5097, %v5223
        %v5256 = vmul.f32 %v5099, %v5224
        %v5257 = vmul.f32 %v5101, %v5225
        %v5258 = vmul.f32 %v5103, %v5226
        %v5259 = vmul.f32 %v5105, %v5227
        %v5260 = vmul.f32 %v5107, %v5228
        %v5261 = vmul.f32 %v5109, %v5229
        %v5262 = vmul.f32 %v5111, %v5230
        %v5263 = vmul.f32 %v5113, %v5231
        %v5264 = vmul.f32 %v5115, %v5232
        %v5265 = vmul.f32 %v5117, %v5233
        %v5266 = vmul.f32 %v5119, %v5234
        %v5267 = vmul.f32 %v5121, %v5235
        %v5268 = vmul.f32 %v5123, %v5236
        %v5269 = vmul.f32 %v5125, %v5237
        %v5270 = vmul.f32 %v5127, %v5238
        %v5271 = vmul.f32 %v5129, %v5239
        %v5272 = vmul.f32 %v5131, %v5240
        %v5273 = vmul.f32 %v5133, %v5241
        %v5274 = vmul.f32 %v5135, %v5242
        %v5275 = vmul.f32 %v5137, %v5243
        %v5276 = vmul.f32 %v5139, %v5244
        %v5277 = vmul.f32 %v5141, %v5245
        %v5278 = vmul.f32 %v5143, %v5246
        %v5279 = vmul.f32 %v5145, %v5247
        %v5280 = vmul.f32 %v5147, %v5248
        %v5281 = vmul.f32 %v5149, %v5249
        %v5282 = vmul.f32 %v5151, %v5250
        %v5283 = vmul.f32 %v5153, %v5251
        %v5284 = vmul.f32 %v5155, %v5252
        %v5285 = vmul.f32 %v5157, %v5253
        %v5286 = vpack.c.bf16 %v5255, %v5254
        %v5287 = vpack.c.bf16 %v5257, %v5256
        %v5288 = vpack.c.bf16 %v5259, %v5258
        %v5289 = vpack.c.bf16 %v5261, %v5260
        %v5290 = vpack.c.bf16 %v5263, %v5262
        %v5291 = vpack.c.bf16 %v5265, %v5264
        %v5292 = vpack.c.bf16 %v5267, %v5266
        %v5293 = vpack.c.bf16 %v5269, %v5268
        %v5294 = vpack.c.bf16 %v5271, %v5270
        %v5295 = vpack.c.bf16 %v5273, %v5272
        %v5296 = vpack.c.bf16 %v5275, %v5274
        %v5297 = vpack.c.bf16 %v5277, %v5276
        %v5298 = vpack.c.bf16 %v5279, %v5278
        %v5299 = vpack.c.bf16 %v5281, %v5280
        %v5300 = vpack.c.bf16 %v5283, %v5282
        %v5301 = vpack.c.bf16 %v5285, %v5284
        %5302 = vrot.lane.b32.xlu0 %v1734, 40
        %v5303 = vpop.permute.xlu0 %5302
        %5304 = vrot.lane.b32.xlu0 %v1735, 40
        %v5305 = vpop.permute.xlu0 %5304
        %5306 = vrot.lane.b32.xlu0 %v1736, 40
        %v5307 = vpop.permute.xlu0 %5306
        %5308 = vrot.lane.b32.xlu0 %v1737, 40
        %v5309 = vpop.permute.xlu0 %5308
        %5310 = vrot.lane.b32.xlu0 %v1738, 40
        %v5311 = vpop.permute.xlu0 %5310
        %5312 = vrot.lane.b32.xlu0 %v1739, 40
        %v5313 = vpop.permute.xlu0 %5312
        %5314 = vrot.lane.b32.xlu0 %v1740, 40
        %v5315 = vpop.permute.xlu0 %5314
        %5316 = vrot.lane.b32.xlu0 %v1741, 40
        %v5317 = vpop.permute.xlu0 %5316
        %5326 = vmatprep.subr.bf16.mxu0 0
        %5327 = vmatpush1.bf16.msra.mxu0 %v5303
        %5328 = vmatprep.subr.bf16.mxu0 0
        %5329 = vmatpush1.bf16.msra.mxu0 %v5305
        %5330 = vmatprep.subr.bf16.mxu0 0
        %5331 = vmatpush1.bf16.msra.mxu0 %v5307
        %5332 = vmatprep.subr.bf16.mxu0 0
        %5333 = vmatpush1.bf16.msra.mxu0 %v5309
        %5334 = vmatprep.subr.bf16.mxu0 0
        %5335 = vmatpush1.bf16.msra.mxu0 %v5311
        %5336 = vmatprep.subr.bf16.mxu0 0
        %5337 = vmatpush1.bf16.msra.mxu0 %v5313
        %5338 = vmatprep.subr.bf16.mxu0 0
        %5339 = vmatpush1.bf16.msra.mxu0 %v5315
        %5340 = vmatprep.subr.bf16.mxu0 0
        %5341 = vmatpush1.bf16.msra.mxu0 %v5317
        %5342 = vmatprep.subr.bf16.mxu0 0
        %5343 = vmatpush1.bf16.msra.mxu0 0
        %5344 = vmatprep.subr.bf16.mxu0 0
        %5345 = vmatpush1.bf16.msra.mxu0 0
        %5346 = vmatprep.subr.bf16.mxu0 0
        %5347 = vmatpush1.bf16.msra.mxu0 0
        %5348 = vmatprep.subr.bf16.mxu0 0
        %5349 = vmatpush1.bf16.msra.mxu0 0
        %5350 = vmatprep.subr.bf16.mxu0 0
        %5351 = vmatpush1.bf16.msra.mxu0 0
        %5352 = vmatprep.subr.bf16.mxu0 0
        %5353 = vmatpush1.bf16.msra.mxu0 0
        %5354 = vmatprep.subr.bf16.mxu0 0
        %5355 = vmatpush1.bf16.msra.mxu0 0
        %5356 = vmatprep.subr.bf16.mxu0 0
        %5357 = vmatpush1.bf16.msra.mxu0 0
        %5358 = vmatprep.mubr.bf16.mxu0 0
        %5359 = vmatmul.mubr.bf16.gmra.mrb[0].mxu0 %v5286
        %v5360 = vpop.f32.mrb[0].mxu0
        %v5361 = vadd.f32 0.0, %v5360
        %v5362 = vpop.f32.mrb[0].mxu0
        %v5363 = vpop.f32.mrb[0].mxu0
        %v5364 = vadd.f32 0.0, %v5363
        %v5365 = vpop.f32.mrb[0].mxu0
        %5366 = vmatprep.mubr.bf16.mxu0 0
        %5367 = vmatmul.mubr.bf16.gmra.mrb[0].mxu0 %v5287
        %v5368 = vpop.f32.mrb[0].mxu0
        %v5369 = vadd.f32 0.0, %v5368
        %v5370 = vpop.f32.mrb[0].mxu0
        %v5371 = vpop.f32.mrb[0].mxu0
        %v5372 = vadd.f32 0.0, %v5371
        %v5373 = vpop.f32.mrb[0].mxu0
        %5374 = vmatprep.mubr.bf16.mxu0 0
        %5375 = vmatmul.mubr.bf16.gmra.mrb[0].mxu0 %v5288
        %v5376 = vpop.f32.mrb[0].mxu0
        %v5377 = vadd.f32 0.0, %v5376
        %v5378 = vpop.f32.mrb[0].mxu0
        %v5379 = vpop.f32.mrb[0].mxu0
        %v5380 = vadd.f32 0.0, %v5379
        %v5381 = vpop.f32.mrb[0].mxu0
        %5382 = vmatprep.mubr.bf16.mxu0 0
        %5383 = vmatmul.mubr.bf16.gmra.mrb[0].mxu0 %v5289
        %v5384 = vpop.f32.mrb[0].mxu0
        %v5385 = vadd.f32 0.0, %v5384
        %v5386 = vpop.f32.mrb[0].mxu0
        %v5387 = vpop.f32.mrb[0].mxu0
        %v5388 = vadd.f32 0.0, %v5387
        %v5389 = vpop.f32.mrb[0].mxu0
        %5390 = vmatprep.mubr.bf16.mxu0 0
        %5391 = vmatmul.mubr.bf16.gmra.mrb[0].mxu0 %v5290
        %v5392 = vpop.f32.mrb[0].mxu0
        %v5393 = vadd.f32 0.0, %v5392
        %v5394 = vpop.f32.mrb[0].mxu0
        %v5395 = vpop.f32.mrb[0].mxu0
        %v5396 = vadd.f32 0.0, %v5395
        %v5397 = vpop.f32.mrb[0].mxu0
        %5398 = vmatprep.mubr.bf16.mxu0 0
        %5399 = vmatmul.mubr.bf16.gmra.mrb[0].mxu0 %v5291
        %v5400 = vpop.f32.mrb[0].mxu0
        %v5401 = vadd.f32 0.0, %v5400
        %v5402 = vpop.f32.mrb[0].mxu0
        %v5403 = vpop.f32.mrb[0].mxu0
        %v5404 = vadd.f32 0.0, %v5403
        %v5405 = vpop.f32.mrb[0].mxu0
        %5406 = vmatprep.mubr.bf16.mxu0 0
        %5407 = vmatmul.mubr.bf16.gmra.mrb[0].mxu0 %v5292
        %v5408 = vpop.f32.mrb[0].mxu0
        %v5409 = vadd.f32 0.0, %v5408
        %v5410 = vpop.f32.mrb[0].mxu0
        %v5411 = vpop.f32.mrb[0].mxu0
        %v5412 = vadd.f32 0.0, %v5411
        %v5413 = vpop.f32.mrb[0].mxu0
        %5414 = vmatprep.mubr.bf16.mxu0 0
        %5415 = vmatmul.mubr.bf16.gmra.mrb[0].mxu0 %v5293
        %v5416 = vpop.f32.mrb[0].mxu0
        %v5417 = vadd.f32 0.0, %v5416
        %v5418 = vpop.f32.mrb[0].mxu0
        %v5419 = vpop.f32.mrb[0].mxu0
        %v5420 = vadd.f32 0.0, %v5419
        %v5421 = vpop.f32.mrb[0].mxu0
        %5422 = vdwg.mxu0
        %5423 = vrot.lane.b32.xlu0 %v1742, 40
        %v5424 = vpop.permute.xlu0 %5423
        %5425 = vrot.lane.b32.xlu0 %v1743, 40
        %v5426 = vpop.permute.xlu0 %5425
        %5427 = vrot.lane.b32.xlu0 %v1744, 40
        %v5428 = vpop.permute.xlu0 %5427
        %5429 = vrot.lane.b32.xlu0 %v1745, 40
        %v5430 = vpop.permute.xlu0 %5429
        %5431 = vrot.lane.b32.xlu0 %v1746, 40
        %v5432 = vpop.permute.xlu0 %5431
        %5433 = vrot.lane.b32.xlu0 %v1747, 40
        %v5434 = vpop.permute.xlu0 %5433
        %5435 = vrot.lane.b32.xlu0 %v1748, 40
        %v5436 = vpop.permute.xlu0 %5435
        %5437 = vrot.lane.b32.xlu0 %v1749, 40
        %v5438 = vpop.permute.xlu0 %5437
        %5447 = vmatprep.subr.bf16.mxu0 0
        %5448 = vmatpush1.bf16.msra.mxu0 %v5424
        %5449 = vmatprep.subr.bf16.mxu0 0
        %5450 = vmatpush1.bf16.msra.mxu0 %v5426
        %5451 = vmatprep.subr.bf16.mxu0 0
        %5452 = vmatpush1.bf16.msra.mxu0 %v5428
        %5453 = vmatprep.subr.bf16.mxu0 0
        %5454 = vmatpush1.bf16.msra.mxu0 %v5430
        %5455 = vmatprep.subr.bf16.mxu0 0
        %5456 = vmatpush1.bf16.msra.mxu0 %v5432
        %5457 = vmatprep.subr.bf16.mxu0 0
        %5458 = vmatpush1.bf16.msra.mxu0 %v5434
        %5459 = vmatprep.subr.bf16.mxu0 0
        %5460 = vmatpush1.bf16.msra.mxu0 %v5436
        %5461 = vmatprep.subr.bf16.mxu0 0
        %5462 = vmatpush1.bf16.msra.mxu0 %v5438
        %5463 = vmatprep.subr.bf16.mxu0 0
        %5464 = vmatpush1.bf16.msra.mxu0 0
        %5465 = vmatprep.subr.bf16.mxu0 0
        %5466 = vmatpush1.bf16.msra.mxu0 0
        %5467 = vmatprep.subr.bf16.mxu0 0
        %5468 = vmatpush1.bf16.msra.mxu0 0
        %5469 = vmatprep.subr.bf16.mxu0 0
        %5470 = vmatpush1.bf16.msra.mxu0 0
        %5471 = vmatprep.subr.bf16.mxu0 0
        %5472 = vmatpush1.bf16.msra.mxu0 0
        %5473 = vmatprep.subr.bf16.mxu0 0
        %5474 = vmatpush1.bf16.msra.mxu0 0
        %5475 = vmatprep.subr.bf16.mxu0 0
        %5476 = vmatpush1.bf16.msra.mxu0 0
        %5477 = vmatprep.subr.bf16.mxu0 0
        %5478 = vmatpush1.bf16.msra.mxu0 0
        %5479 = vmatprep.mubr.bf16.mxu0 0
        %5480 = vmatmul.mubr.bf16.gmra.mrb[0].mxu0 %v5294
        %v5481 = vpop.f32.mrb[0].mxu0
        %v5482 = vadd.f32 0.0, %v5481
        %v5483 = vpop.f32.mrb[0].mxu0
        %v5484 = vpop.f32.mrb[0].mxu0
        %v5485 = vadd.f32 0.0, %v5484
        %v5486 = vpop.f32.mrb[0].mxu0
        %5487 = vmatprep.mubr.bf16.mxu0 0
        %5488 = vmatmul.mubr.bf16.gmra.mrb[0].mxu0 %v5295
        %v5489 = vpop.f32.mrb[0].mxu0
        %v5490 = vadd.f32 0.0, %v5489
        %v5491 = vpop.f32.mrb[0].mxu0
        %v5492 = vpop.f32.mrb[0].mxu0
        %v5493 = vadd.f32 0.0, %v5492
        %v5494 = vpop.f32.mrb[0].mxu0
        %5495 = vmatprep.mubr.bf16.mxu0 0
        %5496 = vmatmul.mubr.bf16.gmra.mrb[0].mxu0 %v5296
        %v5497 = vpop.f32.mrb[0].mxu0
        %v5498 = vadd.f32 0.0, %v5497
        %v5499 = vpop.f32.mrb[0].mxu0
        %v5500 = vpop.f32.mrb[0].mxu0
        %v5501 = vadd.f32 0.0, %v5500
        %v5502 = vpop.f32.mrb[0].mxu0
        %5503 = vmatprep.mubr.bf16.mxu0 0
        %5504 = vmatmul.mubr.bf16.gmra.mrb[0].mxu0 %v5297
        %v5505 = vpop.f32.mrb[0].mxu0
        %v5506 = vadd.f32 0.0, %v5505
        %v5507 = vpop.f32.mrb[0].mxu0
        %v5508 = vpop.f32.mrb[0].mxu0
        %v5509 = vadd.f32 0.0, %v5508
        %v5510 = vpop.f32.mrb[0].mxu0
        %5511 = vmatprep.mubr.bf16.mxu0 0
        %5512 = vmatmul.mubr.bf16.gmra.mrb[0].mxu0 %v5298
        %v5513 = vpop.f32.mrb[0].mxu0
        %v5514 = vadd.f32 0.0, %v5513
        %v5515 = vpop.f32.mrb[0].mxu0
        %v5516 = vpop.f32.mrb[0].mxu0
        %v5517 = vadd.f32 0.0, %v5516
        %v5518 = vpop.f32.mrb[0].mxu0
        %5519 = vmatprep.mubr.bf16.mxu0 0
        %5520 = vmatmul.mubr.bf16.gmra.mrb[0].mxu0 %v5299
        %v5521 = vpop.f32.mrb[0].mxu0
        %v5522 = vadd.f32 0.0, %v5521
        %v5523 = vpop.f32.mrb[0].mxu0
        %v5524 = vpop.f32.mrb[0].mxu0
        %v5525 = vadd.f32 0.0, %v5524
        %v5526 = vpop.f32.mrb[0].mxu0
        %5527 = vmatprep.mubr.bf16.mxu0 0
        %5528 = vmatmul.mubr.bf16.gmra.mrb[0].mxu0 %v5300
        %v5529 = vpop.f32.mrb[0].mxu0
        %v5530 = vadd.f32 0.0, %v5529
        %v5531 = vpop.f32.mrb[0].mxu0
        %v5532 = vpop.f32.mrb[0].mxu0
        %v5533 = vadd.f32 0.0, %v5532
        %v5534 = vpop.f32.mrb[0].mxu0
        %5535 = vmatprep.mubr.bf16.mxu0 0
        %5536 = vmatmul.mubr.bf16.gmra.mrb[0].mxu0 %v5301
        %v5537 = vpop.f32.mrb[0].mxu0
        %v5538 = vadd.f32 0.0, %v5537
        %v5539 = vpop.f32.mrb[0].mxu0
        %v5540 = vpop.f32.mrb[0].mxu0
        %v5541 = vadd.f32 0.0, %v5540
        %v5542 = vpop.f32.mrb[0].mxu0
        %5543 = vdwg.mxu0
        %5576 = vrot.lane.b32.xlu0 %v5361, 8
        %v5577 = vpop.permute.xlu0 %5576
        %5578 = vrot.lane.b32.xlu0 %v5364, 8
        %v5579 = vpop.permute.xlu0 %5578
        %5580 = vrot.lane.b32.xlu0 %v5369, 8
        %v5581 = vpop.permute.xlu0 %5580
        %5582 = vrot.lane.b32.xlu0 %v5372, 8
        %v5583 = vpop.permute.xlu0 %5582
        %5584 = vrot.lane.b32.xlu0 %v5377, 8
        %v5585 = vpop.permute.xlu0 %5584
        %5586 = vrot.lane.b32.xlu0 %v5380, 8
        %v5587 = vpop.permute.xlu0 %5586
        %5588 = vrot.lane.b32.xlu0 %v5385, 8
        %v5589 = vpop.permute.xlu0 %5588
        %5590 = vrot.lane.b32.xlu0 %v5388, 8
        %v5591 = vpop.permute.xlu0 %5590
        %5592 = vrot.lane.b32.xlu0 %v5393, 8
        %v5593 = vpop.permute.xlu0 %5592
        %5594 = vrot.lane.b32.xlu0 %v5396, 8
        %v5595 = vpop.permute.xlu0 %5594
        %5596 = vrot.lane.b32.xlu0 %v5401, 8
        %v5597 = vpop.permute.xlu0 %5596
        %5598 = vrot.lane.b32.xlu0 %v5404, 8
        %v5599 = vpop.permute.xlu0 %5598
        %5600 = vrot.lane.b32.xlu0 %v5409, 8
        %v5601 = vpop.permute.xlu0 %5600
        %5602 = vrot.lane.b32.xlu0 %v5412, 8
        %v5603 = vpop.permute.xlu0 %5602
        %5604 = vrot.lane.b32.xlu0 %v5417, 8
        %v5605 = vpop.permute.xlu0 %5604
        %5606 = vrot.lane.b32.xlu0 %v5420, 8
        %v5607 = vpop.permute.xlu0 %5606
        %5608 = vrot.lane.b32.xlu0 %v5482, 8
        %v5609 = vpop.permute.xlu0 %5608
        %5610 = vrot.lane.b32.xlu0 %v5485, 8
        %v5611 = vpop.permute.xlu0 %5610
        %5612 = vrot.lane.b32.xlu0 %v5490, 8
        %v5613 = vpop.permute.xlu0 %5612
        %5614 = vrot.lane.b32.xlu0 %v5493, 8
        %v5615 = vpop.permute.xlu0 %5614
        %5616 = vrot.lane.b32.xlu0 %v5498, 8
        %v5617 = vpop.permute.xlu0 %5616
        %5618 = vrot.lane.b32.xlu0 %v5501, 8
        %v5619 = vpop.permute.xlu0 %5618
        %5620 = vrot.lane.b32.xlu0 %v5506, 8
        %v5621 = vpop.permute.xlu0 %5620
        %5622 = vrot.lane.b32.xlu0 %v5509, 8
        %v5623 = vpop.permute.xlu0 %5622
        %5624 = vrot.lane.b32.xlu0 %v5514, 8
        %v5625 = vpop.permute.xlu0 %5624
        %5626 = vrot.lane.b32.xlu0 %v5517, 8
        %v5627 = vpop.permute.xlu0 %5626
        %5628 = vrot.lane.b32.xlu0 %v5522, 8
        %v5629 = vpop.permute.xlu0 %5628
        %5630 = vrot.lane.b32.xlu0 %v5525, 8
        %v5631 = vpop.permute.xlu0 %5630
        %5632 = vrot.lane.b32.xlu0 %v5530, 8
        %v5633 = vpop.permute.xlu0 %5632
        %5634 = vrot.lane.b32.xlu0 %v5533, 8
        %v5635 = vpop.permute.xlu0 %5634
        %5636 = vrot.lane.b32.xlu0 %v5538, 8
        %v5637 = vpop.permute.xlu0 %5636
        %5638 = vrot.lane.b32.xlu0 %v5541, 8
        %v5639 = vpop.permute.xlu0 %5638
        %v5672 = vsel %vm1790, %v4461, %v5577
        %v5673 = vsel %vm1790, %v4464, %v5579
        %v5674 = vsel %vm1790, %v4469, %v5581
        %v5675 = vsel %vm1790, %v4472, %v5583
        %v5676 = vsel %vm1790, %v4477, %v5585
        %v5677 = vsel %vm1790, %v4480, %v5587
        %v5678 = vsel %vm1790, %v4485, %v5589
        %v5679 = vsel %vm1790, %v4488, %v5591
        %v5680 = vsel %vm1790, %v4493, %v5593
        %v5681 = vsel %vm1790, %v4496, %v5595
        %v5682 = vsel %vm1790, %v4501, %v5597
        %v5683 = vsel %vm1790, %v4504, %v5599
        %v5684 = vsel %vm1790, %v4509, %v5601
        %v5685 = vsel %vm1790, %v4512, %v5603
        %v5686 = vsel %vm1790, %v4517, %v5605
        %v5687 = vsel %vm1790, %v4520, %v5607
        %v5688 = vsel %vm1790, %v4582, %v5609
        %v5689 = vsel %vm1790, %v4585, %v5611
        %v5690 = vsel %vm1790, %v4590, %v5613
        %v5691 = vsel %vm1790, %v4593, %v5615
        %v5692 = vsel %vm1790, %v4598, %v5617
        %v5693 = vsel %vm1790, %v4601, %v5619
        %v5694 = vsel %vm1790, %v4606, %v5621
        %v5695 = vsel %vm1790, %v4609, %v5623
        %v5696 = vsel %vm1790, %v4614, %v5625
        %v5697 = vsel %vm1790, %v4617, %v5627
        %v5698 = vsel %vm1790, %v4622, %v5629
        %v5699 = vsel %vm1790, %v4625, %v5631
        %v5700 = vsel %vm1790, %v4630, %v5633
        %v5701 = vsel %vm1790, %v4633, %v5635
        %v5702 = vsel %vm1790, %v4638, %v5637
        %v5703 = vsel %vm1790, %v4641, %v5639
        %v5704 = vpack.c.bf16 %v5673, %v5672
        %v5705 = vpack.c.bf16 %v5675, %v5674
        %v5706 = vpack.c.bf16 %v5677, %v5676
        %v5707 = vpack.c.bf16 %v5679, %v5678
        %v5708 = vpack.c.bf16 %v5681, %v5680
        %v5709 = vpack.c.bf16 %v5683, %v5682
        %v5710 = vpack.c.bf16 %v5685, %v5684
        %v5711 = vpack.c.bf16 %v5687, %v5686
        %v5712 = vpack.c.bf16 %v5689, %v5688
        %v5713 = vpack.c.bf16 %v5691, %v5690
        %v5714 = vpack.c.bf16 %v5693, %v5692
        %v5715 = vpack.c.bf16 %v5695, %v5694
        %v5716 = vpack.c.bf16 %v5697, %v5696
        %v5717 = vpack.c.bf16 %v5699, %v5698
        %v5718 = vpack.c.bf16 %v5701, %v5700
        %v5719 = vpack.c.bf16 %v5703, %v5702
        %5736 = vrot.lane.b32.xlu0 %v5704, 16
        %v5737 = vpop.permute.xlu0 %5736
        %5738 = vrot.lane.b32.xlu0 %v5705, 16
        %v5739 = vpop.permute.xlu0 %5738
        %5740 = vrot.lane.b32.xlu0 %v5706, 16
        %v5741 = vpop.permute.xlu0 %5740
        %5742 = vrot.lane.b32.xlu0 %v5707, 16
        %v5743 = vpop.permute.xlu0 %5742
        %5744 = vrot.lane.b32.xlu0 %v5708, 16
        %v5745 = vpop.permute.xlu0 %5744
        %5746 = vrot.lane.b32.xlu0 %v5709, 16
        %v5747 = vpop.permute.xlu0 %5746
        %5748 = vrot.lane.b32.xlu0 %v5710, 16
        %v5749 = vpop.permute.xlu0 %5748
        %5750 = vrot.lane.b32.xlu0 %v5711, 16
        %v5751 = vpop.permute.xlu0 %5750
        %5752 = vrot.lane.b32.xlu0 %v5712, 16
        %v5753 = vpop.permute.xlu0 %5752
        %5754 = vrot.lane.b32.xlu0 %v5713, 16
        %v5755 = vpop.permute.xlu0 %5754
        %5756 = vrot.lane.b32.xlu0 %v5714, 16
        %v5757 = vpop.permute.xlu0 %5756
        %5758 = vrot.lane.b32.xlu0 %v5715, 16
        %v5759 = vpop.permute.xlu0 %5758
        %5760 = vrot.lane.b32.xlu0 %v5716, 16
        %v5761 = vpop.permute.xlu0 %5760
        %5762 = vrot.lane.b32.xlu0 %v5717, 16
        %v5763 = vpop.permute.xlu0 %5762
        %5764 = vrot.lane.b32.xlu0 %v5718, 16
        %v5765 = vpop.permute.xlu0 %5764
        %5766 = vrot.lane.b32.xlu0 %v5719, 16
        %v5767 = vpop.permute.xlu0 %5766
        %vm5784 = vcmask 261248
        %5785 = vst.msk [vmem:[#allocation3] sm:$0xff] %vm5784, %v5737
        %5786 = vst.msk [vmem:[#allocation3 + $0x8] sm:$0xff] %vm5784, %v5739
        %5787 = vst.msk [vmem:[#allocation3 + $0x10] sm:$0xff] %vm5784, %v5741
        %5788 = vst.msk [vmem:[#allocation3 + $0x18] sm:$0xff] %vm5784, %v5743
        %5789 = vst.msk [vmem:[#allocation3 + $0x20] sm:$0xff] %vm5784, %v5745
        %5790 = vst.msk [vmem:[#allocation3 + $0x28] sm:$0xff] %vm5784, %v5747
        %5791 = vst.msk [vmem:[#allocation3 + $0x30] sm:$0xff] %vm5784, %v5749
        %5792 = vst.msk [vmem:[#allocation3 + $0x38] sm:$0xff] %vm5784, %v5751
        %5793 = vst.msk [vmem:[#allocation3 + $0x40] sm:$0xff] %vm5784, %v5753
        %5794 = vst.msk [vmem:[#allocation3 + $0x48] sm:$0xff] %vm5784, %v5755
        %5795 = vst.msk [vmem:[#allocation3 + $0x50] sm:$0xff] %vm5784, %v5757
        %5796 = vst.msk [vmem:[#allocation3 + $0x58] sm:$0xff] %vm5784, %v5759
        %5797 = vst.msk [vmem:[#allocation3 + $0x60] sm:$0xff] %vm5784, %v5761
        %5798 = vst.msk [vmem:[#allocation3 + $0x68] sm:$0xff] %vm5784, %v5763
        %5799 = vst.msk [vmem:[#allocation3 + $0x70] sm:$0xff] %vm5784, %v5765
        %5800 = vst.msk [vmem:[#allocation3 + $0x78] sm:$0xff] %vm5784, %v5767
        %v5801 = vld [vmem:[#allocation3] sm:$0xff]
        %v5802 = vld [vmem:[#allocation3 + $0x8] sm:$0xff]
        %v5803 = vld [vmem:[#allocation3 + $0x10] sm:$0xff]
        %v5804 = vld [vmem:[#allocation3 + $0x18] sm:$0xff]
        %v5805 = vld [vmem:[#allocation3 + $0x20] sm:$0xff]
        %v5806 = vld [vmem:[#allocation3 + $0x28] sm:$0xff]
        %v5807 = vld [vmem:[#allocation3 + $0x30] sm:$0xff]
        %v5808 = vld [vmem:[#allocation3 + $0x38] sm:$0xff]
        %v5809 = vld [vmem:[#allocation3 + $0x40] sm:$0xff]
        %v5810 = vld [vmem:[#allocation3 + $0x48] sm:$0xff]
        %v5811 = vld [vmem:[#allocation3 + $0x50] sm:$0xff]
        %v5812 = vld [vmem:[#allocation3 + $0x58] sm:$0xff]
        %v5813 = vld [vmem:[#allocation3 + $0x60] sm:$0xff]
        %v5814 = vld [vmem:[#allocation3 + $0x68] sm:$0xff]
        %v5815 = vld [vmem:[#allocation3 + $0x70] sm:$0xff]
        %v5816 = vld [vmem:[#allocation3 + $0x78] sm:$0xff]
        %v5817 = vld [vmem:[%s741] sm:$0xf]
        %v5818 = vld [vmem:[%s741 + $0x4] sm:$0xf]
        %v5819 = vld [vmem:[%s741 + $0x8] sm:$0xf]
        %v5820 = vld [vmem:[%s741 + $0xc] sm:$0xf]
        %v5821 = vld [vmem:[%s749] sm:$0x1]
        %v5823 = vlaneseq
        %v5824 = vshrl.u32 %v5823, 7
        %v5825 = vsub.s32 0, %v5824
        %v5826 = vrot.slane %v5821, %v5825
        %v5832 = vunpack.c.l.b16 %v5817
        %v5833 = vunpack.c.l.b16 %v5818
        %v5834 = vunpack.c.l.b16 %v5819
        %v5835 = vunpack.c.l.b16 %v5820
        %v5836 = vpack.c.b16 %v5833, %v5832
        %v5837 = vpack.c.b16 %v5835, %v5834
        %v5841 = vsel %vm992, %v5801, 0
        %v5844 = vsel %vm992, %v5802, 0
        %v5847 = vsel %vm992, %v5803, 0
        %v5850 = vsel %vm992, %v5804, 0
        %v5853 = vsel %vm992, %v5805, 0
        %v5856 = vsel %vm992, %v5806, 0
        %v5859 = vsel %vm992, %v5807, 0
        %v5862 = vsel %vm992, %v5808, 0
        %v5865 = vsel %vm992, %v5809, 0
        %v5868 = vsel %vm992, %v5810, 0
        %v5871 = vsel %vm992, %v5811, 0
        %v5874 = vsel %vm992, %v5812, 0
        %v5877 = vsel %vm992, %v5813, 0
        %v5880 = vsel %vm992, %v5814, 0
        %v5883 = vsel %vm992, %v5815, 0
        %v5886 = vsel %vm992, %v5816, 0
        %5888 = vmatprep.subr.bf16.mxu0 0
        %5889 = vmatpush1.bf16.msra.mxu0 %v5836
        %5890 = vmatprep.subr.bf16.mxu0 0
        %5891 = vmatpush1.bf16.msra.mxu0 %v5837
        %5892 = vmatprep.subr.bf16.mxu0 0
        %5893 = vmatpush1.bf16.msra.mxu0 0
        %5894 = vmatprep.subr.bf16.mxu0 0
        %5895 = vmatpush1.bf16.msra.mxu0 0
        %5896 = vmatprep.subr.bf16.mxu0 0
        %5897 = vmatpush1.bf16.msra.mxu0 0
        %5898 = vmatprep.subr.bf16.mxu0 0
        %5899 = vmatpush1.bf16.msra.mxu0 0
        %5900 = vmatprep.subr.bf16.mxu0 0
        %5901 = vmatpush1.bf16.msra.mxu0 0
        %5902 = vmatprep.subr.bf16.mxu0 0
        %5903 = vmatpush1.bf16.msra.mxu0 0
        %5904 = vmatprep.subr.bf16.mxu0 0
        %5905 = vmatpush1.bf16.msra.mxu0 0
        %5906 = vmatprep.subr.bf16.mxu0 0
        %5907 = vmatpush1.bf16.msra.mxu0 0
        %5908 = vmatprep.subr.bf16.mxu0 0
        %5909 = vmatpush1.bf16.msra.mxu0 0
        %5910 = vmatprep.subr.bf16.mxu0 0
        %5911 = vmatpush1.bf16.msra.mxu0 0
        %5912 = vmatprep.subr.bf16.mxu0 0
        %5913 = vmatpush1.bf16.msra.mxu0 0
        %5914 = vmatprep.subr.bf16.mxu0 0
        %5915 = vmatpush1.bf16.msra.mxu0 0
        %5916 = vmatprep.subr.bf16.mxu0 0
        %5917 = vmatpush1.bf16.msra.mxu0 0
        %5918 = vmatprep.subr.bf16.mxu0 0
        %5919 = vmatpush1.bf16.msra.mxu0 0
        %5920 = vmatprep.mubr.bf16.mxu0 0
        %5921 = vmatmul.mubr.bf16.gmra.mrb[0].mxu0 %v5841
        %v5922 = vpop.f32.mrb[0].mxu0
        %v5923 = vadd.f32 %v5826, %v5922
        %v5924 = vpop.f32.mrb[0].mxu0
        %v5925 = vpop.f32.mrb[0].mxu0
        %v5926 = vadd.f32 %v5826, %v5925
        %v5927 = vpop.f32.mrb[0].mxu0
        %5928 = vmatprep.mubr.bf16.mxu0 0
        %5929 = vmatmul.mubr.bf16.gmra.mrb[0].mxu0 %v5844
        %v5930 = vpop.f32.mrb[0].mxu0
        %v5931 = vadd.f32 %v5826, %v5930
        %v5932 = vpop.f32.mrb[0].mxu0
        %v5933 = vpop.f32.mrb[0].mxu0
        %v5934 = vadd.f32 %v5826, %v5933
        %v5935 = vpop.f32.mrb[0].mxu0
        %5936 = vmatprep.mubr.bf16.mxu0 0
        %5937 = vmatmul.mubr.bf16.gmra.mrb[0].mxu0 %v5847
        %v5938 = vpop.f32.mrb[0].mxu0
        %v5939 = vadd.f32 %v5826, %v5938
        %v5940 = vpop.f32.mrb[0].mxu0
        %v5941 = vpop.f32.mrb[0].mxu0
        %v5942 = vadd.f32 %v5826, %v5941
        %v5943 = vpop.f32.mrb[0].mxu0
        %5944 = vmatprep.mubr.bf16.mxu0 0
        %5945 = vmatmul.mubr.bf16.gmra.mrb[0].mxu0 %v5850
        %v5946 = vpop.f32.mrb[0].mxu0
        %v5947 = vadd.f32 %v5826, %v5946
        %v5948 = vpop.f32.mrb[0].mxu0
        %v5949 = vpop.f32.mrb[0].mxu0
        %v5950 = vadd.f32 %v5826, %v5949
        %v5951 = vpop.f32.mrb[0].mxu0
        %5952 = vmatprep.mubr.bf16.mxu0 0
        %5953 = vmatmul.mubr.bf16.gmra.mrb[0].mxu0 %v5853
        %v5954 = vpop.f32.mrb[0].mxu0
        %v5955 = vadd.f32 %v5826, %v5954
        %v5956 = vpop.f32.mrb[0].mxu0
        %v5957 = vpop.f32.mrb[0].mxu0
        %v5958 = vadd.f32 %v5826, %v5957
        %v5959 = vpop.f32.mrb[0].mxu0
        %5960 = vmatprep.mubr.bf16.mxu0 0
        %5961 = vmatmul.mubr.bf16.gmra.mrb[0].mxu0 %v5856
        %v5962 = vpop.f32.mrb[0].mxu0
        %v5963 = vadd.f32 %v5826, %v5962
        %v5964 = vpop.f32.mrb[0].mxu0
        %v5965 = vpop.f32.mrb[0].mxu0
        %v5966 = vadd.f32 %v5826, %v5965
        %v5967 = vpop.f32.mrb[0].mxu0
        %5968 = vmatprep.mubr.bf16.mxu0 0
        %5969 = vmatmul.mubr.bf16.gmra.mrb[0].mxu0 %v5859
        %v5970 = vpop.f32.mrb[0].mxu0
        %v5971 = vadd.f32 %v5826, %v5970
        %v5972 = vpop.f32.mrb[0].mxu0
        %v5973 = vpop.f32.mrb[0].mxu0
        %v5974 = vadd.f32 %v5826, %v5973
        %v5975 = vpop.f32.mrb[0].mxu0
        %5976 = vmatprep.mubr.bf16.mxu0 0
        %5977 = vmatmul.mubr.bf16.gmra.mrb[0].mxu0 %v5862
        %v5978 = vpop.f32.mrb[0].mxu0
        %v5979 = vadd.f32 %v5826, %v5978
        %v5980 = vpop.f32.mrb[0].mxu0
        %v5981 = vpop.f32.mrb[0].mxu0
        %v5982 = vadd.f32 %v5826, %v5981
        %v5983 = vpop.f32.mrb[0].mxu0
        %5984 = vmatprep.mubr.bf16.mxu0 0
        %5985 = vmatmul.mubr.bf16.gmra.mrb[0].mxu0 %v5865
        %v5986 = vpop.f32.mrb[0].mxu0
        %v5987 = vadd.f32 %v5826, %v5986
        %v5988 = vpop.f32.mrb[0].mxu0
        %v5989 = vpop.f32.mrb[0].mxu0
        %v5990 = vadd.f32 %v5826, %v5989
        %v5991 = vpop.f32.mrb[0].mxu0
        %5992 = vmatprep.mubr.bf16.mxu0 0
        %5993 = vmatmul.mubr.bf16.gmra.mrb[0].mxu0 %v5868
        %v5994 = vpop.f32.mrb[0].mxu0
        %v5995 = vadd.f32 %v5826, %v5994
        %v5996 = vpop.f32.mrb[0].mxu0
        %v5997 = vpop.f32.mrb[0].mxu0
        %v5998 = vadd.f32 %v5826, %v5997
        %v5999 = vpop.f32.mrb[0].mxu0
        %6000 = vmatprep.mubr.bf16.mxu0 0
        %6001 = vmatmul.mubr.bf16.gmra.mrb[0].mxu0 %v5871
        %v6002 = vpop.f32.mrb[0].mxu0
        %v6003 = vadd.f32 %v5826, %v6002
        %v6004 = vpop.f32.mrb[0].mxu0
        %v6005 = vpop.f32.mrb[0].mxu0
        %v6006 = vadd.f32 %v5826, %v6005
        %v6007 = vpop.f32.mrb[0].mxu0
        %6008 = vmatprep.mubr.bf16.mxu0 0
        %6009 = vmatmul.mubr.bf16.gmra.mrb[0].mxu0 %v5874
        %v6010 = vpop.f32.mrb[0].mxu0
        %v6011 = vadd.f32 %v5826, %v6010
        %v6012 = vpop.f32.mrb[0].mxu0
        %v6013 = vpop.f32.mrb[0].mxu0
        %v6014 = vadd.f32 %v5826, %v6013
        %v6015 = vpop.f32.mrb[0].mxu0
        %6016 = vmatprep.mubr.bf16.mxu0 0
        %6017 = vmatmul.mubr.bf16.gmra.mrb[0].mxu0 %v5877
        %v6018 = vpop.f32.mrb[0].mxu0
        %v6019 = vadd.f32 %v5826, %v6018
        %v6020 = vpop.f32.mrb[0].mxu0
        %v6021 = vpop.f32.mrb[0].mxu0
        %v6022 = vadd.f32 %v5826, %v6021
        %v6023 = vpop.f32.mrb[0].mxu0
        %6024 = vmatprep.mubr.bf16.mxu0 0
        %6025 = vmatmul.mubr.bf16.gmra.mrb[0].mxu0 %v5880
        %v6026 = vpop.f32.mrb[0].mxu0
        %v6027 = vadd.f32 %v5826, %v6026
        %v6028 = vpop.f32.mrb[0].mxu0
        %v6029 = vpop.f32.mrb[0].mxu0
        %v6030 = vadd.f32 %v5826, %v6029
        %v6031 = vpop.f32.mrb[0].mxu0
        %6032 = vmatprep.mubr.bf16.mxu0 0
        %6033 = vmatmul.mubr.bf16.gmra.mrb[0].mxu0 %v5883
        %v6034 = vpop.f32.mrb[0].mxu0
        %v6035 = vadd.f32 %v5826, %v6034
        %v6036 = vpop.f32.mrb[0].mxu0
        %v6037 = vpop.f32.mrb[0].mxu0
        %v6038 = vadd.f32 %v5826, %v6037
        %v6039 = vpop.f32.mrb[0].mxu0
        %6040 = vmatprep.mubr.bf16.mxu0 0
        %6041 = vmatmul.mubr.bf16.gmra.mrb[0].mxu0 %v5886
        %v6042 = vpop.f32.mrb[0].mxu0
        %v6043 = vadd.f32 %v5826, %v6042
        %v6044 = vpop.f32.mrb[0].mxu0
        %v6045 = vpop.f32.mrb[0].mxu0
        %v6046 = vadd.f32 %v5826, %v6045
        %v6047 = vpop.f32.mrb[0].mxu0
        %6048 = vdwg.mxu0
        %v6049 = vadd.f32 %v958, %v5923
        %v6050 = vadd.f32 %v959, %v5926
        %v6051 = vadd.f32 %v960, %v5931
        %v6052 = vadd.f32 %v961, %v5934
        %v6053 = vadd.f32 %v962, %v5939
        %v6054 = vadd.f32 %v963, %v5942
        %v6055 = vadd.f32 %v964, %v5947
        %v6056 = vadd.f32 %v965, %v5950
        %v6057 = vadd.f32 %v966, %v5955
        %v6058 = vadd.f32 %v967, %v5958
        %v6059 = vadd.f32 %v968, %v5963
        %v6060 = vadd.f32 %v969, %v5966
        %v6061 = vadd.f32 %v970, %v5971
        %v6062 = vadd.f32 %v971, %v5974
        %v6063 = vadd.f32 %v972, %v5979
        %v6064 = vadd.f32 %v973, %v5982
        %v6065 = vadd.f32 %v974, %v5987
        %v6066 = vadd.f32 %v975, %v5990
        %v6067 = vadd.f32 %v976, %v5995
        %v6068 = vadd.f32 %v977, %v5998
        %v6069 = vadd.f32 %v978, %v6003
        %v6070 = vadd.f32 %v979, %v6006
        %v6071 = vadd.f32 %v980, %v6011
        %v6072 = vadd.f32 %v981, %v6014
        %v6073 = vadd.f32 %v982, %v6019
        %v6074 = vadd.f32 %v983, %v6022
        %v6075 = vadd.f32 %v984, %v6027
        %v6076 = vadd.f32 %v985, %v6030
        %v6077 = vadd.f32 %v986, %v6035
        %v6078 = vadd.f32 %v987, %v6038
        %v6079 = vadd.f32 %v988, %v6043
        %v6080 = vadd.f32 %v989, %v6046
        %v6081 = vld [vmem:[%s757] sm:$0x1]
        %v6082 = vld [vmem:[%s765] sm:$0x1]
        %v6083 = vsel %vm992, %v6049, 0.0
        %6084 = vadd.xlane.f32.xlu0 %v6083
        %v6085 = vpop.xlane.xlu0 %6084
        %v6086 = vsel %vm992, %v6050, 0.0
        %6087 = vadd.xlane.f32.xlu0 %v6086
        %v6088 = vpop.xlane.xlu0 %6087
        %v6089 = vsel %vm992, %v6051, 0.0
        %6090 = vadd.xlane.f32.xlu0 %v6089
        %v6091 = vpop.xlane.xlu0 %6090
        %v6092 = vsel %vm992, %v6052, 0.0
        %6093 = vadd.xlane.f32.xlu0 %v6092
        %v6094 = vpop.xlane.xlu0 %6093
        %v6095 = vsel %vm992, %v6053, 0.0
        %6096 = vadd.xlane.f32.xlu0 %v6095
        %v6097 = vpop.xlane.xlu0 %6096
        %v6098 = vsel %vm992, %v6054, 0.0
        %6099 = vadd.xlane.f32.xlu0 %v6098
        %v6100 = vpop.xlane.xlu0 %6099
        %v6101 = vsel %vm992, %v6055, 0.0
        %6102 = vadd.xlane.f32.xlu0 %v6101
        %v6103 = vpop.xlane.xlu0 %6102
        %v6104 = vsel %vm992, %v6056, 0.0
        %6105 = vadd.xlane.f32.xlu0 %v6104
        %v6106 = vpop.xlane.xlu0 %6105
        %v6107 = vsel %vm992, %v6057, 0.0
        %6108 = vadd.xlane.f32.xlu0 %v6107
        %v6109 = vpop.xlane.xlu0 %6108
        %v6110 = vsel %vm992, %v6058, 0.0
        %6111 = vadd.xlane.f32.xlu0 %v6110
        %v6112 = vpop.xlane.xlu0 %6111
        %v6113 = vsel %vm992, %v6059, 0.0
        %6114 = vadd.xlane.f32.xlu0 %v6113
        %v6115 = vpop.xlane.xlu0 %6114
        %v6116 = vsel %vm992, %v6060, 0.0
        %6117 = vadd.xlane.f32.xlu0 %v6116
        %v6118 = vpop.xlane.xlu0 %6117
        %v6119 = vsel %vm992, %v6061, 0.0
        %6120 = vadd.xlane.f32.xlu0 %v6119
        %v6121 = vpop.xlane.xlu0 %6120
        %v6122 = vsel %vm992, %v6062, 0.0
        %6123 = vadd.xlane.f32.xlu0 %v6122
        %v6124 = vpop.xlane.xlu0 %6123
        %v6125 = vsel %vm992, %v6063, 0.0
        %6126 = vadd.xlane.f32.xlu0 %v6125
        %v6127 = vpop.xlane.xlu0 %6126
        %v6128 = vsel %vm992, %v6064, 0.0
        %6129 = vadd.xlane.f32.xlu0 %v6128
        %v6130 = vpop.xlane.xlu0 %6129
        %v6131 = vsel %vm992, %v6065, 0.0
        %6132 = vadd.xlane.f32.xlu0 %v6131
        %v6133 = vpop.xlane.xlu0 %6132
        %v6134 = vsel %vm992, %v6066, 0.0
        %6135 = vadd.xlane.f32.xlu0 %v6134
        %v6136 = vpop.xlane.xlu0 %6135
        %v6137 = vsel %vm992, %v6067, 0.0
        %6138 = vadd.xlane.f32.xlu0 %v6137
        %v6139 = vpop.xlane.xlu0 %6138
        %v6140 = vsel %vm992, %v6068, 0.0
        %6141 = vadd.xlane.f32.xlu0 %v6140
        %v6142 = vpop.xlane.xlu0 %6141
        %v6143 = vsel %vm992, %v6069, 0.0
        %6144 = vadd.xlane.f32.xlu0 %v6143
        %v6145 = vpop.xlane.xlu0 %6144
        %v6146 = vsel %vm992, %v6070, 0.0
        %6147 = vadd.xlane.f32.xlu0 %v6146
        %v6148 = vpop.xlane.xlu0 %6147
        %v6149 = vsel %vm992, %v6071, 0.0
        %6150 = vadd.xlane.f32.xlu0 %v6149
        %v6151 = vpop.xlane.xlu0 %6150
        %v6152 = vsel %vm992, %v6072, 0.0
        %6153 = vadd.xlane.f32.xlu0 %v6152
        %v6154 = vpop.xlane.xlu0 %6153
        %v6155 = vsel %vm992, %v6073, 0.0
        %6156 = vadd.xlane.f32.xlu0 %v6155
        %v6157 = vpop.xlane.xlu0 %6156
        %v6158 = vsel %vm992, %v6074, 0.0
        %6159 = vadd.xlane.f32.xlu0 %v6158
        %v6160 = vpop.xlane.xlu0 %6159
        %v6161 = vsel %vm992, %v6075, 0.0
        %6162 = vadd.xlane.f32.xlu0 %v6161
        %v6163 = vpop.xlane.xlu0 %6162
        %v6164 = vsel %vm992, %v6076, 0.0
        %6165 = vadd.xlane.f32.xlu0 %v6164
        %v6166 = vpop.xlane.xlu0 %6165
        %v6167 = vsel %vm992, %v6077, 0.0
        %6168 = vadd.xlane.f32.xlu0 %v6167
        %v6169 = vpop.xlane.xlu0 %6168
        %v6170 = vsel %vm992, %v6078, 0.0
        %6171 = vadd.xlane.f32.xlu0 %v6170
        %v6172 = vpop.xlane.xlu0 %6171
        %v6173 = vsel %vm992, %v6079, 0.0
        %6174 = vadd.xlane.f32.xlu0 %v6173
        %v6175 = vpop.xlane.xlu0 %6174
        %v6176 = vsel %vm992, %v6080, 0.0
        %6177 = vadd.xlane.f32.xlu0 %v6176
        %v6178 = vpop.xlane.xlu0 %6177
        %v6179 = vmul.f32 %v6085, %v1089
        %v6180 = vmul.f32 %v6088, %v1089
        %v6181 = vmul.f32 %v6091, %v1089
        %v6182 = vmul.f32 %v6094, %v1089
        %v6183 = vmul.f32 %v6097, %v1089
        %v6184 = vmul.f32 %v6100, %v1089
        %v6185 = vmul.f32 %v6103, %v1089
        %v6186 = vmul.f32 %v6106, %v1089
        %v6187 = vmul.f32 %v6109, %v1089
        %v6188 = vmul.f32 %v6112, %v1089
        %v6189 = vmul.f32 %v6115, %v1089
        %v6190 = vmul.f32 %v6118, %v1089
        %v6191 = vmul.f32 %v6121, %v1089
        %v6192 = vmul.f32 %v6124, %v1089
        %v6193 = vmul.f32 %v6127, %v1089
        %v6194 = vmul.f32 %v6130, %v1089
        %v6195 = vmul.f32 %v6133, %v1089
        %v6196 = vmul.f32 %v6136, %v1089
        %v6197 = vmul.f32 %v6139, %v1089
        %v6198 = vmul.f32 %v6142, %v1089
        %v6199 = vmul.f32 %v6145, %v1089
        %v6200 = vmul.f32 %v6148, %v1089
        %v6201 = vmul.f32 %v6151, %v1089
        %v6202 = vmul.f32 %v6154, %v1089
        %v6203 = vmul.f32 %v6157, %v1089
        %v6204 = vmul.f32 %v6160, %v1089
        %v6205 = vmul.f32 %v6163, %v1089
        %v6206 = vmul.f32 %v6166, %v1089
        %v6207 = vmul.f32 %v6169, %v1089
        %v6208 = vmul.f32 %v6172, %v1089
        %v6209 = vmul.f32 %v6175, %v1089
        %v6210 = vmul.f32 %v6178, %v1089
        %v6211 = vsub.f32 %v6049, %v6179
        %v6212 = vsub.f32 %v6050, %v6180
        %v6213 = vsub.f32 %v6051, %v6181
        %v6214 = vsub.f32 %v6052, %v6182
        %v6215 = vsub.f32 %v6053, %v6183
        %v6216 = vsub.f32 %v6054, %v6184
        %v6217 = vsub.f32 %v6055, %v6185
        %v6218 = vsub.f32 %v6056, %v6186
        %v6219 = vsub.f32 %v6057, %v6187
        %v6220 = vsub.f32 %v6058, %v6188
        %v6221 = vsub.f32 %v6059, %v6189
        %v6222 = vsub.f32 %v6060, %v6190
        %v6223 = vsub.f32 %v6061, %v6191
        %v6224 = vsub.f32 %v6062, %v6192
        %v6225 = vsub.f32 %v6063, %v6193
        %v6226 = vsub.f32 %v6064, %v6194
        %v6227 = vsub.f32 %v6065, %v6195
        %v6228 = vsub.f32 %v6066, %v6196
        %v6229 = vsub.f32 %v6067, %v6197
        %v6230 = vsub.f32 %v6068, %v6198
        %v6231 = vsub.f32 %v6069, %v6199
        %v6232 = vsub.f32 %v6070, %v6200
        %v6233 = vsub.f32 %v6071, %v6201
        %v6234 = vsub.f32 %v6072, %v6202
        %v6235 = vsub.f32 %v6073, %v6203
        %v6236 = vsub.f32 %v6074, %v6204
        %v6237 = vsub.f32 %v6075, %v6205
        %v6238 = vsub.f32 %v6076, %v6206
        %v6239 = vsub.f32 %v6077, %v6207
        %v6240 = vsub.f32 %v6078, %v6208
        %v6241 = vsub.f32 %v6079, %v6209
        %v6242 = vsub.f32 %v6080, %v6210
        %v6243 = vmul.f32 %v6211, %v6211
        %v6244 = vmul.f32 %v6212, %v6212
        %v6245 = vmul.f32 %v6213, %v6213
        %v6246 = vmul.f32 %v6214, %v6214
        %v6247 = vmul.f32 %v6215, %v6215
        %v6248 = vmul.f32 %v6216, %v6216
        %v6249 = vmul.f32 %v6217, %v6217
        %v6250 = vmul.f32 %v6218, %v6218
        %v6251 = vmul.f32 %v6219, %v6219
        %v6252 = vmul.f32 %v6220, %v6220
        %v6253 = vmul.f32 %v6221, %v6221
        %v6254 = vmul.f32 %v6222, %v6222
        %v6255 = vmul.f32 %v6223, %v6223
        %v6256 = vmul.f32 %v6224, %v6224
        %v6257 = vmul.f32 %v6225, %v6225
        %v6258 = vmul.f32 %v6226, %v6226
        %v6259 = vmul.f32 %v6227, %v6227
        %v6260 = vmul.f32 %v6228, %v6228
        %v6261 = vmul.f32 %v6229, %v6229
        %v6262 = vmul.f32 %v6230, %v6230
        %v6263 = vmul.f32 %v6231, %v6231
        %v6264 = vmul.f32 %v6232, %v6232
        %v6265 = vmul.f32 %v6233, %v6233
        %v6266 = vmul.f32 %v6234, %v6234
        %v6267 = vmul.f32 %v6235, %v6235
        %v6268 = vmul.f32 %v6236, %v6236
        %v6269 = vmul.f32 %v6237, %v6237
        %v6270 = vmul.f32 %v6238, %v6238
        %v6271 = vmul.f32 %v6239, %v6239
        %v6272 = vmul.f32 %v6240, %v6240
        %v6273 = vmul.f32 %v6241, %v6241
        %v6274 = vmul.f32 %v6242, %v6242
        %v6275 = vsel %vm992, %v6243, 0.0
        %6276 = vadd.xlane.f32.xlu0 %v6275
        %v6277 = vpop.xlane.xlu0 %6276
        %v6278 = vsel %vm992, %v6244, 0.0
        %6279 = vadd.xlane.f32.xlu0 %v6278
        %v6280 = vpop.xlane.xlu0 %6279
        %v6281 = vsel %vm992, %v6245, 0.0
        %6282 = vadd.xlane.f32.xlu0 %v6281
        %v6283 = vpop.xlane.xlu0 %6282
        %v6284 = vsel %vm992, %v6246, 0.0
        %6285 = vadd.xlane.f32.xlu0 %v6284
        %v6286 = vpop.xlane.xlu0 %6285
        %v6287 = vsel %vm992, %v6247, 0.0
        %6288 = vadd.xlane.f32.xlu0 %v6287
        %v6289 = vpop.xlane.xlu0 %6288
        %v6290 = vsel %vm992, %v6248, 0.0
        %6291 = vadd.xlane.f32.xlu0 %v6290
        %v6292 = vpop.xlane.xlu0 %6291
        %v6293 = vsel %vm992, %v6249, 0.0
        %6294 = vadd.xlane.f32.xlu0 %v6293
        %v6295 = vpop.xlane.xlu0 %6294
        %v6296 = vsel %vm992, %v6250, 0.0
        %6297 = vadd.xlane.f32.xlu0 %v6296
        %v6298 = vpop.xlane.xlu0 %6297
        %v6299 = vsel %vm992, %v6251, 0.0
        %6300 = vadd.xlane.f32.xlu0 %v6299
        %v6301 = vpop.xlane.xlu0 %6300
        %v6302 = vsel %vm992, %v6252, 0.0
        %6303 = vadd.xlane.f32.xlu0 %v6302
        %v6304 = vpop.xlane.xlu0 %6303
        %v6305 = vsel %vm992, %v6253, 0.0
        %6306 = vadd.xlane.f32.xlu0 %v6305
        %v6307 = vpop.xlane.xlu0 %6306
        %v6308 = vsel %vm992, %v6254, 0.0
        %6309 = vadd.xlane.f32.xlu0 %v6308
        %v6310 = vpop.xlane.xlu0 %6309
        %v6311 = vsel %vm992, %v6255, 0.0
        %6312 = vadd.xlane.f32.xlu0 %v6311
        %v6313 = vpop.xlane.xlu0 %6312
        %v6314 = vsel %vm992, %v6256, 0.0
        %6315 = vadd.xlane.f32.xlu0 %v6314
        %v6316 = vpop.xlane.xlu0 %6315
        %v6317 = vsel %vm992, %v6257, 0.0
        %6318 = vadd.xlane.f32.xlu0 %v6317
        %v6319 = vpop.xlane.xlu0 %6318
        %v6320 = vsel %vm992, %v6258, 0.0
        %6321 = vadd.xlane.f32.xlu0 %v6320
        %v6322 = vpop.xlane.xlu0 %6321
        %v6323 = vsel %vm992, %v6259, 0.0
        %6324 = vadd.xlane.f32.xlu0 %v6323
        %v6325 = vpop.xlane.xlu0 %6324
        %v6326 = vsel %vm992, %v6260, 0.0
        %6327 = vadd.xlane.f32.xlu0 %v6326
        %v6328 = vpop.xlane.xlu0 %6327
        %v6329 = vsel %vm992, %v6261, 0.0
        %6330 = vadd.xlane.f32.xlu0 %v6329
        %v6331 = vpop.xlane.xlu0 %6330
        %v6332 = vsel %vm992, %v6262, 0.0
        %6333 = vadd.xlane.f32.xlu0 %v6332
        %v6334 = vpop.xlane.xlu0 %6333
        %v6335 = vsel %vm992, %v6263, 0.0
        %6336 = vadd.xlane.f32.xlu0 %v6335
        %v6337 = vpop.xlane.xlu0 %6336
        %v6338 = vsel %vm992, %v6264, 0.0
        %6339 = vadd.xlane.f32.xlu0 %v6338
        %v6340 = vpop.xlane.xlu0 %6339
        %v6341 = vsel %vm992, %v6265, 0.0
        %6342 = vadd.xlane.f32.xlu0 %v6341
        %v6343 = vpop.xlane.xlu0 %6342
        %v6344 = vsel %vm992, %v6266, 0.0
        %6345 = vadd.xlane.f32.xlu0 %v6344
        %v6346 = vpop.xlane.xlu0 %6345
        %v6347 = vsel %vm992, %v6267, 0.0
        %6348 = vadd.xlane.f32.xlu0 %v6347
        %v6349 = vpop.xlane.xlu0 %6348
        %v6350 = vsel %vm992, %v6268, 0.0
        %6351 = vadd.xlane.f32.xlu0 %v6350
        %v6352 = vpop.xlane.xlu0 %6351
        %v6353 = vsel %vm992, %v6269, 0.0
        %6354 = vadd.xlane.f32.xlu0 %v6353
        %v6355 = vpop.xlane.xlu0 %6354
        %v6356 = vsel %vm992, %v6270, 0.0
        %6357 = vadd.xlane.f32.xlu0 %v6356
        %v6358 = vpop.xlane.xlu0 %6357
        %v6359 = vsel %vm992, %v6271, 0.0
        %6360 = vadd.xlane.f32.xlu0 %v6359
        %v6361 = vpop.xlane.xlu0 %6360
        %v6362 = vsel %vm992, %v6272, 0.0
        %6363 = vadd.xlane.f32.xlu0 %v6362
        %v6364 = vpop.xlane.xlu0 %6363
        %v6365 = vsel %vm992, %v6273, 0.0
        %6366 = vadd.xlane.f32.xlu0 %v6365
        %v6367 = vpop.xlane.xlu0 %6366
        %v6368 = vsel %vm992, %v6274, 0.0
        %6369 = vadd.xlane.f32.xlu0 %v6368
        %v6370 = vpop.xlane.xlu0 %6369
        %v6371 = vmul.f32 %v6277, %v1089
        %v6372 = vmul.f32 %v6280, %v1089
        %v6373 = vmul.f32 %v6283, %v1089
        %v6374 = vmul.f32 %v6286, %v1089
        %v6375 = vmul.f32 %v6289, %v1089
        %v6376 = vmul.f32 %v6292, %v1089
        %v6377 = vmul.f32 %v6295, %v1089
        %v6378 = vmul.f32 %v6298, %v1089
        %v6379 = vmul.f32 %v6301, %v1089
        %v6380 = vmul.f32 %v6304, %v1089
        %v6381 = vmul.f32 %v6307, %v1089
        %v6382 = vmul.f32 %v6310, %v1089
        %v6383 = vmul.f32 %v6313, %v1089
        %v6384 = vmul.f32 %v6316, %v1089
        %v6385 = vmul.f32 %v6319, %v1089
        %v6386 = vmul.f32 %v6322, %v1089
        %v6387 = vmul.f32 %v6325, %v1089
        %v6388 = vmul.f32 %v6328, %v1089
        %v6389 = vmul.f32 %v6331, %v1089
        %v6390 = vmul.f32 %v6334, %v1089
        %v6391 = vmul.f32 %v6337, %v1089
        %v6392 = vmul.f32 %v6340, %v1089
        %v6393 = vmul.f32 %v6343, %v1089
        %v6394 = vmul.f32 %v6346, %v1089
        %v6395 = vmul.f32 %v6349, %v1089
        %v6396 = vmul.f32 %v6352, %v1089
        %v6397 = vmul.f32 %v6355, %v1089
        %v6398 = vmul.f32 %v6358, %v1089
        %v6399 = vmul.f32 %v6361, %v1089
        %v6400 = vmul.f32 %v6364, %v1089
        %v6401 = vmul.f32 %v6367, %v1089
        %v6402 = vmul.f32 %v6370, %v1089
        %v6403 = vadd.f32 %v6371, 1e-05
        %v6404 = vadd.f32 %v6372, 1e-05
        %v6405 = vadd.f32 %v6373, 1e-05
        %v6406 = vadd.f32 %v6374, 1e-05
        %v6407 = vadd.f32 %v6375, 1e-05
        %v6408 = vadd.f32 %v6376, 1e-05
        %v6409 = vadd.f32 %v6377, 1e-05
        %v6410 = vadd.f32 %v6378, 1e-05
        %v6411 = vadd.f32 %v6379, 1e-05
        %v6412 = vadd.f32 %v6380, 1e-05
        %v6413 = vadd.f32 %v6381, 1e-05
        %v6414 = vadd.f32 %v6382, 1e-05
        %v6415 = vadd.f32 %v6383, 1e-05
        %v6416 = vadd.f32 %v6384, 1e-05
        %v6417 = vadd.f32 %v6385, 1e-05
        %v6418 = vadd.f32 %v6386, 1e-05
        %v6419 = vadd.f32 %v6387, 1e-05
        %v6420 = vadd.f32 %v6388, 1e-05
        %v6421 = vadd.f32 %v6389, 1e-05
        %v6422 = vadd.f32 %v6390, 1e-05
        %v6423 = vadd.f32 %v6391, 1e-05
        %v6424 = vadd.f32 %v6392, 1e-05
        %v6425 = vadd.f32 %v6393, 1e-05
        %v6426 = vadd.f32 %v6394, 1e-05
        %v6427 = vadd.f32 %v6395, 1e-05
        %v6428 = vadd.f32 %v6396, 1e-05
        %v6429 = vadd.f32 %v6397, 1e-05
        %v6430 = vadd.f32 %v6398, 1e-05
        %v6431 = vadd.f32 %v6399, 1e-05
        %v6432 = vadd.f32 %v6400, 1e-05
        %v6433 = vadd.f32 %v6401, 1e-05
        %v6434 = vadd.f32 %v6402, 1e-05
        %v6435 = vrsqrt.pop %v6403
        %v6436 = vrsqrt.pop %v6404
        %v6437 = vrsqrt.pop %v6405
        %v6438 = vrsqrt.pop %v6406
        %v6439 = vrsqrt.pop %v6407
        %v6440 = vrsqrt.pop %v6408
        %v6441 = vrsqrt.pop %v6409
        %v6442 = vrsqrt.pop %v6410
        %v6443 = vrsqrt.pop %v6411
        %v6444 = vrsqrt.pop %v6412
        %v6445 = vrsqrt.pop %v6413
        %v6446 = vrsqrt.pop %v6414
        %v6447 = vrsqrt.pop %v6415
        %v6448 = vrsqrt.pop %v6416
        %v6449 = vrsqrt.pop %v6417
        %v6450 = vrsqrt.pop %v6418
        %v6451 = vrsqrt.pop %v6419
        %v6452 = vrsqrt.pop %v6420
        %v6453 = vrsqrt.pop %v6421
        %v6454 = vrsqrt.pop %v6422
        %v6455 = vrsqrt.pop %v6423
        %v6456 = vrsqrt.pop %v6424
        %v6457 = vrsqrt.pop %v6425
        %v6458 = vrsqrt.pop %v6426
        %v6459 = vrsqrt.pop %v6427
        %v6460 = vrsqrt.pop %v6428
        %v6461 = vrsqrt.pop %v6429
        %v6462 = vrsqrt.pop %v6430
        %v6463 = vrsqrt.pop %v6431
        %v6464 = vrsqrt.pop %v6432
        %v6465 = vrsqrt.pop %v6433
        %v6466 = vrsqrt.pop %v6434
        %v6467 = vmul.f32 %v6211, %v6435
        %v6468 = vmul.f32 %v6212, %v6436
        %v6469 = vmul.f32 %v6213, %v6437
        %v6470 = vmul.f32 %v6214, %v6438
        %v6471 = vmul.f32 %v6215, %v6439
        %v6472 = vmul.f32 %v6216, %v6440
        %v6473 = vmul.f32 %v6217, %v6441
        %v6474 = vmul.f32 %v6218, %v6442
        %v6475 = vmul.f32 %v6219, %v6443
        %v6476 = vmul.f32 %v6220, %v6444
        %v6477 = vmul.f32 %v6221, %v6445
        %v6478 = vmul.f32 %v6222, %v6446
        %v6479 = vmul.f32 %v6223, %v6447
        %v6480 = vmul.f32 %v6224, %v6448
        %v6481 = vmul.f32 %v6225, %v6449
        %v6482 = vmul.f32 %v6226, %v6450
        %v6483 = vmul.f32 %v6227, %v6451
        %v6484 = vmul.f32 %v6228, %v6452
        %v6485 = vmul.f32 %v6229, %v6453
        %v6486 = vmul.f32 %v6230, %v6454
        %v6487 = vmul.f32 %v6231, %v6455
        %v6488 = vmul.f32 %v6232, %v6456
        %v6489 = vmul.f32 %v6233, %v6457
        %v6490 = vmul.f32 %v6234, %v6458
        %v6491 = vmul.f32 %v6235, %v6459
        %v6492 = vmul.f32 %v6236, %v6460
        %v6493 = vmul.f32 %v6237, %v6461
        %v6494 = vmul.f32 %v6238, %v6462
        %v6495 = vmul.f32 %v6239, %v6463
        %v6496 = vmul.f32 %v6240, %v6464
        %v6497 = vmul.f32 %v6241, %v6465
        %v6498 = vmul.f32 %v6242, %v6466
        %v6500 = vlaneseq
        %v6501 = vshrl.u32 %v6500, 7
        %v6502 = vsub.s32 0, %v6501
        %v6503 = vrot.slane %v6081, %v6502
        %v6505 = vmul.f32 %v6467, %v6503
        %v6506 = vmul.f32 %v6468, %v6503
        %v6507 = vmul.f32 %v6469, %v6503
        %v6508 = vmul.f32 %v6470, %v6503
        %v6509 = vmul.f32 %v6471, %v6503
        %v6510 = vmul.f32 %v6472, %v6503
        %v6511 = vmul.f32 %v6473, %v6503
        %v6512 = vmul.f32 %v6474, %v6503
        %v6513 = vmul.f32 %v6475, %v6503
        %v6514 = vmul.f32 %v6476, %v6503
        %v6515 = vmul.f32 %v6477, %v6503
        %v6516 = vmul.f32 %v6478, %v6503
        %v6517 = vmul.f32 %v6479, %v6503
        %v6518 = vmul.f32 %v6480, %v6503
        %v6519 = vmul.f32 %v6481, %v6503
        %v6520 = vmul.f32 %v6482, %v6503
        %v6521 = vmul.f32 %v6483, %v6503
        %v6522 = vmul.f32 %v6484, %v6503
        %v6523 = vmul.f32 %v6485, %v6503
        %v6524 = vmul.f32 %v6486, %v6503
        %v6525 = vmul.f32 %v6487, %v6503
        %v6526 = vmul.f32 %v6488, %v6503
        %v6527 = vmul.f32 %v6489, %v6503
        %v6528 = vmul.f32 %v6490, %v6503
        %v6529 = vmul.f32 %v6491, %v6503
        %v6530 = vmul.f32 %v6492, %v6503
        %v6531 = vmul.f32 %v6493, %v6503
        %v6532 = vmul.f32 %v6494, %v6503
        %v6533 = vmul.f32 %v6495, %v6503
        %v6534 = vmul.f32 %v6496, %v6503
        %v6535 = vmul.f32 %v6497, %v6503
        %v6536 = vmul.f32 %v6498, %v6503
        %v6538 = vlaneseq
        %v6539 = vshrl.u32 %v6538, 7
        %v6540 = vsub.s32 0, %v6539
        %v6541 = vrot.slane %v6082, %v6540
        %v6543 = vadd.f32 %v6505, %v6541
        %v6544 = vadd.f32 %v6506, %v6541
        %v6545 = vadd.f32 %v6507, %v6541
        %v6546 = vadd.f32 %v6508, %v6541
        %v6547 = vadd.f32 %v6509, %v6541
        %v6548 = vadd.f32 %v6510, %v6541
        %v6549 = vadd.f32 %v6511, %v6541
        %v6550 = vadd.f32 %v6512, %v6541
        %v6551 = vadd.f32 %v6513, %v6541
        %v6552 = vadd.f32 %v6514, %v6541
        %v6553 = vadd.f32 %v6515, %v6541
        %v6554 = vadd.f32 %v6516, %v6541
        %v6555 = vadd.f32 %v6517, %v6541
        %v6556 = vadd.f32 %v6518, %v6541
        %v6557 = vadd.f32 %v6519, %v6541
        %v6558 = vadd.f32 %v6520, %v6541
        %v6559 = vadd.f32 %v6521, %v6541
        %v6560 = vadd.f32 %v6522, %v6541
        %v6561 = vadd.f32 %v6523, %v6541
        %v6562 = vadd.f32 %v6524, %v6541
        %v6563 = vadd.f32 %v6525, %v6541
        %v6564 = vadd.f32 %v6526, %v6541
        %v6565 = vadd.f32 %v6527, %v6541
        %v6566 = vadd.f32 %v6528, %v6541
        %v6567 = vadd.f32 %v6529, %v6541
        %v6568 = vadd.f32 %v6530, %v6541
        %v6569 = vadd.f32 %v6531, %v6541
        %v6570 = vadd.f32 %v6532, %v6541
        %v6571 = vadd.f32 %v6533, %v6541
        %v6572 = vadd.f32 %v6534, %v6541
        %v6573 = vadd.f32 %v6535, %v6541
        %v6574 = vadd.f32 %v6536, %v6541
        %v6575 = vpack.c.bf16 %v6544, %v6543
        %v6576 = vpack.c.bf16 %v6546, %v6545
        %v6577 = vpack.c.bf16 %v6548, %v6547
        %v6578 = vpack.c.bf16 %v6550, %v6549
        %v6579 = vpack.c.bf16 %v6552, %v6551
        %v6580 = vpack.c.bf16 %v6554, %v6553
        %v6581 = vpack.c.bf16 %v6556, %v6555
        %v6582 = vpack.c.bf16 %v6558, %v6557
        %v6583 = vpack.c.bf16 %v6560, %v6559
        %v6584 = vpack.c.bf16 %v6562, %v6561
        %v6585 = vpack.c.bf16 %v6564, %v6563
        %v6586 = vpack.c.bf16 %v6566, %v6565
        %v6587 = vpack.c.bf16 %v6568, %v6567
        %v6588 = vpack.c.bf16 %v6570, %v6569
        %v6589 = vpack.c.bf16 %v6572, %v6571
        %v6590 = vpack.c.bf16 %v6574, %v6573
        %v6591 = vld [vmem:[%s774] sm:$0xf]
        %v6592 = vld [vmem:[%s774 + $0x4] sm:$0xf]
        %v6593 = vld [vmem:[%s774 + $0x8] sm:$0xf]
        %v6594 = vld [vmem:[%s774 + $0xc] sm:$0xf]
        %v6595 = vld [vmem:[%s782] sm:$0x1]
        %v6597 = vlaneseq
        %v6598 = vshrl.u32 %v6597, 7
        %v6599 = vsub.s32 0, %v6598
        %v6600 = vrot.slane %v6595, %v6599
        %v6606 = vunpack.c.l.b16 %v6591
        %v6607 = vunpack.c.l.b16 %v6592
        %v6608 = vunpack.c.l.b16 %v6593
        %v6609 = vunpack.c.l.b16 %v6594
        %v6610 = vpack.c.b16 %v6607, %v6606
        %v6611 = vpack.c.b16 %v6609, %v6608
        %v6615 = vsel %vm992, %v6575, 0
        %v6618 = vsel %vm992, %v6576, 0
        %v6621 = vsel %vm992, %v6577, 0
        %v6624 = vsel %vm992, %v6578, 0
        %v6627 = vsel %vm992, %v6579, 0
        %v6630 = vsel %vm992, %v6580, 0
        %v6633 = vsel %vm992, %v6581, 0
        %v6636 = vsel %vm992, %v6582, 0
        %v6639 = vsel %vm992, %v6583, 0
        %v6642 = vsel %vm992, %v6584, 0
        %v6645 = vsel %vm992, %v6585, 0
        %v6648 = vsel %vm992, %v6586, 0
        %v6651 = vsel %vm992, %v6587, 0
        %v6654 = vsel %vm992, %v6588, 0
        %v6657 = vsel %vm992, %v6589, 0
        %v6660 = vsel %vm992, %v6590, 0
        %6662 = vmatprep.subr.bf16.mxu0 0
        %6663 = vmatpush1.bf16.msra.mxu0 %v6610
        %6664 = vmatprep.subr.bf16.mxu0 0
        %6665 = vmatpush1.bf16.msra.mxu0 %v6611
        %6666 = vmatprep.subr.bf16.mxu0 0
        %6667 = vmatpush1.bf16.msra.mxu0 0
        %6668 = vmatprep.subr.bf16.mxu0 0
        %6669 = vmatpush1.bf16.msra.mxu0 0
        %6670 = vmatprep.subr.bf16.mxu0 0
        %6671 = vmatpush1.bf16.msra.mxu0 0
        %6672 = vmatprep.subr.bf16.mxu0 0
        %6673 = vmatpush1.bf16.msra.mxu0 0
        %6674 = vmatprep.subr.bf16.mxu0 0
        %6675 = vmatpush1.bf16.msra.mxu0 0
        %6676 = vmatprep.subr.bf16.mxu0 0
        %6677 = vmatpush1.bf16.msra.mxu0 0
        %6678 = vmatprep.subr.bf16.mxu0 0
        %6679 = vmatpush1.bf16.msra.mxu0 0
        %6680 = vmatprep.subr.bf16.mxu0 0
        %6681 = vmatpush1.bf16.msra.mxu0 0
        %6682 = vmatprep.subr.bf16.mxu0 0
        %6683 = vmatpush1.bf16.msra.mxu0 0
        %6684 = vmatprep.subr.bf16.mxu0 0
        %6685 = vmatpush1.bf16.msra.mxu0 0
        %6686 = vmatprep.subr.bf16.mxu0 0
        %6687 = vmatpush1.bf16.msra.mxu0 0
        %6688 = vmatprep.subr.bf16.mxu0 0
        %6689 = vmatpush1.bf16.msra.mxu0 0
        %6690 = vmatprep.subr.bf16.mxu0 0
        %6691 = vmatpush1.bf16.msra.mxu0 0
        %6692 = vmatprep.subr.bf16.mxu0 0
        %6693 = vmatpush1.bf16.msra.mxu0 0
        %6694 = vmatprep.mubr.bf16.mxu0 0
        %6695 = vmatmul.mubr.bf16.gmra.mrb[0].mxu0 %v6615
        %v6696 = vpop.f32.mrb[0].mxu0
        %v6697 = vadd.f32 %v6600, %v6696
        %v6698 = vpop.f32.mrb[0].mxu0
        %v6699 = vpop.f32.mrb[0].mxu0
        %v6700 = vadd.f32 %v6600, %v6699
        %v6701 = vpop.f32.mrb[0].mxu0
        %6702 = vmatprep.mubr.bf16.mxu0 0
        %6703 = vmatmul.mubr.bf16.gmra.mrb[0].mxu0 %v6618
        %v6704 = vpop.f32.mrb[0].mxu0
        %v6705 = vadd.f32 %v6600, %v6704
        %v6706 = vpop.f32.mrb[0].mxu0
        %v6707 = vpop.f32.mrb[0].mxu0
        %v6708 = vadd.f32 %v6600, %v6707
        %v6709 = vpop.f32.mrb[0].mxu0
        %6710 = vmatprep.mubr.bf16.mxu0 0
        %6711 = vmatmul.mubr.bf16.gmra.mrb[0].mxu0 %v6621
        %v6712 = vpop.f32.mrb[0].mxu0
        %v6713 = vadd.f32 %v6600, %v6712
        %v6714 = vpop.f32.mrb[0].mxu0
        %v6715 = vpop.f32.mrb[0].mxu0
        %v6716 = vadd.f32 %v6600, %v6715
        %v6717 = vpop.f32.mrb[0].mxu0
        %6718 = vmatprep.mubr.bf16.mxu0 0
        %6719 = vmatmul.mubr.bf16.gmra.mrb[0].mxu0 %v6624
        %v6720 = vpop.f32.mrb[0].mxu0
        %v6721 = vadd.f32 %v6600, %v6720
        %v6722 = vpop.f32.mrb[0].mxu0
        %v6723 = vpop.f32.mrb[0].mxu0
        %v6724 = vadd.f32 %v6600, %v6723
        %v6725 = vpop.f32.mrb[0].mxu0
        %6726 = vmatprep.mubr.bf16.mxu0 0
        %6727 = vmatmul.mubr.bf16.gmra.mrb[0].mxu0 %v6627
        %v6728 = vpop.f32.mrb[0].mxu0
        %v6729 = vadd.f32 %v6600, %v6728
        %v6730 = vpop.f32.mrb[0].mxu0
        %v6731 = vpop.f32.mrb[0].mxu0
        %v6732 = vadd.f32 %v6600, %v6731
        %v6733 = vpop.f32.mrb[0].mxu0
        %6734 = vmatprep.mubr.bf16.mxu0 0
        %6735 = vmatmul.mubr.bf16.gmra.mrb[0].mxu0 %v6630
        %v6736 = vpop.f32.mrb[0].mxu0
        %v6737 = vadd.f32 %v6600, %v6736
        %v6738 = vpop.f32.mrb[0].mxu0
        %v6739 = vpop.f32.mrb[0].mxu0
        %v6740 = vadd.f32 %v6600, %v6739
        %v6741 = vpop.f32.mrb[0].mxu0
        %6742 = vmatprep.mubr.bf16.mxu0 0
        %6743 = vmatmul.mubr.bf16.gmra.mrb[0].mxu0 %v6633
        %v6744 = vpop.f32.mrb[0].mxu0
        %v6745 = vadd.f32 %v6600, %v6744
        %v6746 = vpop.f32.mrb[0].mxu0
        %v6747 = vpop.f32.mrb[0].mxu0
        %v6748 = vadd.f32 %v6600, %v6747
        %v6749 = vpop.f32.mrb[0].mxu0
        %6750 = vmatprep.mubr.bf16.mxu0 0
        %6751 = vmatmul.mubr.bf16.gmra.mrb[0].mxu0 %v6636
        %v6752 = vpop.f32.mrb[0].mxu0
        %v6753 = vadd.f32 %v6600, %v6752
        %v6754 = vpop.f32.mrb[0].mxu0
        %v6755 = vpop.f32.mrb[0].mxu0
        %v6756 = vadd.f32 %v6600, %v6755
        %v6757 = vpop.f32.mrb[0].mxu0
        %6758 = vmatprep.mubr.bf16.mxu0 0
        %6759 = vmatmul.mubr.bf16.gmra.mrb[0].mxu0 %v6639
        %v6760 = vpop.f32.mrb[0].mxu0
        %v6761 = vadd.f32 %v6600, %v6760
        %v6762 = vpop.f32.mrb[0].mxu0
        %v6763 = vpop.f32.mrb[0].mxu0
        %v6764 = vadd.f32 %v6600, %v6763
        %v6765 = vpop.f32.mrb[0].mxu0
        %6766 = vmatprep.mubr.bf16.mxu0 0
        %6767 = vmatmul.mubr.bf16.gmra.mrb[0].mxu0 %v6642
        %v6768 = vpop.f32.mrb[0].mxu0
        %v6769 = vadd.f32 %v6600, %v6768
        %v6770 = vpop.f32.mrb[0].mxu0
        %v6771 = vpop.f32.mrb[0].mxu0
        %v6772 = vadd.f32 %v6600, %v6771
        %v6773 = vpop.f32.mrb[0].mxu0
        %6774 = vmatprep.mubr.bf16.mxu0 0
        %6775 = vmatmul.mubr.bf16.gmra.mrb[0].mxu0 %v6645
        %v6776 = vpop.f32.mrb[0].mxu0
        %v6777 = vadd.f32 %v6600, %v6776
        %v6778 = vpop.f32.mrb[0].mxu0
        %v6779 = vpop.f32.mrb[0].mxu0
        %v6780 = vadd.f32 %v6600, %v6779
        %v6781 = vpop.f32.mrb[0].mxu0
        %6782 = vmatprep.mubr.bf16.mxu0 0
        %6783 = vmatmul.mubr.bf16.gmra.mrb[0].mxu0 %v6648
        %v6784 = vpop.f32.mrb[0].mxu0
        %v6785 = vadd.f32 %v6600, %v6784
        %v6786 = vpop.f32.mrb[0].mxu0
        %v6787 = vpop.f32.mrb[0].mxu0
        %v6788 = vadd.f32 %v6600, %v6787
        %v6789 = vpop.f32.mrb[0].mxu0
        %6790 = vmatprep.mubr.bf16.mxu0 0
        %6791 = vmatmul.mubr.bf16.gmra.mrb[0].mxu0 %v6651
        %v6792 = vpop.f32.mrb[0].mxu0
        %v6793 = vadd.f32 %v6600, %v6792
        %v6794 = vpop.f32.mrb[0].mxu0
        %v6795 = vpop.f32.mrb[0].mxu0
        %v6796 = vadd.f32 %v6600, %v6795
        %v6797 = vpop.f32.mrb[0].mxu0
        %6798 = vmatprep.mubr.bf16.mxu0 0
        %6799 = vmatmul.mubr.bf16.gmra.mrb[0].mxu0 %v6654
        %v6800 = vpop.f32.mrb[0].mxu0
        %v6801 = vadd.f32 %v6600, %v6800
        %v6802 = vpop.f32.mrb[0].mxu0
        %v6803 = vpop.f32.mrb[0].mxu0
        %v6804 = vadd.f32 %v6600, %v6803
        %v6805 = vpop.f32.mrb[0].mxu0
        %6806 = vmatprep.mubr.bf16.mxu0 0
        %6807 = vmatmul.mubr.bf16.gmra.mrb[0].mxu0 %v6657
        %v6808 = vpop.f32.mrb[0].mxu0
        %v6809 = vadd.f32 %v6600, %v6808
        %v6810 = vpop.f32.mrb[0].mxu0
        %v6811 = vpop.f32.mrb[0].mxu0
        %v6812 = vadd.f32 %v6600, %v6811
        %v6813 = vpop.f32.mrb[0].mxu0
        %6814 = vmatprep.mubr.bf16.mxu0 0
        %6815 = vmatmul.mubr.bf16.gmra.mrb[0].mxu0 %v6660
        %v6816 = vpop.f32.mrb[0].mxu0
        %v6817 = vadd.f32 %v6600, %v6816
        %v6818 = vpop.f32.mrb[0].mxu0
        %v6819 = vpop.f32.mrb[0].mxu0
        %v6820 = vadd.f32 %v6600, %v6819
        %v6821 = vpop.f32.mrb[0].mxu0
        %6822 = vdwg.mxu0
        %v6823 = vmul.f32 %v6697, 1.702
        %v6824 = vmul.f32 %v6700, 1.702
        %v6825 = vmul.f32 %v6705, 1.702
        %v6826 = vmul.f32 %v6708, 1.702
        %v6827 = vmul.f32 %v6713, 1.702
        %v6828 = vmul.f32 %v6716, 1.702
        %v6829 = vmul.f32 %v6721, 1.702
        %v6830 = vmul.f32 %v6724, 1.702
        %v6831 = vmul.f32 %v6729, 1.702
        %v6832 = vmul.f32 %v6732, 1.702
        %v6833 = vmul.f32 %v6737, 1.702
        %v6834 = vmul.f32 %v6740, 1.702
        %v6835 = vmul.f32 %v6745, 1.702
        %v6836 = vmul.f32 %v6748, 1.702
        %v6837 = vmul.f32 %v6753, 1.702
        %v6838 = vmul.f32 %v6756, 1.702
        %v6839 = vmul.f32 %v6761, 1.702
        %v6840 = vmul.f32 %v6764, 1.702
        %v6841 = vmul.f32 %v6769, 1.702
        %v6842 = vmul.f32 %v6772, 1.702
        %v6843 = vmul.f32 %v6777, 1.702
        %v6844 = vmul.f32 %v6780, 1.702
        %v6845 = vmul.f32 %v6785, 1.702
        %v6846 = vmul.f32 %v6788, 1.702
        %v6847 = vmul.f32 %v6793, 1.702
        %v6848 = vmul.f32 %v6796, 1.702
        %v6849 = vmul.f32 %v6801, 1.702
        %v6850 = vmul.f32 %v6804, 1.702
        %v6851 = vmul.f32 %v6809, 1.702
        %v6852 = vmul.f32 %v6812, 1.702
        %v6853 = vmul.f32 %v6817, 1.702
        %v6854 = vmul.f32 %v6820, 1.702
        %v6855 = vxor.u32 %v6823, 2147483648
        %v6856 = vxor.u32 %v6824, 2147483648
        %v6857 = vxor.u32 %v6825, 2147483648
        %v6858 = vxor.u32 %v6826, 2147483648
        %v6859 = vxor.u32 %v6827, 2147483648
        %v6860 = vxor.u32 %v6828, 2147483648
        %v6861 = vxor.u32 %v6829, 2147483648
        %v6862 = vxor.u32 %v6830, 2147483648
        %v6863 = vxor.u32 %v6831, 2147483648
        %v6864 = vxor.u32 %v6832, 2147483648
        %v6865 = vxor.u32 %v6833, 2147483648
        %v6866 = vxor.u32 %v6834, 2147483648
        %v6867 = vxor.u32 %v6835, 2147483648
        %v6868 = vxor.u32 %v6836, 2147483648
        %v6869 = vxor.u32 %v6837, 2147483648
        %v6870 = vxor.u32 %v6838, 2147483648
        %v6871 = vxor.u32 %v6839, 2147483648
        %v6872 = vxor.u32 %v6840, 2147483648
        %v6873 = vxor.u32 %v6841, 2147483648
        %v6874 = vxor.u32 %v6842, 2147483648
        %v6875 = vxor.u32 %v6843, 2147483648
        %v6876 = vxor.u32 %v6844, 2147483648
        %v6877 = vxor.u32 %v6845, 2147483648
        %v6878 = vxor.u32 %v6846, 2147483648
        %v6879 = vxor.u32 %v6847, 2147483648
        %v6880 = vxor.u32 %v6848, 2147483648
        %v6881 = vxor.u32 %v6849, 2147483648
        %v6882 = vxor.u32 %v6850, 2147483648
        %v6883 = vxor.u32 %v6851, 2147483648
        %v6884 = vxor.u32 %v6852, 2147483648
        %v6885 = vxor.u32 %v6853, 2147483648
        %v6886 = vxor.u32 %v6854, 2147483648
        %v6887 = vmul.f32 %v6855, 1.442695
        %v6888 = vpow.pop %v6887
        %v6889 = vmul.f32 %v6856, 1.442695
        %v6890 = vpow.pop %v6889
        %v6891 = vmul.f32 %v6857, 1.442695
        %v6892 = vpow.pop %v6891
        %v6893 = vmul.f32 %v6858, 1.442695
        %v6894 = vpow.pop %v6893
        %v6895 = vmul.f32 %v6859, 1.442695
        %v6896 = vpow.pop %v6895
        %v6897 = vmul.f32 %v6860, 1.442695
        %v6898 = vpow.pop %v6897
        %v6899 = vmul.f32 %v6861, 1.442695
        %v6900 = vpow.pop %v6899
        %v6901 = vmul.f32 %v6862, 1.442695
        %v6902 = vpow.pop %v6901
        %v6903 = vmul.f32 %v6863, 1.442695
        %v6904 = vpow.pop %v6903
        %v6905 = vmul.f32 %v6864, 1.442695
        %v6906 = vpow.pop %v6905
        %v6907 = vmul.f32 %v6865, 1.442695
        %v6908 = vpow.pop %v6907
        %v6909 = vmul.f32 %v6866, 1.442695
        %v6910 = vpow.pop %v6909
        %v6911 = vmul.f32 %v6867, 1.442695
        %v6912 = vpow.pop %v6911
        %v6913 = vmul.f32 %v6868, 1.442695
        %v6914 = vpow.pop %v6913
        %v6915 = vmul.f32 %v6869, 1.442695
        %v6916 = vpow.pop %v6915
        %v6917 = vmul.f32 %v6870, 1.442695
        %v6918 = vpow.pop %v6917
        %v6919 = vmul.f32 %v6871, 1.442695
        %v6920 = vpow.pop %v6919
        %v6921 = vmul.f32 %v6872, 1.442695
        %v6922 = vpow.pop %v6921
        %v6923 = vmul.f32 %v6873, 1.442695
        %v6924 = vpow.pop %v6923
        %v6925 = vmul.f32 %v6874, 1.442695
        %v6926 = vpow.pop %v6925
        %v6927 = vmul.f32 %v6875, 1.442695
        %v6928 = vpow.pop %v6927
        %v6929 = vmul.f32 %v6876, 1.442695
        %v6930 = vpow.pop %v6929
        %v6931 = vmul.f32 %v6877, 1.442695
        %v6932 = vpow.pop %v6931
        %v6933 = vmul.f32 %v6878, 1.442695
        %v6934 = vpow.pop %v6933
        %v6935 = vmul.f32 %v6879, 1.442695
        %v6936 = vpow.pop %v6935
        %v6937 = vmul.f32 %v6880, 1.442695
        %v6938 = vpow.pop %v6937
        %v6939 = vmul.f32 %v6881, 1.442695
        %v6940 = vpow.pop %v6939
        %v6941 = vmul.f32 %v6882, 1.442695
        %v6942 = vpow.pop %v6941
        %v6943 = vmul.f32 %v6883, 1.442695
        %v6944 = vpow.pop %v6943
        %v6945 = vmul.f32 %v6884, 1.442695
        %v6946 = vpow.pop %v6945
        %v6947 = vmul.f32 %v6885, 1.442695
        %v6948 = vpow.pop %v6947
        %v6949 = vmul.f32 %v6886, 1.442695
        %v6950 = vpow.pop %v6949
        %v6951 = vadd.f32 %v6888, 1.0
        %v6952 = vadd.f32 %v6890, 1.0
        %v6953 = vadd.f32 %v6892, 1.0
        %v6954 = vadd.f32 %v6894, 1.0
        %v6955 = vadd.f32 %v6896, 1.0
        %v6956 = vadd.f32 %v6898, 1.0
        %v6957 = vadd.f32 %v6900, 1.0
        %v6958 = vadd.f32 %v6902, 1.0
        %v6959 = vadd.f32 %v6904, 1.0
        %v6960 = vadd.f32 %v6906, 1.0
        %v6961 = vadd.f32 %v6908, 1.0
        %v6962 = vadd.f32 %v6910, 1.0
        %v6963 = vadd.f32 %v6912, 1.0
        %v6964 = vadd.f32 %v6914, 1.0
        %v6965 = vadd.f32 %v6916, 1.0
        %v6966 = vadd.f32 %v6918, 1.0
        %v6967 = vadd.f32 %v6920, 1.0
        %v6968 = vadd.f32 %v6922, 1.0
        %v6969 = vadd.f32 %v6924, 1.0
        %v6970 = vadd.f32 %v6926, 1.0
        %v6971 = vadd.f32 %v6928, 1.0
        %v6972 = vadd.f32 %v6930, 1.0
        %v6973 = vadd.f32 %v6932, 1.0
        %v6974 = vadd.f32 %v6934, 1.0
        %v6975 = vadd.f32 %v6936, 1.0
        %v6976 = vadd.f32 %v6938, 1.0
        %v6977 = vadd.f32 %v6940, 1.0
        %v6978 = vadd.f32 %v6942, 1.0
        %v6979 = vadd.f32 %v6944, 1.0
        %v6980 = vadd.f32 %v6946, 1.0
        %v6981 = vadd.f32 %v6948, 1.0
        %v6982 = vadd.f32 %v6950, 1.0
        %v6983 = vrcp.pop %v6951
        %v6984 = vmul.f32 1.0, %v6983
        %v6985 = vrcp.pop %v6952
        %v6986 = vmul.f32 1.0, %v6985
        %v6987 = vrcp.pop %v6953
        %v6988 = vmul.f32 1.0, %v6987
        %v6989 = vrcp.pop %v6954
        %v6990 = vmul.f32 1.0, %v6989
        %v6991 = vrcp.pop %v6955
        %v6992 = vmul.f32 1.0, %v6991
        %v6993 = vrcp.pop %v6956
        %v6994 = vmul.f32 1.0, %v6993
        %v6995 = vrcp.pop %v6957
        %v6996 = vmul.f32 1.0, %v6995
        %v6997 = vrcp.pop %v6958
        %v6998 = vmul.f32 1.0, %v6997
        %v6999 = vrcp.pop %v6959
        %v7000 = vmul.f32 1.0, %v6999
        %v7001 = vrcp.pop %v6960
        %v7002 = vmul.f32 1.0, %v7001
        %v7003 = vrcp.pop %v6961
        %v7004 = vmul.f32 1.0, %v7003
        %v7005 = vrcp.pop %v6962
        %v7006 = vmul.f32 1.0, %v7005
        %v7007 = vrcp.pop %v6963
        %v7008 = vmul.f32 1.0, %v7007
        %v7009 = vrcp.pop %v6964
        %v7010 = vmul.f32 1.0, %v7009
        %v7011 = vrcp.pop %v6965
        %v7012 = vmul.f32 1.0, %v7011
        %v7013 = vrcp.pop %v6966
        %v7014 = vmul.f32 1.0, %v7013
        %v7015 = vrcp.pop %v6967
        %v7016 = vmul.f32 1.0, %v7015
        %v7017 = vrcp.pop %v6968
        %v7018 = vmul.f32 1.0, %v7017
        %v7019 = vrcp.pop %v6969
        %v7020 = vmul.f32 1.0, %v7019
        %v7021 = vrcp.pop %v6970
        %v7022 = vmul.f32 1.0, %v7021
        %v7023 = vrcp.pop %v6971
        %v7024 = vmul.f32 1.0, %v7023
        %v7025 = vrcp.pop %v6972
        %v7026 = vmul.f32 1.0, %v7025
        %v7027 = vrcp.pop %v6973
        %v7028 = vmul.f32 1.0, %v7027
        %v7029 = vrcp.pop %v6974
        %v7030 = vmul.f32 1.0, %v7029
        %v7031 = vrcp.pop %v6975
        %v7032 = vmul.f32 1.0, %v7031
        %v7033 = vrcp.pop %v6976
        %v7034 = vmul.f32 1.0, %v7033
        %v7035 = vrcp.pop %v6977
        %v7036 = vmul.f32 1.0, %v7035
        %v7037 = vrcp.pop %v6978
        %v7038 = vmul.f32 1.0, %v7037
        %v7039 = vrcp.pop %v6979
        %v7040 = vmul.f32 1.0, %v7039
        %v7041 = vrcp.pop %v6980
        %v7042 = vmul.f32 1.0, %v7041
        %v7043 = vrcp.pop %v6981
        %v7044 = vmul.f32 1.0, %v7043
        %v7045 = vrcp.pop %v6982
        %v7046 = vmul.f32 1.0, %v7045
        %v7047 = vmul.f32 %v6697, %v6984
        %v7048 = vmul.f32 %v6700, %v6986
        %v7049 = vmul.f32 %v6705, %v6988
        %v7050 = vmul.f32 %v6708, %v6990
        %v7051 = vmul.f32 %v6713, %v6992
        %v7052 = vmul.f32 %v6716, %v6994
        %v7053 = vmul.f32 %v6721, %v6996
        %v7054 = vmul.f32 %v6724, %v6998
        %v7055 = vmul.f32 %v6729, %v7000
        %v7056 = vmul.f32 %v6732, %v7002
        %v7057 = vmul.f32 %v6737, %v7004
        %v7058 = vmul.f32 %v6740, %v7006
        %v7059 = vmul.f32 %v6745, %v7008
        %v7060 = vmul.f32 %v6748, %v7010
        %v7061 = vmul.f32 %v6753, %v7012
        %v7062 = vmul.f32 %v6756, %v7014
        %v7063 = vmul.f32 %v6761, %v7016
        %v7064 = vmul.f32 %v6764, %v7018
        %v7065 = vmul.f32 %v6769, %v7020
        %v7066 = vmul.f32 %v6772, %v7022
        %v7067 = vmul.f32 %v6777, %v7024
        %v7068 = vmul.f32 %v6780, %v7026
        %v7069 = vmul.f32 %v6785, %v7028
        %v7070 = vmul.f32 %v6788, %v7030
        %v7071 = vmul.f32 %v6793, %v7032
        %v7072 = vmul.f32 %v6796, %v7034
        %v7073 = vmul.f32 %v6801, %v7036
        %v7074 = vmul.f32 %v6804, %v7038
        %v7075 = vmul.f32 %v6809, %v7040
        %v7076 = vmul.f32 %v6812, %v7042
        %v7077 = vmul.f32 %v6817, %v7044
        %v7078 = vmul.f32 %v6820, %v7046
        %v7079 = vpack.c.bf16 %v7048, %v7047
        %v7080 = vpack.c.bf16 %v7050, %v7049
        %v7081 = vpack.c.bf16 %v7052, %v7051
        %v7082 = vpack.c.bf16 %v7054, %v7053
        %v7083 = vpack.c.bf16 %v7056, %v7055
        %v7084 = vpack.c.bf16 %v7058, %v7057
        %v7085 = vpack.c.bf16 %v7060, %v7059
        %v7086 = vpack.c.bf16 %v7062, %v7061
        %v7087 = vpack.c.bf16 %v7064, %v7063
        %v7088 = vpack.c.bf16 %v7066, %v7065
        %v7089 = vpack.c.bf16 %v7068, %v7067
        %v7090 = vpack.c.bf16 %v7070, %v7069
        %v7091 = vpack.c.bf16 %v7072, %v7071
        %v7092 = vpack.c.bf16 %v7074, %v7073
        %v7093 = vpack.c.bf16 %v7076, %v7075
        %v7094 = vpack.c.bf16 %v7078, %v7077
        %v7095 = vld [vmem:[%s791] sm:$0xf]
        %v7096 = vld [vmem:[%s791 + $0x4] sm:$0xf]
        %v7097 = vld [vmem:[%s791 + $0x8] sm:$0xf]
        %v7098 = vld [vmem:[%s791 + $0xc] sm:$0xf]
        %v7099 = vld [vmem:[%s791 + $0x10] sm:$0xf]
        %v7100 = vld [vmem:[%s791 + $0x14] sm:$0xf]
        %v7101 = vld [vmem:[%s791 + $0x18] sm:$0xf]
        %v7102 = vld [vmem:[%s791 + $0x1c] sm:$0xf]
        %v7103 = vld [vmem:[%s791 + $0x20] sm:$0xf]
        %v7104 = vld [vmem:[%s791 + $0x24] sm:$0xf]
        %v7105 = vld [vmem:[%s791 + $0x28] sm:$0xf]
        %v7106 = vld [vmem:[%s791 + $0x2c] sm:$0xf]
        %v7107 = vld [vmem:[%s791 + $0x30] sm:$0xf]
        %v7108 = vld [vmem:[%s791 + $0x34] sm:$0xf]
        %v7109 = vld [vmem:[%s791 + $0x38] sm:$0xf]
        %v7110 = vld [vmem:[%s791 + $0x3c] sm:$0xf]
        %v7111 = vld [vmem:[%s799] sm:$0x1]
        %v7113 = vlaneseq
        %v7114 = vshrl.u32 %v7113, 7
        %v7115 = vsub.s32 0, %v7114
        %v7116 = vrot.slane %v7111, %v7115
        %v7134 = vunpack.c.l.b16 %v7095
        %v7135 = vunpack.c.l.b16 %v7096
        %v7136 = vunpack.c.l.b16 %v7097
        %v7137 = vunpack.c.l.b16 %v7098
        %v7138 = vunpack.c.l.b16 %v7099
        %v7139 = vunpack.c.l.b16 %v7100
        %v7140 = vunpack.c.l.b16 %v7101
        %v7141 = vunpack.c.l.b16 %v7102
        %v7142 = vunpack.c.l.b16 %v7103
        %v7143 = vunpack.c.l.b16 %v7104
        %v7144 = vunpack.c.l.b16 %v7105
        %v7145 = vunpack.c.l.b16 %v7106
        %v7146 = vunpack.c.l.b16 %v7107
        %v7147 = vunpack.c.l.b16 %v7108
        %v7148 = vunpack.c.l.b16 %v7109
        %v7149 = vunpack.c.l.b16 %v7110
        %v7150 = vpack.c.b16 %v7135, %v7134
        %v7151 = vpack.c.b16 %v7137, %v7136
        %v7152 = vpack.c.b16 %v7139, %v7138
        %v7153 = vpack.c.b16 %v7141, %v7140
        %v7154 = vpack.c.b16 %v7143, %v7142
        %v7155 = vpack.c.b16 %v7145, %v7144
        %v7156 = vpack.c.b16 %v7147, %v7146
        %v7157 = vpack.c.b16 %v7149, %v7148
        %7166 = vmatprep.subr.bf16.mxu0 0
        %7167 = vmatpush1.bf16.msra.mxu0 %v7150
        %7168 = vmatprep.subr.bf16.mxu0 0
        %7169 = vmatpush1.bf16.msra.mxu0 %v7151
        %7170 = vmatprep.subr.bf16.mxu0 0
        %7171 = vmatpush1.bf16.msra.mxu0 %v7152
        %7172 = vmatprep.subr.bf16.mxu0 0
        %7173 = vmatpush1.bf16.msra.mxu0 %v7153
        %7174 = vmatprep.subr.bf16.mxu0 0
        %7175 = vmatpush1.bf16.msra.mxu0 %v7154
        %7176 = vmatprep.subr.bf16.mxu0 0
        %7177 = vmatpush1.bf16.msra.mxu0 %v7155
        %7178 = vmatprep.subr.bf16.mxu0 0
        %7179 = vmatpush1.bf16.msra.mxu0 %v7156
        %7180 = vmatprep.subr.bf16.mxu0 0
        %7181 = vmatpush1.bf16.msra.mxu0 %v7157
        %7182 = vmatprep.subr.bf16.mxu0 0
        %7183 = vmatpush1.bf16.msra.mxu0 0
        %7184 = vmatprep.subr.bf16.mxu0 0
        %7185 = vmatpush1.bf16.msra.mxu0 0
        %7186 = vmatprep.subr.bf16.mxu0 0
        %7187 = vmatpush1.bf16.msra.mxu0 0
        %7188 = vmatprep.subr.bf16.mxu0 0
        %7189 = vmatpush1.bf16.msra.mxu0 0
        %7190 = vmatprep.subr.bf16.mxu0 0
        %7191 = vmatpush1.bf16.msra.mxu0 0
        %7192 = vmatprep.subr.bf16.mxu0 0
        %7193 = vmatpush1.bf16.msra.mxu0 0
        %7194 = vmatprep.subr.bf16.mxu0 0
        %7195 = vmatpush1.bf16.msra.mxu0 0
        %7196 = vmatprep.subr.bf16.mxu0 0
        %7197 = vmatpush1.bf16.msra.mxu0 0
        %7198 = vmatprep.mubr.bf16.mxu0 0
        %7199 = vmatmul.mubr.bf16.gmra.mrb[0].mxu0 %v7079
        %v7200 = vpop.f32.mrb[0].mxu0
        %v7201 = vadd.f32 %v7116, %v7200
        %v7202 = vpop.f32.mrb[0].mxu0
        %v7203 = vpop.f32.mrb[0].mxu0
        %v7204 = vadd.f32 %v7116, %v7203
        %v7205 = vpop.f32.mrb[0].mxu0
        %7206 = vmatprep.mubr.bf16.mxu0 0
        %7207 = vmatmul.mubr.bf16.gmra.mrb[0].mxu0 %v7080
        %v7208 = vpop.f32.mrb[0].mxu0
        %v7209 = vadd.f32 %v7116, %v7208
        %v7210 = vpop.f32.mrb[0].mxu0
        %v7211 = vpop.f32.mrb[0].mxu0
        %v7212 = vadd.f32 %v7116, %v7211
        %v7213 = vpop.f32.mrb[0].mxu0
        %7214 = vmatprep.mubr.bf16.mxu0 0
        %7215 = vmatmul.mubr.bf16.gmra.mrb[0].mxu0 %v7081
        %v7216 = vpop.f32.mrb[0].mxu0
        %v7217 = vadd.f32 %v7116, %v7216
        %v7218 = vpop.f32.mrb[0].mxu0
        %v7219 = vpop.f32.mrb[0].mxu0
        %v7220 = vadd.f32 %v7116, %v7219
        %v7221 = vpop.f32.mrb[0].mxu0
        %7222 = vmatprep.mubr.bf16.mxu0 0
        %7223 = vmatmul.mubr.bf16.gmra.mrb[0].mxu0 %v7082
        %v7224 = vpop.f32.mrb[0].mxu0
        %v7225 = vadd.f32 %v7116, %v7224
        %v7226 = vpop.f32.mrb[0].mxu0
        %v7227 = vpop.f32.mrb[0].mxu0
        %v7228 = vadd.f32 %v7116, %v7227
        %v7229 = vpop.f32.mrb[0].mxu0
        %7230 = vmatprep.mubr.bf16.mxu0 0
        %7231 = vmatmul.mubr.bf16.gmra.mrb[0].mxu0 %v7083
        %v7232 = vpop.f32.mrb[0].mxu0
        %v7233 = vadd.f32 %v7116, %v7232
        %v7234 = vpop.f32.mrb[0].mxu0
        %v7235 = vpop.f32.mrb[0].mxu0
        %v7236 = vadd.f32 %v7116, %v7235
        %v7237 = vpop.f32.mrb[0].mxu0
        %7238 = vmatprep.mubr.bf16.mxu0 0
        %7239 = vmatmul.mubr.bf16.gmra.mrb[0].mxu0 %v7084
        %v7240 = vpop.f32.mrb[0].mxu0
        %v7241 = vadd.f32 %v7116, %v7240
        %v7242 = vpop.f32.mrb[0].mxu0
        %v7243 = vpop.f32.mrb[0].mxu0
        %v7244 = vadd.f32 %v7116, %v7243
        %v7245 = vpop.f32.mrb[0].mxu0
        %7246 = vmatprep.mubr.bf16.mxu0 0
        %7247 = vmatmul.mubr.bf16.gmra.mrb[0].mxu0 %v7085
        %v7248 = vpop.f32.mrb[0].mxu0
        %v7249 = vadd.f32 %v7116, %v7248
        %v7250 = vpop.f32.mrb[0].mxu0
        %v7251 = vpop.f32.mrb[0].mxu0
        %v7252 = vadd.f32 %v7116, %v7251
        %v7253 = vpop.f32.mrb[0].mxu0
        %7254 = vmatprep.mubr.bf16.mxu0 0
        %7255 = vmatmul.mubr.bf16.gmra.mrb[0].mxu0 %v7086
        %v7256 = vpop.f32.mrb[0].mxu0
        %v7257 = vadd.f32 %v7116, %v7256
        %v7258 = vpop.f32.mrb[0].mxu0
        %v7259 = vpop.f32.mrb[0].mxu0
        %v7260 = vadd.f32 %v7116, %v7259
        %v7261 = vpop.f32.mrb[0].mxu0
        %7262 = vmatprep.mubr.bf16.mxu0 0
        %7263 = vmatmul.mubr.bf16.gmra.mrb[0].mxu0 %v7087
        %v7264 = vpop.f32.mrb[0].mxu0
        %v7265 = vadd.f32 %v7116, %v7264
        %v7266 = vpop.f32.mrb[0].mxu0
        %v7267 = vpop.f32.mrb[0].mxu0
        %v7268 = vadd.f32 %v7116, %v7267
        %v7269 = vpop.f32.mrb[0].mxu0
        %7270 = vmatprep.mubr.bf16.mxu0 0
        %7271 = vmatmul.mubr.bf16.gmra.mrb[0].mxu0 %v7088
        %v7272 = vpop.f32.mrb[0].mxu0
        %v7273 = vadd.f32 %v7116, %v7272
        %v7274 = vpop.f32.mrb[0].mxu0
        %v7275 = vpop.f32.mrb[0].mxu0
        %v7276 = vadd.f32 %v7116, %v7275
        %v7277 = vpop.f32.mrb[0].mxu0
        %7278 = vmatprep.mubr.bf16.mxu0 0
        %7279 = vmatmul.mubr.bf16.gmra.mrb[0].mxu0 %v7089
        %v7280 = vpop.f32.mrb[0].mxu0
        %v7281 = vadd.f32 %v7116, %v7280
        %v7282 = vpop.f32.mrb[0].mxu0
        %v7283 = vpop.f32.mrb[0].mxu0
        %v7284 = vadd.f32 %v7116, %v7283
        %v7285 = vpop.f32.mrb[0].mxu0
        %7286 = vmatprep.mubr.bf16.mxu0 0
        %7287 = vmatmul.mubr.bf16.gmra.mrb[0].mxu0 %v7090
        %v7288 = vpop.f32.mrb[0].mxu0
        %v7289 = vadd.f32 %v7116, %v7288
        %v7290 = vpop.f32.mrb[0].mxu0
        %v7291 = vpop.f32.mrb[0].mxu0
        %v7292 = vadd.f32 %v7116, %v7291
        %v7293 = vpop.f32.mrb[0].mxu0
        %7294 = vmatprep.mubr.bf16.mxu0 0
        %7295 = vmatmul.mubr.bf16.gmra.mrb[0].mxu0 %v7091
        %v7296 = vpop.f32.mrb[0].mxu0
        %v7297 = vadd.f32 %v7116, %v7296
        %v7298 = vpop.f32.mrb[0].mxu0
        %v7299 = vpop.f32.mrb[0].mxu0
        %v7300 = vadd.f32 %v7116, %v7299
        %v7301 = vpop.f32.mrb[0].mxu0
        %7302 = vmatprep.mubr.bf16.mxu0 0
        %7303 = vmatmul.mubr.bf16.gmra.mrb[0].mxu0 %v7092
        %v7304 = vpop.f32.mrb[0].mxu0
        %v7305 = vadd.f32 %v7116, %v7304
        %v7306 = vpop.f32.mrb[0].mxu0
        %v7307 = vpop.f32.mrb[0].mxu0
        %v7308 = vadd.f32 %v7116, %v7307
        %v7309 = vpop.f32.mrb[0].mxu0
        %7310 = vmatprep.mubr.bf16.mxu0 0
        %7311 = vmatmul.mubr.bf16.gmra.mrb[0].mxu0 %v7093
        %v7312 = vpop.f32.mrb[0].mxu0
        %v7313 = vadd.f32 %v7116, %v7312
        %v7314 = vpop.f32.mrb[0].mxu0
        %v7315 = vpop.f32.mrb[0].mxu0
        %v7316 = vadd.f32 %v7116, %v7315
        %v7317 = vpop.f32.mrb[0].mxu0
        %7318 = vmatprep.mubr.bf16.mxu0 0
        %7319 = vmatmul.mubr.bf16.gmra.mrb[0].mxu0 %v7094
        %v7320 = vpop.f32.mrb[0].mxu0
        %v7321 = vadd.f32 %v7116, %v7320
        %v7322 = vpop.f32.mrb[0].mxu0
        %v7323 = vpop.f32.mrb[0].mxu0
        %v7324 = vadd.f32 %v7116, %v7323
        %v7325 = vpop.f32.mrb[0].mxu0
        %7326 = vdwg.mxu0
        %v7327 = vadd.f32 %v6049, %v7201
        %v7328 = vadd.f32 %v6050, %v7204
        %v7329 = vadd.f32 %v6051, %v7209
        %v7330 = vadd.f32 %v6052, %v7212
        %v7331 = vadd.f32 %v6053, %v7217
        %v7332 = vadd.f32 %v6054, %v7220
        %v7333 = vadd.f32 %v6055, %v7225
        %v7334 = vadd.f32 %v6056, %v7228
        %v7335 = vadd.f32 %v6057, %v7233
        %v7336 = vadd.f32 %v6058, %v7236
        %v7337 = vadd.f32 %v6059, %v7241
        %v7338 = vadd.f32 %v6060, %v7244
        %v7339 = vadd.f32 %v6061, %v7249
        %v7340 = vadd.f32 %v6062, %v7252
        %v7341 = vadd.f32 %v6063, %v7257
        %v7342 = vadd.f32 %v6064, %v7260
        %v7343 = vadd.f32 %v6065, %v7265
        %v7344 = vadd.f32 %v6066, %v7268
        %v7345 = vadd.f32 %v6067, %v7273
        %v7346 = vadd.f32 %v6068, %v7276
        %v7347 = vadd.f32 %v6069, %v7281
        %v7348 = vadd.f32 %v6070, %v7284
        %v7349 = vadd.f32 %v6071, %v7289
        %v7350 = vadd.f32 %v6072, %v7292
        %v7351 = vadd.f32 %v6073, %v7297
        %v7352 = vadd.f32 %v6074, %v7300
        %v7353 = vadd.f32 %v6075, %v7305
        %v7354 = vadd.f32 %v6076, %v7308
        %v7355 = vadd.f32 %v6077, %v7313
        %v7356 = vadd.f32 %v6078, %v7316
        %v7357 = vadd.f32 %v6079, %v7321
        %v7358 = vadd.f32 %v6080, %v7324
        %7359 = vst.msk [vmem:[#allocation2] sm:$0xff] %vm992, %v7327
        %7360 = vst.msk [vmem:[#allocation2 + $0x8] sm:$0xff] %vm992, %v7328
        %7361 = vst.msk [vmem:[#allocation2 + $0x10] sm:$0xff] %vm992, %v7329
        %7362 = vst.msk [vmem:[#allocation2 + $0x18] sm:$0xff] %vm992, %v7330
        %7363 = vst.msk [vmem:[#allocation2 + $0x20] sm:$0xff] %vm992, %v7331
        %7364 = vst.msk [vmem:[#allocation2 + $0x28] sm:$0xff] %vm992, %v7332
        %7365 = vst.msk [vmem:[#allocation2 + $0x30] sm:$0xff] %vm992, %v7333
        %7366 = vst.msk [vmem:[#allocation2 + $0x38] sm:$0xff] %vm992, %v7334
        %7367 = vst.msk [vmem:[#allocation2 + $0x40] sm:$0xff] %vm992, %v7335
        %7368 = vst.msk [vmem:[#allocation2 + $0x48] sm:$0xff] %vm992, %v7336
        %7369 = vst.msk [vmem:[#allocation2 + $0x50] sm:$0xff] %vm992, %v7337
        %7370 = vst.msk [vmem:[#allocation2 + $0x58] sm:$0xff] %vm992, %v7338
        %7371 = vst.msk [vmem:[#allocation2 + $0x60] sm:$0xff] %vm992, %v7339
        %7372 = vst.msk [vmem:[#allocation2 + $0x68] sm:$0xff] %vm992, %v7340
        %7373 = vst.msk [vmem:[#allocation2 + $0x70] sm:$0xff] %vm992, %v7341
        %7374 = vst.msk [vmem:[#allocation2 + $0x78] sm:$0xff] %vm992, %v7342
        %7375 = vst.msk [vmem:[#allocation2 + $0x80] sm:$0xff] %vm992, %v7343
        %7376 = vst.msk [vmem:[#allocation2 + $0x88] sm:$0xff] %vm992, %v7344
        %7377 = vst.msk [vmem:[#allocation2 + $0x90] sm:$0xff] %vm992, %v7345
        %7378 = vst.msk [vmem:[#allocation2 + $0x98] sm:$0xff] %vm992, %v7346
        %7379 = vst.msk [vmem:[#allocation2 + $0xa0] sm:$0xff] %vm992, %v7347
        %7380 = vst.msk [vmem:[#allocation2 + $0xa8] sm:$0xff] %vm992, %v7348
        %7381 = vst.msk [vmem:[#allocation2 + $0xb0] sm:$0xff] %vm992, %v7349
        %7382 = vst.msk [vmem:[#allocation2 + $0xb8] sm:$0xff] %vm992, %v7350
        %7383 = vst.msk [vmem:[#allocation2 + $0xc0] sm:$0xff] %vm992, %v7351
        %7384 = vst.msk [vmem:[#allocation2 + $0xc8] sm:$0xff] %vm992, %v7352
        %7385 = vst.msk [vmem:[#allocation2 + $0xd0] sm:$0xff] %vm992, %v7353
        %7386 = vst.msk [vmem:[#allocation2 + $0xd8] sm:$0xff] %vm992, %v7354
        %7387 = vst.msk [vmem:[#allocation2 + $0xe0] sm:$0xff] %vm992, %v7355
        %7388 = vst.msk [vmem:[#allocation2 + $0xe8] sm:$0xff] %vm992, %v7356
        %7389 = vst.msk [vmem:[#allocation2 + $0xf0] sm:$0xff] %vm992, %v7357
        %7390 = vst.msk [vmem:[#allocation2 + $0xf8] sm:$0xff] %vm992, %v7358
        %p7391 = scmp.eq.s32.totalorder %s33, 1
        // Predicated region
        $region137: #{tpu_custom_call.1} parent=75 // pred_check
          %p7392 = pneg %p7391
        $region138: #{tpu_custom_call.1} parent=75 // pred_check_branch
          %7394 = sbr.rel (%p7392) target = $region140
        $region139: #{tpu_custom_call.1} parent=75 // pred_region
          %7395 = vst.msk [vmem:[#allocation21] sm:$0xff] %vm992, %v7327
          %7396 = vst.msk [vmem:[#allocation21 + $0x8] sm:$0xff] %vm992, %v7328
          %7397 = vst.msk [vmem:[#allocation21 + $0x10] sm:$0xff] %vm992, %v7329
          %7398 = vst.msk [vmem:[#allocation21 + $0x18] sm:$0xff] %vm992, %v7330
          %7399 = vst.msk [vmem:[#allocation21 + $0x20] sm:$0xff] %vm992, %v7331
          %7400 = vst.msk [vmem:[#allocation21 + $0x28] sm:$0xff] %vm992, %v7332
          %7401 = vst.msk [vmem:[#allocation21 + $0x30] sm:$0xff] %vm992, %v7333
          %7402 = vst.msk [vmem:[#allocation21 + $0x38] sm:$0xff] %vm992, %v7334
          %7403 = vst.msk [vmem:[#allocation21 + $0x40] sm:$0xff] %vm992, %v7335
          %7404 = vst.msk [vmem:[#allocation21 + $0x48] sm:$0xff] %vm992, %v7336
          %7405 = vst.msk [vmem:[#allocation21 + $0x50] sm:$0xff] %vm992, %v7337
          %7406 = vst.msk [vmem:[#allocation21 + $0x58] sm:$0xff] %vm992, %v7338
          %7407 = vst.msk [vmem:[#allocation21 + $0x60] sm:$0xff] %vm992, %v7339
          %7408 = vst.msk [vmem:[#allocation21 + $0x68] sm:$0xff] %vm992, %v7340
          %7409 = vst.msk [vmem:[#allocation21 + $0x70] sm:$0xff] %vm992, %v7341
          %7410 = vst.msk [vmem:[#allocation21 + $0x78] sm:$0xff] %vm992, %v7342
          %7411 = vst.msk [vmem:[#allocation21 + $0x80] sm:$0xff] %vm992, %v7343
          %7412 = vst.msk [vmem:[#allocation21 + $0x88] sm:$0xff] %vm992, %v7344
          %7413 = vst.msk [vmem:[#allocation21 + $0x90] sm:$0xff] %vm992, %v7345
          %7414 = vst.msk [vmem:[#allocation21 + $0x98] sm:$0xff] %vm992, %v7346
          %7415 = vst.msk [vmem:[#allocation21 + $0xa0] sm:$0xff] %vm992, %v7347
          %7416 = vst.msk [vmem:[#allocation21 + $0xa8] sm:$0xff] %vm992, %v7348
          %7417 = vst.msk [vmem:[#allocation21 + $0xb0] sm:$0xff] %vm992, %v7349
          %7418 = vst.msk [vmem:[#allocation21 + $0xb8] sm:$0xff] %vm992, %v7350
          %7419 = vst.msk [vmem:[#allocation21 + $0xc0] sm:$0xff] %vm992, %v7351
          %7420 = vst.msk [vmem:[#allocation21 + $0xc8] sm:$0xff] %vm992, %v7352
          %7421 = vst.msk [vmem:[#allocation21 + $0xd0] sm:$0xff] %vm992, %v7353
          %7422 = vst.msk [vmem:[#allocation21 + $0xd8] sm:$0xff] %vm992, %v7354
          %7423 = vst.msk [vmem:[#allocation21 + $0xe0] sm:$0xff] %vm992, %v7355
          %7424 = vst.msk [vmem:[#allocation21 + $0xe8] sm:$0xff] %vm992, %v7356
          %7425 = vst.msk [vmem:[#allocation21 + $0xf0] sm:$0xff] %vm992, %v7357
          %7426 = vst.msk [vmem:[#allocation21 + $0xf8] sm:$0xff] %vm992, %v7358
        $region140: #{tpu_custom_call.1} parent=75 // pred_fallthru
          _
        // Predicated region
        $region141: #{tpu_custom_call.1} parent=75 // pred_check
          %p7427 = pneg %p417
        $region142: #{tpu_custom_call.1} parent=75 // pred_check_branch
          %7429 = sbr.rel (%p7427) target = $region144
        $region143: #{tpu_custom_call.1} parent=75 // pred_region
          %s7430 = smul.u32 2, %s32
          %s7432 = ssub.s32 4096, 4096
          %7433 = vsyncadd [#allocation6], %s7432
          %s7434 = smul.addr %s7430, 16
          %s7435 = smul.addr %s7434, 128
          %s7436 = scalar_lea.hbm %s14, %s7435
          %s7437 = sshll.u32 [#allocation21], 4
          %s7438 = int_to_ptr.vmem [resolvable:$true] %s7437
          %7443 = dma.vmem_to_hbm [thread:$0]  %s7438, 4096, %s7436, [#allocation6], 128, 128, 8
        $region144: #{tpu_custom_call.1} parent=75 // pred_fallthru
          _
        // Predicated region
        $region145: #{tpu_custom_call.1} parent=75 // pred_check
          %p7444 = pneg %p417
        $region146: #{tpu_custom_call.1} parent=75 // pred_check_branch
          %7446 = sbr.rel (%p7444) target = $region148
        $region147: #{tpu_custom_call.1} parent=75 // pred_region
          %7447 = dma.done [#allocation6], 4096
        $region148: #{tpu_custom_call.1} parent=75 // pred_fallthru
          _
      $region76: #{tpu_custom_call.1} parent=5 // pred_fallthru
        _
      %p7448 = scmp.le.s32.totalorder 2, %s23
      // Predicated region
      $region149: #{tpu_custom_call.1} parent=5 // pred_check
        %p7449 = pneg %p7448
      $region150: #{tpu_custom_call.1} parent=5 // pred_check_branch
        %7451 = sbr.rel (%p7449) target = $region152
      $region151: #{tpu_custom_call.1} parent=5 // pred_region
        %s7452 = ssub.s32 %s23, 2
      $region152: #{tpu_custom_call.1} parent=5 // pred_fallthru
        _
    $region6: #{tpu_custom_call.1} parent=1 // loop_footer
      %s27 = sadd.s32 1, %s23
    $region7: #{tpu_custom_call.1} parent=1 // loop_footer_branch
      %22 = sbr.rel target = $region3
    $region8: #{tpu_custom_call.1} parent=1 // loop_exit
      _
    %7453 = vsyncpa [#allocation5], 1
    %s7454 = scalar_lea.sflag [#allocation5], 1
    %7455 = vsyncpa %s7454, 1
    %7456 = vsyncpa [#allocation8], 1
    %7457 = vsyncpa [#allocation6], 1
    %s7458 = scalar_lea.sflag [#allocation6], 1
    %7459 = vsyncpa %s7458, 1

</llo_original>
